<compile_context>
chip_gen: v7x
topology: tpu7x:2x2x1
jax: 0.10.0
libtpu: 0.0.40
codegen_flags: <defaults>
</compile_context>

<pallas_src>
import functools

import numpy as np

import jax
import jax.numpy as jnp
from jax import lax
from jax.experimental import pallas as pl
from jax.experimental.pallas import tpu as pltpu


def _round_up(x, m):
    return (x + m - 1) // m * m


# ----------------------------------------------------------------------------
# Fused Pallas kernel: conv0 + relu + conv1 + relu + fc + LayerNorm + tanh
# ----------------------------------------------------------------------------
def _fused_encoder_kernel(x_ref, sel0_ref, sel1_ref, w0_ref, b0_ref,
                          w1_ref, b1_ref, fcw_ref, fcb_ref, g_ref, beta_ref,
                          o_ref, *, eps):
    """
    x_ref    : (B, Cin, H, W)      raw NCHW observation (whole array in VMEM)
    sel0_ref : (kh, Ho0, H)        0/1 row-selection matrices (stride folded in)
    sel1_ref : (kh, Ho1, Ho0)      0/1 row-selection matrices for conv1
    w0_ref   : (kh, Cin, W, N0)    width-lowered conv0 weights (lane padded)
    b0_ref   : (1, N0)             conv0 bias tiled over output columns
    w1_ref   : (kh, N0, N1)        width-lowered conv1 weights
    b1_ref   : (1, N1)
    fcw_ref  : (Ho1, N1, feat)     fc weight, NCHW flatten + permutation folded in
    fcb_ref / g_ref / beta_ref : (1, feat)
    o_ref    : (B, feat)           final features
    """
    batch, cin = x_ref.shape[0], x_ref.shape[1]
    kh = w0_ref.shape[0]
    ho0, n0 = sel0_ref.shape[1], w0_ref.shape[3]
    ho1, n1, feat = fcw_ref.shape[0], fcw_ref.shape[1], fcw_ref.shape[2]

    for b in range(batch):                        # B=2: fully unrolled
        # ---- conv0 (stride folded into sel0 / weight slab) ----
        acc0 = jnp.zeros((ho0, n0), jnp.float32)
        for c in range(cin):
            xc = x_ref[b, c]                                      # (H, W)
            for i in range(kh):
                rows = jnp.dot(sel0_ref[i], xc,
                               preferred_element_type=jnp.float32)  # (Ho0, W)
                acc0 = acc0 + jnp.dot(rows, w0_ref[i, c],
                                      preferred_element_type=jnp.float32)
        y0 = jnp.maximum(acc0 + b0_ref[...], 0.0)                 # (Ho0, N0)

        # ---- conv1: same trick on the vreg-resident conv0 activation ----
        acc1 = jnp.zeros((ho1, n1), jnp.float32)
        for i in range(kh):
            rows = jnp.dot(sel1_ref[i], y0,
                           preferred_element_type=jnp.float32)    # (Ho1, N0)
            acc1 = acc1 + jnp.dot(rows, w1_ref[i],
                                  preferred_element_type=jnp.float32)
        y1 = jnp.maximum(acc1 + b1_ref[...], 0.0)                 # (Ho1, N1)

        # ---- fc (PyTorch NCHW flatten folded into fcw) ----
        z = fcb_ref[...]                                          # (1, feat)
        for r in range(ho1):
            z = z + jnp.dot(y1[r:r + 1, :], fcw_ref[r],
                            preferred_element_type=jnp.float32)

        # ---- LayerNorm (biased var, eps inside sqrt) + tanh ----
        mean = jnp.mean(z, axis=-1, keepdims=True)
        var = jnp.mean((z - mean) ** 2, axis=-1, keepdims=True)
        zn = (z - mean) * lax.rsqrt(var + eps)
        o_ref[b:b + 1, :] = jnp.tanh(zn * g_ref[...] + beta_ref[...])


def pixel_encoder_forward(obs_nchw, prep, *, cfg):
    """Single fused pallas_call for the whole PixelEncoder forward."""
    B = obs_nchw.shape[0]
    kern = functools.partial(_fused_encoder_kernel, eps=cfg["eps"])
    vmem = pl.BlockSpec(memory_space=pltpu.MemorySpace.VMEM)
    return pl.pallas_call(
        kern,
        out_shape=jax.ShapeDtypeStruct((B, cfg["feat"]), jnp.float32),
        in_specs=[vmem] * 11,
        out_specs=vmem,
        compiler_params=pltpu.CompilerParams(
            vmem_limit_bytes=32 * 1024 * 1024),
    )(obs_nchw, prep["sel0"], prep["sel1"], prep["w0"], prep["b0"],
      prep["w1"], prep["b1"], prep["fcw"], prep["fcb"], prep["g"],
      prep["beta"])


# ----------------------------------------------------------------------------
# One-time (setup) weight preprocessing: selection matrices + weight slabs.
# ----------------------------------------------------------------------------
def prepare_encoder_params(params, obs_shape, *, num_layers=2, num_filters=32,
                           feature_dim=50, kernel_size=(3, 3), stride=(2, 2)):
    assert num_layers == 2, "kernel is specialized to the module's default depth"
    kh, kw = kernel_size
    sh, sw = stride
    C, H, W = obs_shape
    F = num_filters
    ho0 = (H - kh) // sh + 1
    wo0 = (W - kw) // sw + 1
    ho1 = (ho0 - kh) // sh + 1
    wo1 = (wo0 - kw) // sw + 1
    n0 = _round_up(wo0 * F, 128)   # lane-dense width of conv0 activation rows
    n1 = _round_up(wo1 * F, 128)   # lane-dense width of conv1 activation rows

    w0 = np.asarray(params["conv0_w"], np.float32)   # (F, C, kh, kw)  OIHW
    b0 = np.asarray(params["conv0_b"], np.float32)
    w1 = np.asarray(params["conv1_w"], np.float32)   # (F, F, kh, kw)
    b1 = np.asarray(params["conv1_b"], np.float32)
    fcw = np.asarray(params["fc_w"], np.float32)     # (F*ho1*wo1, feat)
    fcb = np.asarray(params["fc_b"], np.float32)
    g = np.asarray(params["ln_g"], np.float32)
    bt = np.asarray(params["ln_b"], np.float32)
    assert fcw.shape[0] == F * ho1 * wo1

    # 0/1 row-selection matrices: sel0[i] @ X picks rows i, i+sh, ..., i+sh*(ho0-1)
    sel0 = np.zeros((kh, ho0, H), np.float32)
    for i in range(kh):
        for r in range(ho0):
            sel0[i, r, sh * r + i] = 1.0
    sel1 = np.zeros((kh, ho1, ho0), np.float32)
    for i in range(kh):
        for r in range(ho1):
            sel1[i, r, sh * r + i] = 1.0

    # conv0: for kernel-row i, in-channel c:  (W_in, wo0*F) slab with the kw
    # width taps scattered so that  rows(Ho0, W) @ slab  = conv0 pre-act rows.
    w0_big = np.zeros((kh, C, W, n0), np.float32)
    for i in range(kh):
        for c in range(C):
            for wo in range(wo0):
                for j in range(kw):
                    w0_big[i, c, sw * wo + j, wo * F:(wo + 1) * F] = w0[:, c, i, j]
    b0_row = np.zeros((1, n0), np.float32)
    for wo in range(wo0):
        b0_row[0, wo * F:(wo + 1) * F] = b0

    # conv1: same lowering, input lane index = wi*F + ci  (conv0 layout).
    w1_big = np.zeros((kh, n0, n1), np.float32)
    for i in range(kh):
        for ci in range(F):
            for wo in range(wo1):
                for j in range(kw):
                    wi = sw * wo + j
                    w1_big[i, wi * F + ci, wo * F:(wo + 1) * F] = w1[:, ci, i, j]
    b1_row = np.zeros((1, n1), np.float32)
    for wo in range(wo1):
        b1_row[0, wo * F:(wo + 1) * F] = b1

    # fc: fold the PyTorch NCHW flatten (index co*ho1*wo1 + ho*wo1 + wo) into a
    # per-output-row weight block indexed by the kernel's (wo*F + co) lanes.
    fcw_big = np.zeros((ho1, n1, feature_dim), np.float32)
    for ho in range(ho1):
        for wo in range(wo1):
            for co in range(F):
                fcw_big[ho, wo * F + co, :] = fcw[co * ho1 * wo1 + ho * wo1 + wo, :]

    prep = dict(
        sel0=jnp.asarray(sel0), sel1=jnp.asarray(sel1),
        w0=jnp.asarray(w0_big), b0=jnp.asarray(b0_row),
        w1=jnp.asarray(w1_big), b1=jnp.asarray(b1_row),
        fcw=jnp.asarray(fcw_big),
        fcb=jnp.asarray(fcb.reshape(1, feature_dim)),
        g=jnp.asarray(g.reshape(1, feature_dim)),
        beta=jnp.asarray(bt.reshape(1, feature_dim)),
    )
    cfg = dict(kh=kh, sh=sh, ho0=ho0, wo0=wo0, ho1=ho1, wo1=wo1,
               nf=F, feat=feature_dim, n0=n0, n1=n1, eps=1e-5)
    return prep, cfg


# ----------------------------------------------------------------------------
# Pure-JAX reference (mirrors the PyTorch semantics) for validation
# ----------------------------------------------------------------------------
def reference_forward(obs_nchw, params, *, num_layers=2,
                      stride=(2, 2), kernel_size=(3, 3)):
    x = obs_nchw
    for i in range(num_layers):
        w = params[f"conv{i}_w"]
        b = params[f"conv{i}_b"]
        x = lax.conv_general_dilated(
            x, w, window_strides=stride, padding="VALID",
            dimension_numbers=("NCHW", "OIHW", "NCHW"))
        x = jnp.maximum(x + b.reshape(1, -1, 1, 1), 0.0)
    h = x.reshape(x.shape[0], -1)
    z = h @ params["fc_w"] + params["fc_b"]
    mean = z.mean(-1, keepdims=True)
    var = ((z - mean) ** 2).mean(-1, keepdims=True)
    y = (z - mean) / jnp.sqrt(var + 1e-5) * params["ln_g"] + params["ln_b"]
    return jnp.tanh(y)


# ----------------------------------------------------------------------------
# Deterministic parameter init (synthetic; no checkpoint loading)
# ----------------------------------------------------------------------------
def init_params(key, obs_shape, num_layers, num_filters, feature_dim,
                kernel_size, stride):
    kh, kw = kernel_size
    sh, sw = stride
    c, h, w = obs_shape
    params = {}
    keys = jax.random.split(key, 2 * num_layers + 2)
    cin = c
    ho, wo = h, w
    for i in range(num_layers):
        params[f"conv{i}_w"] = 0.1 * jax.random.normal(
            keys[2 * i], (num_filters, cin, kh, kw), dtype=jnp.float32)
        params[f"conv{i}_b"] = 0.1 * jax.random.normal(
            keys[2 * i + 1], (num_filters,), dtype=jnp.float32)
        cin = num_filters
        ho = (ho - kh) // sh + 1
        wo = (wo - kw) // sw + 1
    out_dim = num_filters * ho * wo
    params["fc_w"] = 0.1 * jax.random.normal(
        keys[-2], (out_dim, feature_dim), dtype=jnp.float32)
    params["fc_b"] = 0.1 * jax.random.normal(
        keys[-1], (feature_dim,), dtype=jnp.float32)
    params["ln_g"] = jnp.ones((feature_dim,), dtype=jnp.float32)
    params["ln_b"] = jnp.zeros((feature_dim,), dtype=jnp.float32)
    return params, out_dim


if __name__ == "__main__":
    # Small shapes consistent with the module: obs (C=4, H=16, W=16), batch=2.
    obs_shape = (4, 16, 16)
    batch = 2
    num_layers = 2
    num_filters = 32
    feature_dim = 50
    kernel_size = (3, 3)
    stride = (2, 2)

    key = jax.random.PRNGKey(0)
    k_obs, k_par = jax.random.split(key)
    obs = jax.random.normal(k_obs, (batch,) + obs_shape, dtype=jnp.float32)

    params, out_dim = init_params(k_par, obs_shape, num_layers, num_filters,
                                  feature_dim, kernel_size, stride)
    # PixelEncoder prints its flattened conv output size; mirror that.
    print("PixelEncoder outputsize:", out_dim)

    # One-time weight preprocessing (outside the hot path), then a jitted
    # forward that is exactly one fused pallas_call.
    prep, cfg = prepare_encoder_params(
        params, obs_shape, num_layers=num_layers, num_filters=num_filters,
        feature_dim=feature_dim, kernel_size=kernel_size, stride=stride)
    fwd = jax.jit(functools.partial(pixel_encoder_forward, cfg=cfg))

    out = jax.block_until_ready(fwd(obs, prep))

    ref = jax.block_until_ready(
        reference_forward(obs, params, num_layers=num_layers,
                          stride=stride, kernel_size=kernel_size))

    assert out.shape == (batch, feature_dim), out.shape
    assert jnp.allclose(out, ref, atol=1e-2, rtol=1e-2), \
        float(jnp.max(jnp.abs(out - ref)))
    print("KERNEL_OK")
</pallas_src>

<mosaic_0001>
module attributes {stable_mosaic.version = 11 : i64} {
  func.func @_fused_encoder_kernel(%arg0: memref<2x4x16x16xf32, #tpu.memory_space<vmem>>, %arg1: memref<3x7x16xf32, #tpu.memory_space<vmem>>, %arg2: memref<3x3x7xf32, #tpu.memory_space<vmem>>, %arg3: memref<3x4x16x256xf32, #tpu.memory_space<vmem>>, %arg4: memref<1x256xf32, #tpu.memory_space<vmem>>, %arg5: memref<3x256x128xf32, #tpu.memory_space<vmem>>, %arg6: memref<1x128xf32, #tpu.memory_space<vmem>>, %arg7: memref<3x128x50xf32, #tpu.memory_space<vmem>>, %arg8: memref<1x50xf32, #tpu.memory_space<vmem>>, %arg9: memref<1x50xf32, #tpu.memory_space<vmem>>, %arg10: memref<1x50xf32, #tpu.memory_space<vmem>>, %arg11: memref<2x50xf32, #tpu.memory_space<vmem>>) attributes {dimension_semantics = [], scalar_prefetch = 0 : i64, scratch_operands = 0 : i64, tpu.core_type = #tpu.core_type<tc>} {
    %cst = arith.constant 0.000000e+00 : f32
    %0 = vector.broadcast %cst : f32 to vector<7x256xf32>
    %c0 = arith.constant 0 : index
    %c0_0 = arith.constant 0 : index
    %c0_1 = arith.constant 0 : index
    %c0_2 = arith.constant 0 : index
    %1 = vector.load %arg0[%c0, %c0_0, %c0_1, %c0_2] : memref<2x4x16x16xf32, #tpu.memory_space<vmem>>, vector<1x1x16x16xf32>
    %2 = vector.shape_cast %1 : vector<1x1x16x16xf32> to vector<16x16xf32>
    %c0_3 = arith.constant 0 : index
    %c0_4 = arith.constant 0 : index
    %c0_5 = arith.constant 0 : index
    %3 = vector.load %arg1[%c0_3, %c0_4, %c0_5] : memref<3x7x16xf32, #tpu.memory_space<vmem>>, vector<1x7x16xf32>
    %4 = vector.shape_cast %3 : vector<1x7x16xf32> to vector<7x16xf32>
    %cst_6 = arith.constant dense<0.000000e+00> : vector<7x16xf32>
    %5 = tpu.matmul %4, %2, %cst_6 {dimension_numbers = #tpu.dot_dimension_numbers<[1], [0], [0], [1], [0, 0, 1, 1], [], []>} : vector<7x16xf32>, vector<16x16xf32>, vector<7x16xf32> -> vector<7x16xf32>
    %c0_7 = arith.constant 0 : index
    %c0_8 = arith.constant 0 : index
    %c0_9 = arith.constant 0 : index
    %c0_10 = arith.constant 0 : index
    %6 = vector.load %arg3[%c0_7, %c0_8, %c0_9, %c0_10] : memref<3x4x16x256xf32, #tpu.memory_space<vmem>>, vector<1x1x16x256xf32>
    %7 = vector.shape_cast %6 : vector<1x1x16x256xf32> to vector<16x256xf32>
    %cst_11 = arith.constant dense<0.000000e+00> : vector<7x256xf32>
    %8 = tpu.matmul %5, %7, %cst_11 {dimension_numbers = #tpu.dot_dimension_numbers<[1], [0], [0], [1], [0, 0, 1, 1], [], []>} : vector<7x16xf32>, vector<16x256xf32>, vector<7x256xf32> -> vector<7x256xf32>
    %9 = arith.addf %0, %8 : vector<7x256xf32>
    %c1 = arith.constant 1 : index
    %c0_12 = arith.constant 0 : index
    %c0_13 = arith.constant 0 : index
    %10 = vector.load %arg1[%c1, %c0_12, %c0_13] : memref<3x7x16xf32, #tpu.memory_space<vmem>>, vector<1x7x16xf32>
    %11 = vector.shape_cast %10 : vector<1x7x16xf32> to vector<7x16xf32>
    %cst_14 = arith.constant dense<0.000000e+00> : vector<7x16xf32>
    %12 = tpu.matmul %11, %2, %cst_14 {dimension_numbers = #tpu.dot_dimension_numbers<[1], [0], [0], [1], [0, 0, 1, 1], [], []>} : vector<7x16xf32>, vector<16x16xf32>, vector<7x16xf32> -> vector<7x16xf32>
    %c1_15 = arith.constant 1 : index
    %c0_16 = arith.constant 0 : index
    %c0_17 = arith.constant 0 : index
    %c0_18 = arith.constant 0 : index
    %13 = vector.load %arg3[%c1_15, %c0_16, %c0_17, %c0_18] : memref<3x4x16x256xf32, #tpu.memory_space<vmem>>, vector<1x1x16x256xf32>
    %14 = vector.shape_cast %13 : vector<1x1x16x256xf32> to vector<16x256xf32>
    %cst_19 = arith.constant dense<0.000000e+00> : vector<7x256xf32>
    %15 = tpu.matmul %12, %14, %cst_19 {dimension_numbers = #tpu.dot_dimension_numbers<[1], [0], [0], [1], [0, 0, 1, 1], [], []>} : vector<7x16xf32>, vector<16x256xf32>, vector<7x256xf32> -> vector<7x256xf32>
    %16 = arith.addf %9, %15 : vector<7x256xf32>
    %c2 = arith.constant 2 : index
    %c0_20 = arith.constant 0 : index
    %c0_21 = arith.constant 0 : index
    %17 = vector.load %arg1[%c2, %c0_20, %c0_21] : memref<3x7x16xf32, #tpu.memory_space<vmem>>, vector<1x7x16xf32>
    %18 = vector.shape_cast %17 : vector<1x7x16xf32> to vector<7x16xf32>
    %cst_22 = arith.constant dense<0.000000e+00> : vector<7x16xf32>
    %19 = tpu.matmul %18, %2, %cst_22 {dimension_numbers = #tpu.dot_dimension_numbers<[1], [0], [0], [1], [0, 0, 1, 1], [], []>} : vector<7x16xf32>, vector<16x16xf32>, vector<7x16xf32> -> vector<7x16xf32>
    %c2_23 = arith.constant 2 : index
    %c0_24 = arith.constant 0 : index
    %c0_25 = arith.constant 0 : index
    %c0_26 = arith.constant 0 : index
    %20 = vector.load %arg3[%c2_23, %c0_24, %c0_25, %c0_26] : memref<3x4x16x256xf32, #tpu.memory_space<vmem>>, vector<1x1x16x256xf32>
    %21 = vector.shape_cast %20 : vector<1x1x16x256xf32> to vector<16x256xf32>
    %cst_27 = arith.constant dense<0.000000e+00> : vector<7x256xf32>
    %22 = tpu.matmul %19, %21, %cst_27 {dimension_numbers = #tpu.dot_dimension_numbers<[1], [0], [0], [1], [0, 0, 1, 1], [], []>} : vector<7x16xf32>, vector<16x256xf32>, vector<7x256xf32> -> vector<7x256xf32>
    %23 = arith.addf %16, %22 : vector<7x256xf32>
    %c0_28 = arith.constant 0 : index
    %c1_29 = arith.constant 1 : index
    %c0_30 = arith.constant 0 : index
    %c0_31 = arith.constant 0 : index
    %24 = vector.load %arg0[%c0_28, %c1_29, %c0_30, %c0_31] : memref<2x4x16x16xf32, #tpu.memory_space<vmem>>, vector<1x1x16x16xf32>
    %25 = vector.shape_cast %24 : vector<1x1x16x16xf32> to vector<16x16xf32>
    %c0_32 = arith.constant 0 : index
    %c0_33 = arith.constant 0 : index
    %c0_34 = arith.constant 0 : index
    %26 = vector.load %arg1[%c0_32, %c0_33, %c0_34] : memref<3x7x16xf32, #tpu.memory_space<vmem>>, vector<1x7x16xf32>
    %27 = vector.shape_cast %26 : vector<1x7x16xf32> to vector<7x16xf32>
    %cst_35 = arith.constant dense<0.000000e+00> : vector<7x16xf32>
    %28 = tpu.matmul %27, %25, %cst_35 {dimension_numbers = #tpu.dot_dimension_numbers<[1], [0], [0], [1], [0, 0, 1, 1], [], []>} : vector<7x16xf32>, vector<16x16xf32>, vector<7x16xf32> -> vector<7x16xf32>
    %c0_36 = arith.constant 0 : index
    %c1_37 = arith.constant 1 : index
    %c0_38 = arith.constant 0 : index
    %c0_39 = arith.constant 0 : index
    %29 = vector.load %arg3[%c0_36, %c1_37, %c0_38, %c0_39] : memref<3x4x16x256xf32, #tpu.memory_space<vmem>>, vector<1x1x16x256xf32>
    %30 = vector.shape_cast %29 : vector<1x1x16x256xf32> to vector<16x256xf32>
    %cst_40 = arith.constant dense<0.000000e+00> : vector<7x256xf32>
    %31 = tpu.matmul %28, %30, %cst_40 {dimension_numbers = #tpu.dot_dimension_numbers<[1], [0], [0], [1], [0, 0, 1, 1], [], []>} : vector<7x16xf32>, vector<16x256xf32>, vector<7x256xf32> -> vector<7x256xf32>
    %32 = arith.addf %23, %31 : vector<7x256xf32>
    %c1_41 = arith.constant 1 : index
    %c0_42 = arith.constant 0 : index
    %c0_43 = arith.constant 0 : index
    %33 = vector.load %arg1[%c1_41, %c0_42, %c0_43] : memref<3x7x16xf32, #tpu.memory_space<vmem>>, vector<1x7x16xf32>
    %34 = vector.shape_cast %33 : vector<1x7x16xf32> to vector<7x16xf32>
    %cst_44 = arith.constant dense<0.000000e+00> : vector<7x16xf32>
    %35 = tpu.matmul %34, %25, %cst_44 {dimension_numbers = #tpu.dot_dimension_numbers<[1], [0], [0], [1], [0, 0, 1, 1], [], []>} : vector<7x16xf32>, vector<16x16xf32>, vector<7x16xf32> -> vector<7x16xf32>
    %c1_45 = arith.constant 1 : index
    %c1_46 = arith.constant 1 : index
    %c0_47 = arith.constant 0 : index
    %c0_48 = arith.constant 0 : index
    %36 = vector.load %arg3[%c1_45, %c1_46, %c0_47, %c0_48] : memref<3x4x16x256xf32, #tpu.memory_space<vmem>>, vector<1x1x16x256xf32>
    %37 = vector.shape_cast %36 : vector<1x1x16x256xf32> to vector<16x256xf32>
    %cst_49 = arith.constant dense<0.000000e+00> : vector<7x256xf32>
    %38 = tpu.matmul %35, %37, %cst_49 {dimension_numbers = #tpu.dot_dimension_numbers<[1], [0], [0], [1], [0, 0, 1, 1], [], []>} : vector<7x16xf32>, vector<16x256xf32>, vector<7x256xf32> -> vector<7x256xf32>
    %39 = arith.addf %32, %38 : vector<7x256xf32>
    %c2_50 = arith.constant 2 : index
    %c0_51 = arith.constant 0 : index
    %c0_52 = arith.constant 0 : index
    %40 = vector.load %arg1[%c2_50, %c0_51, %c0_52] : memref<3x7x16xf32, #tpu.memory_space<vmem>>, vector<1x7x16xf32>
    %41 = vector.shape_cast %40 : vector<1x7x16xf32> to vector<7x16xf32>
    %cst_53 = arith.constant dense<0.000000e+00> : vector<7x16xf32>
    %42 = tpu.matmul %41, %25, %cst_53 {dimension_numbers = #tpu.dot_dimension_numbers<[1], [0], [0], [1], [0, 0, 1, 1], [], []>} : vector<7x16xf32>, vector<16x16xf32>, vector<7x16xf32> -> vector<7x16xf32>
    %c2_54 = arith.constant 2 : index
    %c1_55 = arith.constant 1 : index
    %c0_56 = arith.constant 0 : index
    %c0_57 = arith.constant 0 : index
    %43 = vector.load %arg3[%c2_54, %c1_55, %c0_56, %c0_57] : memref<3x4x16x256xf32, #tpu.memory_space<vmem>>, vector<1x1x16x256xf32>
    %44 = vector.shape_cast %43 : vector<1x1x16x256xf32> to vector<16x256xf32>
    %cst_58 = arith.constant dense<0.000000e+00> : vector<7x256xf32>
    %45 = tpu.matmul %42, %44, %cst_58 {dimension_numbers = #tpu.dot_dimension_numbers<[1], [0], [0], [1], [0, 0, 1, 1], [], []>} : vector<7x16xf32>, vector<16x256xf32>, vector<7x256xf32> -> vector<7x256xf32>
    %46 = arith.addf %39, %45 : vector<7x256xf32>
    %c0_59 = arith.constant 0 : index
    %c2_60 = arith.constant 2 : index
    %c0_61 = arith.constant 0 : index
    %c0_62 = arith.constant 0 : index
    %47 = vector.load %arg0[%c0_59, %c2_60, %c0_61, %c0_62] : memref<2x4x16x16xf32, #tpu.memory_space<vmem>>, vector<1x1x16x16xf32>
    %48 = vector.shape_cast %47 : vector<1x1x16x16xf32> to vector<16x16xf32>
    %c0_63 = arith.constant 0 : index
    %c0_64 = arith.constant 0 : index
    %c0_65 = arith.constant 0 : index
    %49 = vector.load %arg1[%c0_63, %c0_64, %c0_65] : memref<3x7x16xf32, #tpu.memory_space<vmem>>, vector<1x7x16xf32>
    %50 = vector.shape_cast %49 : vector<1x7x16xf32> to vector<7x16xf32>
    %cst_66 = arith.constant dense<0.000000e+00> : vector<7x16xf32>
    %51 = tpu.matmul %50, %48, %cst_66 {dimension_numbers = #tpu.dot_dimension_numbers<[1], [0], [0], [1], [0, 0, 1, 1], [], []>} : vector<7x16xf32>, vector<16x16xf32>, vector<7x16xf32> -> vector<7x16xf32>
    %c0_67 = arith.constant 0 : index
    %c2_68 = arith.constant 2 : index
    %c0_69 = arith.constant 0 : index
    %c0_70 = arith.constant 0 : index
    %52 = vector.load %arg3[%c0_67, %c2_68, %c0_69, %c0_70] : memref<3x4x16x256xf32, #tpu.memory_space<vmem>>, vector<1x1x16x256xf32>
    %53 = vector.shape_cast %52 : vector<1x1x16x256xf32> to vector<16x256xf32>
    %cst_71 = arith.constant dense<0.000000e+00> : vector<7x256xf32>
    %54 = tpu.matmul %51, %53, %cst_71 {dimension_numbers = #tpu.dot_dimension_numbers<[1], [0], [0], [1], [0, 0, 1, 1], [], []>} : vector<7x16xf32>, vector<16x256xf32>, vector<7x256xf32> -> vector<7x256xf32>
    %55 = arith.addf %46, %54 : vector<7x256xf32>
    %c1_72 = arith.constant 1 : index
    %c0_73 = arith.constant 0 : index
    %c0_74 = arith.constant 0 : index
    %56 = vector.load %arg1[%c1_72, %c0_73, %c0_74] : memref<3x7x16xf32, #tpu.memory_space<vmem>>, vector<1x7x16xf32>
    %57 = vector.shape_cast %56 : vector<1x7x16xf32> to vector<7x16xf32>
    %cst_75 = arith.constant dense<0.000000e+00> : vector<7x16xf32>
    %58 = tpu.matmul %57, %48, %cst_75 {dimension_numbers = #tpu.dot_dimension_numbers<[1], [0], [0], [1], [0, 0, 1, 1], [], []>} : vector<7x16xf32>, vector<16x16xf32>, vector<7x16xf32> -> vector<7x16xf32>
    %c1_76 = arith.constant 1 : index
    %c2_77 = arith.constant 2 : index
    %c0_78 = arith.constant 0 : index
    %c0_79 = arith.constant 0 : index
    %59 = vector.load %arg3[%c1_76, %c2_77, %c0_78, %c0_79] : memref<3x4x16x256xf32, #tpu.memory_space<vmem>>, vector<1x1x16x256xf32>
    %60 = vector.shape_cast %59 : vector<1x1x16x256xf32> to vector<16x256xf32>
    %cst_80 = arith.constant dense<0.000000e+00> : vector<7x256xf32>
    %61 = tpu.matmul %58, %60, %cst_80 {dimension_numbers = #tpu.dot_dimension_numbers<[1], [0], [0], [1], [0, 0, 1, 1], [], []>} : vector<7x16xf32>, vector<16x256xf32>, vector<7x256xf32> -> vector<7x256xf32>
    %62 = arith.addf %55, %61 : vector<7x256xf32>
    %c2_81 = arith.constant 2 : index
    %c0_82 = arith.constant 0 : index
    %c0_83 = arith.constant 0 : index
    %63 = vector.load %arg1[%c2_81, %c0_82, %c0_83] : memref<3x7x16xf32, #tpu.memory_space<vmem>>, vector<1x7x16xf32>
    %64 = vector.shape_cast %63 : vector<1x7x16xf32> to vector<7x16xf32>
    %cst_84 = arith.constant dense<0.000000e+00> : vector<7x16xf32>
    %65 = tpu.matmul %64, %48, %cst_84 {dimension_numbers = #tpu.dot_dimension_numbers<[1], [0], [0], [1], [0, 0, 1, 1], [], []>} : vector<7x16xf32>, vector<16x16xf32>, vector<7x16xf32> -> vector<7x16xf32>
    %c2_85 = arith.constant 2 : index
    %c2_86 = arith.constant 2 : index
    %c0_87 = arith.constant 0 : index
    %c0_88 = arith.constant 0 : index
    %66 = vector.load %arg3[%c2_85, %c2_86, %c0_87, %c0_88] : memref<3x4x16x256xf32, #tpu.memory_space<vmem>>, vector<1x1x16x256xf32>
    %67 = vector.shape_cast %66 : vector<1x1x16x256xf32> to vector<16x256xf32>
    %cst_89 = arith.constant dense<0.000000e+00> : vector<7x256xf32>
    %68 = tpu.matmul %65, %67, %cst_89 {dimension_numbers = #tpu.dot_dimension_numbers<[1], [0], [0], [1], [0, 0, 1, 1], [], []>} : vector<7x16xf32>, vector<16x256xf32>, vector<7x256xf32> -> vector<7x256xf32>
    %69 = arith.addf %62, %68 : vector<7x256xf32>
    %c0_90 = arith.constant 0 : index
    %c3 = arith.constant 3 : index
    %c0_91 = arith.constant 0 : index
    %c0_92 = arith.constant 0 : index
    %70 = vector.load %arg0[%c0_90, %c3, %c0_91, %c0_92] : memref<2x4x16x16xf32, #tpu.memory_space<vmem>>, vector<1x1x16x16xf32>
    %71 = vector.shape_cast %70 : vector<1x1x16x16xf32> to vector<16x16xf32>
    %c0_93 = arith.constant 0 : index
    %c0_94 = arith.constant 0 : index
    %c0_95 = arith.constant 0 : index
    %72 = vector.load %arg1[%c0_93, %c0_94, %c0_95] : memref<3x7x16xf32, #tpu.memory_space<vmem>>, vector<1x7x16xf32>
    %73 = vector.shape_cast %72 : vector<1x7x16xf32> to vector<7x16xf32>
    %cst_96 = arith.constant dense<0.000000e+00> : vector<7x16xf32>
    %74 = tpu.matmul %73, %71, %cst_96 {dimension_numbers = #tpu.dot_dimension_numbers<[1], [0], [0], [1], [0, 0, 1, 1], [], []>} : vector<7x16xf32>, vector<16x16xf32>, vector<7x16xf32> -> vector<7x16xf32>
    %c0_97 = arith.constant 0 : index
    %c3_98 = arith.constant 3 : index
    %c0_99 = arith.constant 0 : index
    %c0_100 = arith.constant 0 : index
    %75 = vector.load %arg3[%c0_97, %c3_98, %c0_99, %c0_100] : memref<3x4x16x256xf32, #tpu.memory_space<vmem>>, vector<1x1x16x256xf32>
    %76 = vector.shape_cast %75 : vector<1x1x16x256xf32> to vector<16x256xf32>
    %cst_101 = arith.constant dense<0.000000e+00> : vector<7x256xf32>
    %77 = tpu.matmul %74, %76, %cst_101 {dimension_numbers = #tpu.dot_dimension_numbers<[1], [0], [0], [1], [0, 0, 1, 1], [], []>} : vector<7x16xf32>, vector<16x256xf32>, vector<7x256xf32> -> vector<7x256xf32>
    %78 = arith.addf %69, %77 : vector<7x256xf32>
    %c1_102 = arith.constant 1 : index
    %c0_103 = arith.constant 0 : index
    %c0_104 = arith.constant 0 : index
    %79 = vector.load %arg1[%c1_102, %c0_103, %c0_104] : memref<3x7x16xf32, #tpu.memory_space<vmem>>, vector<1x7x16xf32>
    %80 = vector.shape_cast %79 : vector<1x7x16xf32> to vector<7x16xf32>
    %cst_105 = arith.constant dense<0.000000e+00> : vector<7x16xf32>
    %81 = tpu.matmul %80, %71, %cst_105 {dimension_numbers = #tpu.dot_dimension_numbers<[1], [0], [0], [1], [0, 0, 1, 1], [], []>} : vector<7x16xf32>, vector<16x16xf32>, vector<7x16xf32> -> vector<7x16xf32>
    %c1_106 = arith.constant 1 : index
    %c3_107 = arith.constant 3 : index
    %c0_108 = arith.constant 0 : index
    %c0_109 = arith.constant 0 : index
    %82 = vector.load %arg3[%c1_106, %c3_107, %c0_108, %c0_109] : memref<3x4x16x256xf32, #tpu.memory_space<vmem>>, vector<1x1x16x256xf32>
    %83 = vector.shape_cast %82 : vector<1x1x16x256xf32> to vector<16x256xf32>
    %cst_110 = arith.constant dense<0.000000e+00> : vector<7x256xf32>
    %84 = tpu.matmul %81, %83, %cst_110 {dimension_numbers = #tpu.dot_dimension_numbers<[1], [0], [0], [1], [0, 0, 1, 1], [], []>} : vector<7x16xf32>, vector<16x256xf32>, vector<7x256xf32> -> vector<7x256xf32>
    %85 = arith.addf %78, %84 : vector<7x256xf32>
    %c2_111 = arith.constant 2 : index
    %c0_112 = arith.constant 0 : index
    %c0_113 = arith.constant 0 : index
    %86 = vector.load %arg1[%c2_111, %c0_112, %c0_113] : memref<3x7x16xf32, #tpu.memory_space<vmem>>, vector<1x7x16xf32>
    %87 = vector.shape_cast %86 : vector<1x7x16xf32> to vector<7x16xf32>
    %cst_114 = arith.constant dense<0.000000e+00> : vector<7x16xf32>
    %88 = tpu.matmul %87, %71, %cst_114 {dimension_numbers = #tpu.dot_dimension_numbers<[1], [0], [0], [1], [0, 0, 1, 1], [], []>} : vector<7x16xf32>, vector<16x16xf32>, vector<7x16xf32> -> vector<7x16xf32>
    %c2_115 = arith.constant 2 : index
    %c3_116 = arith.constant 3 : index
    %c0_117 = arith.constant 0 : index
    %c0_118 = arith.constant 0 : index
    %89 = vector.load %arg3[%c2_115, %c3_116, %c0_117, %c0_118] : memref<3x4x16x256xf32, #tpu.memory_space<vmem>>, vector<1x1x16x256xf32>
    %90 = vector.shape_cast %89 : vector<1x1x16x256xf32> to vector<16x256xf32>
    %cst_119 = arith.constant dense<0.000000e+00> : vector<7x256xf32>
    %91 = tpu.matmul %88, %90, %cst_119 {dimension_numbers = #tpu.dot_dimension_numbers<[1], [0], [0], [1], [0, 0, 1, 1], [], []>} : vector<7x16xf32>, vector<16x256xf32>, vector<7x256xf32> -> vector<7x256xf32>
    %92 = arith.addf %85, %91 : vector<7x256xf32>
    %c0_120 = arith.constant 0 : index
    %c0_121 = arith.constant 0 : index
    %93 = vector.load %arg4[%c0_120, %c0_121] : memref<1x256xf32, #tpu.memory_space<vmem>>, vector<1x256xf32>
    %94 = vector.broadcast %93 : vector<1x256xf32> to vector<7x256xf32>
    %95 = arith.addf %92, %94 : vector<7x256xf32>
    %cst_122 = arith.constant 0.000000e+00 : f32
    %96 = vector.broadcast %cst_122 : f32 to vector<7x256xf32>
    %97 = arith.maximumf %95, %96 : vector<7x256xf32>
    %cst_123 = arith.constant 0.000000e+00 : f32
    %98 = vector.broadcast %cst_123 : f32 to vector<3x128xf32>
    %c0_124 = arith.constant 0 : index
    %c0_125 = arith.constant 0 : index
    %c0_126 = arith.constant 0 : index
    %99 = vector.load %arg2[%c0_124, %c0_125, %c0_126] : memref<3x3x7xf32, #tpu.memory_space<vmem>>, vector<1x3x7xf32>
    %100 = vector.shape_cast %99 : vector<1x3x7xf32> to vector<3x7xf32>
    %cst_127 = arith.constant dense<0.000000e+00> : vector<3x256xf32>
    %101 = tpu.matmul %100, %97, %cst_127 {dimension_numbers = #tpu.dot_dimension_numbers<[1], [0], [0], [1], [0, 0, 1, 1], [], []>} : vector<3x7xf32>, vector<7x256xf32>, vector<3x256xf32> -> vector<3x256xf32>
    %c0_128 = arith.constant 0 : index
    %c0_129 = arith.constant 0 : index
    %c0_130 = arith.constant 0 : index
    %102 = vector.load %arg5[%c0_128, %c0_129, %c0_130] : memref<3x256x128xf32, #tpu.memory_space<vmem>>, vector<1x256x128xf32>
    %103 = vector.shape_cast %102 : vector<1x256x128xf32> to vector<256x128xf32>
    %cst_131 = arith.constant dense<0.000000e+00> : vector<3x128xf32>
    %104 = tpu.matmul %101, %103, %cst_131 {dimension_numbers = #tpu.dot_dimension_numbers<[1], [0], [0], [1], [0, 0, 1, 1], [], []>} : vector<3x256xf32>, vector<256x128xf32>, vector<3x128xf32> -> vector<3x128xf32>
    %105 = arith.addf %98, %104 : vector<3x128xf32>
    %c1_132 = arith.constant 1 : index
    %c0_133 = arith.constant 0 : index
    %c0_134 = arith.constant 0 : index
    %106 = vector.load %arg2[%c1_132, %c0_133, %c0_134] : memref<3x3x7xf32, #tpu.memory_space<vmem>>, vector<1x3x7xf32>
    %107 = vector.shape_cast %106 : vector<1x3x7xf32> to vector<3x7xf32>
    %cst_135 = arith.constant dense<0.000000e+00> : vector<3x256xf32>
    %108 = tpu.matmul %107, %97, %cst_135 {dimension_numbers = #tpu.dot_dimension_numbers<[1], [0], [0], [1], [0, 0, 1, 1], [], []>} : vector<3x7xf32>, vector<7x256xf32>, vector<3x256xf32> -> vector<3x256xf32>
    %c1_136 = arith.constant 1 : index
    %c0_137 = arith.constant 0 : index
    %c0_138 = arith.constant 0 : index
    %109 = vector.load %arg5[%c1_136, %c0_137, %c0_138] : memref<3x256x128xf32, #tpu.memory_space<vmem>>, vector<1x256x128xf32>
    %110 = vector.shape_cast %109 : vector<1x256x128xf32> to vector<256x128xf32>
    %cst_139 = arith.constant dense<0.000000e+00> : vector<3x128xf32>
    %111 = tpu.matmul %108, %110, %cst_139 {dimension_numbers = #tpu.dot_dimension_numbers<[1], [0], [0], [1], [0, 0, 1, 1], [], []>} : vector<3x256xf32>, vector<256x128xf32>, vector<3x128xf32> -> vector<3x128xf32>
    %112 = arith.addf %105, %111 : vector<3x128xf32>
    %c2_140 = arith.constant 2 : index
    %c0_141 = arith.constant 0 : index
    %c0_142 = arith.constant 0 : index
    %113 = vector.load %arg2[%c2_140, %c0_141, %c0_142] : memref<3x3x7xf32, #tpu.memory_space<vmem>>, vector<1x3x7xf32>
    %114 = vector.shape_cast %113 : vector<1x3x7xf32> to vector<3x7xf32>
    %cst_143 = arith.constant dense<0.000000e+00> : vector<3x256xf32>
    %115 = tpu.matmul %114, %97, %cst_143 {dimension_numbers = #tpu.dot_dimension_numbers<[1], [0], [0], [1], [0, 0, 1, 1], [], []>} : vector<3x7xf32>, vector<7x256xf32>, vector<3x256xf32> -> vector<3x256xf32>
    %c2_144 = arith.constant 2 : index
    %c0_145 = arith.constant 0 : index
    %c0_146 = arith.constant 0 : index
    %116 = vector.load %arg5[%c2_144, %c0_145, %c0_146] : memref<3x256x128xf32, #tpu.memory_space<vmem>>, vector<1x256x128xf32>
    %117 = vector.shape_cast %116 : vector<1x256x128xf32> to vector<256x128xf32>
    %cst_147 = arith.constant dense<0.000000e+00> : vector<3x128xf32>
    %118 = tpu.matmul %115, %117, %cst_147 {dimension_numbers = #tpu.dot_dimension_numbers<[1], [0], [0], [1], [0, 0, 1, 1], [], []>} : vector<3x256xf32>, vector<256x128xf32>, vector<3x128xf32> -> vector<3x128xf32>
    %119 = arith.addf %112, %118 : vector<3x128xf32>
    %c0_148 = arith.constant 0 : index
    %c0_149 = arith.constant 0 : index
    %120 = vector.load %arg6[%c0_148, %c0_149] : memref<1x128xf32, #tpu.memory_space<vmem>>, vector<1x128xf32>
    %121 = vector.broadcast %120 : vector<1x128xf32> to vector<3x128xf32>
    %122 = arith.addf %119, %121 : vector<3x128xf32>
    %cst_150 = arith.constant 0.000000e+00 : f32
    %123 = vector.broadcast %cst_150 : f32 to vector<3x128xf32>
    %124 = arith.maximumf %122, %123 : vector<3x128xf32>
    %c0_151 = arith.constant 0 : index
    %c0_152 = arith.constant 0 : index
    %125 = vector.load %arg8[%c0_151, %c0_152] : memref<1x50xf32, #tpu.memory_space<vmem>>, vector<1x50xf32>
    %126 = vector.extract_strided_slice %124 {offsets = [0, 0], sizes = [1, 128], strides = [1, 1]} : vector<3x128xf32> to vector<1x128xf32>
    %c0_153 = arith.constant 0 : index
    %c0_154 = arith.constant 0 : index
    %c0_155 = arith.constant 0 : index
    %127 = vector.load %arg7[%c0_153, %c0_154, %c0_155] : memref<3x128x50xf32, #tpu.memory_space<vmem>>, vector<1x128x50xf32>
    %128 = vector.shape_cast %127 : vector<1x128x50xf32> to vector<128x50xf32>
    %cst_156 = arith.constant dense<0.000000e+00> : vector<1x50xf32>
    %129 = tpu.matmul %126, %128, %cst_156 {dimension_numbers = #tpu.dot_dimension_numbers<[1], [0], [0], [1], [0, 0, 1, 1], [], []>} : vector<1x128xf32>, vector<128x50xf32>, vector<1x50xf32> -> vector<1x50xf32>
    %130 = arith.addf %125, %129 : vector<1x50xf32>
    %131 = vector.extract_strided_slice %124 {offsets = [1, 0], sizes = [1, 128], strides = [1, 1]} : vector<3x128xf32> to vector<1x128xf32>
    %c1_157 = arith.constant 1 : index
    %c0_158 = arith.constant 0 : index
    %c0_159 = arith.constant 0 : index
    %132 = vector.load %arg7[%c1_157, %c0_158, %c0_159] : memref<3x128x50xf32, #tpu.memory_space<vmem>>, vector<1x128x50xf32>
    %133 = vector.shape_cast %132 : vector<1x128x50xf32> to vector<128x50xf32>
    %cst_160 = arith.constant dense<0.000000e+00> : vector<1x50xf32>
    %134 = tpu.matmul %131, %133, %cst_160 {dimension_numbers = #tpu.dot_dimension_numbers<[1], [0], [0], [1], [0, 0, 1, 1], [], []>} : vector<1x128xf32>, vector<128x50xf32>, vector<1x50xf32> -> vector<1x50xf32>
    %135 = arith.addf %130, %134 : vector<1x50xf32>
    %136 = vector.extract_strided_slice %124 {offsets = [2, 0], sizes = [1, 128], strides = [1, 1]} : vector<3x128xf32> to vector<1x128xf32>
    %c2_161 = arith.constant 2 : index
    %c0_162 = arith.constant 0 : index
    %c0_163 = arith.constant 0 : index
    %137 = vector.load %arg7[%c2_161, %c0_162, %c0_163] : memref<3x128x50xf32, #tpu.memory_space<vmem>>, vector<1x128x50xf32>
    %138 = vector.shape_cast %137 : vector<1x128x50xf32> to vector<128x50xf32>
    %cst_164 = arith.constant dense<0.000000e+00> : vector<1x50xf32>
    %139 = tpu.matmul %136, %138, %cst_164 {dimension_numbers = #tpu.dot_dimension_numbers<[1], [0], [0], [1], [0, 0, 1, 1], [], []>} : vector<1x128xf32>, vector<128x50xf32>, vector<1x50xf32> -> vector<1x50xf32>
    %140 = arith.addf %135, %139 : vector<1x50xf32>
    %cst_165 = arith.constant dense<0.000000e+00> : vector<1xf32>
    %141 = vector.multi_reduction <add>, %140, %cst_165 [1] : vector<1x50xf32> to vector<1xf32>
    %142 = vector.shape_cast %141 : vector<1xf32> to vector<1x1xf32>
    %cst_166 = arith.constant 5.000000e+01 : f32
    %143 = vector.broadcast %cst_166 : f32 to vector<1x1xf32>
    %144 = arith.divf %142, %143 : vector<1x1xf32>
    %145 = vector.broadcast %144 : vector<1x1xf32> to vector<1x50xf32>
    %146 = arith.subf %140, %145 : vector<1x50xf32>
    %147 = arith.mulf %146, %146 : vector<1x50xf32>
    %cst_167 = arith.constant dense<0.000000e+00> : vector<1xf32>
    %148 = vector.multi_reduction <add>, %147, %cst_167 [1] : vector<1x50xf32> to vector<1xf32>
    %149 = vector.shape_cast %148 : vector<1xf32> to vector<1x1xf32>
    %cst_168 = arith.constant 5.000000e+01 : f32
    %150 = vector.broadcast %cst_168 : f32 to vector<1x1xf32>
    %151 = arith.divf %149, %150 : vector<1x1xf32>
    %152 = vector.broadcast %144 : vector<1x1xf32> to vector<1x50xf32>
    %153 = arith.subf %140, %152 : vector<1x50xf32>
    %cst_169 = arith.constant 9.99999974E-6 : f32
    %154 = vector.broadcast %cst_169 : f32 to vector<1x1xf32>
    %155 = arith.addf %151, %154 : vector<1x1xf32>
    %156 = math.rsqrt %155 : vector<1x1xf32>
    %157 = vector.broadcast %156 : vector<1x1xf32> to vector<1x50xf32>
    %158 = arith.mulf %153, %157 : vector<1x50xf32>
    %c0_170 = arith.constant 0 : index
    %c0_171 = arith.constant 0 : index
    %159 = vector.load %arg9[%c0_170, %c0_171] : memref<1x50xf32, #tpu.memory_space<vmem>>, vector<1x50xf32>
    %160 = arith.mulf %158, %159 : vector<1x50xf32>
    %c0_172 = arith.constant 0 : index
    %c0_173 = arith.constant 0 : index
    %161 = vector.load %arg10[%c0_172, %c0_173] : memref<1x50xf32, #tpu.memory_space<vmem>>, vector<1x50xf32>
    %162 = arith.addf %160, %161 : vector<1x50xf32>
    %163 = math.tanh %162 : vector<1x50xf32>
    %c0_174 = arith.constant 0 : index
    %c0_175 = arith.constant 0 : index
    %164 = vector.load %arg11[%c0_174, %c0_175] : memref<2x50xf32, #tpu.memory_space<vmem>>, vector<1x50xf32>
    tpu.vector_store %arg11[%c0_174, %c0_175], %163 {strides = array<i32>} : memref<2x50xf32, #tpu.memory_space<vmem>>, vector<1x50xf32>,
    %cst_176 = arith.constant 0.000000e+00 : f32
    %165 = vector.broadcast %cst_176 : f32 to vector<7x256xf32>
    %c1_177 = arith.constant 1 : index
    %c0_178 = arith.constant 0 : index
    %c0_179 = arith.constant 0 : index
    %c0_180 = arith.constant 0 : index
    %166 = vector.load %arg0[%c1_177, %c0_178, %c0_179, %c0_180] : memref<2x4x16x16xf32, #tpu.memory_space<vmem>>, vector<1x1x16x16xf32>
    %167 = vector.shape_cast %166 : vector<1x1x16x16xf32> to vector<16x16xf32>
    %c0_181 = arith.constant 0 : index
    %c0_182 = arith.constant 0 : index
    %c0_183 = arith.constant 0 : index
    %168 = vector.load %arg1[%c0_181, %c0_182, %c0_183] : memref<3x7x16xf32, #tpu.memory_space<vmem>>, vector<1x7x16xf32>
    %169 = vector.shape_cast %168 : vector<1x7x16xf32> to vector<7x16xf32>
    %cst_184 = arith.constant dense<0.000000e+00> : vector<7x16xf32>
    %170 = tpu.matmul %169, %167, %cst_184 {dimension_numbers = #tpu.dot_dimension_numbers<[1], [0], [0], [1], [0, 0, 1, 1], [], []>} : vector<7x16xf32>, vector<16x16xf32>, vector<7x16xf32> -> vector<7x16xf32>
    %c0_185 = arith.constant 0 : index
    %c0_186 = arith.constant 0 : index
    %c0_187 = arith.constant 0 : index
    %c0_188 = arith.constant 0 : index
    %171 = vector.load %arg3[%c0_185, %c0_186, %c0_187, %c0_188] : memref<3x4x16x256xf32, #tpu.memory_space<vmem>>, vector<1x1x16x256xf32>
    %172 = vector.shape_cast %171 : vector<1x1x16x256xf32> to vector<16x256xf32>
    %cst_189 = arith.constant dense<0.000000e+00> : vector<7x256xf32>
    %173 = tpu.matmul %170, %172, %cst_189 {dimension_numbers = #tpu.dot_dimension_numbers<[1], [0], [0], [1], [0, 0, 1, 1], [], []>} : vector<7x16xf32>, vector<16x256xf32>, vector<7x256xf32> -> vector<7x256xf32>
    %174 = arith.addf %165, %173 : vector<7x256xf32>
    %c1_190 = arith.constant 1 : index
    %c0_191 = arith.constant 0 : index
    %c0_192 = arith.constant 0 : index
    %175 = vector.load %arg1[%c1_190, %c0_191, %c0_192] : memref<3x7x16xf32, #tpu.memory_space<vmem>>, vector<1x7x16xf32>
    %176 = vector.shape_cast %175 : vector<1x7x16xf32> to vector<7x16xf32>
    %cst_193 = arith.constant dense<0.000000e+00> : vector<7x16xf32>
    %177 = tpu.matmul %176, %167, %cst_193 {dimension_numbers = #tpu.dot_dimension_numbers<[1], [0], [0], [1], [0, 0, 1, 1], [], []>} : vector<7x16xf32>, vector<16x16xf32>, vector<7x16xf32> -> vector<7x16xf32>
    %c1_194 = arith.constant 1 : index
    %c0_195 = arith.constant 0 : index
    %c0_196 = arith.constant 0 : index
    %c0_197 = arith.constant 0 : index
    %178 = vector.load %arg3[%c1_194, %c0_195, %c0_196, %c0_197] : memref<3x4x16x256xf32, #tpu.memory_space<vmem>>, vector<1x1x16x256xf32>
    %179 = vector.shape_cast %178 : vector<1x1x16x256xf32> to vector<16x256xf32>
    %cst_198 = arith.constant dense<0.000000e+00> : vector<7x256xf32>
    %180 = tpu.matmul %177, %179, %cst_198 {dimension_numbers = #tpu.dot_dimension_numbers<[1], [0], [0], [1], [0, 0, 1, 1], [], []>} : vector<7x16xf32>, vector<16x256xf32>, vector<7x256xf32> -> vector<7x256xf32>
    %181 = arith.addf %174, %180 : vector<7x256xf32>
    %c2_199 = arith.constant 2 : index
    %c0_200 = arith.constant 0 : index
    %c0_201 = arith.constant 0 : index
    %182 = vector.load %arg1[%c2_199, %c0_200, %c0_201] : memref<3x7x16xf32, #tpu.memory_space<vmem>>, vector<1x7x16xf32>
    %183 = vector.shape_cast %182 : vector<1x7x16xf32> to vector<7x16xf32>
    %cst_202 = arith.constant dense<0.000000e+00> : vector<7x16xf32>
    %184 = tpu.matmul %183, %167, %cst_202 {dimension_numbers = #tpu.dot_dimension_numbers<[1], [0], [0], [1], [0, 0, 1, 1], [], []>} : vector<7x16xf32>, vector<16x16xf32>, vector<7x16xf32> -> vector<7x16xf32>
    %c2_203 = arith.constant 2 : index
    %c0_204 = arith.constant 0 : index
    %c0_205 = arith.constant 0 : index
    %c0_206 = arith.constant 0 : index
    %185 = vector.load %arg3[%c2_203, %c0_204, %c0_205, %c0_206] : memref<3x4x16x256xf32, #tpu.memory_space<vmem>>, vector<1x1x16x256xf32>
    %186 = vector.shape_cast %185 : vector<1x1x16x256xf32> to vector<16x256xf32>
    %cst_207 = arith.constant dense<0.000000e+00> : vector<7x256xf32>
    %187 = tpu.matmul %184, %186, %cst_207 {dimension_numbers = #tpu.dot_dimension_numbers<[1], [0], [0], [1], [0, 0, 1, 1], [], []>} : vector<7x16xf32>, vector<16x256xf32>, vector<7x256xf32> -> vector<7x256xf32>
    %188 = arith.addf %181, %187 : vector<7x256xf32>
    %c1_208 = arith.constant 1 : index
    %c1_209 = arith.constant 1 : index
    %c0_210 = arith.constant 0 : index
    %c0_211 = arith.constant 0 : index
    %189 = vector.load %arg0[%c1_208, %c1_209, %c0_210, %c0_211] : memref<2x4x16x16xf32, #tpu.memory_space<vmem>>, vector<1x1x16x16xf32>
    %190 = vector.shape_cast %189 : vector<1x1x16x16xf32> to vector<16x16xf32>
    %c0_212 = arith.constant 0 : index
    %c0_213 = arith.constant 0 : index
    %c0_214 = arith.constant 0 : index
    %191 = vector.load %arg1[%c0_212, %c0_213, %c0_214] : memref<3x7x16xf32, #tpu.memory_space<vmem>>, vector<1x7x16xf32>
    %192 = vector.shape_cast %191 : vector<1x7x16xf32> to vector<7x16xf32>
    %cst_215 = arith.constant dense<0.000000e+00> : vector<7x16xf32>
    %193 = tpu.matmul %192, %190, %cst_215 {dimension_numbers = #tpu.dot_dimension_numbers<[1], [0], [0], [1], [0, 0, 1, 1], [], []>} : vector<7x16xf32>, vector<16x16xf32>, vector<7x16xf32> -> vector<7x16xf32>
    %c0_216 = arith.constant 0 : index
    %c1_217 = arith.constant 1 : index
    %c0_218 = arith.constant 0 : index
    %c0_219 = arith.constant 0 : index
    %194 = vector.load %arg3[%c0_216, %c1_217, %c0_218, %c0_219] : memref<3x4x16x256xf32, #tpu.memory_space<vmem>>, vector<1x1x16x256xf32>
    %195 = vector.shape_cast %194 : vector<1x1x16x256xf32> to vector<16x256xf32>
    %cst_220 = arith.constant dense<0.000000e+00> : vector<7x256xf32>
    %196 = tpu.matmul %193, %195, %cst_220 {dimension_numbers = #tpu.dot_dimension_numbers<[1], [0], [0], [1], [0, 0, 1, 1], [], []>} : vector<7x16xf32>, vector<16x256xf32>, vector<7x256xf32> -> vector<7x256xf32>
    %197 = arith.addf %188, %196 : vector<7x256xf32>
    %c1_221 = arith.constant 1 : index
    %c0_222 = arith.constant 0 : index
    %c0_223 = arith.constant 0 : index
    %198 = vector.load %arg1[%c1_221, %c0_222, %c0_223] : memref<3x7x16xf32, #tpu.memory_space<vmem>>, vector<1x7x16xf32>
    %199 = vector.shape_cast %198 : vector<1x7x16xf32> to vector<7x16xf32>
    %cst_224 = arith.constant dense<0.000000e+00> : vector<7x16xf32>
    %200 = tpu.matmul %199, %190, %cst_224 {dimension_numbers = #tpu.dot_dimension_numbers<[1], [0], [0], [1], [0, 0, 1, 1], [], []>} : vector<7x16xf32>, vector<16x16xf32>, vector<7x16xf32> -> vector<7x16xf32>
    %c1_225 = arith.constant 1 : index
    %c1_226 = arith.constant 1 : index
    %c0_227 = arith.constant 0 : index
    %c0_228 = arith.constant 0 : index
    %201 = vector.load %arg3[%c1_225, %c1_226, %c0_227, %c0_228] : memref<3x4x16x256xf32, #tpu.memory_space<vmem>>, vector<1x1x16x256xf32>
    %202 = vector.shape_cast %201 : vector<1x1x16x256xf32> to vector<16x256xf32>
    %cst_229 = arith.constant dense<0.000000e+00> : vector<7x256xf32>
    %203 = tpu.matmul %200, %202, %cst_229 {dimension_numbers = #tpu.dot_dimension_numbers<[1], [0], [0], [1], [0, 0, 1, 1], [], []>} : vector<7x16xf32>, vector<16x256xf32>, vector<7x256xf32> -> vector<7x256xf32>
    %204 = arith.addf %197, %203 : vector<7x256xf32>
    %c2_230 = arith.constant 2 : index
    %c0_231 = arith.constant 0 : index
    %c0_232 = arith.constant 0 : index
    %205 = vector.load %arg1[%c2_230, %c0_231, %c0_232] : memref<3x7x16xf32, #tpu.memory_space<vmem>>, vector<1x7x16xf32>
    %206 = vector.shape_cast %205 : vector<1x7x16xf32> to vector<7x16xf32>
    %cst_233 = arith.constant dense<0.000000e+00> : vector<7x16xf32>
    %207 = tpu.matmul %206, %190, %cst_233 {dimension_numbers = #tpu.dot_dimension_numbers<[1], [0], [0], [1], [0, 0, 1, 1], [], []>} : vector<7x16xf32>, vector<16x16xf32>, vector<7x16xf32> -> vector<7x16xf32>
    %c2_234 = arith.constant 2 : index
    %c1_235 = arith.constant 1 : index
    %c0_236 = arith.constant 0 : index
    %c0_237 = arith.constant 0 : index
    %208 = vector.load %arg3[%c2_234, %c1_235, %c0_236, %c0_237] : memref<3x4x16x256xf32, #tpu.memory_space<vmem>>, vector<1x1x16x256xf32>
    %209 = vector.shape_cast %208 : vector<1x1x16x256xf32> to vector<16x256xf32>
    %cst_238 = arith.constant dense<0.000000e+00> : vector<7x256xf32>
    %210 = tpu.matmul %207, %209, %cst_238 {dimension_numbers = #tpu.dot_dimension_numbers<[1], [0], [0], [1], [0, 0, 1, 1], [], []>} : vector<7x16xf32>, vector<16x256xf32>, vector<7x256xf32> -> vector<7x256xf32>
    %211 = arith.addf %204, %210 : vector<7x256xf32>
    %c1_239 = arith.constant 1 : index
    %c2_240 = arith.constant 2 : index
    %c0_241 = arith.constant 0 : index
    %c0_242 = arith.constant 0 : index
    %212 = vector.load %arg0[%c1_239, %c2_240, %c0_241, %c0_242] : memref<2x4x16x16xf32, #tpu.memory_space<vmem>>, vector<1x1x16x16xf32>
    %213 = vector.shape_cast %212 : vector<1x1x16x16xf32> to vector<16x16xf32>
    %c0_243 = arith.constant 0 : index
    %c0_244 = arith.constant 0 : index
    %c0_245 = arith.constant 0 : index
    %214 = vector.load %arg1[%c0_243, %c0_244, %c0_245] : memref<3x7x16xf32, #tpu.memory_space<vmem>>, vector<1x7x16xf32>
    %215 = vector.shape_cast %214 : vector<1x7x16xf32> to vector<7x16xf32>
    %cst_246 = arith.constant dense<0.000000e+00> : vector<7x16xf32>
    %216 = tpu.matmul %215, %213, %cst_246 {dimension_numbers = #tpu.dot_dimension_numbers<[1], [0], [0], [1], [0, 0, 1, 1], [], []>} : vector<7x16xf32>, vector<16x16xf32>, vector<7x16xf32> -> vector<7x16xf32>
    %c0_247 = arith.constant 0 : index
    %c2_248 = arith.constant 2 : index
    %c0_249 = arith.constant 0 : index
    %c0_250 = arith.constant 0 : index
    %217 = vector.load %arg3[%c0_247, %c2_248, %c0_249, %c0_250] : memref<3x4x16x256xf32, #tpu.memory_space<vmem>>, vector<1x1x16x256xf32>
    %218 = vector.shape_cast %217 : vector<1x1x16x256xf32> to vector<16x256xf32>
    %cst_251 = arith.constant dense<0.000000e+00> : vector<7x256xf32>
    %219 = tpu.matmul %216, %218, %cst_251 {dimension_numbers = #tpu.dot_dimension_numbers<[1], [0], [0], [1], [0, 0, 1, 1], [], []>} : vector<7x16xf32>, vector<16x256xf32>, vector<7x256xf32> -> vector<7x256xf32>
    %220 = arith.addf %211, %219 : vector<7x256xf32>
    %c1_252 = arith.constant 1 : index
    %c0_253 = arith.constant 0 : index
    %c0_254 = arith.constant 0 : index
    %221 = vector.load %arg1[%c1_252, %c0_253, %c0_254] : memref<3x7x16xf32, #tpu.memory_space<vmem>>, vector<1x7x16xf32>
    %222 = vector.shape_cast %221 : vector<1x7x16xf32> to vector<7x16xf32>
    %cst_255 = arith.constant dense<0.000000e+00> : vector<7x16xf32>
    %223 = tpu.matmul %222, %213, %cst_255 {dimension_numbers = #tpu.dot_dimension_numbers<[1], [0], [0], [1], [0, 0, 1, 1], [], []>} : vector<7x16xf32>, vector<16x16xf32>, vector<7x16xf32> -> vector<7x16xf32>
    %c1_256 = arith.constant 1 : index
    %c2_257 = arith.constant 2 : index
    %c0_258 = arith.constant 0 : index
    %c0_259 = arith.constant 0 : index
    %224 = vector.load %arg3[%c1_256, %c2_257, %c0_258, %c0_259] : memref<3x4x16x256xf32, #tpu.memory_space<vmem>>, vector<1x1x16x256xf32>
    %225 = vector.shape_cast %224 : vector<1x1x16x256xf32> to vector<16x256xf32>
    %cst_260 = arith.constant dense<0.000000e+00> : vector<7x256xf32>
    %226 = tpu.matmul %223, %225, %cst_260 {dimension_numbers = #tpu.dot_dimension_numbers<[1], [0], [0], [1], [0, 0, 1, 1], [], []>} : vector<7x16xf32>, vector<16x256xf32>, vector<7x256xf32> -> vector<7x256xf32>
    %227 = arith.addf %220, %226 : vector<7x256xf32>
    %c2_261 = arith.constant 2 : index
    %c0_262 = arith.constant 0 : index
    %c0_263 = arith.constant 0 : index
    %228 = vector.load %arg1[%c2_261, %c0_262, %c0_263] : memref<3x7x16xf32, #tpu.memory_space<vmem>>, vector<1x7x16xf32>
    %229 = vector.shape_cast %228 : vector<1x7x16xf32> to vector<7x16xf32>
    %cst_264 = arith.constant dense<0.000000e+00> : vector<7x16xf32>
    %230 = tpu.matmul %229, %213, %cst_264 {dimension_numbers = #tpu.dot_dimension_numbers<[1], [0], [0], [1], [0, 0, 1, 1], [], []>} : vector<7x16xf32>, vector<16x16xf32>, vector<7x16xf32> -> vector<7x16xf32>
    %c2_265 = arith.constant 2 : index
    %c2_266 = arith.constant 2 : index
    %c0_267 = arith.constant 0 : index
    %c0_268 = arith.constant 0 : index
    %231 = vector.load %arg3[%c2_265, %c2_266, %c0_267, %c0_268] : memref<3x4x16x256xf32, #tpu.memory_space<vmem>>, vector<1x1x16x256xf32>
    %232 = vector.shape_cast %231 : vector<1x1x16x256xf32> to vector<16x256xf32>
    %cst_269 = arith.constant dense<0.000000e+00> : vector<7x256xf32>
    %233 = tpu.matmul %230, %232, %cst_269 {dimension_numbers = #tpu.dot_dimension_numbers<[1], [0], [0], [1], [0, 0, 1, 1], [], []>} : vector<7x16xf32>, vector<16x256xf32>, vector<7x256xf32> -> vector<7x256xf32>
    %234 = arith.addf %227, %233 : vector<7x256xf32>
    %c1_270 = arith.constant 1 : index
    %c3_271 = arith.constant 3 : index
    %c0_272 = arith.constant 0 : index
    %c0_273 = arith.constant 0 : index
    %235 = vector.load %arg0[%c1_270, %c3_271, %c0_272, %c0_273] : memref<2x4x16x16xf32, #tpu.memory_space<vmem>>, vector<1x1x16x16xf32>
    %236 = vector.shape_cast %235 : vector<1x1x16x16xf32> to vector<16x16xf32>
    %c0_274 = arith.constant 0 : index
    %c0_275 = arith.constant 0 : index
    %c0_276 = arith.constant 0 : index
    %237 = vector.load %arg1[%c0_274, %c0_275, %c0_276] : memref<3x7x16xf32, #tpu.memory_space<vmem>>, vector<1x7x16xf32>
    %238 = vector.shape_cast %237 : vector<1x7x16xf32> to vector<7x16xf32>
    %cst_277 = arith.constant dense<0.000000e+00> : vector<7x16xf32>
    %239 = tpu.matmul %238, %236, %cst_277 {dimension_numbers = #tpu.dot_dimension_numbers<[1], [0], [0], [1], [0, 0, 1, 1], [], []>} : vector<7x16xf32>, vector<16x16xf32>, vector<7x16xf32> -> vector<7x16xf32>
    %c0_278 = arith.constant 0 : index
    %c3_279 = arith.constant 3 : index
    %c0_280 = arith.constant 0 : index
    %c0_281 = arith.constant 0 : index
    %240 = vector.load %arg3[%c0_278, %c3_279, %c0_280, %c0_281] : memref<3x4x16x256xf32, #tpu.memory_space<vmem>>, vector<1x1x16x256xf32>
    %241 = vector.shape_cast %240 : vector<1x1x16x256xf32> to vector<16x256xf32>
    %cst_282 = arith.constant dense<0.000000e+00> : vector<7x256xf32>
    %242 = tpu.matmul %239, %241, %cst_282 {dimension_numbers = #tpu.dot_dimension_numbers<[1], [0], [0], [1], [0, 0, 1, 1], [], []>} : vector<7x16xf32>, vector<16x256xf32>, vector<7x256xf32> -> vector<7x256xf32>
    %243 = arith.addf %234, %242 : vector<7x256xf32>
    %c1_283 = arith.constant 1 : index
    %c0_284 = arith.constant 0 : index
    %c0_285 = arith.constant 0 : index
    %244 = vector.load %arg1[%c1_283, %c0_284, %c0_285] : memref<3x7x16xf32, #tpu.memory_space<vmem>>, vector<1x7x16xf32>
    %245 = vector.shape_cast %244 : vector<1x7x16xf32> to vector<7x16xf32>
    %cst_286 = arith.constant dense<0.000000e+00> : vector<7x16xf32>
    %246 = tpu.matmul %245, %236, %cst_286 {dimension_numbers = #tpu.dot_dimension_numbers<[1], [0], [0], [1], [0, 0, 1, 1], [], []>} : vector<7x16xf32>, vector<16x16xf32>, vector<7x16xf32> -> vector<7x16xf32>
    %c1_287 = arith.constant 1 : index
    %c3_288 = arith.constant 3 : index
    %c0_289 = arith.constant 0 : index
    %c0_290 = arith.constant 0 : index
    %247 = vector.load %arg3[%c1_287, %c3_288, %c0_289, %c0_290] : memref<3x4x16x256xf32, #tpu.memory_space<vmem>>, vector<1x1x16x256xf32>
    %248 = vector.shape_cast %247 : vector<1x1x16x256xf32> to vector<16x256xf32>
    %cst_291 = arith.constant dense<0.000000e+00> : vector<7x256xf32>
    %249 = tpu.matmul %246, %248, %cst_291 {dimension_numbers = #tpu.dot_dimension_numbers<[1], [0], [0], [1], [0, 0, 1, 1], [], []>} : vector<7x16xf32>, vector<16x256xf32>, vector<7x256xf32> -> vector<7x256xf32>
    %250 = arith.addf %243, %249 : vector<7x256xf32>
    %c2_292 = arith.constant 2 : index
    %c0_293 = arith.constant 0 : index
    %c0_294 = arith.constant 0 : index
    %251 = vector.load %arg1[%c2_292, %c0_293, %c0_294] : memref<3x7x16xf32, #tpu.memory_space<vmem>>, vector<1x7x16xf32>
    %252 = vector.shape_cast %251 : vector<1x7x16xf32> to vector<7x16xf32>
    %cst_295 = arith.constant dense<0.000000e+00> : vector<7x16xf32>
    %253 = tpu.matmul %252, %236, %cst_295 {dimension_numbers = #tpu.dot_dimension_numbers<[1], [0], [0], [1], [0, 0, 1, 1], [], []>} : vector<7x16xf32>, vector<16x16xf32>, vector<7x16xf32> -> vector<7x16xf32>
    %c2_296 = arith.constant 2 : index
    %c3_297 = arith.constant 3 : index
    %c0_298 = arith.constant 0 : index
    %c0_299 = arith.constant 0 : index
    %254 = vector.load %arg3[%c2_296, %c3_297, %c0_298, %c0_299] : memref<3x4x16x256xf32, #tpu.memory_space<vmem>>, vector<1x1x16x256xf32>
    %255 = vector.shape_cast %254 : vector<1x1x16x256xf32> to vector<16x256xf32>
    %cst_300 = arith.constant dense<0.000000e+00> : vector<7x256xf32>
    %256 = tpu.matmul %253, %255, %cst_300 {dimension_numbers = #tpu.dot_dimension_numbers<[1], [0], [0], [1], [0, 0, 1, 1], [], []>} : vector<7x16xf32>, vector<16x256xf32>, vector<7x256xf32> -> vector<7x256xf32>
    %257 = arith.addf %250, %256 : vector<7x256xf32>
    %c0_301 = arith.constant 0 : index
    %c0_302 = arith.constant 0 : index
    %258 = vector.load %arg4[%c0_301, %c0_302] : memref<1x256xf32, #tpu.memory_space<vmem>>, vector<1x256xf32>
    %259 = vector.broadcast %258 : vector<1x256xf32> to vector<7x256xf32>
    %260 = arith.addf %257, %259 : vector<7x256xf32>
    %cst_303 = arith.constant 0.000000e+00 : f32
    %261 = vector.broadcast %cst_303 : f32 to vector<7x256xf32>
    %262 = arith.maximumf %260, %261 : vector<7x256xf32>
    %cst_304 = arith.constant 0.000000e+00 : f32
    %263 = vector.broadcast %cst_304 : f32 to vector<3x128xf32>
    %c0_305 = arith.constant 0 : index
    %c0_306 = arith.constant 0 : index
    %c0_307 = arith.constant 0 : index
    %264 = vector.load %arg2[%c0_305, %c0_306, %c0_307] : memref<3x3x7xf32, #tpu.memory_space<vmem>>, vector<1x3x7xf32>
    %265 = vector.shape_cast %264 : vector<1x3x7xf32> to vector<3x7xf32>
    %cst_308 = arith.constant dense<0.000000e+00> : vector<3x256xf32>
    %266 = tpu.matmul %265, %262, %cst_308 {dimension_numbers = #tpu.dot_dimension_numbers<[1], [0], [0], [1], [0, 0, 1, 1], [], []>} : vector<3x7xf32>, vector<7x256xf32>, vector<3x256xf32> -> vector<3x256xf32>
    %c0_309 = arith.constant 0 : index
    %c0_310 = arith.constant 0 : index
    %c0_311 = arith.constant 0 : index
    %267 = vector.load %arg5[%c0_309, %c0_310, %c0_311] : memref<3x256x128xf32, #tpu.memory_space<vmem>>, vector<1x256x128xf32>
    %268 = vector.shape_cast %267 : vector<1x256x128xf32> to vector<256x128xf32>
    %cst_312 = arith.constant dense<0.000000e+00> : vector<3x128xf32>
    %269 = tpu.matmul %266, %268, %cst_312 {dimension_numbers = #tpu.dot_dimension_numbers<[1], [0], [0], [1], [0, 0, 1, 1], [], []>} : vector<3x256xf32>, vector<256x128xf32>, vector<3x128xf32> -> vector<3x128xf32>
    %270 = arith.addf %263, %269 : vector<3x128xf32>
    %c1_313 = arith.constant 1 : index
    %c0_314 = arith.constant 0 : index
    %c0_315 = arith.constant 0 : index
    %271 = vector.load %arg2[%c1_313, %c0_314, %c0_315] : memref<3x3x7xf32, #tpu.memory_space<vmem>>, vector<1x3x7xf32>
    %272 = vector.shape_cast %271 : vector<1x3x7xf32> to vector<3x7xf32>
    %cst_316 = arith.constant dense<0.000000e+00> : vector<3x256xf32>
    %273 = tpu.matmul %272, %262, %cst_316 {dimension_numbers = #tpu.dot_dimension_numbers<[1], [0], [0], [1], [0, 0, 1, 1], [], []>} : vector<3x7xf32>, vector<7x256xf32>, vector<3x256xf32> -> vector<3x256xf32>
    %c1_317 = arith.constant 1 : index
    %c0_318 = arith.constant 0 : index
    %c0_319 = arith.constant 0 : index
    %274 = vector.load %arg5[%c1_317, %c0_318, %c0_319] : memref<3x256x128xf32, #tpu.memory_space<vmem>>, vector<1x256x128xf32>
    %275 = vector.shape_cast %274 : vector<1x256x128xf32> to vector<256x128xf32>
    %cst_320 = arith.constant dense<0.000000e+00> : vector<3x128xf32>
    %276 = tpu.matmul %273, %275, %cst_320 {dimension_numbers = #tpu.dot_dimension_numbers<[1], [0], [0], [1], [0, 0, 1, 1], [], []>} : vector<3x256xf32>, vector<256x128xf32>, vector<3x128xf32> -> vector<3x128xf32>
    %277 = arith.addf %270, %276 : vector<3x128xf32>
    %c2_321 = arith.constant 2 : index
    %c0_322 = arith.constant 0 : index
    %c0_323 = arith.constant 0 : index
    %278 = vector.load %arg2[%c2_321, %c0_322, %c0_323] : memref<3x3x7xf32, #tpu.memory_space<vmem>>, vector<1x3x7xf32>
    %279 = vector.shape_cast %278 : vector<1x3x7xf32> to vector<3x7xf32>
    %cst_324 = arith.constant dense<0.000000e+00> : vector<3x256xf32>
    %280 = tpu.matmul %279, %262, %cst_324 {dimension_numbers = #tpu.dot_dimension_numbers<[1], [0], [0], [1], [0, 0, 1, 1], [], []>} : vector<3x7xf32>, vector<7x256xf32>, vector<3x256xf32> -> vector<3x256xf32>
    %c2_325 = arith.constant 2 : index
    %c0_326 = arith.constant 0 : index
    %c0_327 = arith.constant 0 : index
    %281 = vector.load %arg5[%c2_325, %c0_326, %c0_327] : memref<3x256x128xf32, #tpu.memory_space<vmem>>, vector<1x256x128xf32>
    %282 = vector.shape_cast %281 : vector<1x256x128xf32> to vector<256x128xf32>
    %cst_328 = arith.constant dense<0.000000e+00> : vector<3x128xf32>
    %283 = tpu.matmul %280, %282, %cst_328 {dimension_numbers = #tpu.dot_dimension_numbers<[1], [0], [0], [1], [0, 0, 1, 1], [], []>} : vector<3x256xf32>, vector<256x128xf32>, vector<3x128xf32> -> vector<3x128xf32>
    %284 = arith.addf %277, %283 : vector<3x128xf32>
    %c0_329 = arith.constant 0 : index
    %c0_330 = arith.constant 0 : index
    %285 = vector.load %arg6[%c0_329, %c0_330] : memref<1x128xf32, #tpu.memory_space<vmem>>, vector<1x128xf32>
    %286 = vector.broadcast %285 : vector<1x128xf32> to vector<3x128xf32>
    %287 = arith.addf %284, %286 : vector<3x128xf32>
    %cst_331 = arith.constant 0.000000e+00 : f32
    %288 = vector.broadcast %cst_331 : f32 to vector<3x128xf32>
    %289 = arith.maximumf %287, %288 : vector<3x128xf32>
    %c0_332 = arith.constant 0 : index
    %c0_333 = arith.constant 0 : index
    %290 = vector.load %arg8[%c0_332, %c0_333] : memref<1x50xf32, #tpu.memory_space<vmem>>, vector<1x50xf32>
    %291 = vector.extract_strided_slice %289 {offsets = [0, 0], sizes = [1, 128], strides = [1, 1]} : vector<3x128xf32> to vector<1x128xf32>
    %c0_334 = arith.constant 0 : index
    %c0_335 = arith.constant 0 : index
    %c0_336 = arith.constant 0 : index
    %292 = vector.load %arg7[%c0_334, %c0_335, %c0_336] : memref<3x128x50xf32, #tpu.memory_space<vmem>>, vector<1x128x50xf32>
    %293 = vector.shape_cast %292 : vector<1x128x50xf32> to vector<128x50xf32>
    %cst_337 = arith.constant dense<0.000000e+00> : vector<1x50xf32>
    %294 = tpu.matmul %291, %293, %cst_337 {dimension_numbers = #tpu.dot_dimension_numbers<[1], [0], [0], [1], [0, 0, 1, 1], [], []>} : vector<1x128xf32>, vector<128x50xf32>, vector<1x50xf32> -> vector<1x50xf32>
    %295 = arith.addf %290, %294 : vector<1x50xf32>
    %296 = vector.extract_strided_slice %289 {offsets = [1, 0], sizes = [1, 128], strides = [1, 1]} : vector<3x128xf32> to vector<1x128xf32>
    %c1_338 = arith.constant 1 : index
    %c0_339 = arith.constant 0 : index
    %c0_340 = arith.constant 0 : index
    %297 = vector.load %arg7[%c1_338, %c0_339, %c0_340] : memref<3x128x50xf32, #tpu.memory_space<vmem>>, vector<1x128x50xf32>
    %298 = vector.shape_cast %297 : vector<1x128x50xf32> to vector<128x50xf32>
    %cst_341 = arith.constant dense<0.000000e+00> : vector<1x50xf32>
    %299 = tpu.matmul %296, %298, %cst_341 {dimension_numbers = #tpu.dot_dimension_numbers<[1], [0], [0], [1], [0, 0, 1, 1], [], []>} : vector<1x128xf32>, vector<128x50xf32>, vector<1x50xf32> -> vector<1x50xf32>
    %300 = arith.addf %295, %299 : vector<1x50xf32>
    %301 = vector.extract_strided_slice %289 {offsets = [2, 0], sizes = [1, 128], strides = [1, 1]} : vector<3x128xf32> to vector<1x128xf32>
    %c2_342 = arith.constant 2 : index
    %c0_343 = arith.constant 0 : index
    %c0_344 = arith.constant 0 : index
    %302 = vector.load %arg7[%c2_342, %c0_343, %c0_344] : memref<3x128x50xf32, #tpu.memory_space<vmem>>, vector<1x128x50xf32>
    %303 = vector.shape_cast %302 : vector<1x128x50xf32> to vector<128x50xf32>
    %cst_345 = arith.constant dense<0.000000e+00> : vector<1x50xf32>
    %304 = tpu.matmul %301, %303, %cst_345 {dimension_numbers = #tpu.dot_dimension_numbers<[1], [0], [0], [1], [0, 0, 1, 1], [], []>} : vector<1x128xf32>, vector<128x50xf32>, vector<1x50xf32> -> vector<1x50xf32>
    %305 = arith.addf %300, %304 : vector<1x50xf32>
    %cst_346 = arith.constant dense<0.000000e+00> : vector<1xf32>
    %306 = vector.multi_reduction <add>, %305, %cst_346 [1] : vector<1x50xf32> to vector<1xf32>
    %307 = vector.shape_cast %306 : vector<1xf32> to vector<1x1xf32>
    %cst_347 = arith.constant 5.000000e+01 : f32
    %308 = vector.broadcast %cst_347 : f32 to vector<1x1xf32>
    %309 = arith.divf %307, %308 : vector<1x1xf32>
    %310 = vector.broadcast %309 : vector<1x1xf32> to vector<1x50xf32>
    %311 = arith.subf %305, %310 : vector<1x50xf32>
    %312 = arith.mulf %311, %311 : vector<1x50xf32>
    %cst_348 = arith.constant dense<0.000000e+00> : vector<1xf32>
    %313 = vector.multi_reduction <add>, %312, %cst_348 [1] : vector<1x50xf32> to vector<1xf32>
    %314 = vector.shape_cast %313 : vector<1xf32> to vector<1x1xf32>
    %cst_349 = arith.constant 5.000000e+01 : f32
    %315 = vector.broadcast %cst_349 : f32 to vector<1x1xf32>
    %316 = arith.divf %314, %315 : vector<1x1xf32>
    %317 = vector.broadcast %309 : vector<1x1xf32> to vector<1x50xf32>
    %318 = arith.subf %305, %317 : vector<1x50xf32>
    %cst_350 = arith.constant 9.99999974E-6 : f32
    %319 = vector.broadcast %cst_350 : f32 to vector<1x1xf32>
    %320 = arith.addf %316, %319 : vector<1x1xf32>
    %321 = math.rsqrt %320 : vector<1x1xf32>
    %322 = vector.broadcast %321 : vector<1x1xf32> to vector<1x50xf32>
    %323 = arith.mulf %318, %322 : vector<1x50xf32>
    %c0_351 = arith.constant 0 : index
    %c0_352 = arith.constant 0 : index
    %324 = vector.load %arg9[%c0_351, %c0_352] : memref<1x50xf32, #tpu.memory_space<vmem>>, vector<1x50xf32>
    %325 = arith.mulf %323, %324 : vector<1x50xf32>
    %c0_353 = arith.constant 0 : index
    %c0_354 = arith.constant 0 : index
    %326 = vector.load %arg10[%c0_353, %c0_354] : memref<1x50xf32, #tpu.memory_space<vmem>>, vector<1x50xf32>
    %327 = arith.addf %325, %326 : vector<1x50xf32>
    %328 = math.tanh %327 : vector<1x50xf32>
    %c1_355 = arith.constant 1 : index
    %c0_356 = arith.constant 0 : index
    %329 = vector.load %arg11[%c1_355, %c0_356] : memref<2x50xf32, #tpu.memory_space<vmem>>, vector<1x50xf32>
    tpu.vector_store %arg11[%c1_355, %c0_356], %328 {strides = array<i32>} : memref<2x50xf32, #tpu.memory_space<vmem>>, vector<1x50xf32>,
    return
  }
}

</mosaic_0001>

<llo_original>
// kernel: pixel_encoder_forward.1
$region0: #{pixel_encoder_forward.1}
  #allocation0 [shape = 'u32[]', space=smem, size = 0x4, offset = 0x4, fixed_abs, tag = 'smem constant byte address 0x4 - core index']
  #allocation1 [shape = 'u32[144,128]{1,0:T(1,128)}', space=vmem, size = 0x12000, scoped, tag = 'internal scratch']
  %s0 = inlined_call_operand.vmem [shape: f32[2,4,16,16], index: 0, kind: input, shape index: {}]
  %s1 = inlined_call_operand.vmem [shape: f32[3,7,16], index: 1, kind: input, shape index: {}]
  %s2 = inlined_call_operand.vmem [shape: f32[3,3,7], index: 2, kind: input, shape index: {}]
  %s3 = inlined_call_operand.vmem [shape: f32[3,4,16,256], index: 3, kind: input, shape index: {}]
  %s4 = inlined_call_operand.vmem [shape: f32[1,256], index: 4, kind: input, shape index: {}]
  %s5 = inlined_call_operand.hbm [shape: f32[3,256,128], index: 5, kind: input, shape index: {}]
  %s6 = inlined_call_operand.vmem [shape: f32[1,128], index: 6, kind: input, shape index: {}]
  %s7 = inlined_call_operand.vmem [shape: f32[3,128,50], index: 7, kind: input, shape index: {}]
  %s8 = inlined_call_operand.vmem [shape: f32[1,50], index: 8, kind: input, shape index: {}]
  %s9 = inlined_call_operand.vmem [shape: f32[1,50], index: 9, kind: input, shape index: {}]
  %s10 = inlined_call_operand.vmem [shape: f32[1,50], index: 10, kind: input, shape index: {}]
  %s11 = inlined_call_operand.hbm [shape: f32[2,50], index: 11, kind: output, shape index: {}]
  %s12 = sld [smem:[#allocation0]]
  $region58: #{pixel_encoder_forward.1} parent=0
    _
  %s14 = ssub.s32 1, %s12
  %s15 = scalar_select 0, %s14, %s12
  $region1: #{pixel_encoder_forward.1} parent=0
    #allocation2 [shape = 'u8[393216]{0}', space=vmem, size = 0x60000, scoped, tag = 'input window, operand 5, single buffered']
    #allocation3 [shape = 's32[1]{0}', space=sflag, size = 0x4, scoped, tag = 'scoped memory for pixel_encoder_forward.1']
    #allocation4 [shape = 's32[1]{0}', space=sflag, size = 0x4, scoped, tag = 'scoped memory for pixel_encoder_forward.1']
    #allocation5 [shape = 'u8[1024]{0}', space=vmem, size = 0x400, scoped, tag = 'output window, operand 0, single buffered']
    %16 = vsyncpa [#allocation3], 0
    %17 = vsyncpa [#allocation4], 0
    // Predicated region
    $region2: #{pixel_encoder_forward.1} parent=1 // pred_check
      _
    $region3: #{pixel_encoder_forward.1} parent=1 // pred_check_branch
      %19 = sbr.rel (0) target = $region5
    $region4: #{pixel_encoder_forward.1} parent=1 // pred_region
      _
    $region5: #{pixel_encoder_forward.1} parent=1 // pred_fallthru
      _
    // Predicated region
    $region6: #{pixel_encoder_forward.1} parent=1 // pred_check
      _
    $region7: #{pixel_encoder_forward.1} parent=1 // pred_check_branch
      %21 = sbr.rel (0) target = $region9
    $region8: #{pixel_encoder_forward.1} parent=1 // pred_region
      _
    $region9: #{pixel_encoder_forward.1} parent=1 // pred_fallthru
      _
    // Predicated region
    $region10: #{pixel_encoder_forward.1} parent=1 // pred_check
      _
    $region11: #{pixel_encoder_forward.1} parent=1 // pred_check_branch
      %23 = sbr.rel (0) target = $region13
    $region12: #{pixel_encoder_forward.1} parent=1 // pred_region
      _
    $region13: #{pixel_encoder_forward.1} parent=1 // pred_fallthru
      _
    // Predicated region
    $region14: #{pixel_encoder_forward.1} parent=1 // pred_check
      _
    $region15: #{pixel_encoder_forward.1} parent=1 // pred_check_branch
      %25 = sbr.rel (0) target = $region17
    $region16: #{pixel_encoder_forward.1} parent=1 // pred_region
      _
    $region17: #{pixel_encoder_forward.1} parent=1 // pred_fallthru
      _
    // Predicated region
    $region18: #{pixel_encoder_forward.1} parent=1 // pred_check
      _
    $region19: #{pixel_encoder_forward.1} parent=1 // pred_check_branch
      %27 = sbr.rel (0) target = $region21
    $region20: #{pixel_encoder_forward.1} parent=1 // pred_region
      _
    $region21: #{pixel_encoder_forward.1} parent=1 // pred_fallthru
      _
    // Predicated region
    $region22: #{pixel_encoder_forward.1} parent=1 // pred_check
      _
    $region23: #{pixel_encoder_forward.1} parent=1 // pred_check_branch
      %29 = sbr.rel (0) target = $region25
    $region24: #{pixel_encoder_forward.1} parent=1 // pred_region
      %s31 = ssub.s32 12288, 12288
      %32 = vsyncadd [#allocation3], %s31
      %s33 = sshll.u32 [#allocation2], 4
      %s34 = int_to_ptr.vmem [resolvable:$true] %s33
      %39 = dma.hbm_to_vmem [thread:$0]  %s5, 12288, %s34, [#allocation3], 128, 128, 8
    $region25: #{pixel_encoder_forward.1} parent=1 // pred_fallthru
      _
    // Predicated region
    $region26: #{pixel_encoder_forward.1} parent=1 // pred_check
      _
    $region27: #{pixel_encoder_forward.1} parent=1 // pred_check_branch
      %41 = sbr.rel (0) target = $region29
    $region28: #{pixel_encoder_forward.1} parent=1 // pred_region
      _
    $region29: #{pixel_encoder_forward.1} parent=1 // pred_fallthru
      _
    // Predicated region
    $region30: #{pixel_encoder_forward.1} parent=1 // pred_check
      _
    $region31: #{pixel_encoder_forward.1} parent=1 // pred_check_branch
      %43 = sbr.rel (0) target = $region33
    $region32: #{pixel_encoder_forward.1} parent=1 // pred_region
      _
    $region33: #{pixel_encoder_forward.1} parent=1 // pred_fallthru
      _
    // Predicated region
    $region34: #{pixel_encoder_forward.1} parent=1 // pred_check
      _
    $region35: #{pixel_encoder_forward.1} parent=1 // pred_check_branch
      %45 = sbr.rel (0) target = $region37
    $region36: #{pixel_encoder_forward.1} parent=1 // pred_region
      _
    $region37: #{pixel_encoder_forward.1} parent=1 // pred_fallthru
      _
    // Predicated region
    $region38: #{pixel_encoder_forward.1} parent=1 // pred_check
      _
    $region39: #{pixel_encoder_forward.1} parent=1 // pred_check_branch
      %47 = sbr.rel (0) target = $region41
    $region40: #{pixel_encoder_forward.1} parent=1 // pred_region
      _
    $region41: #{pixel_encoder_forward.1} parent=1 // pred_fallthru
      _
    // Predicated region
    $region42: #{pixel_encoder_forward.1} parent=1 // pred_check
      _
    $region43: #{pixel_encoder_forward.1} parent=1 // pred_check_branch
      %49 = sbr.rel (0) target = $region45
    $region44: #{pixel_encoder_forward.1} parent=1 // pred_region
      _
    $region45: #{pixel_encoder_forward.1} parent=1 // pred_fallthru
      _
    // Predicated region
    $region46: #{pixel_encoder_forward.1} parent=1 // pred_check
      _
    $region47: #{pixel_encoder_forward.1} parent=1 // pred_check_branch
      %51 = sbr.rel (0) target = $region49
    $region48: #{pixel_encoder_forward.1} parent=1 // pred_region
      %52 = dma.done [#allocation3], 12288
    $region49: #{pixel_encoder_forward.1} parent=1 // pred_fallthru
      _
    %v53 = vld [vmem:[%s0] sm:$0xff]
    %v54 = vld [vmem:[%s0 + $0x8] sm:$0xff]
    %v55 = vld [vmem:[%s1] sm:$0x7f]
    %vm56 = vcmask 130048
    %v58 = vsel %vm56, %v55, 0
    %60 = vmatprep.subr.mxu0 0.0
    %61 = vmatpush1.msra.mxu0 %v53
    %62 = vmatprep.subr.mxu0 0.0
    %63 = vmatpush1.msra.mxu0 %v54
    %64 = vmatprep.subr.mxu0 0.0
    %65 = vmatpush1.msra.mxu0 0.0
    %66 = vmatprep.subr.mxu0 0.0
    %67 = vmatpush1.msra.mxu0 0.0
    %68 = vmatprep.subr.mxu0 0.0
    %69 = vmatpush1.msra.mxu0 0.0
    %70 = vmatprep.subr.mxu0 0.0
    %71 = vmatpush1.msra.mxu0 0.0
    %72 = vmatprep.subr.mxu0 0.0
    %73 = vmatpush1.msra.mxu0 0.0
    %74 = vmatprep.subr.mxu0 0.0
    %75 = vmatpush1.msra.mxu0 0.0
    %76 = vmatprep.subr.mxu0 0.0
    %77 = vmatpush1.msra.mxu0 0.0
    %78 = vmatprep.subr.mxu0 0.0
    %79 = vmatpush1.msra.mxu0 0.0
    %80 = vmatprep.subr.mxu0 0.0
    %81 = vmatpush1.msra.mxu0 0.0
    %82 = vmatprep.subr.mxu0 0.0
    %83 = vmatpush1.msra.mxu0 0.0
    %84 = vmatprep.subr.mxu0 0.0
    %85 = vmatpush1.msra.mxu0 0.0
    %86 = vmatprep.subr.mxu0 0.0
    %87 = vmatpush1.msra.mxu0 0.0
    %88 = vmatprep.subr.mxu0 0.0
    %89 = vmatpush1.msra.mxu0 0.0
    %90 = vmatprep.subr.mxu0 0.0
    %91 = vmatpush1.msra.mxu0 0.0
    %92 = vmatprep.subr.mxu0 0.0
    %93 = vmatpush1.msra.mxu0 0.0
    %94 = vmatprep.subr.mxu0 0.0
    %95 = vmatpush1.msra.mxu0 0.0
    %96 = vmatprep.subr.mxu0 0.0
    %97 = vmatpush1.msra.mxu0 0.0
    %98 = vmatprep.subr.mxu0 0.0
    %99 = vmatpush1.msra.mxu0 0.0
    %100 = vmatprep.subr.mxu0 0.0
    %101 = vmatpush1.msra.mxu0 0.0
    %102 = vmatprep.subr.mxu0 0.0
    %103 = vmatpush1.msra.mxu0 0.0
    %104 = vmatprep.subr.mxu0 0.0
    %105 = vmatpush1.msra.mxu0 0.0
    %106 = vmatprep.subr.mxu0 0.0
    %107 = vmatpush1.msra.mxu0 0.0
    %108 = vmatprep.subr.mxu0 0.0
    %109 = vmatpush1.msra.mxu0 0.0
    %110 = vmatprep.subr.mxu0 0.0
    %111 = vmatpush1.msra.mxu0 0.0
    %112 = vmatprep.subr.mxu0 0.0
    %113 = vmatpush1.msra.mxu0 0.0
    %114 = vmatprep.subr.mxu0 0.0
    %115 = vmatpush1.msra.mxu0 0.0
    %116 = vmatprep.subr.mxu0 0.0
    %117 = vmatpush1.msra.mxu0 0.0
    %118 = vmatprep.subr.mxu0 0.0
    %119 = vmatpush1.msra.mxu0 0.0
    %120 = vmatprep.subr.mxu0 0.0
    %121 = vmatpush1.msra.mxu0 0.0
    %122 = vmatprep.subr.mxu0 0.0
    %123 = vmatpush1.msra.mxu0 0.0
    %124 = vmatprep.mubr.f32.mxu0 0.0
    %125 = vmatmul.mubr.f32.gmra.mrb[0].mxu0 %v58
    %v126 = vpop.f32.mrb[0].mxu0
    %v127 = vadd.f32 0.0, %v126
    %v128 = vpop.f32.mrb[0].mxu0
    %129 = vdwg.mxu0
    %v130 = vld [vmem:[%s3] sm:$0xff]
    %v131 = vld [vmem:[%s3 + $0x8] sm:$0xff]
    %v132 = vld [vmem:[%s3 + $0x10] sm:$0xff]
    %v133 = vld [vmem:[%s3 + $0x18] sm:$0xff]
    %s134 = scalar_lea.vmem %s1, 8
    %v135 = vld [vmem:[%s134] sm:$0x7f]
    %v137 = vsel %vm56, %v135, 0
    %139 = vmatprep.subr.mxu0 0.0
    %140 = vmatpush1.msra.mxu0 %v53
    %141 = vmatprep.subr.mxu0 0.0
    %142 = vmatpush1.msra.mxu0 %v54
    %143 = vmatprep.subr.mxu0 0.0
    %144 = vmatpush1.msra.mxu0 0.0
    %145 = vmatprep.subr.mxu0 0.0
    %146 = vmatpush1.msra.mxu0 0.0
    %147 = vmatprep.subr.mxu0 0.0
    %148 = vmatpush1.msra.mxu0 0.0
    %149 = vmatprep.subr.mxu0 0.0
    %150 = vmatpush1.msra.mxu0 0.0
    %151 = vmatprep.subr.mxu0 0.0
    %152 = vmatpush1.msra.mxu0 0.0
    %153 = vmatprep.subr.mxu0 0.0
    %154 = vmatpush1.msra.mxu0 0.0
    %155 = vmatprep.subr.mxu0 0.0
    %156 = vmatpush1.msra.mxu0 0.0
    %157 = vmatprep.subr.mxu0 0.0
    %158 = vmatpush1.msra.mxu0 0.0
    %159 = vmatprep.subr.mxu0 0.0
    %160 = vmatpush1.msra.mxu0 0.0
    %161 = vmatprep.subr.mxu0 0.0
    %162 = vmatpush1.msra.mxu0 0.0
    %163 = vmatprep.subr.mxu0 0.0
    %164 = vmatpush1.msra.mxu0 0.0
    %165 = vmatprep.subr.mxu0 0.0
    %166 = vmatpush1.msra.mxu0 0.0
    %167 = vmatprep.subr.mxu0 0.0
    %168 = vmatpush1.msra.mxu0 0.0
    %169 = vmatprep.subr.mxu0 0.0
    %170 = vmatpush1.msra.mxu0 0.0
    %171 = vmatprep.subr.mxu0 0.0
    %172 = vmatpush1.msra.mxu0 0.0
    %173 = vmatprep.subr.mxu0 0.0
    %174 = vmatpush1.msra.mxu0 0.0
    %175 = vmatprep.subr.mxu0 0.0
    %176 = vmatpush1.msra.mxu0 0.0
    %177 = vmatprep.subr.mxu0 0.0
    %178 = vmatpush1.msra.mxu0 0.0
    %179 = vmatprep.subr.mxu0 0.0
    %180 = vmatpush1.msra.mxu0 0.0
    %181 = vmatprep.subr.mxu0 0.0
    %182 = vmatpush1.msra.mxu0 0.0
    %183 = vmatprep.subr.mxu0 0.0
    %184 = vmatpush1.msra.mxu0 0.0
    %185 = vmatprep.subr.mxu0 0.0
    %186 = vmatpush1.msra.mxu0 0.0
    %187 = vmatprep.subr.mxu0 0.0
    %188 = vmatpush1.msra.mxu0 0.0
    %189 = vmatprep.subr.mxu0 0.0
    %190 = vmatpush1.msra.mxu0 0.0
    %191 = vmatprep.subr.mxu0 0.0
    %192 = vmatpush1.msra.mxu0 0.0
    %193 = vmatprep.subr.mxu0 0.0
    %194 = vmatpush1.msra.mxu0 0.0
    %195 = vmatprep.subr.mxu0 0.0
    %196 = vmatpush1.msra.mxu0 0.0
    %197 = vmatprep.subr.mxu0 0.0
    %198 = vmatpush1.msra.mxu0 0.0
    %199 = vmatprep.subr.mxu0 0.0
    %200 = vmatpush1.msra.mxu0 0.0
    %201 = vmatprep.subr.mxu0 0.0
    %202 = vmatpush1.msra.mxu0 0.0
    %203 = vmatprep.mubr.f32.mxu0 0.0
    %204 = vmatmul.mubr.f32.gmra.mrb[0].mxu0 %v137
    %v205 = vpop.f32.mrb[0].mxu0
    %v206 = vadd.f32 0.0, %v205
    %v207 = vpop.f32.mrb[0].mxu0
    %208 = vdwg.mxu0
    %s209 = scalar_lea.vmem %s3, 128
    %v210 = vld [vmem:[%s209] sm:$0xff]
    %v211 = vld [vmem:[%s209 + $0x8] sm:$0xff]
    %v212 = vld [vmem:[%s209 + $0x10] sm:$0xff]
    %v213 = vld [vmem:[%s209 + $0x18] sm:$0xff]
    %v215 = vsel %vm56, %v206, 0
    %217 = vmatprep.subr.mxu0 %v211
    %218 = vmatpush1.msra.mxu0 %v210
    %219 = vmatprep.subr.mxu0 %v213
    %220 = vmatpush1.msra.mxu0 %v212
    %221 = vmatprep.subr.mxu0 0.0
    %222 = vmatpush1.msra.mxu0 0.0
    %223 = vmatprep.subr.mxu0 0.0
    %224 = vmatpush1.msra.mxu0 0.0
    %225 = vmatprep.subr.mxu0 0.0
    %226 = vmatpush1.msra.mxu0 0.0
    %227 = vmatprep.subr.mxu0 0.0
    %228 = vmatpush1.msra.mxu0 0.0
    %229 = vmatprep.subr.mxu0 0.0
    %230 = vmatpush1.msra.mxu0 0.0
    %231 = vmatprep.subr.mxu0 0.0
    %232 = vmatpush1.msra.mxu0 0.0
    %233 = vmatprep.subr.mxu0 0.0
    %234 = vmatpush1.msra.mxu0 0.0
    %235 = vmatprep.subr.mxu0 0.0
    %236 = vmatpush1.msra.mxu0 0.0
    %237 = vmatprep.subr.mxu0 0.0
    %238 = vmatpush1.msra.mxu0 0.0
    %239 = vmatprep.subr.mxu0 0.0
    %240 = vmatpush1.msra.mxu0 0.0
    %241 = vmatprep.subr.mxu0 0.0
    %242 = vmatpush1.msra.mxu0 0.0
    %243 = vmatprep.subr.mxu0 0.0
    %244 = vmatpush1.msra.mxu0 0.0
    %245 = vmatprep.subr.mxu0 0.0
    %246 = vmatpush1.msra.mxu0 0.0
    %247 = vmatprep.subr.mxu0 0.0
    %248 = vmatpush1.msra.mxu0 0.0
    %249 = vmatprep.subr.mxu0 0.0
    %250 = vmatpush1.msra.mxu0 0.0
    %251 = vmatprep.subr.mxu0 0.0
    %252 = vmatpush1.msra.mxu0 0.0
    %253 = vmatprep.subr.mxu0 0.0
    %254 = vmatpush1.msra.mxu0 0.0
    %255 = vmatprep.subr.mxu0 0.0
    %256 = vmatpush1.msra.mxu0 0.0
    %257 = vmatprep.subr.mxu0 0.0
    %258 = vmatpush1.msra.mxu0 0.0
    %259 = vmatprep.subr.mxu0 0.0
    %260 = vmatpush1.msra.mxu0 0.0
    %261 = vmatprep.subr.mxu0 0.0
    %262 = vmatpush1.msra.mxu0 0.0
    %263 = vmatprep.subr.mxu0 0.0
    %264 = vmatpush1.msra.mxu0 0.0
    %265 = vmatprep.subr.mxu0 0.0
    %266 = vmatpush1.msra.mxu0 0.0
    %267 = vmatprep.subr.mxu0 0.0
    %268 = vmatpush1.msra.mxu0 0.0
    %269 = vmatprep.subr.mxu0 0.0
    %270 = vmatpush1.msra.mxu0 0.0
    %271 = vmatprep.subr.mxu0 0.0
    %272 = vmatpush1.msra.mxu0 0.0
    %273 = vmatprep.subr.mxu0 0.0
    %274 = vmatpush1.msra.mxu0 0.0
    %275 = vmatprep.subr.mxu0 0.0
    %276 = vmatpush1.msra.mxu0 0.0
    %277 = vmatprep.subr.mxu0 0.0
    %278 = vmatpush1.msra.mxu0 0.0
    %279 = vmatprep.subr.mxu0 0.0
    %280 = vmatpush1.msra.mxu0 0.0
    %281 = vmatprep.mubr.f32.mxu0 0.0
    %282 = vmatmul.mubr.f32.gmra.mrb[0].mxu0 %v215
    %v283 = vpop.f32.mrb[0].mxu0
    %v284 = vadd.f32 0.0, %v283
    %v285 = vpop.f32.mrb[0].mxu0
    %v286 = vadd.f32 0.0, %v285
    %287 = vdwg.mxu0
    %v289 = vsel %vm56, %v127, 0
    %291 = vmatprep.subr.mxu0 %v131
    %292 = vmatpush1.msra.mxu0 %v130
    %293 = vmatprep.subr.mxu0 %v133
    %294 = vmatpush1.msra.mxu0 %v132
    %295 = vmatprep.subr.mxu0 0.0
    %296 = vmatpush1.msra.mxu0 0.0
    %297 = vmatprep.subr.mxu0 0.0
    %298 = vmatpush1.msra.mxu0 0.0
    %299 = vmatprep.subr.mxu0 0.0
    %300 = vmatpush1.msra.mxu0 0.0
    %301 = vmatprep.subr.mxu0 0.0
    %302 = vmatpush1.msra.mxu0 0.0
    %303 = vmatprep.subr.mxu0 0.0
    %304 = vmatpush1.msra.mxu0 0.0
    %305 = vmatprep.subr.mxu0 0.0
    %306 = vmatpush1.msra.mxu0 0.0
    %307 = vmatprep.subr.mxu0 0.0
    %308 = vmatpush1.msra.mxu0 0.0
    %309 = vmatprep.subr.mxu0 0.0
    %310 = vmatpush1.msra.mxu0 0.0
    %311 = vmatprep.subr.mxu0 0.0
    %312 = vmatpush1.msra.mxu0 0.0
    %313 = vmatprep.subr.mxu0 0.0
    %314 = vmatpush1.msra.mxu0 0.0
    %315 = vmatprep.subr.mxu0 0.0
    %316 = vmatpush1.msra.mxu0 0.0
    %317 = vmatprep.subr.mxu0 0.0
    %318 = vmatpush1.msra.mxu0 0.0
    %319 = vmatprep.subr.mxu0 0.0
    %320 = vmatpush1.msra.mxu0 0.0
    %321 = vmatprep.subr.mxu0 0.0
    %322 = vmatpush1.msra.mxu0 0.0
    %323 = vmatprep.subr.mxu0 0.0
    %324 = vmatpush1.msra.mxu0 0.0
    %325 = vmatprep.subr.mxu0 0.0
    %326 = vmatpush1.msra.mxu0 0.0
    %327 = vmatprep.subr.mxu0 0.0
    %328 = vmatpush1.msra.mxu0 0.0
    %329 = vmatprep.subr.mxu0 0.0
    %330 = vmatpush1.msra.mxu0 0.0
    %331 = vmatprep.subr.mxu0 0.0
    %332 = vmatpush1.msra.mxu0 0.0
    %333 = vmatprep.subr.mxu0 0.0
    %334 = vmatpush1.msra.mxu0 0.0
    %335 = vmatprep.subr.mxu0 0.0
    %336 = vmatpush1.msra.mxu0 0.0
    %337 = vmatprep.subr.mxu0 0.0
    %338 = vmatpush1.msra.mxu0 0.0
    %339 = vmatprep.subr.mxu0 0.0
    %340 = vmatpush1.msra.mxu0 0.0
    %341 = vmatprep.subr.mxu0 0.0
    %342 = vmatpush1.msra.mxu0 0.0
    %343 = vmatprep.subr.mxu0 0.0
    %344 = vmatpush1.msra.mxu0 0.0
    %345 = vmatprep.subr.mxu0 0.0
    %346 = vmatpush1.msra.mxu0 0.0
    %347 = vmatprep.subr.mxu0 0.0
    %348 = vmatpush1.msra.mxu0 0.0
    %349 = vmatprep.subr.mxu0 0.0
    %350 = vmatpush1.msra.mxu0 0.0
    %351 = vmatprep.subr.mxu0 0.0
    %352 = vmatpush1.msra.mxu0 0.0
    %353 = vmatprep.subr.mxu0 0.0
    %354 = vmatpush1.msra.mxu0 0.0
    %355 = vmatprep.mubr.f32.mxu0 0.0
    %356 = vmatmul.mubr.f32.gmra.mrb[0].mxu0 %v289
    %v357 = vpop.f32.mrb[0].mxu0
    %v358 = vadd.f32 %v284, %v357
    %v359 = vpop.f32.mrb[0].mxu0
    %v360 = vadd.f32 %v286, %v359
    %361 = vdwg.mxu0
    %s362 = scalar_lea.vmem %s1, 16
    %v363 = vld [vmem:[%s362] sm:$0x7f]
    %v365 = vsel %vm56, %v363, 0
    %367 = vmatprep.subr.mxu0 0.0
    %368 = vmatpush1.msra.mxu0 %v53
    %369 = vmatprep.subr.mxu0 0.0
    %370 = vmatpush1.msra.mxu0 %v54
    %371 = vmatprep.subr.mxu0 0.0
    %372 = vmatpush1.msra.mxu0 0.0
    %373 = vmatprep.subr.mxu0 0.0
    %374 = vmatpush1.msra.mxu0 0.0
    %375 = vmatprep.subr.mxu0 0.0
    %376 = vmatpush1.msra.mxu0 0.0
    %377 = vmatprep.subr.mxu0 0.0
    %378 = vmatpush1.msra.mxu0 0.0
    %379 = vmatprep.subr.mxu0 0.0
    %380 = vmatpush1.msra.mxu0 0.0
    %381 = vmatprep.subr.mxu0 0.0
    %382 = vmatpush1.msra.mxu0 0.0
    %383 = vmatprep.subr.mxu0 0.0
    %384 = vmatpush1.msra.mxu0 0.0
    %385 = vmatprep.subr.mxu0 0.0
    %386 = vmatpush1.msra.mxu0 0.0
    %387 = vmatprep.subr.mxu0 0.0
    %388 = vmatpush1.msra.mxu0 0.0
    %389 = vmatprep.subr.mxu0 0.0
    %390 = vmatpush1.msra.mxu0 0.0
    %391 = vmatprep.subr.mxu0 0.0
    %392 = vmatpush1.msra.mxu0 0.0
    %393 = vmatprep.subr.mxu0 0.0
    %394 = vmatpush1.msra.mxu0 0.0
    %395 = vmatprep.subr.mxu0 0.0
    %396 = vmatpush1.msra.mxu0 0.0
    %397 = vmatprep.subr.mxu0 0.0
    %398 = vmatpush1.msra.mxu0 0.0
    %399 = vmatprep.subr.mxu0 0.0
    %400 = vmatpush1.msra.mxu0 0.0
    %401 = vmatprep.subr.mxu0 0.0
    %402 = vmatpush1.msra.mxu0 0.0
    %403 = vmatprep.subr.mxu0 0.0
    %404 = vmatpush1.msra.mxu0 0.0
    %405 = vmatprep.subr.mxu0 0.0
    %406 = vmatpush1.msra.mxu0 0.0
    %407 = vmatprep.subr.mxu0 0.0
    %408 = vmatpush1.msra.mxu0 0.0
    %409 = vmatprep.subr.mxu0 0.0
    %410 = vmatpush1.msra.mxu0 0.0
    %411 = vmatprep.subr.mxu0 0.0
    %412 = vmatpush1.msra.mxu0 0.0
    %413 = vmatprep.subr.mxu0 0.0
    %414 = vmatpush1.msra.mxu0 0.0
    %415 = vmatprep.subr.mxu0 0.0
    %416 = vmatpush1.msra.mxu0 0.0
    %417 = vmatprep.subr.mxu0 0.0
    %418 = vmatpush1.msra.mxu0 0.0
    %419 = vmatprep.subr.mxu0 0.0
    %420 = vmatpush1.msra.mxu0 0.0
    %421 = vmatprep.subr.mxu0 0.0
    %422 = vmatpush1.msra.mxu0 0.0
    %423 = vmatprep.subr.mxu0 0.0
    %424 = vmatpush1.msra.mxu0 0.0
    %425 = vmatprep.subr.mxu0 0.0
    %426 = vmatpush1.msra.mxu0 0.0
    %427 = vmatprep.subr.mxu0 0.0
    %428 = vmatpush1.msra.mxu0 0.0
    %429 = vmatprep.subr.mxu0 0.0
    %430 = vmatpush1.msra.mxu0 0.0
    %431 = vmatprep.mubr.f32.mxu0 0.0
    %432 = vmatmul.mubr.f32.gmra.mrb[0].mxu0 %v365
    %v433 = vpop.f32.mrb[0].mxu0
    %v434 = vadd.f32 0.0, %v433
    %v435 = vpop.f32.mrb[0].mxu0
    %436 = vdwg.mxu0
    %s437 = scalar_lea.vmem %s3, 256
    %v438 = vld [vmem:[%s437] sm:$0xff]
    %v439 = vld [vmem:[%s437 + $0x8] sm:$0xff]
    %v440 = vld [vmem:[%s437 + $0x10] sm:$0xff]
    %v441 = vld [vmem:[%s437 + $0x18] sm:$0xff]
    %v443 = vsel %vm56, %v434, 0
    %445 = vmatprep.subr.mxu0 %v439
    %446 = vmatpush1.msra.mxu0 %v438
    %447 = vmatprep.subr.mxu0 %v441
    %448 = vmatpush1.msra.mxu0 %v440
    %449 = vmatprep.subr.mxu0 0.0
    %450 = vmatpush1.msra.mxu0 0.0
    %451 = vmatprep.subr.mxu0 0.0
    %452 = vmatpush1.msra.mxu0 0.0
    %453 = vmatprep.subr.mxu0 0.0
    %454 = vmatpush1.msra.mxu0 0.0
    %455 = vmatprep.subr.mxu0 0.0
    %456 = vmatpush1.msra.mxu0 0.0
    %457 = vmatprep.subr.mxu0 0.0
    %458 = vmatpush1.msra.mxu0 0.0
    %459 = vmatprep.subr.mxu0 0.0
    %460 = vmatpush1.msra.mxu0 0.0
    %461 = vmatprep.subr.mxu0 0.0
    %462 = vmatpush1.msra.mxu0 0.0
    %463 = vmatprep.subr.mxu0 0.0
    %464 = vmatpush1.msra.mxu0 0.0
    %465 = vmatprep.subr.mxu0 0.0
    %466 = vmatpush1.msra.mxu0 0.0
    %467 = vmatprep.subr.mxu0 0.0
    %468 = vmatpush1.msra.mxu0 0.0
    %469 = vmatprep.subr.mxu0 0.0
    %470 = vmatpush1.msra.mxu0 0.0
    %471 = vmatprep.subr.mxu0 0.0
    %472 = vmatpush1.msra.mxu0 0.0
    %473 = vmatprep.subr.mxu0 0.0
    %474 = vmatpush1.msra.mxu0 0.0
    %475 = vmatprep.subr.mxu0 0.0
    %476 = vmatpush1.msra.mxu0 0.0
    %477 = vmatprep.subr.mxu0 0.0
    %478 = vmatpush1.msra.mxu0 0.0
    %479 = vmatprep.subr.mxu0 0.0
    %480 = vmatpush1.msra.mxu0 0.0
    %481 = vmatprep.subr.mxu0 0.0
    %482 = vmatpush1.msra.mxu0 0.0
    %483 = vmatprep.subr.mxu0 0.0
    %484 = vmatpush1.msra.mxu0 0.0
    %485 = vmatprep.subr.mxu0 0.0
    %486 = vmatpush1.msra.mxu0 0.0
    %487 = vmatprep.subr.mxu0 0.0
    %488 = vmatpush1.msra.mxu0 0.0
    %489 = vmatprep.subr.mxu0 0.0
    %490 = vmatpush1.msra.mxu0 0.0
    %491 = vmatprep.subr.mxu0 0.0
    %492 = vmatpush1.msra.mxu0 0.0
    %493 = vmatprep.subr.mxu0 0.0
    %494 = vmatpush1.msra.mxu0 0.0
    %495 = vmatprep.subr.mxu0 0.0
    %496 = vmatpush1.msra.mxu0 0.0
    %497 = vmatprep.subr.mxu0 0.0
    %498 = vmatpush1.msra.mxu0 0.0
    %499 = vmatprep.subr.mxu0 0.0
    %500 = vmatpush1.msra.mxu0 0.0
    %501 = vmatprep.subr.mxu0 0.0
    %502 = vmatpush1.msra.mxu0 0.0
    %503 = vmatprep.subr.mxu0 0.0
    %504 = vmatpush1.msra.mxu0 0.0
    %505 = vmatprep.subr.mxu0 0.0
    %506 = vmatpush1.msra.mxu0 0.0
    %507 = vmatprep.subr.mxu0 0.0
    %508 = vmatpush1.msra.mxu0 0.0
    %509 = vmatprep.mubr.f32.mxu0 0.0
    %510 = vmatmul.mubr.f32.gmra.mrb[0].mxu0 %v443
    %v511 = vpop.f32.mrb[0].mxu0
    %v512 = vadd.f32 0.0, %v511
    %v513 = vpop.f32.mrb[0].mxu0
    %v514 = vadd.f32 0.0, %v513
    %515 = vdwg.mxu0
    %v516 = vadd.f32 %v358, %v512
    %v517 = vadd.f32 %v360, %v514
    %s518 = scalar_lea.vmem %s0, 16
    %v519 = vld [vmem:[%s518] sm:$0xff]
    %v520 = vld [vmem:[%s518 + $0x8] sm:$0xff]
    %521 = vmatprep.subr.mxu0 0.0
    %522 = vmatpush1.msra.mxu0 %v519
    %523 = vmatprep.subr.mxu0 0.0
    %524 = vmatpush1.msra.mxu0 %v520
    %525 = vmatprep.subr.mxu0 0.0
    %526 = vmatpush1.msra.mxu0 0.0
    %527 = vmatprep.subr.mxu0 0.0
    %528 = vmatpush1.msra.mxu0 0.0
    %529 = vmatprep.subr.mxu0 0.0
    %530 = vmatpush1.msra.mxu0 0.0
    %531 = vmatprep.subr.mxu0 0.0
    %532 = vmatpush1.msra.mxu0 0.0
    %533 = vmatprep.subr.mxu0 0.0
    %534 = vmatpush1.msra.mxu0 0.0
    %535 = vmatprep.subr.mxu0 0.0
    %536 = vmatpush1.msra.mxu0 0.0
    %537 = vmatprep.subr.mxu0 0.0
    %538 = vmatpush1.msra.mxu0 0.0
    %539 = vmatprep.subr.mxu0 0.0
    %540 = vmatpush1.msra.mxu0 0.0
    %541 = vmatprep.subr.mxu0 0.0
    %542 = vmatpush1.msra.mxu0 0.0
    %543 = vmatprep.subr.mxu0 0.0
    %544 = vmatpush1.msra.mxu0 0.0
    %545 = vmatprep.subr.mxu0 0.0
    %546 = vmatpush1.msra.mxu0 0.0
    %547 = vmatprep.subr.mxu0 0.0
    %548 = vmatpush1.msra.mxu0 0.0
    %549 = vmatprep.subr.mxu0 0.0
    %550 = vmatpush1.msra.mxu0 0.0
    %551 = vmatprep.subr.mxu0 0.0
    %552 = vmatpush1.msra.mxu0 0.0
    %553 = vmatprep.subr.mxu0 0.0
    %554 = vmatpush1.msra.mxu0 0.0
    %555 = vmatprep.subr.mxu0 0.0
    %556 = vmatpush1.msra.mxu0 0.0
    %557 = vmatprep.subr.mxu0 0.0
    %558 = vmatpush1.msra.mxu0 0.0
    %559 = vmatprep.subr.mxu0 0.0
    %560 = vmatpush1.msra.mxu0 0.0
    %561 = vmatprep.subr.mxu0 0.0
    %562 = vmatpush1.msra.mxu0 0.0
    %563 = vmatprep.subr.mxu0 0.0
    %564 = vmatpush1.msra.mxu0 0.0
    %565 = vmatprep.subr.mxu0 0.0
    %566 = vmatpush1.msra.mxu0 0.0
    %567 = vmatprep.subr.mxu0 0.0
    %568 = vmatpush1.msra.mxu0 0.0
    %569 = vmatprep.subr.mxu0 0.0
    %570 = vmatpush1.msra.mxu0 0.0
    %571 = vmatprep.subr.mxu0 0.0
    %572 = vmatpush1.msra.mxu0 0.0
    %573 = vmatprep.subr.mxu0 0.0
    %574 = vmatpush1.msra.mxu0 0.0
    %575 = vmatprep.subr.mxu0 0.0
    %576 = vmatpush1.msra.mxu0 0.0
    %577 = vmatprep.subr.mxu0 0.0
    %578 = vmatpush1.msra.mxu0 0.0
    %579 = vmatprep.subr.mxu0 0.0
    %580 = vmatpush1.msra.mxu0 0.0
    %581 = vmatprep.subr.mxu0 0.0
    %582 = vmatpush1.msra.mxu0 0.0
    %583 = vmatprep.subr.mxu0 0.0
    %584 = vmatpush1.msra.mxu0 0.0
    %585 = vmatprep.mubr.f32.mxu0 0.0
    %586 = vmatmul.mubr.f32.gmra.mrb[0].mxu0 %v58
    %v587 = vpop.f32.mrb[0].mxu0
    %v588 = vadd.f32 0.0, %v587
    %v589 = vpop.f32.mrb[0].mxu0
    %590 = vdwg.mxu0
    %s591 = scalar_lea.vmem %s3, 32
    %v592 = vld [vmem:[%s591] sm:$0xff]
    %v593 = vld [vmem:[%s591 + $0x8] sm:$0xff]
    %v594 = vld [vmem:[%s591 + $0x10] sm:$0xff]
    %v595 = vld [vmem:[%s591 + $0x18] sm:$0xff]
    %v597 = vsel %vm56, %v588, 0
    %599 = vmatprep.subr.mxu0 %v593
    %600 = vmatpush1.msra.mxu0 %v592
    %601 = vmatprep.subr.mxu0 %v595
    %602 = vmatpush1.msra.mxu0 %v594
    %603 = vmatprep.subr.mxu0 0.0
    %604 = vmatpush1.msra.mxu0 0.0
    %605 = vmatprep.subr.mxu0 0.0
    %606 = vmatpush1.msra.mxu0 0.0
    %607 = vmatprep.subr.mxu0 0.0
    %608 = vmatpush1.msra.mxu0 0.0
    %609 = vmatprep.subr.mxu0 0.0
    %610 = vmatpush1.msra.mxu0 0.0
    %611 = vmatprep.subr.mxu0 0.0
    %612 = vmatpush1.msra.mxu0 0.0
    %613 = vmatprep.subr.mxu0 0.0
    %614 = vmatpush1.msra.mxu0 0.0
    %615 = vmatprep.subr.mxu0 0.0
    %616 = vmatpush1.msra.mxu0 0.0
    %617 = vmatprep.subr.mxu0 0.0
    %618 = vmatpush1.msra.mxu0 0.0
    %619 = vmatprep.subr.mxu0 0.0
    %620 = vmatpush1.msra.mxu0 0.0
    %621 = vmatprep.subr.mxu0 0.0
    %622 = vmatpush1.msra.mxu0 0.0
    %623 = vmatprep.subr.mxu0 0.0
    %624 = vmatpush1.msra.mxu0 0.0
    %625 = vmatprep.subr.mxu0 0.0
    %626 = vmatpush1.msra.mxu0 0.0
    %627 = vmatprep.subr.mxu0 0.0
    %628 = vmatpush1.msra.mxu0 0.0
    %629 = vmatprep.subr.mxu0 0.0
    %630 = vmatpush1.msra.mxu0 0.0
    %631 = vmatprep.subr.mxu0 0.0
    %632 = vmatpush1.msra.mxu0 0.0
    %633 = vmatprep.subr.mxu0 0.0
    %634 = vmatpush1.msra.mxu0 0.0
    %635 = vmatprep.subr.mxu0 0.0
    %636 = vmatpush1.msra.mxu0 0.0
    %637 = vmatprep.subr.mxu0 0.0
    %638 = vmatpush1.msra.mxu0 0.0
    %639 = vmatprep.subr.mxu0 0.0
    %640 = vmatpush1.msra.mxu0 0.0
    %641 = vmatprep.subr.mxu0 0.0
    %642 = vmatpush1.msra.mxu0 0.0
    %643 = vmatprep.subr.mxu0 0.0
    %644 = vmatpush1.msra.mxu0 0.0
    %645 = vmatprep.subr.mxu0 0.0
    %646 = vmatpush1.msra.mxu0 0.0
    %647 = vmatprep.subr.mxu0 0.0
    %648 = vmatpush1.msra.mxu0 0.0
    %649 = vmatprep.subr.mxu0 0.0
    %650 = vmatpush1.msra.mxu0 0.0
    %651 = vmatprep.subr.mxu0 0.0
    %652 = vmatpush1.msra.mxu0 0.0
    %653 = vmatprep.subr.mxu0 0.0
    %654 = vmatpush1.msra.mxu0 0.0
    %655 = vmatprep.subr.mxu0 0.0
    %656 = vmatpush1.msra.mxu0 0.0
    %657 = vmatprep.subr.mxu0 0.0
    %658 = vmatpush1.msra.mxu0 0.0
    %659 = vmatprep.subr.mxu0 0.0
    %660 = vmatpush1.msra.mxu0 0.0
    %661 = vmatprep.subr.mxu0 0.0
    %662 = vmatpush1.msra.mxu0 0.0
    %663 = vmatprep.mubr.f32.mxu0 0.0
    %664 = vmatmul.mubr.f32.gmra.mrb[0].mxu0 %v597
    %v665 = vpop.f32.mrb[0].mxu0
    %v666 = vadd.f32 0.0, %v665
    %v667 = vpop.f32.mrb[0].mxu0
    %v668 = vadd.f32 0.0, %v667
    %669 = vdwg.mxu0
    %v670 = vadd.f32 %v516, %v666
    %v671 = vadd.f32 %v517, %v668
    %672 = vmatprep.subr.mxu0 0.0
    %673 = vmatpush1.msra.mxu0 %v519
    %674 = vmatprep.subr.mxu0 0.0
    %675 = vmatpush1.msra.mxu0 %v520
    %676 = vmatprep.subr.mxu0 0.0
    %677 = vmatpush1.msra.mxu0 0.0
    %678 = vmatprep.subr.mxu0 0.0
    %679 = vmatpush1.msra.mxu0 0.0
    %680 = vmatprep.subr.mxu0 0.0
    %681 = vmatpush1.msra.mxu0 0.0
    %682 = vmatprep.subr.mxu0 0.0
    %683 = vmatpush1.msra.mxu0 0.0
    %684 = vmatprep.subr.mxu0 0.0
    %685 = vmatpush1.msra.mxu0 0.0
    %686 = vmatprep.subr.mxu0 0.0
    %687 = vmatpush1.msra.mxu0 0.0
    %688 = vmatprep.subr.mxu0 0.0
    %689 = vmatpush1.msra.mxu0 0.0
    %690 = vmatprep.subr.mxu0 0.0
    %691 = vmatpush1.msra.mxu0 0.0
    %692 = vmatprep.subr.mxu0 0.0
    %693 = vmatpush1.msra.mxu0 0.0
    %694 = vmatprep.subr.mxu0 0.0
    %695 = vmatpush1.msra.mxu0 0.0
    %696 = vmatprep.subr.mxu0 0.0
    %697 = vmatpush1.msra.mxu0 0.0
    %698 = vmatprep.subr.mxu0 0.0
    %699 = vmatpush1.msra.mxu0 0.0
    %700 = vmatprep.subr.mxu0 0.0
    %701 = vmatpush1.msra.mxu0 0.0
    %702 = vmatprep.subr.mxu0 0.0
    %703 = vmatpush1.msra.mxu0 0.0
    %704 = vmatprep.subr.mxu0 0.0
    %705 = vmatpush1.msra.mxu0 0.0
    %706 = vmatprep.subr.mxu0 0.0
    %707 = vmatpush1.msra.mxu0 0.0
    %708 = vmatprep.subr.mxu0 0.0
    %709 = vmatpush1.msra.mxu0 0.0
    %710 = vmatprep.subr.mxu0 0.0
    %711 = vmatpush1.msra.mxu0 0.0
    %712 = vmatprep.subr.mxu0 0.0
    %713 = vmatpush1.msra.mxu0 0.0
    %714 = vmatprep.subr.mxu0 0.0
    %715 = vmatpush1.msra.mxu0 0.0
    %716 = vmatprep.subr.mxu0 0.0
    %717 = vmatpush1.msra.mxu0 0.0
    %718 = vmatprep.subr.mxu0 0.0
    %719 = vmatpush1.msra.mxu0 0.0
    %720 = vmatprep.subr.mxu0 0.0
    %721 = vmatpush1.msra.mxu0 0.0
    %722 = vmatprep.subr.mxu0 0.0
    %723 = vmatpush1.msra.mxu0 0.0
    %724 = vmatprep.subr.mxu0 0.0
    %725 = vmatpush1.msra.mxu0 0.0
    %726 = vmatprep.subr.mxu0 0.0
    %727 = vmatpush1.msra.mxu0 0.0
    %728 = vmatprep.subr.mxu0 0.0
    %729 = vmatpush1.msra.mxu0 0.0
    %730 = vmatprep.subr.mxu0 0.0
    %731 = vmatpush1.msra.mxu0 0.0
    %732 = vmatprep.subr.mxu0 0.0
    %733 = vmatpush1.msra.mxu0 0.0
    %734 = vmatprep.subr.mxu0 0.0
    %735 = vmatpush1.msra.mxu0 0.0
    %736 = vmatprep.mubr.f32.mxu0 0.0
    %737 = vmatmul.mubr.f32.gmra.mrb[0].mxu0 %v137
    %v738 = vpop.f32.mrb[0].mxu0
    %v739 = vadd.f32 0.0, %v738
    %v740 = vpop.f32.mrb[0].mxu0
    %741 = vdwg.mxu0
    %s742 = scalar_lea.vmem %s3, 160
    %v743 = vld [vmem:[%s742] sm:$0xff]
    %v744 = vld [vmem:[%s742 + $0x8] sm:$0xff]
    %v745 = vld [vmem:[%s742 + $0x10] sm:$0xff]
    %v746 = vld [vmem:[%s742 + $0x18] sm:$0xff]
    %v748 = vsel %vm56, %v739, 0
    %750 = vmatprep.subr.mxu0 %v744
    %751 = vmatpush1.msra.mxu0 %v743
    %752 = vmatprep.subr.mxu0 %v746
    %753 = vmatpush1.msra.mxu0 %v745
    %754 = vmatprep.subr.mxu0 0.0
    %755 = vmatpush1.msra.mxu0 0.0
    %756 = vmatprep.subr.mxu0 0.0
    %757 = vmatpush1.msra.mxu0 0.0
    %758 = vmatprep.subr.mxu0 0.0
    %759 = vmatpush1.msra.mxu0 0.0
    %760 = vmatprep.subr.mxu0 0.0
    %761 = vmatpush1.msra.mxu0 0.0
    %762 = vmatprep.subr.mxu0 0.0
    %763 = vmatpush1.msra.mxu0 0.0
    %764 = vmatprep.subr.mxu0 0.0
    %765 = vmatpush1.msra.mxu0 0.0
    %766 = vmatprep.subr.mxu0 0.0
    %767 = vmatpush1.msra.mxu0 0.0
    %768 = vmatprep.subr.mxu0 0.0
    %769 = vmatpush1.msra.mxu0 0.0
    %770 = vmatprep.subr.mxu0 0.0
    %771 = vmatpush1.msra.mxu0 0.0
    %772 = vmatprep.subr.mxu0 0.0
    %773 = vmatpush1.msra.mxu0 0.0
    %774 = vmatprep.subr.mxu0 0.0
    %775 = vmatpush1.msra.mxu0 0.0
    %776 = vmatprep.subr.mxu0 0.0
    %777 = vmatpush1.msra.mxu0 0.0
    %778 = vmatprep.subr.mxu0 0.0
    %779 = vmatpush1.msra.mxu0 0.0
    %780 = vmatprep.subr.mxu0 0.0
    %781 = vmatpush1.msra.mxu0 0.0
    %782 = vmatprep.subr.mxu0 0.0
    %783 = vmatpush1.msra.mxu0 0.0
    %784 = vmatprep.subr.mxu0 0.0
    %785 = vmatpush1.msra.mxu0 0.0
    %786 = vmatprep.subr.mxu0 0.0
    %787 = vmatpush1.msra.mxu0 0.0
    %788 = vmatprep.subr.mxu0 0.0
    %789 = vmatpush1.msra.mxu0 0.0
    %790 = vmatprep.subr.mxu0 0.0
    %791 = vmatpush1.msra.mxu0 0.0
    %792 = vmatprep.subr.mxu0 0.0
    %793 = vmatpush1.msra.mxu0 0.0
    %794 = vmatprep.subr.mxu0 0.0
    %795 = vmatpush1.msra.mxu0 0.0
    %796 = vmatprep.subr.mxu0 0.0
    %797 = vmatpush1.msra.mxu0 0.0
    %798 = vmatprep.subr.mxu0 0.0
    %799 = vmatpush1.msra.mxu0 0.0
    %800 = vmatprep.subr.mxu0 0.0
    %801 = vmatpush1.msra.mxu0 0.0
    %802 = vmatprep.subr.mxu0 0.0
    %803 = vmatpush1.msra.mxu0 0.0
    %804 = vmatprep.subr.mxu0 0.0
    %805 = vmatpush1.msra.mxu0 0.0
    %806 = vmatprep.subr.mxu0 0.0
    %807 = vmatpush1.msra.mxu0 0.0
    %808 = vmatprep.subr.mxu0 0.0
    %809 = vmatpush1.msra.mxu0 0.0
    %810 = vmatprep.subr.mxu0 0.0
    %811 = vmatpush1.msra.mxu0 0.0
    %812 = vmatprep.subr.mxu0 0.0
    %813 = vmatpush1.msra.mxu0 0.0
    %814 = vmatprep.mubr.f32.mxu0 0.0
    %815 = vmatmul.mubr.f32.gmra.mrb[0].mxu0 %v748
    %v816 = vpop.f32.mrb[0].mxu0
    %v817 = vadd.f32 0.0, %v816
    %v818 = vpop.f32.mrb[0].mxu0
    %v819 = vadd.f32 0.0, %v818
    %820 = vdwg.mxu0
    %v821 = vadd.f32 %v670, %v817
    %v822 = vadd.f32 %v671, %v819
    %823 = vmatprep.subr.mxu0 0.0
    %824 = vmatpush1.msra.mxu0 %v519
    %825 = vmatprep.subr.mxu0 0.0
    %826 = vmatpush1.msra.mxu0 %v520
    %827 = vmatprep.subr.mxu0 0.0
    %828 = vmatpush1.msra.mxu0 0.0
    %829 = vmatprep.subr.mxu0 0.0
    %830 = vmatpush1.msra.mxu0 0.0
    %831 = vmatprep.subr.mxu0 0.0
    %832 = vmatpush1.msra.mxu0 0.0
    %833 = vmatprep.subr.mxu0 0.0
    %834 = vmatpush1.msra.mxu0 0.0
    %835 = vmatprep.subr.mxu0 0.0
    %836 = vmatpush1.msra.mxu0 0.0
    %837 = vmatprep.subr.mxu0 0.0
    %838 = vmatpush1.msra.mxu0 0.0
    %839 = vmatprep.subr.mxu0 0.0
    %840 = vmatpush1.msra.mxu0 0.0
    %841 = vmatprep.subr.mxu0 0.0
    %842 = vmatpush1.msra.mxu0 0.0
    %843 = vmatprep.subr.mxu0 0.0
    %844 = vmatpush1.msra.mxu0 0.0
    %845 = vmatprep.subr.mxu0 0.0
    %846 = vmatpush1.msra.mxu0 0.0
    %847 = vmatprep.subr.mxu0 0.0
    %848 = vmatpush1.msra.mxu0 0.0
    %849 = vmatprep.subr.mxu0 0.0
    %850 = vmatpush1.msra.mxu0 0.0
    %851 = vmatprep.subr.mxu0 0.0
    %852 = vmatpush1.msra.mxu0 0.0
    %853 = vmatprep.subr.mxu0 0.0
    %854 = vmatpush1.msra.mxu0 0.0
    %855 = vmatprep.subr.mxu0 0.0
    %856 = vmatpush1.msra.mxu0 0.0
    %857 = vmatprep.subr.mxu0 0.0
    %858 = vmatpush1.msra.mxu0 0.0
    %859 = vmatprep.subr.mxu0 0.0
    %860 = vmatpush1.msra.mxu0 0.0
    %861 = vmatprep.subr.mxu0 0.0
    %862 = vmatpush1.msra.mxu0 0.0
    %863 = vmatprep.subr.mxu0 0.0
    %864 = vmatpush1.msra.mxu0 0.0
    %865 = vmatprep.subr.mxu0 0.0
    %866 = vmatpush1.msra.mxu0 0.0
    %867 = vmatprep.subr.mxu0 0.0
    %868 = vmatpush1.msra.mxu0 0.0
    %869 = vmatprep.subr.mxu0 0.0
    %870 = vmatpush1.msra.mxu0 0.0
    %871 = vmatprep.subr.mxu0 0.0
    %872 = vmatpush1.msra.mxu0 0.0
    %873 = vmatprep.subr.mxu0 0.0
    %874 = vmatpush1.msra.mxu0 0.0
    %875 = vmatprep.subr.mxu0 0.0
    %876 = vmatpush1.msra.mxu0 0.0
    %877 = vmatprep.subr.mxu0 0.0
    %878 = vmatpush1.msra.mxu0 0.0
    %879 = vmatprep.subr.mxu0 0.0
    %880 = vmatpush1.msra.mxu0 0.0
    %881 = vmatprep.subr.mxu0 0.0
    %882 = vmatpush1.msra.mxu0 0.0
    %883 = vmatprep.subr.mxu0 0.0
    %884 = vmatpush1.msra.mxu0 0.0
    %885 = vmatprep.subr.mxu0 0.0
    %886 = vmatpush1.msra.mxu0 0.0
    %887 = vmatprep.mubr.f32.mxu0 0.0
    %888 = vmatmul.mubr.f32.gmra.mrb[0].mxu0 %v365
    %v889 = vpop.f32.mrb[0].mxu0
    %v890 = vadd.f32 0.0, %v889
    %v891 = vpop.f32.mrb[0].mxu0
    %892 = vdwg.mxu0
    %s893 = scalar_lea.vmem %s3, 288
    %v894 = vld [vmem:[%s893] sm:$0xff]
    %v895 = vld [vmem:[%s893 + $0x8] sm:$0xff]
    %v896 = vld [vmem:[%s893 + $0x10] sm:$0xff]
    %v897 = vld [vmem:[%s893 + $0x18] sm:$0xff]
    %v899 = vsel %vm56, %v890, 0
    %901 = vmatprep.subr.mxu0 %v895
    %902 = vmatpush1.msra.mxu0 %v894
    %903 = vmatprep.subr.mxu0 %v897
    %904 = vmatpush1.msra.mxu0 %v896
    %905 = vmatprep.subr.mxu0 0.0
    %906 = vmatpush1.msra.mxu0 0.0
    %907 = vmatprep.subr.mxu0 0.0
    %908 = vmatpush1.msra.mxu0 0.0
    %909 = vmatprep.subr.mxu0 0.0
    %910 = vmatpush1.msra.mxu0 0.0
    %911 = vmatprep.subr.mxu0 0.0
    %912 = vmatpush1.msra.mxu0 0.0
    %913 = vmatprep.subr.mxu0 0.0
    %914 = vmatpush1.msra.mxu0 0.0
    %915 = vmatprep.subr.mxu0 0.0
    %916 = vmatpush1.msra.mxu0 0.0
    %917 = vmatprep.subr.mxu0 0.0
    %918 = vmatpush1.msra.mxu0 0.0
    %919 = vmatprep.subr.mxu0 0.0
    %920 = vmatpush1.msra.mxu0 0.0
    %921 = vmatprep.subr.mxu0 0.0
    %922 = vmatpush1.msra.mxu0 0.0
    %923 = vmatprep.subr.mxu0 0.0
    %924 = vmatpush1.msra.mxu0 0.0
    %925 = vmatprep.subr.mxu0 0.0
    %926 = vmatpush1.msra.mxu0 0.0
    %927 = vmatprep.subr.mxu0 0.0
    %928 = vmatpush1.msra.mxu0 0.0
    %929 = vmatprep.subr.mxu0 0.0
    %930 = vmatpush1.msra.mxu0 0.0
    %931 = vmatprep.subr.mxu0 0.0
    %932 = vmatpush1.msra.mxu0 0.0
    %933 = vmatprep.subr.mxu0 0.0
    %934 = vmatpush1.msra.mxu0 0.0
    %935 = vmatprep.subr.mxu0 0.0
    %936 = vmatpush1.msra.mxu0 0.0
    %937 = vmatprep.subr.mxu0 0.0
    %938 = vmatpush1.msra.mxu0 0.0
    %939 = vmatprep.subr.mxu0 0.0
    %940 = vmatpush1.msra.mxu0 0.0
    %941 = vmatprep.subr.mxu0 0.0
    %942 = vmatpush1.msra.mxu0 0.0
    %943 = vmatprep.subr.mxu0 0.0
    %944 = vmatpush1.msra.mxu0 0.0
    %945 = vmatprep.subr.mxu0 0.0
    %946 = vmatpush1.msra.mxu0 0.0
    %947 = vmatprep.subr.mxu0 0.0
    %948 = vmatpush1.msra.mxu0 0.0
    %949 = vmatprep.subr.mxu0 0.0
    %950 = vmatpush1.msra.mxu0 0.0
    %951 = vmatprep.subr.mxu0 0.0
    %952 = vmatpush1.msra.mxu0 0.0
    %953 = vmatprep.subr.mxu0 0.0
    %954 = vmatpush1.msra.mxu0 0.0
    %955 = vmatprep.subr.mxu0 0.0
    %956 = vmatpush1.msra.mxu0 0.0
    %957 = vmatprep.subr.mxu0 0.0
    %958 = vmatpush1.msra.mxu0 0.0
    %959 = vmatprep.subr.mxu0 0.0
    %960 = vmatpush1.msra.mxu0 0.0
    %961 = vmatprep.subr.mxu0 0.0
    %962 = vmatpush1.msra.mxu0 0.0
    %963 = vmatprep.subr.mxu0 0.0
    %964 = vmatpush1.msra.mxu0 0.0
    %965 = vmatprep.mubr.f32.mxu0 0.0
    %966 = vmatmul.mubr.f32.gmra.mrb[0].mxu0 %v899
    %v967 = vpop.f32.mrb[0].mxu0
    %v968 = vadd.f32 0.0, %v967
    %v969 = vpop.f32.mrb[0].mxu0
    %v970 = vadd.f32 0.0, %v969
    %971 = vdwg.mxu0
    %v972 = vadd.f32 %v821, %v968
    %v973 = vadd.f32 %v822, %v970
    %s974 = scalar_lea.vmem %s0, 32
    %v975 = vld [vmem:[%s974] sm:$0xff]
    %v976 = vld [vmem:[%s974 + $0x8] sm:$0xff]
    %977 = vmatprep.subr.mxu0 0.0
    %978 = vmatpush1.msra.mxu0 %v975
    %979 = vmatprep.subr.mxu0 0.0
    %980 = vmatpush1.msra.mxu0 %v976
    %981 = vmatprep.subr.mxu0 0.0
    %982 = vmatpush1.msra.mxu0 0.0
    %983 = vmatprep.subr.mxu0 0.0
    %984 = vmatpush1.msra.mxu0 0.0
    %985 = vmatprep.subr.mxu0 0.0
    %986 = vmatpush1.msra.mxu0 0.0
    %987 = vmatprep.subr.mxu0 0.0
    %988 = vmatpush1.msra.mxu0 0.0
    %989 = vmatprep.subr.mxu0 0.0
    %990 = vmatpush1.msra.mxu0 0.0
    %991 = vmatprep.subr.mxu0 0.0
    %992 = vmatpush1.msra.mxu0 0.0
    %993 = vmatprep.subr.mxu0 0.0
    %994 = vmatpush1.msra.mxu0 0.0
    %995 = vmatprep.subr.mxu0 0.0
    %996 = vmatpush1.msra.mxu0 0.0
    %997 = vmatprep.subr.mxu0 0.0
    %998 = vmatpush1.msra.mxu0 0.0
    %999 = vmatprep.subr.mxu0 0.0
    %1000 = vmatpush1.msra.mxu0 0.0
    %1001 = vmatprep.subr.mxu0 0.0
    %1002 = vmatpush1.msra.mxu0 0.0
    %1003 = vmatprep.subr.mxu0 0.0
    %1004 = vmatpush1.msra.mxu0 0.0
    %1005 = vmatprep.subr.mxu0 0.0
    %1006 = vmatpush1.msra.mxu0 0.0
    %1007 = vmatprep.subr.mxu0 0.0
    %1008 = vmatpush1.msra.mxu0 0.0
    %1009 = vmatprep.subr.mxu0 0.0
    %1010 = vmatpush1.msra.mxu0 0.0
    %1011 = vmatprep.subr.mxu0 0.0
    %1012 = vmatpush1.msra.mxu0 0.0
    %1013 = vmatprep.subr.mxu0 0.0
    %1014 = vmatpush1.msra.mxu0 0.0
    %1015 = vmatprep.subr.mxu0 0.0
    %1016 = vmatpush1.msra.mxu0 0.0
    %1017 = vmatprep.subr.mxu0 0.0
    %1018 = vmatpush1.msra.mxu0 0.0
    %1019 = vmatprep.subr.mxu0 0.0
    %1020 = vmatpush1.msra.mxu0 0.0
    %1021 = vmatprep.subr.mxu0 0.0
    %1022 = vmatpush1.msra.mxu0 0.0
    %1023 = vmatprep.subr.mxu0 0.0
    %1024 = vmatpush1.msra.mxu0 0.0
    %1025 = vmatprep.subr.mxu0 0.0
    %1026 = vmatpush1.msra.mxu0 0.0
    %1027 = vmatprep.subr.mxu0 0.0
    %1028 = vmatpush1.msra.mxu0 0.0
    %1029 = vmatprep.subr.mxu0 0.0
    %1030 = vmatpush1.msra.mxu0 0.0
    %1031 = vmatprep.subr.mxu0 0.0
    %1032 = vmatpush1.msra.mxu0 0.0
    %1033 = vmatprep.subr.mxu0 0.0
    %1034 = vmatpush1.msra.mxu0 0.0
    %1035 = vmatprep.subr.mxu0 0.0
    %1036 = vmatpush1.msra.mxu0 0.0
    %1037 = vmatprep.subr.mxu0 0.0
    %1038 = vmatpush1.msra.mxu0 0.0
    %1039 = vmatprep.subr.mxu0 0.0
    %1040 = vmatpush1.msra.mxu0 0.0
    %1041 = vmatprep.mubr.f32.mxu0 0.0
    %1042 = vmatmul.mubr.f32.gmra.mrb[0].mxu0 %v58
    %v1043 = vpop.f32.mrb[0].mxu0
    %v1044 = vadd.f32 0.0, %v1043
    %v1045 = vpop.f32.mrb[0].mxu0
    %1046 = vdwg.mxu0
    %s1047 = scalar_lea.vmem %s3, 64
    %v1048 = vld [vmem:[%s1047] sm:$0xff]
    %v1049 = vld [vmem:[%s1047 + $0x8] sm:$0xff]
    %v1050 = vld [vmem:[%s1047 + $0x10] sm:$0xff]
    %v1051 = vld [vmem:[%s1047 + $0x18] sm:$0xff]
    %v1053 = vsel %vm56, %v1044, 0
    %1055 = vmatprep.subr.mxu0 %v1049
    %1056 = vmatpush1.msra.mxu0 %v1048
    %1057 = vmatprep.subr.mxu0 %v1051
    %1058 = vmatpush1.msra.mxu0 %v1050
    %1059 = vmatprep.subr.mxu0 0.0
    %1060 = vmatpush1.msra.mxu0 0.0
    %1061 = vmatprep.subr.mxu0 0.0
    %1062 = vmatpush1.msra.mxu0 0.0
    %1063 = vmatprep.subr.mxu0 0.0
    %1064 = vmatpush1.msra.mxu0 0.0
    %1065 = vmatprep.subr.mxu0 0.0
    %1066 = vmatpush1.msra.mxu0 0.0
    %1067 = vmatprep.subr.mxu0 0.0
    %1068 = vmatpush1.msra.mxu0 0.0
    %1069 = vmatprep.subr.mxu0 0.0
    %1070 = vmatpush1.msra.mxu0 0.0
    %1071 = vmatprep.subr.mxu0 0.0
    %1072 = vmatpush1.msra.mxu0 0.0
    %1073 = vmatprep.subr.mxu0 0.0
    %1074 = vmatpush1.msra.mxu0 0.0
    %1075 = vmatprep.subr.mxu0 0.0
    %1076 = vmatpush1.msra.mxu0 0.0
    %1077 = vmatprep.subr.mxu0 0.0
    %1078 = vmatpush1.msra.mxu0 0.0
    %1079 = vmatprep.subr.mxu0 0.0
    %1080 = vmatpush1.msra.mxu0 0.0
    %1081 = vmatprep.subr.mxu0 0.0
    %1082 = vmatpush1.msra.mxu0 0.0
    %1083 = vmatprep.subr.mxu0 0.0
    %1084 = vmatpush1.msra.mxu0 0.0
    %1085 = vmatprep.subr.mxu0 0.0
    %1086 = vmatpush1.msra.mxu0 0.0
    %1087 = vmatprep.subr.mxu0 0.0
    %1088 = vmatpush1.msra.mxu0 0.0
    %1089 = vmatprep.subr.mxu0 0.0
    %1090 = vmatpush1.msra.mxu0 0.0
    %1091 = vmatprep.subr.mxu0 0.0
    %1092 = vmatpush1.msra.mxu0 0.0
    %1093 = vmatprep.subr.mxu0 0.0
    %1094 = vmatpush1.msra.mxu0 0.0
    %1095 = vmatprep.subr.mxu0 0.0
    %1096 = vmatpush1.msra.mxu0 0.0
    %1097 = vmatprep.subr.mxu0 0.0
    %1098 = vmatpush1.msra.mxu0 0.0
    %1099 = vmatprep.subr.mxu0 0.0
    %1100 = vmatpush1.msra.mxu0 0.0
    %1101 = vmatprep.subr.mxu0 0.0
    %1102 = vmatpush1.msra.mxu0 0.0
    %1103 = vmatprep.subr.mxu0 0.0
    %1104 = vmatpush1.msra.mxu0 0.0
    %1105 = vmatprep.subr.mxu0 0.0
    %1106 = vmatpush1.msra.mxu0 0.0
    %1107 = vmatprep.subr.mxu0 0.0
    %1108 = vmatpush1.msra.mxu0 0.0
    %1109 = vmatprep.subr.mxu0 0.0
    %1110 = vmatpush1.msra.mxu0 0.0
    %1111 = vmatprep.subr.mxu0 0.0
    %1112 = vmatpush1.msra.mxu0 0.0
    %1113 = vmatprep.subr.mxu0 0.0
    %1114 = vmatpush1.msra.mxu0 0.0
    %1115 = vmatprep.subr.mxu0 0.0
    %1116 = vmatpush1.msra.mxu0 0.0
    %1117 = vmatprep.subr.mxu0 0.0
    %1118 = vmatpush1.msra.mxu0 0.0
    %1119 = vmatprep.mubr.f32.mxu0 0.0
    %1120 = vmatmul.mubr.f32.gmra.mrb[0].mxu0 %v1053
    %v1121 = vpop.f32.mrb[0].mxu0
    %v1122 = vadd.f32 0.0, %v1121
    %v1123 = vpop.f32.mrb[0].mxu0
    %v1124 = vadd.f32 0.0, %v1123
    %1125 = vdwg.mxu0
    %v1126 = vadd.f32 %v972, %v1122
    %v1127 = vadd.f32 %v973, %v1124
    %1128 = vmatprep.subr.mxu0 0.0
    %1129 = vmatpush1.msra.mxu0 %v975
    %1130 = vmatprep.subr.mxu0 0.0
    %1131 = vmatpush1.msra.mxu0 %v976
    %1132 = vmatprep.subr.mxu0 0.0
    %1133 = vmatpush1.msra.mxu0 0.0
    %1134 = vmatprep.subr.mxu0 0.0
    %1135 = vmatpush1.msra.mxu0 0.0
    %1136 = vmatprep.subr.mxu0 0.0
    %1137 = vmatpush1.msra.mxu0 0.0
    %1138 = vmatprep.subr.mxu0 0.0
    %1139 = vmatpush1.msra.mxu0 0.0
    %1140 = vmatprep.subr.mxu0 0.0
    %1141 = vmatpush1.msra.mxu0 0.0
    %1142 = vmatprep.subr.mxu0 0.0
    %1143 = vmatpush1.msra.mxu0 0.0
    %1144 = vmatprep.subr.mxu0 0.0
    %1145 = vmatpush1.msra.mxu0 0.0
    %1146 = vmatprep.subr.mxu0 0.0
    %1147 = vmatpush1.msra.mxu0 0.0
    %1148 = vmatprep.subr.mxu0 0.0
    %1149 = vmatpush1.msra.mxu0 0.0
    %1150 = vmatprep.subr.mxu0 0.0
    %1151 = vmatpush1.msra.mxu0 0.0
    %1152 = vmatprep.subr.mxu0 0.0
    %1153 = vmatpush1.msra.mxu0 0.0
    %1154 = vmatprep.subr.mxu0 0.0
    %1155 = vmatpush1.msra.mxu0 0.0
    %1156 = vmatprep.subr.mxu0 0.0
    %1157 = vmatpush1.msra.mxu0 0.0
    %1158 = vmatprep.subr.mxu0 0.0
    %1159 = vmatpush1.msra.mxu0 0.0
    %1160 = vmatprep.subr.mxu0 0.0
    %1161 = vmatpush1.msra.mxu0 0.0
    %1162 = vmatprep.subr.mxu0 0.0
    %1163 = vmatpush1.msra.mxu0 0.0
    %1164 = vmatprep.subr.mxu0 0.0
    %1165 = vmatpush1.msra.mxu0 0.0
    %1166 = vmatprep.subr.mxu0 0.0
    %1167 = vmatpush1.msra.mxu0 0.0
    %1168 = vmatprep.subr.mxu0 0.0
    %1169 = vmatpush1.msra.mxu0 0.0
    %1170 = vmatprep.subr.mxu0 0.0
    %1171 = vmatpush1.msra.mxu0 0.0
    %1172 = vmatprep.subr.mxu0 0.0
    %1173 = vmatpush1.msra.mxu0 0.0
    %1174 = vmatprep.subr.mxu0 0.0
    %1175 = vmatpush1.msra.mxu0 0.0
    %1176 = vmatprep.subr.mxu0 0.0
    %1177 = vmatpush1.msra.mxu0 0.0
    %1178 = vmatprep.subr.mxu0 0.0
    %1179 = vmatpush1.msra.mxu0 0.0
    %1180 = vmatprep.subr.mxu0 0.0
    %1181 = vmatpush1.msra.mxu0 0.0
    %1182 = vmatprep.subr.mxu0 0.0
    %1183 = vmatpush1.msra.mxu0 0.0
    %1184 = vmatprep.subr.mxu0 0.0
    %1185 = vmatpush1.msra.mxu0 0.0
    %1186 = vmatprep.subr.mxu0 0.0
    %1187 = vmatpush1.msra.mxu0 0.0
    %1188 = vmatprep.subr.mxu0 0.0
    %1189 = vmatpush1.msra.mxu0 0.0
    %1190 = vmatprep.subr.mxu0 0.0
    %1191 = vmatpush1.msra.mxu0 0.0
    %1192 = vmatprep.mubr.f32.mxu0 0.0
    %1193 = vmatmul.mubr.f32.gmra.mrb[0].mxu0 %v137
    %v1194 = vpop.f32.mrb[0].mxu0
    %v1195 = vadd.f32 0.0, %v1194
    %v1196 = vpop.f32.mrb[0].mxu0
    %1197 = vdwg.mxu0
    %s1198 = scalar_lea.vmem %s3, 192
    %v1199 = vld [vmem:[%s1198] sm:$0xff]
    %v1200 = vld [vmem:[%s1198 + $0x8] sm:$0xff]
    %v1201 = vld [vmem:[%s1198 + $0x10] sm:$0xff]
    %v1202 = vld [vmem:[%s1198 + $0x18] sm:$0xff]
    %v1204 = vsel %vm56, %v1195, 0
    %1206 = vmatprep.subr.mxu0 %v1200
    %1207 = vmatpush1.msra.mxu0 %v1199
    %1208 = vmatprep.subr.mxu0 %v1202
    %1209 = vmatpush1.msra.mxu0 %v1201
    %1210 = vmatprep.subr.mxu0 0.0
    %1211 = vmatpush1.msra.mxu0 0.0
    %1212 = vmatprep.subr.mxu0 0.0
    %1213 = vmatpush1.msra.mxu0 0.0
    %1214 = vmatprep.subr.mxu0 0.0
    %1215 = vmatpush1.msra.mxu0 0.0
    %1216 = vmatprep.subr.mxu0 0.0
    %1217 = vmatpush1.msra.mxu0 0.0
    %1218 = vmatprep.subr.mxu0 0.0
    %1219 = vmatpush1.msra.mxu0 0.0
    %1220 = vmatprep.subr.mxu0 0.0
    %1221 = vmatpush1.msra.mxu0 0.0
    %1222 = vmatprep.subr.mxu0 0.0
    %1223 = vmatpush1.msra.mxu0 0.0
    %1224 = vmatprep.subr.mxu0 0.0
    %1225 = vmatpush1.msra.mxu0 0.0
    %1226 = vmatprep.subr.mxu0 0.0
    %1227 = vmatpush1.msra.mxu0 0.0
    %1228 = vmatprep.subr.mxu0 0.0
    %1229 = vmatpush1.msra.mxu0 0.0
    %1230 = vmatprep.subr.mxu0 0.0
    %1231 = vmatpush1.msra.mxu0 0.0
    %1232 = vmatprep.subr.mxu0 0.0
    %1233 = vmatpush1.msra.mxu0 0.0
    %1234 = vmatprep.subr.mxu0 0.0
    %1235 = vmatpush1.msra.mxu0 0.0
    %1236 = vmatprep.subr.mxu0 0.0
    %1237 = vmatpush1.msra.mxu0 0.0
    %1238 = vmatprep.subr.mxu0 0.0
    %1239 = vmatpush1.msra.mxu0 0.0
    %1240 = vmatprep.subr.mxu0 0.0
    %1241 = vmatpush1.msra.mxu0 0.0
    %1242 = vmatprep.subr.mxu0 0.0
    %1243 = vmatpush1.msra.mxu0 0.0
    %1244 = vmatprep.subr.mxu0 0.0
    %1245 = vmatpush1.msra.mxu0 0.0
    %1246 = vmatprep.subr.mxu0 0.0
    %1247 = vmatpush1.msra.mxu0 0.0
    %1248 = vmatprep.subr.mxu0 0.0
    %1249 = vmatpush1.msra.mxu0 0.0
    %1250 = vmatprep.subr.mxu0 0.0
    %1251 = vmatpush1.msra.mxu0 0.0
    %1252 = vmatprep.subr.mxu0 0.0
    %1253 = vmatpush1.msra.mxu0 0.0
    %1254 = vmatprep.subr.mxu0 0.0
    %1255 = vmatpush1.msra.mxu0 0.0
    %1256 = vmatprep.subr.mxu0 0.0
    %1257 = vmatpush1.msra.mxu0 0.0
    %1258 = vmatprep.subr.mxu0 0.0
    %1259 = vmatpush1.msra.mxu0 0.0
    %1260 = vmatprep.subr.mxu0 0.0
    %1261 = vmatpush1.msra.mxu0 0.0
    %1262 = vmatprep.subr.mxu0 0.0
    %1263 = vmatpush1.msra.mxu0 0.0
    %1264 = vmatprep.subr.mxu0 0.0
    %1265 = vmatpush1.msra.mxu0 0.0
    %1266 = vmatprep.subr.mxu0 0.0
    %1267 = vmatpush1.msra.mxu0 0.0
    %1268 = vmatprep.subr.mxu0 0.0
    %1269 = vmatpush1.msra.mxu0 0.0
    %1270 = vmatprep.mubr.f32.mxu0 0.0
    %1271 = vmatmul.mubr.f32.gmra.mrb[0].mxu0 %v1204
    %v1272 = vpop.f32.mrb[0].mxu0
    %v1273 = vadd.f32 0.0, %v1272
    %v1274 = vpop.f32.mrb[0].mxu0
    %v1275 = vadd.f32 0.0, %v1274
    %1276 = vdwg.mxu0
    %v1277 = vadd.f32 %v1126, %v1273
    %v1278 = vadd.f32 %v1127, %v1275
    %1279 = vmatprep.subr.mxu0 0.0
    %1280 = vmatpush1.msra.mxu0 %v975
    %1281 = vmatprep.subr.mxu0 0.0
    %1282 = vmatpush1.msra.mxu0 %v976
    %1283 = vmatprep.subr.mxu0 0.0
    %1284 = vmatpush1.msra.mxu0 0.0
    %1285 = vmatprep.subr.mxu0 0.0
    %1286 = vmatpush1.msra.mxu0 0.0
    %1287 = vmatprep.subr.mxu0 0.0
    %1288 = vmatpush1.msra.mxu0 0.0
    %1289 = vmatprep.subr.mxu0 0.0
    %1290 = vmatpush1.msra.mxu0 0.0
    %1291 = vmatprep.subr.mxu0 0.0
    %1292 = vmatpush1.msra.mxu0 0.0
    %1293 = vmatprep.subr.mxu0 0.0
    %1294 = vmatpush1.msra.mxu0 0.0
    %1295 = vmatprep.subr.mxu0 0.0
    %1296 = vmatpush1.msra.mxu0 0.0
    %1297 = vmatprep.subr.mxu0 0.0
    %1298 = vmatpush1.msra.mxu0 0.0
    %1299 = vmatprep.subr.mxu0 0.0
    %1300 = vmatpush1.msra.mxu0 0.0
    %1301 = vmatprep.subr.mxu0 0.0
    %1302 = vmatpush1.msra.mxu0 0.0
    %1303 = vmatprep.subr.mxu0 0.0
    %1304 = vmatpush1.msra.mxu0 0.0
    %1305 = vmatprep.subr.mxu0 0.0
    %1306 = vmatpush1.msra.mxu0 0.0
    %1307 = vmatprep.subr.mxu0 0.0
    %1308 = vmatpush1.msra.mxu0 0.0
    %1309 = vmatprep.subr.mxu0 0.0
    %1310 = vmatpush1.msra.mxu0 0.0
    %1311 = vmatprep.subr.mxu0 0.0
    %1312 = vmatpush1.msra.mxu0 0.0
    %1313 = vmatprep.subr.mxu0 0.0
    %1314 = vmatpush1.msra.mxu0 0.0
    %1315 = vmatprep.subr.mxu0 0.0
    %1316 = vmatpush1.msra.mxu0 0.0
    %1317 = vmatprep.subr.mxu0 0.0
    %1318 = vmatpush1.msra.mxu0 0.0
    %1319 = vmatprep.subr.mxu0 0.0
    %1320 = vmatpush1.msra.mxu0 0.0
    %1321 = vmatprep.subr.mxu0 0.0
    %1322 = vmatpush1.msra.mxu0 0.0
    %1323 = vmatprep.subr.mxu0 0.0
    %1324 = vmatpush1.msra.mxu0 0.0
    %1325 = vmatprep.subr.mxu0 0.0
    %1326 = vmatpush1.msra.mxu0 0.0
    %1327 = vmatprep.subr.mxu0 0.0
    %1328 = vmatpush1.msra.mxu0 0.0
    %1329 = vmatprep.subr.mxu0 0.0
    %1330 = vmatpush1.msra.mxu0 0.0
    %1331 = vmatprep.subr.mxu0 0.0
    %1332 = vmatpush1.msra.mxu0 0.0
    %1333 = vmatprep.subr.mxu0 0.0
    %1334 = vmatpush1.msra.mxu0 0.0
    %1335 = vmatprep.subr.mxu0 0.0
    %1336 = vmatpush1.msra.mxu0 0.0
    %1337 = vmatprep.subr.mxu0 0.0
    %1338 = vmatpush1.msra.mxu0 0.0
    %1339 = vmatprep.subr.mxu0 0.0
    %1340 = vmatpush1.msra.mxu0 0.0
    %1341 = vmatprep.subr.mxu0 0.0
    %1342 = vmatpush1.msra.mxu0 0.0
    %1343 = vmatprep.mubr.f32.mxu0 0.0
    %1344 = vmatmul.mubr.f32.gmra.mrb[0].mxu0 %v365
    %v1345 = vpop.f32.mrb[0].mxu0
    %v1346 = vadd.f32 0.0, %v1345
    %v1347 = vpop.f32.mrb[0].mxu0
    %1348 = vdwg.mxu0
    %s1349 = scalar_lea.vmem %s3, 320
    %v1350 = vld [vmem:[%s1349] sm:$0xff]
    %v1351 = vld [vmem:[%s1349 + $0x8] sm:$0xff]
    %v1352 = vld [vmem:[%s1349 + $0x10] sm:$0xff]
    %v1353 = vld [vmem:[%s1349 + $0x18] sm:$0xff]
    %v1355 = vsel %vm56, %v1346, 0
    %1357 = vmatprep.subr.mxu0 %v1351
    %1358 = vmatpush1.msra.mxu0 %v1350
    %1359 = vmatprep.subr.mxu0 %v1353
    %1360 = vmatpush1.msra.mxu0 %v1352
    %1361 = vmatprep.subr.mxu0 0.0
    %1362 = vmatpush1.msra.mxu0 0.0
    %1363 = vmatprep.subr.mxu0 0.0
    %1364 = vmatpush1.msra.mxu0 0.0
    %1365 = vmatprep.subr.mxu0 0.0
    %1366 = vmatpush1.msra.mxu0 0.0
    %1367 = vmatprep.subr.mxu0 0.0
    %1368 = vmatpush1.msra.mxu0 0.0
    %1369 = vmatprep.subr.mxu0 0.0
    %1370 = vmatpush1.msra.mxu0 0.0
    %1371 = vmatprep.subr.mxu0 0.0
    %1372 = vmatpush1.msra.mxu0 0.0
    %1373 = vmatprep.subr.mxu0 0.0
    %1374 = vmatpush1.msra.mxu0 0.0
    %1375 = vmatprep.subr.mxu0 0.0
    %1376 = vmatpush1.msra.mxu0 0.0
    %1377 = vmatprep.subr.mxu0 0.0
    %1378 = vmatpush1.msra.mxu0 0.0
    %1379 = vmatprep.subr.mxu0 0.0
    %1380 = vmatpush1.msra.mxu0 0.0
    %1381 = vmatprep.subr.mxu0 0.0
    %1382 = vmatpush1.msra.mxu0 0.0
    %1383 = vmatprep.subr.mxu0 0.0
    %1384 = vmatpush1.msra.mxu0 0.0
    %1385 = vmatprep.subr.mxu0 0.0
    %1386 = vmatpush1.msra.mxu0 0.0
    %1387 = vmatprep.subr.mxu0 0.0
    %1388 = vmatpush1.msra.mxu0 0.0
    %1389 = vmatprep.subr.mxu0 0.0
    %1390 = vmatpush1.msra.mxu0 0.0
    %1391 = vmatprep.subr.mxu0 0.0
    %1392 = vmatpush1.msra.mxu0 0.0
    %1393 = vmatprep.subr.mxu0 0.0
    %1394 = vmatpush1.msra.mxu0 0.0
    %1395 = vmatprep.subr.mxu0 0.0
    %1396 = vmatpush1.msra.mxu0 0.0
    %1397 = vmatprep.subr.mxu0 0.0
    %1398 = vmatpush1.msra.mxu0 0.0
    %1399 = vmatprep.subr.mxu0 0.0
    %1400 = vmatpush1.msra.mxu0 0.0
    %1401 = vmatprep.subr.mxu0 0.0
    %1402 = vmatpush1.msra.mxu0 0.0
    %1403 = vmatprep.subr.mxu0 0.0
    %1404 = vmatpush1.msra.mxu0 0.0
    %1405 = vmatprep.subr.mxu0 0.0
    %1406 = vmatpush1.msra.mxu0 0.0
    %1407 = vmatprep.subr.mxu0 0.0
    %1408 = vmatpush1.msra.mxu0 0.0
    %1409 = vmatprep.subr.mxu0 0.0
    %1410 = vmatpush1.msra.mxu0 0.0
    %1411 = vmatprep.subr.mxu0 0.0
    %1412 = vmatpush1.msra.mxu0 0.0
    %1413 = vmatprep.subr.mxu0 0.0
    %1414 = vmatpush1.msra.mxu0 0.0
    %1415 = vmatprep.subr.mxu0 0.0
    %1416 = vmatpush1.msra.mxu0 0.0
    %1417 = vmatprep.subr.mxu0 0.0
    %1418 = vmatpush1.msra.mxu0 0.0
    %1419 = vmatprep.subr.mxu0 0.0
    %1420 = vmatpush1.msra.mxu0 0.0
    %1421 = vmatprep.mubr.f32.mxu0 0.0
    %1422 = vmatmul.mubr.f32.gmra.mrb[0].mxu0 %v1355
    %v1423 = vpop.f32.mrb[0].mxu0
    %v1424 = vadd.f32 0.0, %v1423
    %v1425 = vpop.f32.mrb[0].mxu0
    %v1426 = vadd.f32 0.0, %v1425
    %1427 = vdwg.mxu0
    %v1428 = vadd.f32 %v1277, %v1424
    %v1429 = vadd.f32 %v1278, %v1426
    %s1430 = scalar_lea.vmem %s0, 48
    %v1431 = vld [vmem:[%s1430] sm:$0xff]
    %v1432 = vld [vmem:[%s1430 + $0x8] sm:$0xff]
    %1433 = vmatprep.subr.mxu0 0.0
    %1434 = vmatpush1.msra.mxu0 %v1431
    %1435 = vmatprep.subr.mxu0 0.0
    %1436 = vmatpush1.msra.mxu0 %v1432
    %1437 = vmatprep.subr.mxu0 0.0
    %1438 = vmatpush1.msra.mxu0 0.0
    %1439 = vmatprep.subr.mxu0 0.0
    %1440 = vmatpush1.msra.mxu0 0.0
    %1441 = vmatprep.subr.mxu0 0.0
    %1442 = vmatpush1.msra.mxu0 0.0
    %1443 = vmatprep.subr.mxu0 0.0
    %1444 = vmatpush1.msra.mxu0 0.0
    %1445 = vmatprep.subr.mxu0 0.0
    %1446 = vmatpush1.msra.mxu0 0.0
    %1447 = vmatprep.subr.mxu0 0.0
    %1448 = vmatpush1.msra.mxu0 0.0
    %1449 = vmatprep.subr.mxu0 0.0
    %1450 = vmatpush1.msra.mxu0 0.0
    %1451 = vmatprep.subr.mxu0 0.0
    %1452 = vmatpush1.msra.mxu0 0.0
    %1453 = vmatprep.subr.mxu0 0.0
    %1454 = vmatpush1.msra.mxu0 0.0
    %1455 = vmatprep.subr.mxu0 0.0
    %1456 = vmatpush1.msra.mxu0 0.0
    %1457 = vmatprep.subr.mxu0 0.0
    %1458 = vmatpush1.msra.mxu0 0.0
    %1459 = vmatprep.subr.mxu0 0.0
    %1460 = vmatpush1.msra.mxu0 0.0
    %1461 = vmatprep.subr.mxu0 0.0
    %1462 = vmatpush1.msra.mxu0 0.0
    %1463 = vmatprep.subr.mxu0 0.0
    %1464 = vmatpush1.msra.mxu0 0.0
    %1465 = vmatprep.subr.mxu0 0.0
    %1466 = vmatpush1.msra.mxu0 0.0
    %1467 = vmatprep.subr.mxu0 0.0
    %1468 = vmatpush1.msra.mxu0 0.0
    %1469 = vmatprep.subr.mxu0 0.0
    %1470 = vmatpush1.msra.mxu0 0.0
    %1471 = vmatprep.subr.mxu0 0.0
    %1472 = vmatpush1.msra.mxu0 0.0
    %1473 = vmatprep.subr.mxu0 0.0
    %1474 = vmatpush1.msra.mxu0 0.0
    %1475 = vmatprep.subr.mxu0 0.0
    %1476 = vmatpush1.msra.mxu0 0.0
    %1477 = vmatprep.subr.mxu0 0.0
    %1478 = vmatpush1.msra.mxu0 0.0
    %1479 = vmatprep.subr.mxu0 0.0
    %1480 = vmatpush1.msra.mxu0 0.0
    %1481 = vmatprep.subr.mxu0 0.0
    %1482 = vmatpush1.msra.mxu0 0.0
    %1483 = vmatprep.subr.mxu0 0.0
    %1484 = vmatpush1.msra.mxu0 0.0
    %1485 = vmatprep.subr.mxu0 0.0
    %1486 = vmatpush1.msra.mxu0 0.0
    %1487 = vmatprep.subr.mxu0 0.0
    %1488 = vmatpush1.msra.mxu0 0.0
    %1489 = vmatprep.subr.mxu0 0.0
    %1490 = vmatpush1.msra.mxu0 0.0
    %1491 = vmatprep.subr.mxu0 0.0
    %1492 = vmatpush1.msra.mxu0 0.0
    %1493 = vmatprep.subr.mxu0 0.0
    %1494 = vmatpush1.msra.mxu0 0.0
    %1495 = vmatprep.subr.mxu0 0.0
    %1496 = vmatpush1.msra.mxu0 0.0
    %1497 = vmatprep.mubr.f32.mxu0 0.0
    %1498 = vmatmul.mubr.f32.gmra.mrb[0].mxu0 %v58
    %v1499 = vpop.f32.mrb[0].mxu0
    %v1500 = vadd.f32 0.0, %v1499
    %v1501 = vpop.f32.mrb[0].mxu0
    %1502 = vdwg.mxu0
    %s1503 = scalar_lea.vmem %s3, 96
    %v1504 = vld [vmem:[%s1503] sm:$0xff]
    %v1505 = vld [vmem:[%s1503 + $0x8] sm:$0xff]
    %v1506 = vld [vmem:[%s1503 + $0x10] sm:$0xff]
    %v1507 = vld [vmem:[%s1503 + $0x18] sm:$0xff]
    %v1509 = vsel %vm56, %v1500, 0
    %1511 = vmatprep.subr.mxu0 %v1505
    %1512 = vmatpush1.msra.mxu0 %v1504
    %1513 = vmatprep.subr.mxu0 %v1507
    %1514 = vmatpush1.msra.mxu0 %v1506
    %1515 = vmatprep.subr.mxu0 0.0
    %1516 = vmatpush1.msra.mxu0 0.0
    %1517 = vmatprep.subr.mxu0 0.0
    %1518 = vmatpush1.msra.mxu0 0.0
    %1519 = vmatprep.subr.mxu0 0.0
    %1520 = vmatpush1.msra.mxu0 0.0
    %1521 = vmatprep.subr.mxu0 0.0
    %1522 = vmatpush1.msra.mxu0 0.0
    %1523 = vmatprep.subr.mxu0 0.0
    %1524 = vmatpush1.msra.mxu0 0.0
    %1525 = vmatprep.subr.mxu0 0.0
    %1526 = vmatpush1.msra.mxu0 0.0
    %1527 = vmatprep.subr.mxu0 0.0
    %1528 = vmatpush1.msra.mxu0 0.0
    %1529 = vmatprep.subr.mxu0 0.0
    %1530 = vmatpush1.msra.mxu0 0.0
    %1531 = vmatprep.subr.mxu0 0.0
    %1532 = vmatpush1.msra.mxu0 0.0
    %1533 = vmatprep.subr.mxu0 0.0
    %1534 = vmatpush1.msra.mxu0 0.0
    %1535 = vmatprep.subr.mxu0 0.0
    %1536 = vmatpush1.msra.mxu0 0.0
    %1537 = vmatprep.subr.mxu0 0.0
    %1538 = vmatpush1.msra.mxu0 0.0
    %1539 = vmatprep.subr.mxu0 0.0
    %1540 = vmatpush1.msra.mxu0 0.0
    %1541 = vmatprep.subr.mxu0 0.0
    %1542 = vmatpush1.msra.mxu0 0.0
    %1543 = vmatprep.subr.mxu0 0.0
    %1544 = vmatpush1.msra.mxu0 0.0
    %1545 = vmatprep.subr.mxu0 0.0
    %1546 = vmatpush1.msra.mxu0 0.0
    %1547 = vmatprep.subr.mxu0 0.0
    %1548 = vmatpush1.msra.mxu0 0.0
    %1549 = vmatprep.subr.mxu0 0.0
    %1550 = vmatpush1.msra.mxu0 0.0
    %1551 = vmatprep.subr.mxu0 0.0
    %1552 = vmatpush1.msra.mxu0 0.0
    %1553 = vmatprep.subr.mxu0 0.0
    %1554 = vmatpush1.msra.mxu0 0.0
    %1555 = vmatprep.subr.mxu0 0.0
    %1556 = vmatpush1.msra.mxu0 0.0
    %1557 = vmatprep.subr.mxu0 0.0
    %1558 = vmatpush1.msra.mxu0 0.0
    %1559 = vmatprep.subr.mxu0 0.0
    %1560 = vmatpush1.msra.mxu0 0.0
    %1561 = vmatprep.subr.mxu0 0.0
    %1562 = vmatpush1.msra.mxu0 0.0
    %1563 = vmatprep.subr.mxu0 0.0
    %1564 = vmatpush1.msra.mxu0 0.0
    %1565 = vmatprep.subr.mxu0 0.0
    %1566 = vmatpush1.msra.mxu0 0.0
    %1567 = vmatprep.subr.mxu0 0.0
    %1568 = vmatpush1.msra.mxu0 0.0
    %1569 = vmatprep.subr.mxu0 0.0
    %1570 = vmatpush1.msra.mxu0 0.0
    %1571 = vmatprep.subr.mxu0 0.0
    %1572 = vmatpush1.msra.mxu0 0.0
    %1573 = vmatprep.subr.mxu0 0.0
    %1574 = vmatpush1.msra.mxu0 0.0
    %1575 = vmatprep.mubr.f32.mxu0 0.0
    %1576 = vmatmul.mubr.f32.gmra.mrb[0].mxu0 %v1509
    %v1577 = vpop.f32.mrb[0].mxu0
    %v1578 = vadd.f32 0.0, %v1577
    %v1579 = vpop.f32.mrb[0].mxu0
    %v1580 = vadd.f32 0.0, %v1579
    %1581 = vdwg.mxu0
    %v1582 = vadd.f32 %v1428, %v1578
    %v1583 = vadd.f32 %v1429, %v1580
    %1584 = vmatprep.subr.mxu0 0.0
    %1585 = vmatpush1.msra.mxu0 %v1431
    %1586 = vmatprep.subr.mxu0 0.0
    %1587 = vmatpush1.msra.mxu0 %v1432
    %1588 = vmatprep.subr.mxu0 0.0
    %1589 = vmatpush1.msra.mxu0 0.0
    %1590 = vmatprep.subr.mxu0 0.0
    %1591 = vmatpush1.msra.mxu0 0.0
    %1592 = vmatprep.subr.mxu0 0.0
    %1593 = vmatpush1.msra.mxu0 0.0
    %1594 = vmatprep.subr.mxu0 0.0
    %1595 = vmatpush1.msra.mxu0 0.0
    %1596 = vmatprep.subr.mxu0 0.0
    %1597 = vmatpush1.msra.mxu0 0.0
    %1598 = vmatprep.subr.mxu0 0.0
    %1599 = vmatpush1.msra.mxu0 0.0
    %1600 = vmatprep.subr.mxu0 0.0
    %1601 = vmatpush1.msra.mxu0 0.0
    %1602 = vmatprep.subr.mxu0 0.0
    %1603 = vmatpush1.msra.mxu0 0.0
    %1604 = vmatprep.subr.mxu0 0.0
    %1605 = vmatpush1.msra.mxu0 0.0
    %1606 = vmatprep.subr.mxu0 0.0
    %1607 = vmatpush1.msra.mxu0 0.0
    %1608 = vmatprep.subr.mxu0 0.0
    %1609 = vmatpush1.msra.mxu0 0.0
    %1610 = vmatprep.subr.mxu0 0.0
    %1611 = vmatpush1.msra.mxu0 0.0
    %1612 = vmatprep.subr.mxu0 0.0
    %1613 = vmatpush1.msra.mxu0 0.0
    %1614 = vmatprep.subr.mxu0 0.0
    %1615 = vmatpush1.msra.mxu0 0.0
    %1616 = vmatprep.subr.mxu0 0.0
    %1617 = vmatpush1.msra.mxu0 0.0
    %1618 = vmatprep.subr.mxu0 0.0
    %1619 = vmatpush1.msra.mxu0 0.0
    %1620 = vmatprep.subr.mxu0 0.0
    %1621 = vmatpush1.msra.mxu0 0.0
    %1622 = vmatprep.subr.mxu0 0.0
    %1623 = vmatpush1.msra.mxu0 0.0
    %1624 = vmatprep.subr.mxu0 0.0
    %1625 = vmatpush1.msra.mxu0 0.0
    %1626 = vmatprep.subr.mxu0 0.0
    %1627 = vmatpush1.msra.mxu0 0.0
    %1628 = vmatprep.subr.mxu0 0.0
    %1629 = vmatpush1.msra.mxu0 0.0
    %1630 = vmatprep.subr.mxu0 0.0
    %1631 = vmatpush1.msra.mxu0 0.0
    %1632 = vmatprep.subr.mxu0 0.0
    %1633 = vmatpush1.msra.mxu0 0.0
    %1634 = vmatprep.subr.mxu0 0.0
    %1635 = vmatpush1.msra.mxu0 0.0
    %1636 = vmatprep.subr.mxu0 0.0
    %1637 = vmatpush1.msra.mxu0 0.0
    %1638 = vmatprep.subr.mxu0 0.0
    %1639 = vmatpush1.msra.mxu0 0.0
    %1640 = vmatprep.subr.mxu0 0.0
    %1641 = vmatpush1.msra.mxu0 0.0
    %1642 = vmatprep.subr.mxu0 0.0
    %1643 = vmatpush1.msra.mxu0 0.0
    %1644 = vmatprep.subr.mxu0 0.0
    %1645 = vmatpush1.msra.mxu0 0.0
    %1646 = vmatprep.subr.mxu0 0.0
    %1647 = vmatpush1.msra.mxu0 0.0
    %1648 = vmatprep.mubr.f32.mxu0 0.0
    %1649 = vmatmul.mubr.f32.gmra.mrb[0].mxu0 %v137
    %v1650 = vpop.f32.mrb[0].mxu0
    %v1651 = vadd.f32 0.0, %v1650
    %v1652 = vpop.f32.mrb[0].mxu0
    %1653 = vdwg.mxu0
    %s1654 = scalar_lea.vmem %s3, 224
    %v1655 = vld [vmem:[%s1654] sm:$0xff]
    %v1656 = vld [vmem:[%s1654 + $0x8] sm:$0xff]
    %v1657 = vld [vmem:[%s1654 + $0x10] sm:$0xff]
    %v1658 = vld [vmem:[%s1654 + $0x18] sm:$0xff]
    %v1660 = vsel %vm56, %v1651, 0
    %1662 = vmatprep.subr.mxu0 %v1656
    %1663 = vmatpush1.msra.mxu0 %v1655
    %1664 = vmatprep.subr.mxu0 %v1658
    %1665 = vmatpush1.msra.mxu0 %v1657
    %1666 = vmatprep.subr.mxu0 0.0
    %1667 = vmatpush1.msra.mxu0 0.0
    %1668 = vmatprep.subr.mxu0 0.0
    %1669 = vmatpush1.msra.mxu0 0.0
    %1670 = vmatprep.subr.mxu0 0.0
    %1671 = vmatpush1.msra.mxu0 0.0
    %1672 = vmatprep.subr.mxu0 0.0
    %1673 = vmatpush1.msra.mxu0 0.0
    %1674 = vmatprep.subr.mxu0 0.0
    %1675 = vmatpush1.msra.mxu0 0.0
    %1676 = vmatprep.subr.mxu0 0.0
    %1677 = vmatpush1.msra.mxu0 0.0
    %1678 = vmatprep.subr.mxu0 0.0
    %1679 = vmatpush1.msra.mxu0 0.0
    %1680 = vmatprep.subr.mxu0 0.0
    %1681 = vmatpush1.msra.mxu0 0.0
    %1682 = vmatprep.subr.mxu0 0.0
    %1683 = vmatpush1.msra.mxu0 0.0
    %1684 = vmatprep.subr.mxu0 0.0
    %1685 = vmatpush1.msra.mxu0 0.0
    %1686 = vmatprep.subr.mxu0 0.0
    %1687 = vmatpush1.msra.mxu0 0.0
    %1688 = vmatprep.subr.mxu0 0.0
    %1689 = vmatpush1.msra.mxu0 0.0
    %1690 = vmatprep.subr.mxu0 0.0
    %1691 = vmatpush1.msra.mxu0 0.0
    %1692 = vmatprep.subr.mxu0 0.0
    %1693 = vmatpush1.msra.mxu0 0.0
    %1694 = vmatprep.subr.mxu0 0.0
    %1695 = vmatpush1.msra.mxu0 0.0
    %1696 = vmatprep.subr.mxu0 0.0
    %1697 = vmatpush1.msra.mxu0 0.0
    %1698 = vmatprep.subr.mxu0 0.0
    %1699 = vmatpush1.msra.mxu0 0.0
    %1700 = vmatprep.subr.mxu0 0.0
    %1701 = vmatpush1.msra.mxu0 0.0
    %1702 = vmatprep.subr.mxu0 0.0
    %1703 = vmatpush1.msra.mxu0 0.0
    %1704 = vmatprep.subr.mxu0 0.0
    %1705 = vmatpush1.msra.mxu0 0.0
    %1706 = vmatprep.subr.mxu0 0.0
    %1707 = vmatpush1.msra.mxu0 0.0
    %1708 = vmatprep.subr.mxu0 0.0
    %1709 = vmatpush1.msra.mxu0 0.0
    %1710 = vmatprep.subr.mxu0 0.0
    %1711 = vmatpush1.msra.mxu0 0.0
    %1712 = vmatprep.subr.mxu0 0.0
    %1713 = vmatpush1.msra.mxu0 0.0
    %1714 = vmatprep.subr.mxu0 0.0
    %1715 = vmatpush1.msra.mxu0 0.0
    %1716 = vmatprep.subr.mxu0 0.0
    %1717 = vmatpush1.msra.mxu0 0.0
    %1718 = vmatprep.subr.mxu0 0.0
    %1719 = vmatpush1.msra.mxu0 0.0
    %1720 = vmatprep.subr.mxu0 0.0
    %1721 = vmatpush1.msra.mxu0 0.0
    %1722 = vmatprep.subr.mxu0 0.0
    %1723 = vmatpush1.msra.mxu0 0.0
    %1724 = vmatprep.subr.mxu0 0.0
    %1725 = vmatpush1.msra.mxu0 0.0
    %1726 = vmatprep.mubr.f32.mxu0 0.0
    %1727 = vmatmul.mubr.f32.gmra.mrb[0].mxu0 %v1660
    %v1728 = vpop.f32.mrb[0].mxu0
    %v1729 = vadd.f32 0.0, %v1728
    %v1730 = vpop.f32.mrb[0].mxu0
    %v1731 = vadd.f32 0.0, %v1730
    %1732 = vdwg.mxu0
    %v1733 = vadd.f32 %v1582, %v1729
    %v1734 = vadd.f32 %v1583, %v1731
    %1735 = vmatprep.subr.mxu0 0.0
    %1736 = vmatpush1.msra.mxu0 %v1431
    %1737 = vmatprep.subr.mxu0 0.0
    %1738 = vmatpush1.msra.mxu0 %v1432
    %1739 = vmatprep.subr.mxu0 0.0
    %1740 = vmatpush1.msra.mxu0 0.0
    %1741 = vmatprep.subr.mxu0 0.0
    %1742 = vmatpush1.msra.mxu0 0.0
    %1743 = vmatprep.subr.mxu0 0.0
    %1744 = vmatpush1.msra.mxu0 0.0
    %1745 = vmatprep.subr.mxu0 0.0
    %1746 = vmatpush1.msra.mxu0 0.0
    %1747 = vmatprep.subr.mxu0 0.0
    %1748 = vmatpush1.msra.mxu0 0.0
    %1749 = vmatprep.subr.mxu0 0.0
    %1750 = vmatpush1.msra.mxu0 0.0
    %1751 = vmatprep.subr.mxu0 0.0
    %1752 = vmatpush1.msra.mxu0 0.0
    %1753 = vmatprep.subr.mxu0 0.0
    %1754 = vmatpush1.msra.mxu0 0.0
    %1755 = vmatprep.subr.mxu0 0.0
    %1756 = vmatpush1.msra.mxu0 0.0
    %1757 = vmatprep.subr.mxu0 0.0
    %1758 = vmatpush1.msra.mxu0 0.0
    %1759 = vmatprep.subr.mxu0 0.0
    %1760 = vmatpush1.msra.mxu0 0.0
    %1761 = vmatprep.subr.mxu0 0.0
    %1762 = vmatpush1.msra.mxu0 0.0
    %1763 = vmatprep.subr.mxu0 0.0
    %1764 = vmatpush1.msra.mxu0 0.0
    %1765 = vmatprep.subr.mxu0 0.0
    %1766 = vmatpush1.msra.mxu0 0.0
    %1767 = vmatprep.subr.mxu0 0.0
    %1768 = vmatpush1.msra.mxu0 0.0
    %1769 = vmatprep.subr.mxu0 0.0
    %1770 = vmatpush1.msra.mxu0 0.0
    %1771 = vmatprep.subr.mxu0 0.0
    %1772 = vmatpush1.msra.mxu0 0.0
    %1773 = vmatprep.subr.mxu0 0.0
    %1774 = vmatpush1.msra.mxu0 0.0
    %1775 = vmatprep.subr.mxu0 0.0
    %1776 = vmatpush1.msra.mxu0 0.0
    %1777 = vmatprep.subr.mxu0 0.0
    %1778 = vmatpush1.msra.mxu0 0.0
    %1779 = vmatprep.subr.mxu0 0.0
    %1780 = vmatpush1.msra.mxu0 0.0
    %1781 = vmatprep.subr.mxu0 0.0
    %1782 = vmatpush1.msra.mxu0 0.0
    %1783 = vmatprep.subr.mxu0 0.0
    %1784 = vmatpush1.msra.mxu0 0.0
    %1785 = vmatprep.subr.mxu0 0.0
    %1786 = vmatpush1.msra.mxu0 0.0
    %1787 = vmatprep.subr.mxu0 0.0
    %1788 = vmatpush1.msra.mxu0 0.0
    %1789 = vmatprep.subr.mxu0 0.0
    %1790 = vmatpush1.msra.mxu0 0.0
    %1791 = vmatprep.subr.mxu0 0.0
    %1792 = vmatpush1.msra.mxu0 0.0
    %1793 = vmatprep.subr.mxu0 0.0
    %1794 = vmatpush1.msra.mxu0 0.0
    %1795 = vmatprep.subr.mxu0 0.0
    %1796 = vmatpush1.msra.mxu0 0.0
    %1797 = vmatprep.subr.mxu0 0.0
    %1798 = vmatpush1.msra.mxu0 0.0
    %1799 = vmatprep.mubr.f32.mxu0 0.0
    %1800 = vmatmul.mubr.f32.gmra.mrb[0].mxu0 %v365
    %v1801 = vpop.f32.mrb[0].mxu0
    %v1802 = vadd.f32 0.0, %v1801
    %v1803 = vpop.f32.mrb[0].mxu0
    %1804 = vdwg.mxu0
    %s1805 = scalar_lea.vmem %s3, 352
    %v1806 = vld [vmem:[%s1805] sm:$0xff]
    %v1807 = vld [vmem:[%s1805 + $0x8] sm:$0xff]
    %v1808 = vld [vmem:[%s1805 + $0x10] sm:$0xff]
    %v1809 = vld [vmem:[%s1805 + $0x18] sm:$0xff]
    %v1811 = vsel %vm56, %v1802, 0
    %1813 = vmatprep.subr.mxu0 %v1807
    %1814 = vmatpush1.msra.mxu0 %v1806
    %1815 = vmatprep.subr.mxu0 %v1809
    %1816 = vmatpush1.msra.mxu0 %v1808
    %1817 = vmatprep.subr.mxu0 0.0
    %1818 = vmatpush1.msra.mxu0 0.0
    %1819 = vmatprep.subr.mxu0 0.0
    %1820 = vmatpush1.msra.mxu0 0.0
    %1821 = vmatprep.subr.mxu0 0.0
    %1822 = vmatpush1.msra.mxu0 0.0
    %1823 = vmatprep.subr.mxu0 0.0
    %1824 = vmatpush1.msra.mxu0 0.0
    %1825 = vmatprep.subr.mxu0 0.0
    %1826 = vmatpush1.msra.mxu0 0.0
    %1827 = vmatprep.subr.mxu0 0.0
    %1828 = vmatpush1.msra.mxu0 0.0
    %1829 = vmatprep.subr.mxu0 0.0
    %1830 = vmatpush1.msra.mxu0 0.0
    %1831 = vmatprep.subr.mxu0 0.0
    %1832 = vmatpush1.msra.mxu0 0.0
    %1833 = vmatprep.subr.mxu0 0.0
    %1834 = vmatpush1.msra.mxu0 0.0
    %1835 = vmatprep.subr.mxu0 0.0
    %1836 = vmatpush1.msra.mxu0 0.0
    %1837 = vmatprep.subr.mxu0 0.0
    %1838 = vmatpush1.msra.mxu0 0.0
    %1839 = vmatprep.subr.mxu0 0.0
    %1840 = vmatpush1.msra.mxu0 0.0
    %1841 = vmatprep.subr.mxu0 0.0
    %1842 = vmatpush1.msra.mxu0 0.0
    %1843 = vmatprep.subr.mxu0 0.0
    %1844 = vmatpush1.msra.mxu0 0.0
    %1845 = vmatprep.subr.mxu0 0.0
    %1846 = vmatpush1.msra.mxu0 0.0
    %1847 = vmatprep.subr.mxu0 0.0
    %1848 = vmatpush1.msra.mxu0 0.0
    %1849 = vmatprep.subr.mxu0 0.0
    %1850 = vmatpush1.msra.mxu0 0.0
    %1851 = vmatprep.subr.mxu0 0.0
    %1852 = vmatpush1.msra.mxu0 0.0
    %1853 = vmatprep.subr.mxu0 0.0
    %1854 = vmatpush1.msra.mxu0 0.0
    %1855 = vmatprep.subr.mxu0 0.0
    %1856 = vmatpush1.msra.mxu0 0.0
    %1857 = vmatprep.subr.mxu0 0.0
    %1858 = vmatpush1.msra.mxu0 0.0
    %1859 = vmatprep.subr.mxu0 0.0
    %1860 = vmatpush1.msra.mxu0 0.0
    %1861 = vmatprep.subr.mxu0 0.0
    %1862 = vmatpush1.msra.mxu0 0.0
    %1863 = vmatprep.subr.mxu0 0.0
    %1864 = vmatpush1.msra.mxu0 0.0
    %1865 = vmatprep.subr.mxu0 0.0
    %1866 = vmatpush1.msra.mxu0 0.0
    %1867 = vmatprep.subr.mxu0 0.0
    %1868 = vmatpush1.msra.mxu0 0.0
    %1869 = vmatprep.subr.mxu0 0.0
    %1870 = vmatpush1.msra.mxu0 0.0
    %1871 = vmatprep.subr.mxu0 0.0
    %1872 = vmatpush1.msra.mxu0 0.0
    %1873 = vmatprep.subr.mxu0 0.0
    %1874 = vmatpush1.msra.mxu0 0.0
    %1875 = vmatprep.subr.mxu0 0.0
    %1876 = vmatpush1.msra.mxu0 0.0
    %1877 = vmatprep.mubr.f32.mxu0 0.0
    %1878 = vmatmul.mubr.f32.gmra.mrb[0].mxu0 %v1811
    %v1879 = vpop.f32.mrb[0].mxu0
    %v1880 = vadd.f32 0.0, %v1879
    %v1881 = vpop.f32.mrb[0].mxu0
    %v1882 = vadd.f32 0.0, %v1881
    %1883 = vdwg.mxu0
    %v1884 = vadd.f32 %v1733, %v1880
    %v1885 = vadd.f32 %v1734, %v1882
    %v1886 = vld [vmem:[%s4] sm:$0x3]
    %v1888 = vlaneseq
    %v1889 = vshrl.u32 %v1888, 7
    %v1890 = vsub.s32 0, %v1889
    %v1891 = vrot.slane %v1886, %v1890
    %v1892 = vlaneseq
    %v1893 = vshrl.u32 %v1892, 7
    %v1894 = vsub.s32 1, %v1893
    %v1895 = vrot.slane %v1886, %v1894
    %v1898 = vadd.f32 %v1884, %v1891
    %v1899 = vadd.f32 %v1885, %v1895
    %v1900 = vmax.f32 %v1898, 0.0
    %v1901 = vmax.f32 %v1899, 0.0
    %v1902 = vld [vmem:[%s2] sm:$0x7]
    %vm1903 = vcmask 56320
    %v1905 = vsel %vm1903, %v1902, 0
    %vm1907 = vcmask 1046528
    %v1909 = vsel %vm1907, %v1900, 0
    %v1912 = vsel %vm1907, %v1901, 0
    %1914 = vmatprep.subr.mxu0 %v1912
    %1915 = vmatpush1.msra.mxu0 %v1909
    %1916 = vmatprep.subr.mxu0 0.0
    %1917 = vmatpush1.msra.mxu0 0.0
    %1918 = vmatprep.subr.mxu0 0.0
    %1919 = vmatpush1.msra.mxu0 0.0
    %1920 = vmatprep.subr.mxu0 0.0
    %1921 = vmatpush1.msra.mxu0 0.0
    %1922 = vmatprep.subr.mxu0 0.0
    %1923 = vmatpush1.msra.mxu0 0.0
    %1924 = vmatprep.subr.mxu0 0.0
    %1925 = vmatpush1.msra.mxu0 0.0
    %1926 = vmatprep.subr.mxu0 0.0
    %1927 = vmatpush1.msra.mxu0 0.0
    %1928 = vmatprep.subr.mxu0 0.0
    %1929 = vmatpush1.msra.mxu0 0.0
    %1930 = vmatprep.subr.mxu0 0.0
    %1931 = vmatpush1.msra.mxu0 0.0
    %1932 = vmatprep.subr.mxu0 0.0
    %1933 = vmatpush1.msra.mxu0 0.0
    %1934 = vmatprep.subr.mxu0 0.0
    %1935 = vmatpush1.msra.mxu0 0.0
    %1936 = vmatprep.subr.mxu0 0.0
    %1937 = vmatpush1.msra.mxu0 0.0
    %1938 = vmatprep.subr.mxu0 0.0
    %1939 = vmatpush1.msra.mxu0 0.0
    %1940 = vmatprep.subr.mxu0 0.0
    %1941 = vmatpush1.msra.mxu0 0.0
    %1942 = vmatprep.subr.mxu0 0.0
    %1943 = vmatpush1.msra.mxu0 0.0
    %1944 = vmatprep.subr.mxu0 0.0
    %1945 = vmatpush1.msra.mxu0 0.0
    %1946 = vmatprep.subr.mxu0 0.0
    %1947 = vmatpush1.msra.mxu0 0.0
    %1948 = vmatprep.subr.mxu0 0.0
    %1949 = vmatpush1.msra.mxu0 0.0
    %1950 = vmatprep.subr.mxu0 0.0
    %1951 = vmatpush1.msra.mxu0 0.0
    %1952 = vmatprep.subr.mxu0 0.0
    %1953 = vmatpush1.msra.mxu0 0.0
    %1954 = vmatprep.subr.mxu0 0.0
    %1955 = vmatpush1.msra.mxu0 0.0
    %1956 = vmatprep.subr.mxu0 0.0
    %1957 = vmatpush1.msra.mxu0 0.0
    %1958 = vmatprep.subr.mxu0 0.0
    %1959 = vmatpush1.msra.mxu0 0.0
    %1960 = vmatprep.subr.mxu0 0.0
    %1961 = vmatpush1.msra.mxu0 0.0
    %1962 = vmatprep.subr.mxu0 0.0
    %1963 = vmatpush1.msra.mxu0 0.0
    %1964 = vmatprep.subr.mxu0 0.0
    %1965 = vmatpush1.msra.mxu0 0.0
    %1966 = vmatprep.subr.mxu0 0.0
    %1967 = vmatpush1.msra.mxu0 0.0
    %1968 = vmatprep.subr.mxu0 0.0
    %1969 = vmatpush1.msra.mxu0 0.0
    %1970 = vmatprep.subr.mxu0 0.0
    %1971 = vmatpush1.msra.mxu0 0.0
    %1972 = vmatprep.subr.mxu0 0.0
    %1973 = vmatpush1.msra.mxu0 0.0
    %1974 = vmatprep.subr.mxu0 0.0
    %1975 = vmatpush1.msra.mxu0 0.0
    %1976 = vmatprep.subr.mxu0 0.0
    %1977 = vmatpush1.msra.mxu0 0.0
    %1978 = vmatprep.mubr.f32.mxu0 0.0
    %1979 = vmatmul.mubr.f32.gmra.mrb[0].mxu0 %v1905
    %v1980 = vpop.f32.mrb[0].mxu0
    %v1981 = vadd.f32 0.0, %v1980
    %v1982 = vpop.f32.mrb[0].mxu0
    %v1983 = vadd.f32 0.0, %v1982
    %1984 = vdwg.mxu0
    %v1985 = vld [vmem:[#allocation2] sm:$0xff]
    %v1986 = vld [vmem:[#allocation2 + $0x8] sm:$0xff]
    %v1987 = vld [vmem:[#allocation2 + $0x10] sm:$0xff]
    %v1988 = vld [vmem:[#allocation2 + $0x18] sm:$0xff]
    %v1989 = vld [vmem:[#allocation2 + $0x20] sm:$0xff]
    %v1990 = vld [vmem:[#allocation2 + $0x28] sm:$0xff]
    %v1991 = vld [vmem:[#allocation2 + $0x30] sm:$0xff]
    %v1992 = vld [vmem:[#allocation2 + $0x38] sm:$0xff]
    %v1993 = vld [vmem:[#allocation2 + $0x40] sm:$0xff]
    %v1994 = vld [vmem:[#allocation2 + $0x48] sm:$0xff]
    %v1995 = vld [vmem:[#allocation2 + $0x50] sm:$0xff]
    %v1996 = vld [vmem:[#allocation2 + $0x58] sm:$0xff]
    %v1997 = vld [vmem:[#allocation2 + $0x60] sm:$0xff]
    %v1998 = vld [vmem:[#allocation2 + $0x68] sm:$0xff]
    %v1999 = vld [vmem:[#allocation2 + $0x70] sm:$0xff]
    %v2000 = vld [vmem:[#allocation2 + $0x78] sm:$0xff]
    %v2001 = vld [vmem:[#allocation2 + $0x80] sm:$0xff]
    %v2002 = vld [vmem:[#allocation2 + $0x88] sm:$0xff]
    %v2003 = vld [vmem:[#allocation2 + $0x90] sm:$0xff]
    %v2004 = vld [vmem:[#allocation2 + $0x98] sm:$0xff]
    %v2005 = vld [vmem:[#allocation2 + $0xa0] sm:$0xff]
    %v2006 = vld [vmem:[#allocation2 + $0xa8] sm:$0xff]
    %v2007 = vld [vmem:[#allocation2 + $0xb0] sm:$0xff]
    %v2008 = vld [vmem:[#allocation2 + $0xb8] sm:$0xff]
    %v2009 = vld [vmem:[#allocation2 + $0xc0] sm:$0xff]
    %v2010 = vld [vmem:[#allocation2 + $0xc8] sm:$0xff]
    %v2011 = vld [vmem:[#allocation2 + $0xd0] sm:$0xff]
    %v2012 = vld [vmem:[#allocation2 + $0xd8] sm:$0xff]
    %v2013 = vld [vmem:[#allocation2 + $0xe0] sm:$0xff]
    %v2014 = vld [vmem:[#allocation2 + $0xe8] sm:$0xff]
    %v2015 = vld [vmem:[#allocation2 + $0xf0] sm:$0xff]
    %v2016 = vld [vmem:[#allocation2 + $0xf8] sm:$0xff]
    %s2017 = scalar_lea.vmem %s2, 4
    %v2018 = vld [vmem:[%s2017] sm:$0x7]
    %v2020 = vsel %vm1903, %v2018, 0
    %2022 = vmatprep.subr.mxu0 %v1912
    %2023 = vmatpush1.msra.mxu0 %v1909
    %2024 = vmatprep.subr.mxu0 0.0
    %2025 = vmatpush1.msra.mxu0 0.0
    %2026 = vmatprep.subr.mxu0 0.0
    %2027 = vmatpush1.msra.mxu0 0.0
    %2028 = vmatprep.subr.mxu0 0.0
    %2029 = vmatpush1.msra.mxu0 0.0
    %2030 = vmatprep.subr.mxu0 0.0
    %2031 = vmatpush1.msra.mxu0 0.0
    %2032 = vmatprep.subr.mxu0 0.0
    %2033 = vmatpush1.msra.mxu0 0.0
    %2034 = vmatprep.subr.mxu0 0.0
    %2035 = vmatpush1.msra.mxu0 0.0
    %2036 = vmatprep.subr.mxu0 0.0
    %2037 = vmatpush1.msra.mxu0 0.0
    %2038 = vmatprep.subr.mxu0 0.0
    %2039 = vmatpush1.msra.mxu0 0.0
    %2040 = vmatprep.subr.mxu0 0.0
    %2041 = vmatpush1.msra.mxu0 0.0
    %2042 = vmatprep.subr.mxu0 0.0
    %2043 = vmatpush1.msra.mxu0 0.0
    %2044 = vmatprep.subr.mxu0 0.0
    %2045 = vmatpush1.msra.mxu0 0.0
    %2046 = vmatprep.subr.mxu0 0.0
    %2047 = vmatpush1.msra.mxu0 0.0
    %2048 = vmatprep.subr.mxu0 0.0
    %2049 = vmatpush1.msra.mxu0 0.0
    %2050 = vmatprep.subr.mxu0 0.0
    %2051 = vmatpush1.msra.mxu0 0.0
    %2052 = vmatprep.subr.mxu0 0.0
    %2053 = vmatpush1.msra.mxu0 0.0
    %2054 = vmatprep.subr.mxu0 0.0
    %2055 = vmatpush1.msra.mxu0 0.0
    %2056 = vmatprep.subr.mxu0 0.0
    %2057 = vmatpush1.msra.mxu0 0.0
    %2058 = vmatprep.subr.mxu0 0.0
    %2059 = vmatpush1.msra.mxu0 0.0
    %2060 = vmatprep.subr.mxu0 0.0
    %2061 = vmatpush1.msra.mxu0 0.0
    %2062 = vmatprep.subr.mxu0 0.0
    %2063 = vmatpush1.msra.mxu0 0.0
    %2064 = vmatprep.subr.mxu0 0.0
    %2065 = vmatpush1.msra.mxu0 0.0
    %2066 = vmatprep.subr.mxu0 0.0
    %2067 = vmatpush1.msra.mxu0 0.0
    %2068 = vmatprep.subr.mxu0 0.0
    %2069 = vmatpush1.msra.mxu0 0.0
    %2070 = vmatprep.subr.mxu0 0.0
    %2071 = vmatpush1.msra.mxu0 0.0
    %2072 = vmatprep.subr.mxu0 0.0
    %2073 = vmatpush1.msra.mxu0 0.0
    %2074 = vmatprep.subr.mxu0 0.0
    %2075 = vmatpush1.msra.mxu0 0.0
    %2076 = vmatprep.subr.mxu0 0.0
    %2077 = vmatpush1.msra.mxu0 0.0
    %2078 = vmatprep.subr.mxu0 0.0
    %2079 = vmatpush1.msra.mxu0 0.0
    %2080 = vmatprep.subr.mxu0 0.0
    %2081 = vmatpush1.msra.mxu0 0.0
    %2082 = vmatprep.subr.mxu0 0.0
    %2083 = vmatpush1.msra.mxu0 0.0
    %2084 = vmatprep.subr.mxu0 0.0
    %2085 = vmatpush1.msra.mxu0 0.0
    %2086 = vmatprep.mubr.f32.mxu0 0.0
    %2087 = vmatmul.mubr.f32.gmra.mrb[0].mxu0 %v2020
    %v2088 = vpop.f32.mrb[0].mxu0
    %v2089 = vadd.f32 0.0, %v2088
    %v2090 = vpop.f32.mrb[0].mxu0
    %v2091 = vadd.f32 0.0, %v2090
    %2092 = vdwg.mxu0
    %s2093 = scalar_lea.vmem [#allocation2], 256
    %v2094 = vld [vmem:[%s2093] sm:$0xff]
    %v2095 = vld [vmem:[%s2093 + $0x8] sm:$0xff]
    %v2096 = vld [vmem:[%s2093 + $0x10] sm:$0xff]
    %v2097 = vld [vmem:[%s2093 + $0x18] sm:$0xff]
    %v2098 = vld [vmem:[%s2093 + $0x20] sm:$0xff]
    %v2099 = vld [vmem:[%s2093 + $0x28] sm:$0xff]
    %v2100 = vld [vmem:[%s2093 + $0x30] sm:$0xff]
    %v2101 = vld [vmem:[%s2093 + $0x38] sm:$0xff]
    %v2102 = vld [vmem:[%s2093 + $0x40] sm:$0xff]
    %v2103 = vld [vmem:[%s2093 + $0x48] sm:$0xff]
    %v2104 = vld [vmem:[%s2093 + $0x50] sm:$0xff]
    %v2105 = vld [vmem:[%s2093 + $0x58] sm:$0xff]
    %v2106 = vld [vmem:[%s2093 + $0x60] sm:$0xff]
    %v2107 = vld [vmem:[%s2093 + $0x68] sm:$0xff]
    %v2108 = vld [vmem:[%s2093 + $0x70] sm:$0xff]
    %v2109 = vld [vmem:[%s2093 + $0x78] sm:$0xff]
    %v2110 = vld [vmem:[%s2093 + $0x80] sm:$0xff]
    %v2111 = vld [vmem:[%s2093 + $0x88] sm:$0xff]
    %v2112 = vld [vmem:[%s2093 + $0x90] sm:$0xff]
    %v2113 = vld [vmem:[%s2093 + $0x98] sm:$0xff]
    %v2114 = vld [vmem:[%s2093 + $0xa0] sm:$0xff]
    %v2115 = vld [vmem:[%s2093 + $0xa8] sm:$0xff]
    %v2116 = vld [vmem:[%s2093 + $0xb0] sm:$0xff]
    %v2117 = vld [vmem:[%s2093 + $0xb8] sm:$0xff]
    %v2118 = vld [vmem:[%s2093 + $0xc0] sm:$0xff]
    %v2119 = vld [vmem:[%s2093 + $0xc8] sm:$0xff]
    %v2120 = vld [vmem:[%s2093 + $0xd0] sm:$0xff]
    %v2121 = vld [vmem:[%s2093 + $0xd8] sm:$0xff]
    %v2122 = vld [vmem:[%s2093 + $0xe0] sm:$0xff]
    %v2123 = vld [vmem:[%s2093 + $0xe8] sm:$0xff]
    %v2124 = vld [vmem:[%s2093 + $0xf0] sm:$0xff]
    %v2125 = vld [vmem:[%s2093 + $0xf8] sm:$0xff]
    %2126 = vmatprep.subr.mxu0 0.0
    %2127 = vmatpush1.msra.mxu0 %v2094
    %2128 = vmatprep.subr.mxu0 0.0
    %2129 = vmatpush1.msra.mxu0 %v2095
    %2130 = vmatprep.subr.mxu0 0.0
    %2131 = vmatpush1.msra.mxu0 %v2096
    %2132 = vmatprep.subr.mxu0 0.0
    %2133 = vmatpush1.msra.mxu0 %v2097
    %2134 = vmatprep.subr.mxu0 0.0
    %2135 = vmatpush1.msra.mxu0 %v2098
    %2136 = vmatprep.subr.mxu0 0.0
    %2137 = vmatpush1.msra.mxu0 %v2099
    %2138 = vmatprep.subr.mxu0 0.0
    %2139 = vmatpush1.msra.mxu0 %v2100
    %2140 = vmatprep.subr.mxu0 0.0
    %2141 = vmatpush1.msra.mxu0 %v2101
    %2142 = vmatprep.subr.mxu0 0.0
    %2143 = vmatpush1.msra.mxu0 %v2102
    %2144 = vmatprep.subr.mxu0 0.0
    %2145 = vmatpush1.msra.mxu0 %v2103
    %2146 = vmatprep.subr.mxu0 0.0
    %2147 = vmatpush1.msra.mxu0 %v2104
    %2148 = vmatprep.subr.mxu0 0.0
    %2149 = vmatpush1.msra.mxu0 %v2105
    %2150 = vmatprep.subr.mxu0 0.0
    %2151 = vmatpush1.msra.mxu0 %v2106
    %2152 = vmatprep.subr.mxu0 0.0
    %2153 = vmatpush1.msra.mxu0 %v2107
    %2154 = vmatprep.subr.mxu0 0.0
    %2155 = vmatpush1.msra.mxu0 %v2108
    %2156 = vmatprep.subr.mxu0 0.0
    %2157 = vmatpush1.msra.mxu0 %v2109
    %2158 = vmatprep.subr.mxu0 0.0
    %2159 = vmatpush1.msra.mxu0 %v2110
    %2160 = vmatprep.subr.mxu0 0.0
    %2161 = vmatpush1.msra.mxu0 %v2111
    %2162 = vmatprep.subr.mxu0 0.0
    %2163 = vmatpush1.msra.mxu0 %v2112
    %2164 = vmatprep.subr.mxu0 0.0
    %2165 = vmatpush1.msra.mxu0 %v2113
    %2166 = vmatprep.subr.mxu0 0.0
    %2167 = vmatpush1.msra.mxu0 %v2114
    %2168 = vmatprep.subr.mxu0 0.0
    %2169 = vmatpush1.msra.mxu0 %v2115
    %2170 = vmatprep.subr.mxu0 0.0
    %2171 = vmatpush1.msra.mxu0 %v2116
    %2172 = vmatprep.subr.mxu0 0.0
    %2173 = vmatpush1.msra.mxu0 %v2117
    %2174 = vmatprep.subr.mxu0 0.0
    %2175 = vmatpush1.msra.mxu0 %v2118
    %2176 = vmatprep.subr.mxu0 0.0
    %2177 = vmatpush1.msra.mxu0 %v2119
    %2178 = vmatprep.subr.mxu0 0.0
    %2179 = vmatpush1.msra.mxu0 %v2120
    %2180 = vmatprep.subr.mxu0 0.0
    %2181 = vmatpush1.msra.mxu0 %v2121
    %2182 = vmatprep.subr.mxu0 0.0
    %2183 = vmatpush1.msra.mxu0 %v2122
    %2184 = vmatprep.subr.mxu0 0.0
    %2185 = vmatpush1.msra.mxu0 %v2123
    %2186 = vmatprep.subr.mxu0 0.0
    %2187 = vmatpush1.msra.mxu0 %v2124
    %2188 = vmatprep.subr.mxu0 0.0
    %2189 = vmatpush1.msra.mxu0 %v2125
    %2190 = vmatprep.mubr.f32.mxu0 %v2091
    %2191 = vmatmul.mubr.f32.gmra.mrb[0].mxu0 %v2089
    %v2192 = vpop.f32.mrb[0].mxu0
    %v2193 = vadd.f32 0.0, %v2192
    %v2194 = vpop.f32.mrb[0].mxu0
    %2195 = vdwg.mxu0
    %2196 = vmatprep.subr.mxu0 0.0
    %2197 = vmatpush1.msra.mxu0 %v1985
    %2198 = vmatprep.subr.mxu0 0.0
    %2199 = vmatpush1.msra.mxu0 %v1986
    %2200 = vmatprep.subr.mxu0 0.0
    %2201 = vmatpush1.msra.mxu0 %v1987
    %2202 = vmatprep.subr.mxu0 0.0
    %2203 = vmatpush1.msra.mxu0 %v1988
    %2204 = vmatprep.subr.mxu0 0.0
    %2205 = vmatpush1.msra.mxu0 %v1989
    %2206 = vmatprep.subr.mxu0 0.0
    %2207 = vmatpush1.msra.mxu0 %v1990
    %2208 = vmatprep.subr.mxu0 0.0
    %2209 = vmatpush1.msra.mxu0 %v1991
    %2210 = vmatprep.subr.mxu0 0.0
    %2211 = vmatpush1.msra.mxu0 %v1992
    %2212 = vmatprep.subr.mxu0 0.0
    %2213 = vmatpush1.msra.mxu0 %v1993
    %2214 = vmatprep.subr.mxu0 0.0
    %2215 = vmatpush1.msra.mxu0 %v1994
    %2216 = vmatprep.subr.mxu0 0.0
    %2217 = vmatpush1.msra.mxu0 %v1995
    %2218 = vmatprep.subr.mxu0 0.0
    %2219 = vmatpush1.msra.mxu0 %v1996
    %2220 = vmatprep.subr.mxu0 0.0
    %2221 = vmatpush1.msra.mxu0 %v1997
    %2222 = vmatprep.subr.mxu0 0.0
    %2223 = vmatpush1.msra.mxu0 %v1998
    %2224 = vmatprep.subr.mxu0 0.0
    %2225 = vmatpush1.msra.mxu0 %v1999
    %2226 = vmatprep.subr.mxu0 0.0
    %2227 = vmatpush1.msra.mxu0 %v2000
    %2228 = vmatprep.subr.mxu0 0.0
    %2229 = vmatpush1.msra.mxu0 %v2001
    %2230 = vmatprep.subr.mxu0 0.0
    %2231 = vmatpush1.msra.mxu0 %v2002
    %2232 = vmatprep.subr.mxu0 0.0
    %2233 = vmatpush1.msra.mxu0 %v2003
    %2234 = vmatprep.subr.mxu0 0.0
    %2235 = vmatpush1.msra.mxu0 %v2004
    %2236 = vmatprep.subr.mxu0 0.0
    %2237 = vmatpush1.msra.mxu0 %v2005
    %2238 = vmatprep.subr.mxu0 0.0
    %2239 = vmatpush1.msra.mxu0 %v2006
    %2240 = vmatprep.subr.mxu0 0.0
    %2241 = vmatpush1.msra.mxu0 %v2007
    %2242 = vmatprep.subr.mxu0 0.0
    %2243 = vmatpush1.msra.mxu0 %v2008
    %2244 = vmatprep.subr.mxu0 0.0
    %2245 = vmatpush1.msra.mxu0 %v2009
    %2246 = vmatprep.subr.mxu0 0.0
    %2247 = vmatpush1.msra.mxu0 %v2010
    %2248 = vmatprep.subr.mxu0 0.0
    %2249 = vmatpush1.msra.mxu0 %v2011
    %2250 = vmatprep.subr.mxu0 0.0
    %2251 = vmatpush1.msra.mxu0 %v2012
    %2252 = vmatprep.subr.mxu0 0.0
    %2253 = vmatpush1.msra.mxu0 %v2013
    %2254 = vmatprep.subr.mxu0 0.0
    %2255 = vmatpush1.msra.mxu0 %v2014
    %2256 = vmatprep.subr.mxu0 0.0
    %2257 = vmatpush1.msra.mxu0 %v2015
    %2258 = vmatprep.subr.mxu0 0.0
    %2259 = vmatpush1.msra.mxu0 %v2016
    %2260 = vmatprep.mubr.f32.mxu0 %v1983
    %2261 = vmatmul.mubr.f32.gmra.mrb[0].mxu0 %v1981
    %v2262 = vpop.f32.mrb[0].mxu0
    %v2263 = vadd.f32 %v2193, %v2262
    %v2264 = vpop.f32.mrb[0].mxu0
    %2265 = vdwg.mxu0
    %s2266 = scalar_lea.vmem %s2, 8
    %v2267 = vld [vmem:[%s2266] sm:$0x7]
    %v2269 = vsel %vm1903, %v2267, 0
    %2271 = vmatprep.subr.mxu0 %v1912
    %2272 = vmatpush1.msra.mxu0 %v1909
    %2273 = vmatprep.subr.mxu0 0.0
    %2274 = vmatpush1.msra.mxu0 0.0
    %2275 = vmatprep.subr.mxu0 0.0
    %2276 = vmatpush1.msra.mxu0 0.0
    %2277 = vmatprep.subr.mxu0 0.0
    %2278 = vmatpush1.msra.mxu0 0.0
    %2279 = vmatprep.subr.mxu0 0.0
    %2280 = vmatpush1.msra.mxu0 0.0
    %2281 = vmatprep.subr.mxu0 0.0
    %2282 = vmatpush1.msra.mxu0 0.0
    %2283 = vmatprep.subr.mxu0 0.0
    %2284 = vmatpush1.msra.mxu0 0.0
    %2285 = vmatprep.subr.mxu0 0.0
    %2286 = vmatpush1.msra.mxu0 0.0
    %2287 = vmatprep.subr.mxu0 0.0
    %2288 = vmatpush1.msra.mxu0 0.0
    %2289 = vmatprep.subr.mxu0 0.0
    %2290 = vmatpush1.msra.mxu0 0.0
    %2291 = vmatprep.subr.mxu0 0.0
    %2292 = vmatpush1.msra.mxu0 0.0
    %2293 = vmatprep.subr.mxu0 0.0
    %2294 = vmatpush1.msra.mxu0 0.0
    %2295 = vmatprep.subr.mxu0 0.0
    %2296 = vmatpush1.msra.mxu0 0.0
    %2297 = vmatprep.subr.mxu0 0.0
    %2298 = vmatpush1.msra.mxu0 0.0
    %2299 = vmatprep.subr.mxu0 0.0
    %2300 = vmatpush1.msra.mxu0 0.0
    %2301 = vmatprep.subr.mxu0 0.0
    %2302 = vmatpush1.msra.mxu0 0.0
    %2303 = vmatprep.subr.mxu0 0.0
    %2304 = vmatpush1.msra.mxu0 0.0
    %2305 = vmatprep.subr.mxu0 0.0
    %2306 = vmatpush1.msra.mxu0 0.0
    %2307 = vmatprep.subr.mxu0 0.0
    %2308 = vmatpush1.msra.mxu0 0.0
    %2309 = vmatprep.subr.mxu0 0.0
    %2310 = vmatpush1.msra.mxu0 0.0
    %2311 = vmatprep.subr.mxu0 0.0
    %2312 = vmatpush1.msra.mxu0 0.0
    %2313 = vmatprep.subr.mxu0 0.0
    %2314 = vmatpush1.msra.mxu0 0.0
    %2315 = vmatprep.subr.mxu0 0.0
    %2316 = vmatpush1.msra.mxu0 0.0
    %2317 = vmatprep.subr.mxu0 0.0
    %2318 = vmatpush1.msra.mxu0 0.0
    %2319 = vmatprep.subr.mxu0 0.0
    %2320 = vmatpush1.msra.mxu0 0.0
    %2321 = vmatprep.subr.mxu0 0.0
    %2322 = vmatpush1.msra.mxu0 0.0
    %2323 = vmatprep.subr.mxu0 0.0
    %2324 = vmatpush1.msra.mxu0 0.0
    %2325 = vmatprep.subr.mxu0 0.0
    %2326 = vmatpush1.msra.mxu0 0.0
    %2327 = vmatprep.subr.mxu0 0.0
    %2328 = vmatpush1.msra.mxu0 0.0
    %2329 = vmatprep.subr.mxu0 0.0
    %2330 = vmatpush1.msra.mxu0 0.0
    %2331 = vmatprep.subr.mxu0 0.0
    %2332 = vmatpush1.msra.mxu0 0.0
    %2333 = vmatprep.subr.mxu0 0.0
    %2334 = vmatpush1.msra.mxu0 0.0
    %2335 = vmatprep.mubr.f32.mxu0 0.0
    %2336 = vmatmul.mubr.f32.gmra.mrb[0].mxu0 %v2269
    %v2337 = vpop.f32.mrb[0].mxu0
    %v2338 = vadd.f32 0.0, %v2337
    %v2339 = vpop.f32.mrb[0].mxu0
    %v2340 = vadd.f32 0.0, %v2339
    %2341 = vdwg.mxu0
    %s2342 = scalar_lea.vmem [#allocation2], 512
    %v2343 = vld [vmem:[%s2342] sm:$0xff]
    %v2344 = vld [vmem:[%s2342 + $0x8] sm:$0xff]
    %v2345 = vld [vmem:[%s2342 + $0x10] sm:$0xff]
    %v2346 = vld [vmem:[%s2342 + $0x18] sm:$0xff]
    %v2347 = vld [vmem:[%s2342 + $0x20] sm:$0xff]
    %v2348 = vld [vmem:[%s2342 + $0x28] sm:$0xff]
    %v2349 = vld [vmem:[%s2342 + $0x30] sm:$0xff]
    %v2350 = vld [vmem:[%s2342 + $0x38] sm:$0xff]
    %v2351 = vld [vmem:[%s2342 + $0x40] sm:$0xff]
    %v2352 = vld [vmem:[%s2342 + $0x48] sm:$0xff]
    %v2353 = vld [vmem:[%s2342 + $0x50] sm:$0xff]
    %v2354 = vld [vmem:[%s2342 + $0x58] sm:$0xff]
    %v2355 = vld [vmem:[%s2342 + $0x60] sm:$0xff]
    %v2356 = vld [vmem:[%s2342 + $0x68] sm:$0xff]
    %v2357 = vld [vmem:[%s2342 + $0x70] sm:$0xff]
    %v2358 = vld [vmem:[%s2342 + $0x78] sm:$0xff]
    %v2359 = vld [vmem:[%s2342 + $0x80] sm:$0xff]
    %v2360 = vld [vmem:[%s2342 + $0x88] sm:$0xff]
    %v2361 = vld [vmem:[%s2342 + $0x90] sm:$0xff]
    %v2362 = vld [vmem:[%s2342 + $0x98] sm:$0xff]
    %v2363 = vld [vmem:[%s2342 + $0xa0] sm:$0xff]
    %v2364 = vld [vmem:[%s2342 + $0xa8] sm:$0xff]
    %v2365 = vld [vmem:[%s2342 + $0xb0] sm:$0xff]
    %v2366 = vld [vmem:[%s2342 + $0xb8] sm:$0xff]
    %v2367 = vld [vmem:[%s2342 + $0xc0] sm:$0xff]
    %v2368 = vld [vmem:[%s2342 + $0xc8] sm:$0xff]
    %v2369 = vld [vmem:[%s2342 + $0xd0] sm:$0xff]
    %v2370 = vld [vmem:[%s2342 + $0xd8] sm:$0xff]
    %v2371 = vld [vmem:[%s2342 + $0xe0] sm:$0xff]
    %v2372 = vld [vmem:[%s2342 + $0xe8] sm:$0xff]
    %v2373 = vld [vmem:[%s2342 + $0xf0] sm:$0xff]
    %v2374 = vld [vmem:[%s2342 + $0xf8] sm:$0xff]
    %2375 = vmatprep.subr.mxu0 0.0
    %2376 = vmatpush1.msra.mxu0 %v2343
    %2377 = vmatprep.subr.mxu0 0.0
    %2378 = vmatpush1.msra.mxu0 %v2344
    %2379 = vmatprep.subr.mxu0 0.0
    %2380 = vmatpush1.msra.mxu0 %v2345
    %2381 = vmatprep.subr.mxu0 0.0
    %2382 = vmatpush1.msra.mxu0 %v2346
    %2383 = vmatprep.subr.mxu0 0.0
    %2384 = vmatpush1.msra.mxu0 %v2347
    %2385 = vmatprep.subr.mxu0 0.0
    %2386 = vmatpush1.msra.mxu0 %v2348
    %2387 = vmatprep.subr.mxu0 0.0
    %2388 = vmatpush1.msra.mxu0 %v2349
    %2389 = vmatprep.subr.mxu0 0.0
    %2390 = vmatpush1.msra.mxu0 %v2350
    %2391 = vmatprep.subr.mxu0 0.0
    %2392 = vmatpush1.msra.mxu0 %v2351
    %2393 = vmatprep.subr.mxu0 0.0
    %2394 = vmatpush1.msra.mxu0 %v2352
    %2395 = vmatprep.subr.mxu0 0.0
    %2396 = vmatpush1.msra.mxu0 %v2353
    %2397 = vmatprep.subr.mxu0 0.0
    %2398 = vmatpush1.msra.mxu0 %v2354
    %2399 = vmatprep.subr.mxu0 0.0
    %2400 = vmatpush1.msra.mxu0 %v2355
    %2401 = vmatprep.subr.mxu0 0.0
    %2402 = vmatpush1.msra.mxu0 %v2356
    %2403 = vmatprep.subr.mxu0 0.0
    %2404 = vmatpush1.msra.mxu0 %v2357
    %2405 = vmatprep.subr.mxu0 0.0
    %2406 = vmatpush1.msra.mxu0 %v2358
    %2407 = vmatprep.subr.mxu0 0.0
    %2408 = vmatpush1.msra.mxu0 %v2359
    %2409 = vmatprep.subr.mxu0 0.0
    %2410 = vmatpush1.msra.mxu0 %v2360
    %2411 = vmatprep.subr.mxu0 0.0
    %2412 = vmatpush1.msra.mxu0 %v2361
    %2413 = vmatprep.subr.mxu0 0.0
    %2414 = vmatpush1.msra.mxu0 %v2362
    %2415 = vmatprep.subr.mxu0 0.0
    %2416 = vmatpush1.msra.mxu0 %v2363
    %2417 = vmatprep.subr.mxu0 0.0
    %2418 = vmatpush1.msra.mxu0 %v2364
    %2419 = vmatprep.subr.mxu0 0.0
    %2420 = vmatpush1.msra.mxu0 %v2365
    %2421 = vmatprep.subr.mxu0 0.0
    %2422 = vmatpush1.msra.mxu0 %v2366
    %2423 = vmatprep.subr.mxu0 0.0
    %2424 = vmatpush1.msra.mxu0 %v2367
    %2425 = vmatprep.subr.mxu0 0.0
    %2426 = vmatpush1.msra.mxu0 %v2368
    %2427 = vmatprep.subr.mxu0 0.0
    %2428 = vmatpush1.msra.mxu0 %v2369
    %2429 = vmatprep.subr.mxu0 0.0
    %2430 = vmatpush1.msra.mxu0 %v2370
    %2431 = vmatprep.subr.mxu0 0.0
    %2432 = vmatpush1.msra.mxu0 %v2371
    %2433 = vmatprep.subr.mxu0 0.0
    %2434 = vmatpush1.msra.mxu0 %v2372
    %2435 = vmatprep.subr.mxu0 0.0
    %2436 = vmatpush1.msra.mxu0 %v2373
    %2437 = vmatprep.subr.mxu0 0.0
    %2438 = vmatpush1.msra.mxu0 %v2374
    %2439 = vmatprep.mubr.f32.mxu0 %v2340
    %2440 = vmatmul.mubr.f32.gmra.mrb[0].mxu0 %v2338
    %v2441 = vpop.f32.mrb[0].mxu0
    %v2442 = vadd.f32 0.0, %v2441
    %v2443 = vpop.f32.mrb[0].mxu0
    %2444 = vdwg.mxu0
    %v2445 = vadd.f32 %v2263, %v2442
    %v2446 = vld [vmem:[%s6] sm:$0x1]
    %v2448 = vlaneseq
    %v2449 = vshrl.u32 %v2448, 7
    %v2450 = vsub.s32 0, %v2449
    %v2451 = vrot.slane %v2446, %v2450
    %v2453 = vadd.f32 %v2445, %v2451
    %v2454 = vmax.f32 %v2453, 0.0
    %v2455 = vld [vmem:[%s8] sm:$0x1]
    %v2456 = vld [vmem:[%s7] sm:$0xff]
    %v2457 = vld [vmem:[%s7 + $0x8] sm:$0xff]
    %v2458 = vld [vmem:[%s7 + $0x10] sm:$0xff]
    %v2459 = vld [vmem:[%s7 + $0x18] sm:$0xff]
    %v2460 = vld [vmem:[%s7 + $0x20] sm:$0xff]
    %v2461 = vld [vmem:[%s7 + $0x28] sm:$0xff]
    %v2462 = vld [vmem:[%s7 + $0x30] sm:$0xff]
    %v2463 = vld [vmem:[%s7 + $0x38] sm:$0xff]
    %v2464 = vld [vmem:[%s7 + $0x40] sm:$0xff]
    %v2465 = vld [vmem:[%s7 + $0x48] sm:$0xff]
    %v2466 = vld [vmem:[%s7 + $0x50] sm:$0xff]
    %v2467 = vld [vmem:[%s7 + $0x58] sm:$0xff]
    %v2468 = vld [vmem:[%s7 + $0x60] sm:$0xff]
    %v2469 = vld [vmem:[%s7 + $0x68] sm:$0xff]
    %v2470 = vld [vmem:[%s7 + $0x70] sm:$0xff]
    %v2471 = vld [vmem:[%s7 + $0x78] sm:$0xff]
    %2472 = vmatprep.subr.mxu0 0.0
    %2473 = vmatpush1.msra.mxu0 %v2456
    %2474 = vmatprep.subr.mxu0 0.0
    %2475 = vmatpush1.msra.mxu0 %v2457
    %2476 = vmatprep.subr.mxu0 0.0
    %2477 = vmatpush1.msra.mxu0 %v2458
    %2478 = vmatprep.subr.mxu0 0.0
    %2479 = vmatpush1.msra.mxu0 %v2459
    %2480 = vmatprep.subr.mxu0 0.0
    %2481 = vmatpush1.msra.mxu0 %v2460
    %2482 = vmatprep.subr.mxu0 0.0
    %2483 = vmatpush1.msra.mxu0 %v2461
    %2484 = vmatprep.subr.mxu0 0.0
    %2485 = vmatpush1.msra.mxu0 %v2462
    %2486 = vmatprep.subr.mxu0 0.0
    %2487 = vmatpush1.msra.mxu0 %v2463
    %2488 = vmatprep.subr.mxu0 0.0
    %2489 = vmatpush1.msra.mxu0 %v2464
    %2490 = vmatprep.subr.mxu0 0.0
    %2491 = vmatpush1.msra.mxu0 %v2465
    %2492 = vmatprep.subr.mxu0 0.0
    %2493 = vmatpush1.msra.mxu0 %v2466
    %2494 = vmatprep.subr.mxu0 0.0
    %2495 = vmatpush1.msra.mxu0 %v2467
    %2496 = vmatprep.subr.mxu0 0.0
    %2497 = vmatpush1.msra.mxu0 %v2468
    %2498 = vmatprep.subr.mxu0 0.0
    %2499 = vmatpush1.msra.mxu0 %v2469
    %2500 = vmatprep.subr.mxu0 0.0
    %2501 = vmatpush1.msra.mxu0 %v2470
    %2502 = vmatprep.subr.mxu0 0.0
    %2503 = vmatpush1.msra.mxu0 %v2471
    %2504 = vmatprep.subr.mxu0 0.0
    %2505 = vmatpush1.msra.mxu0 0.0
    %2506 = vmatprep.subr.mxu0 0.0
    %2507 = vmatpush1.msra.mxu0 0.0
    %2508 = vmatprep.subr.mxu0 0.0
    %2509 = vmatpush1.msra.mxu0 0.0
    %2510 = vmatprep.subr.mxu0 0.0
    %2511 = vmatpush1.msra.mxu0 0.0
    %2512 = vmatprep.subr.mxu0 0.0
    %2513 = vmatpush1.msra.mxu0 0.0
    %2514 = vmatprep.subr.mxu0 0.0
    %2515 = vmatpush1.msra.mxu0 0.0
    %2516 = vmatprep.subr.mxu0 0.0
    %2517 = vmatpush1.msra.mxu0 0.0
    %2518 = vmatprep.subr.mxu0 0.0
    %2519 = vmatpush1.msra.mxu0 0.0
    %2520 = vmatprep.subr.mxu0 0.0
    %2521 = vmatpush1.msra.mxu0 0.0
    %2522 = vmatprep.subr.mxu0 0.0
    %2523 = vmatpush1.msra.mxu0 0.0
    %2524 = vmatprep.subr.mxu0 0.0
    %2525 = vmatpush1.msra.mxu0 0.0
    %2526 = vmatprep.subr.mxu0 0.0
    %2527 = vmatpush1.msra.mxu0 0.0
    %2528 = vmatprep.subr.mxu0 0.0
    %2529 = vmatpush1.msra.mxu0 0.0
    %2530 = vmatprep.subr.mxu0 0.0
    %2531 = vmatpush1.msra.mxu0 0.0
    %2532 = vmatprep.subr.mxu0 0.0
    %2533 = vmatpush1.msra.mxu0 0.0
    %2534 = vmatprep.subr.mxu0 0.0
    %2535 = vmatpush1.msra.mxu0 0.0
    %2536 = vmatprep.mubr.f32.mxu0 0.0
    %2537 = vmatmul.mubr.f32.gmra.mrb[0].mxu0 %v2454
    %v2538 = vpop.f32.mrb[0].mxu0
    %v2539 = vadd.f32 0.0, %v2538
    %v2540 = vpop.f32.mrb[0].mxu0
    %2541 = vdwg.mxu0
    %v2542 = vadd.f32 %v2455, %v2539
    %s2543 = scalar_lea.vmem %s7, 128
    %v2544 = vld [vmem:[%s2543] sm:$0xff]
    %v2545 = vld [vmem:[%s2543 + $0x8] sm:$0xff]
    %v2546 = vld [vmem:[%s2543 + $0x10] sm:$0xff]
    %v2547 = vld [vmem:[%s2543 + $0x18] sm:$0xff]
    %v2548 = vld [vmem:[%s2543 + $0x20] sm:$0xff]
    %v2549 = vld [vmem:[%s2543 + $0x28] sm:$0xff]
    %v2550 = vld [vmem:[%s2543 + $0x30] sm:$0xff]
    %v2551 = vld [vmem:[%s2543 + $0x38] sm:$0xff]
    %v2552 = vld [vmem:[%s2543 + $0x40] sm:$0xff]
    %v2553 = vld [vmem:[%s2543 + $0x48] sm:$0xff]
    %v2554 = vld [vmem:[%s2543 + $0x50] sm:$0xff]
    %v2555 = vld [vmem:[%s2543 + $0x58] sm:$0xff]
    %v2556 = vld [vmem:[%s2543 + $0x60] sm:$0xff]
    %v2557 = vld [vmem:[%s2543 + $0x68] sm:$0xff]
    %v2558 = vld [vmem:[%s2543 + $0x70] sm:$0xff]
    %v2559 = vld [vmem:[%s2543 + $0x78] sm:$0xff]
    %v2561 = vrot.slane %v2454, 1
    %2563 = vmatprep.subr.mxu0 0.0
    %2564 = vmatpush1.msra.mxu0 %v2544
    %2565 = vmatprep.subr.mxu0 0.0
    %2566 = vmatpush1.msra.mxu0 %v2545
    %2567 = vmatprep.subr.mxu0 0.0
    %2568 = vmatpush1.msra.mxu0 %v2546
    %2569 = vmatprep.subr.mxu0 0.0
    %2570 = vmatpush1.msra.mxu0 %v2547
    %2571 = vmatprep.subr.mxu0 0.0
    %2572 = vmatpush1.msra.mxu0 %v2548
    %2573 = vmatprep.subr.mxu0 0.0
    %2574 = vmatpush1.msra.mxu0 %v2549
    %2575 = vmatprep.subr.mxu0 0.0
    %2576 = vmatpush1.msra.mxu0 %v2550
    %2577 = vmatprep.subr.mxu0 0.0
    %2578 = vmatpush1.msra.mxu0 %v2551
    %2579 = vmatprep.subr.mxu0 0.0
    %2580 = vmatpush1.msra.mxu0 %v2552
    %2581 = vmatprep.subr.mxu0 0.0
    %2582 = vmatpush1.msra.mxu0 %v2553
    %2583 = vmatprep.subr.mxu0 0.0
    %2584 = vmatpush1.msra.mxu0 %v2554
    %2585 = vmatprep.subr.mxu0 0.0
    %2586 = vmatpush1.msra.mxu0 %v2555
    %2587 = vmatprep.subr.mxu0 0.0
    %2588 = vmatpush1.msra.mxu0 %v2556
    %2589 = vmatprep.subr.mxu0 0.0
    %2590 = vmatpush1.msra.mxu0 %v2557
    %2591 = vmatprep.subr.mxu0 0.0
    %2592 = vmatpush1.msra.mxu0 %v2558
    %2593 = vmatprep.subr.mxu0 0.0
    %2594 = vmatpush1.msra.mxu0 %v2559
    %2595 = vmatprep.subr.mxu0 0.0
    %2596 = vmatpush1.msra.mxu0 0.0
    %2597 = vmatprep.subr.mxu0 0.0
    %2598 = vmatpush1.msra.mxu0 0.0
    %2599 = vmatprep.subr.mxu0 0.0
    %2600 = vmatpush1.msra.mxu0 0.0
    %2601 = vmatprep.subr.mxu0 0.0
    %2602 = vmatpush1.msra.mxu0 0.0
    %2603 = vmatprep.subr.mxu0 0.0
    %2604 = vmatpush1.msra.mxu0 0.0
    %2605 = vmatprep.subr.mxu0 0.0
    %2606 = vmatpush1.msra.mxu0 0.0
    %2607 = vmatprep.subr.mxu0 0.0
    %2608 = vmatpush1.msra.mxu0 0.0
    %2609 = vmatprep.subr.mxu0 0.0
    %2610 = vmatpush1.msra.mxu0 0.0
    %2611 = vmatprep.subr.mxu0 0.0
    %2612 = vmatpush1.msra.mxu0 0.0
    %2613 = vmatprep.subr.mxu0 0.0
    %2614 = vmatpush1.msra.mxu0 0.0
    %2615 = vmatprep.subr.mxu0 0.0
    %2616 = vmatpush1.msra.mxu0 0.0
    %2617 = vmatprep.subr.mxu0 0.0
    %2618 = vmatpush1.msra.mxu0 0.0
    %2619 = vmatprep.subr.mxu0 0.0
    %2620 = vmatpush1.msra.mxu0 0.0
    %2621 = vmatprep.subr.mxu0 0.0
    %2622 = vmatpush1.msra.mxu0 0.0
    %2623 = vmatprep.subr.mxu0 0.0
    %2624 = vmatpush1.msra.mxu0 0.0
    %2625 = vmatprep.subr.mxu0 0.0
    %2626 = vmatpush1.msra.mxu0 0.0
    %2627 = vmatprep.mubr.f32.mxu0 0.0
    %2628 = vmatmul.mubr.f32.gmra.mrb[0].mxu0 %v2561
    %v2629 = vpop.f32.mrb[0].mxu0
    %v2630 = vadd.f32 0.0, %v2629
    %v2631 = vpop.f32.mrb[0].mxu0
    %2632 = vdwg.mxu0
    %v2633 = vadd.f32 %v2542, %v2630
    %s2634 = scalar_lea.vmem %s7, 256
    %v2635 = vld [vmem:[%s2634] sm:$0xff]
    %v2636 = vld [vmem:[%s2634 + $0x8] sm:$0xff]
    %v2637 = vld [vmem:[%s2634 + $0x10] sm:$0xff]
    %v2638 = vld [vmem:[%s2634 + $0x18] sm:$0xff]
    %v2639 = vld [vmem:[%s2634 + $0x20] sm:$0xff]
    %v2640 = vld [vmem:[%s2634 + $0x28] sm:$0xff]
    %v2641 = vld [vmem:[%s2634 + $0x30] sm:$0xff]
    %v2642 = vld [vmem:[%s2634 + $0x38] sm:$0xff]
    %v2643 = vld [vmem:[%s2634 + $0x40] sm:$0xff]
    %v2644 = vld [vmem:[%s2634 + $0x48] sm:$0xff]
    %v2645 = vld [vmem:[%s2634 + $0x50] sm:$0xff]
    %v2646 = vld [vmem:[%s2634 + $0x58] sm:$0xff]
    %v2647 = vld [vmem:[%s2634 + $0x60] sm:$0xff]
    %v2648 = vld [vmem:[%s2634 + $0x68] sm:$0xff]
    %v2649 = vld [vmem:[%s2634 + $0x70] sm:$0xff]
    %v2650 = vld [vmem:[%s2634 + $0x78] sm:$0xff]
    %v2651 = vrot.slane %v2454, 2
    %2653 = vmatprep.subr.mxu0 0.0
    %2654 = vmatpush1.msra.mxu0 %v2635
    %2655 = vmatprep.subr.mxu0 0.0
    %2656 = vmatpush1.msra.mxu0 %v2636
    %2657 = vmatprep.subr.mxu0 0.0
    %2658 = vmatpush1.msra.mxu0 %v2637
    %2659 = vmatprep.subr.mxu0 0.0
    %2660 = vmatpush1.msra.mxu0 %v2638
    %2661 = vmatprep.subr.mxu0 0.0
    %2662 = vmatpush1.msra.mxu0 %v2639
    %2663 = vmatprep.subr.mxu0 0.0
    %2664 = vmatpush1.msra.mxu0 %v2640
    %2665 = vmatprep.subr.mxu0 0.0
    %2666 = vmatpush1.msra.mxu0 %v2641
    %2667 = vmatprep.subr.mxu0 0.0
    %2668 = vmatpush1.msra.mxu0 %v2642
    %2669 = vmatprep.subr.mxu0 0.0
    %2670 = vmatpush1.msra.mxu0 %v2643
    %2671 = vmatprep.subr.mxu0 0.0
    %2672 = vmatpush1.msra.mxu0 %v2644
    %2673 = vmatprep.subr.mxu0 0.0
    %2674 = vmatpush1.msra.mxu0 %v2645
    %2675 = vmatprep.subr.mxu0 0.0
    %2676 = vmatpush1.msra.mxu0 %v2646
    %2677 = vmatprep.subr.mxu0 0.0
    %2678 = vmatpush1.msra.mxu0 %v2647
    %2679 = vmatprep.subr.mxu0 0.0
    %2680 = vmatpush1.msra.mxu0 %v2648
    %2681 = vmatprep.subr.mxu0 0.0
    %2682 = vmatpush1.msra.mxu0 %v2649
    %2683 = vmatprep.subr.mxu0 0.0
    %2684 = vmatpush1.msra.mxu0 %v2650
    %2685 = vmatprep.subr.mxu0 0.0
    %2686 = vmatpush1.msra.mxu0 0.0
    %2687 = vmatprep.subr.mxu0 0.0
    %2688 = vmatpush1.msra.mxu0 0.0
    %2689 = vmatprep.subr.mxu0 0.0
    %2690 = vmatpush1.msra.mxu0 0.0
    %2691 = vmatprep.subr.mxu0 0.0
    %2692 = vmatpush1.msra.mxu0 0.0
    %2693 = vmatprep.subr.mxu0 0.0
    %2694 = vmatpush1.msra.mxu0 0.0
    %2695 = vmatprep.subr.mxu0 0.0
    %2696 = vmatpush1.msra.mxu0 0.0
    %2697 = vmatprep.subr.mxu0 0.0
    %2698 = vmatpush1.msra.mxu0 0.0
    %2699 = vmatprep.subr.mxu0 0.0
    %2700 = vmatpush1.msra.mxu0 0.0
    %2701 = vmatprep.subr.mxu0 0.0
    %2702 = vmatpush1.msra.mxu0 0.0
    %2703 = vmatprep.subr.mxu0 0.0
    %2704 = vmatpush1.msra.mxu0 0.0
    %2705 = vmatprep.subr.mxu0 0.0
    %2706 = vmatpush1.msra.mxu0 0.0
    %2707 = vmatprep.subr.mxu0 0.0
    %2708 = vmatpush1.msra.mxu0 0.0
    %2709 = vmatprep.subr.mxu0 0.0
    %2710 = vmatpush1.msra.mxu0 0.0
    %2711 = vmatprep.subr.mxu0 0.0
    %2712 = vmatpush1.msra.mxu0 0.0
    %2713 = vmatprep.subr.mxu0 0.0
    %2714 = vmatpush1.msra.mxu0 0.0
    %2715 = vmatprep.subr.mxu0 0.0
    %2716 = vmatpush1.msra.mxu0 0.0
    %2717 = vmatprep.mubr.f32.mxu0 0.0
    %2718 = vmatmul.mubr.f32.gmra.mrb[0].mxu0 %v2651
    %v2719 = vpop.f32.mrb[0].mxu0
    %v2720 = vadd.f32 0.0, %v2719
    %v2721 = vpop.f32.mrb[0].mxu0
    %2722 = vdwg.mxu0
    %v2723 = vadd.f32 %v2633, %v2720
    %vm2724 = vcmask 401408
    %v2725 = vsel %vm2724, %v2723, 0.0
    %2726 = vadd.xlane.f32.xlu0 %v2725
    %v2727 = vpop.xlane.xlu0 %2726
    %v2728 = vrcp.pop 50.0
    %v2729 = vmul.f32 %v2727, %v2728
    %v2730 = vsub.f32 %v2723, %v2729
    %v2731 = vmul.f32 %v2730, %v2730
    %v2732 = vsel %vm2724, %v2731, 0.0
    %2733 = vadd.xlane.f32.xlu0 %v2732
    %v2734 = vpop.xlane.xlu0 %2733
    %v2735 = vmul.f32 %v2734, %v2728
    %v2736 = vadd.f32 %v2735, 1e-05
    %v2737 = vrsqrt.pop %v2736
    %v2738 = vmul.f32 %v2730, %v2737
    %v2739 = vld [vmem:[%s9] sm:$0x1]
    %v2740 = vmul.f32 %v2738, %v2739
    %v2741 = vld [vmem:[%s10] sm:$0x1]
    %v2742 = vadd.f32 %v2740, %v2741
    %v2743 = vtanh.pop %v2742
    %2744 = vst.msk [vmem:[#allocation5] sm:$0x1] %vm2724, %v2743
    %s2745 = scalar_lea.vmem %s0, 64
    %v2746 = vld [vmem:[%s2745] sm:$0xff]
    %v2747 = vld [vmem:[%s2745 + $0x8] sm:$0xff]
    %v2748 = vld [vmem:[%s1] sm:$0x7f]
    %v2750 = vsel %vm56, %v2748, 0
    %2752 = vmatprep.subr.mxu0 0.0
    %2753 = vmatpush1.msra.mxu0 %v2746
    %2754 = vmatprep.subr.mxu0 0.0
    %2755 = vmatpush1.msra.mxu0 %v2747
    %2756 = vmatprep.subr.mxu0 0.0
    %2757 = vmatpush1.msra.mxu0 0.0
    %2758 = vmatprep.subr.mxu0 0.0
    %2759 = vmatpush1.msra.mxu0 0.0
    %2760 = vmatprep.subr.mxu0 0.0
    %2761 = vmatpush1.msra.mxu0 0.0
    %2762 = vmatprep.subr.mxu0 0.0
    %2763 = vmatpush1.msra.mxu0 0.0
    %2764 = vmatprep.subr.mxu0 0.0
    %2765 = vmatpush1.msra.mxu0 0.0
    %2766 = vmatprep.subr.mxu0 0.0
    %2767 = vmatpush1.msra.mxu0 0.0
    %2768 = vmatprep.subr.mxu0 0.0
    %2769 = vmatpush1.msra.mxu0 0.0
    %2770 = vmatprep.subr.mxu0 0.0
    %2771 = vmatpush1.msra.mxu0 0.0
    %2772 = vmatprep.subr.mxu0 0.0
    %2773 = vmatpush1.msra.mxu0 0.0
    %2774 = vmatprep.subr.mxu0 0.0
    %2775 = vmatpush1.msra.mxu0 0.0
    %2776 = vmatprep.subr.mxu0 0.0
    %2777 = vmatpush1.msra.mxu0 0.0
    %2778 = vmatprep.subr.mxu0 0.0
    %2779 = vmatpush1.msra.mxu0 0.0
    %2780 = vmatprep.subr.mxu0 0.0
    %2781 = vmatpush1.msra.mxu0 0.0
    %2782 = vmatprep.subr.mxu0 0.0
    %2783 = vmatpush1.msra.mxu0 0.0
    %2784 = vmatprep.subr.mxu0 0.0
    %2785 = vmatpush1.msra.mxu0 0.0
    %2786 = vmatprep.subr.mxu0 0.0
    %2787 = vmatpush1.msra.mxu0 0.0
    %2788 = vmatprep.subr.mxu0 0.0
    %2789 = vmatpush1.msra.mxu0 0.0
    %2790 = vmatprep.subr.mxu0 0.0
    %2791 = vmatpush1.msra.mxu0 0.0
    %2792 = vmatprep.subr.mxu0 0.0
    %2793 = vmatpush1.msra.mxu0 0.0
    %2794 = vmatprep.subr.mxu0 0.0
    %2795 = vmatpush1.msra.mxu0 0.0
    %2796 = vmatprep.subr.mxu0 0.0
    %2797 = vmatpush1.msra.mxu0 0.0
    %2798 = vmatprep.subr.mxu0 0.0
    %2799 = vmatpush1.msra.mxu0 0.0
    %2800 = vmatprep.subr.mxu0 0.0
    %2801 = vmatpush1.msra.mxu0 0.0
    %2802 = vmatprep.subr.mxu0 0.0
    %2803 = vmatpush1.msra.mxu0 0.0
    %2804 = vmatprep.subr.mxu0 0.0
    %2805 = vmatpush1.msra.mxu0 0.0
    %2806 = vmatprep.subr.mxu0 0.0
    %2807 = vmatpush1.msra.mxu0 0.0
    %2808 = vmatprep.subr.mxu0 0.0
    %2809 = vmatpush1.msra.mxu0 0.0
    %2810 = vmatprep.subr.mxu0 0.0
    %2811 = vmatpush1.msra.mxu0 0.0
    %2812 = vmatprep.subr.mxu0 0.0
    %2813 = vmatpush1.msra.mxu0 0.0
    %2814 = vmatprep.subr.mxu0 0.0
    %2815 = vmatpush1.msra.mxu0 0.0
    %2816 = vmatprep.mubr.f32.mxu0 0.0
    %2817 = vmatmul.mubr.f32.gmra.mrb[0].mxu0 %v2750
    %v2818 = vpop.f32.mrb[0].mxu0
    %v2819 = vadd.f32 0.0, %v2818
    %v2820 = vpop.f32.mrb[0].mxu0
    %2821 = vdwg.mxu0
    %v2822 = vld [vmem:[%s3] sm:$0xff]
    %v2823 = vld [vmem:[%s3 + $0x8] sm:$0xff]
    %v2824 = vld [vmem:[%s3 + $0x10] sm:$0xff]
    %v2825 = vld [vmem:[%s3 + $0x18] sm:$0xff]
    %v2826 = vld [vmem:[%s134] sm:$0x7f]
    %v2828 = vsel %vm56, %v2826, 0
    %2830 = vmatprep.subr.mxu0 0.0
    %2831 = vmatpush1.msra.mxu0 %v2746
    %2832 = vmatprep.subr.mxu0 0.0
    %2833 = vmatpush1.msra.mxu0 %v2747
    %2834 = vmatprep.subr.mxu0 0.0
    %2835 = vmatpush1.msra.mxu0 0.0
    %2836 = vmatprep.subr.mxu0 0.0
    %2837 = vmatpush1.msra.mxu0 0.0
    %2838 = vmatprep.subr.mxu0 0.0
    %2839 = vmatpush1.msra.mxu0 0.0
    %2840 = vmatprep.subr.mxu0 0.0
    %2841 = vmatpush1.msra.mxu0 0.0
    %2842 = vmatprep.subr.mxu0 0.0
    %2843 = vmatpush1.msra.mxu0 0.0
    %2844 = vmatprep.subr.mxu0 0.0
    %2845 = vmatpush1.msra.mxu0 0.0
    %2846 = vmatprep.subr.mxu0 0.0
    %2847 = vmatpush1.msra.mxu0 0.0
    %2848 = vmatprep.subr.mxu0 0.0
    %2849 = vmatpush1.msra.mxu0 0.0
    %2850 = vmatprep.subr.mxu0 0.0
    %2851 = vmatpush1.msra.mxu0 0.0
    %2852 = vmatprep.subr.mxu0 0.0
    %2853 = vmatpush1.msra.mxu0 0.0
    %2854 = vmatprep.subr.mxu0 0.0
    %2855 = vmatpush1.msra.mxu0 0.0
    %2856 = vmatprep.subr.mxu0 0.0
    %2857 = vmatpush1.msra.mxu0 0.0
    %2858 = vmatprep.subr.mxu0 0.0
    %2859 = vmatpush1.msra.mxu0 0.0
    %2860 = vmatprep.subr.mxu0 0.0
    %2861 = vmatpush1.msra.mxu0 0.0
    %2862 = vmatprep.subr.mxu0 0.0
    %2863 = vmatpush1.msra.mxu0 0.0
    %2864 = vmatprep.subr.mxu0 0.0
    %2865 = vmatpush1.msra.mxu0 0.0
    %2866 = vmatprep.subr.mxu0 0.0
    %2867 = vmatpush1.msra.mxu0 0.0
    %2868 = vmatprep.subr.mxu0 0.0
    %2869 = vmatpush1.msra.mxu0 0.0
    %2870 = vmatprep.subr.mxu0 0.0
    %2871 = vmatpush1.msra.mxu0 0.0
    %2872 = vmatprep.subr.mxu0 0.0
    %2873 = vmatpush1.msra.mxu0 0.0
    %2874 = vmatprep.subr.mxu0 0.0
    %2875 = vmatpush1.msra.mxu0 0.0
    %2876 = vmatprep.subr.mxu0 0.0
    %2877 = vmatpush1.msra.mxu0 0.0
    %2878 = vmatprep.subr.mxu0 0.0
    %2879 = vmatpush1.msra.mxu0 0.0
    %2880 = vmatprep.subr.mxu0 0.0
    %2881 = vmatpush1.msra.mxu0 0.0
    %2882 = vmatprep.subr.mxu0 0.0
    %2883 = vmatpush1.msra.mxu0 0.0
    %2884 = vmatprep.subr.mxu0 0.0
    %2885 = vmatpush1.msra.mxu0 0.0
    %2886 = vmatprep.subr.mxu0 0.0
    %2887 = vmatpush1.msra.mxu0 0.0
    %2888 = vmatprep.subr.mxu0 0.0
    %2889 = vmatpush1.msra.mxu0 0.0
    %2890 = vmatprep.subr.mxu0 0.0
    %2891 = vmatpush1.msra.mxu0 0.0
    %2892 = vmatprep.subr.mxu0 0.0
    %2893 = vmatpush1.msra.mxu0 0.0
    %2894 = vmatprep.mubr.f32.mxu0 0.0
    %2895 = vmatmul.mubr.f32.gmra.mrb[0].mxu0 %v2828
    %v2896 = vpop.f32.mrb[0].mxu0
    %v2897 = vadd.f32 0.0, %v2896
    %v2898 = vpop.f32.mrb[0].mxu0
    %2899 = vdwg.mxu0
    %v2900 = vld [vmem:[%s209] sm:$0xff]
    %v2901 = vld [vmem:[%s209 + $0x8] sm:$0xff]
    %v2902 = vld [vmem:[%s209 + $0x10] sm:$0xff]
    %v2903 = vld [vmem:[%s209 + $0x18] sm:$0xff]
    %v2905 = vsel %vm56, %v2897, 0
    %2907 = vmatprep.subr.mxu0 %v2901
    %2908 = vmatpush1.msra.mxu0 %v2900
    %2909 = vmatprep.subr.mxu0 %v2903
    %2910 = vmatpush1.msra.mxu0 %v2902
    %2911 = vmatprep.subr.mxu0 0.0
    %2912 = vmatpush1.msra.mxu0 0.0
    %2913 = vmatprep.subr.mxu0 0.0
    %2914 = vmatpush1.msra.mxu0 0.0
    %2915 = vmatprep.subr.mxu0 0.0
    %2916 = vmatpush1.msra.mxu0 0.0
    %2917 = vmatprep.subr.mxu0 0.0
    %2918 = vmatpush1.msra.mxu0 0.0
    %2919 = vmatprep.subr.mxu0 0.0
    %2920 = vmatpush1.msra.mxu0 0.0
    %2921 = vmatprep.subr.mxu0 0.0
    %2922 = vmatpush1.msra.mxu0 0.0
    %2923 = vmatprep.subr.mxu0 0.0
    %2924 = vmatpush1.msra.mxu0 0.0
    %2925 = vmatprep.subr.mxu0 0.0
    %2926 = vmatpush1.msra.mxu0 0.0
    %2927 = vmatprep.subr.mxu0 0.0
    %2928 = vmatpush1.msra.mxu0 0.0
    %2929 = vmatprep.subr.mxu0 0.0
    %2930 = vmatpush1.msra.mxu0 0.0
    %2931 = vmatprep.subr.mxu0 0.0
    %2932 = vmatpush1.msra.mxu0 0.0
    %2933 = vmatprep.subr.mxu0 0.0
    %2934 = vmatpush1.msra.mxu0 0.0
    %2935 = vmatprep.subr.mxu0 0.0
    %2936 = vmatpush1.msra.mxu0 0.0
    %2937 = vmatprep.subr.mxu0 0.0
    %2938 = vmatpush1.msra.mxu0 0.0
    %2939 = vmatprep.subr.mxu0 0.0
    %2940 = vmatpush1.msra.mxu0 0.0
    %2941 = vmatprep.subr.mxu0 0.0
    %2942 = vmatpush1.msra.mxu0 0.0
    %2943 = vmatprep.subr.mxu0 0.0
    %2944 = vmatpush1.msra.mxu0 0.0
    %2945 = vmatprep.subr.mxu0 0.0
    %2946 = vmatpush1.msra.mxu0 0.0
    %2947 = vmatprep.subr.mxu0 0.0
    %2948 = vmatpush1.msra.mxu0 0.0
    %2949 = vmatprep.subr.mxu0 0.0
    %2950 = vmatpush1.msra.mxu0 0.0
    %2951 = vmatprep.subr.mxu0 0.0
    %2952 = vmatpush1.msra.mxu0 0.0
    %2953 = vmatprep.subr.mxu0 0.0
    %2954 = vmatpush1.msra.mxu0 0.0
    %2955 = vmatprep.subr.mxu0 0.0
    %2956 = vmatpush1.msra.mxu0 0.0
    %2957 = vmatprep.subr.mxu0 0.0
    %2958 = vmatpush1.msra.mxu0 0.0
    %2959 = vmatprep.subr.mxu0 0.0
    %2960 = vmatpush1.msra.mxu0 0.0
    %2961 = vmatprep.subr.mxu0 0.0
    %2962 = vmatpush1.msra.mxu0 0.0
    %2963 = vmatprep.subr.mxu0 0.0
    %2964 = vmatpush1.msra.mxu0 0.0
    %2965 = vmatprep.subr.mxu0 0.0
    %2966 = vmatpush1.msra.mxu0 0.0
    %2967 = vmatprep.subr.mxu0 0.0
    %2968 = vmatpush1.msra.mxu0 0.0
    %2969 = vmatprep.subr.mxu0 0.0
    %2970 = vmatpush1.msra.mxu0 0.0
    %2971 = vmatprep.mubr.f32.mxu0 0.0
    %2972 = vmatmul.mubr.f32.gmra.mrb[0].mxu0 %v2905
    %v2973 = vpop.f32.mrb[0].mxu0
    %v2974 = vadd.f32 0.0, %v2973
    %v2975 = vpop.f32.mrb[0].mxu0
    %v2976 = vadd.f32 0.0, %v2975
    %2977 = vdwg.mxu0
    %v2979 = vsel %vm56, %v2819, 0
    %2981 = vmatprep.subr.mxu0 %v2823
    %2982 = vmatpush1.msra.mxu0 %v2822
    %2983 = vmatprep.subr.mxu0 %v2825
    %2984 = vmatpush1.msra.mxu0 %v2824
    %2985 = vmatprep.subr.mxu0 0.0
    %2986 = vmatpush1.msra.mxu0 0.0
    %2987 = vmatprep.subr.mxu0 0.0
    %2988 = vmatpush1.msra.mxu0 0.0
    %2989 = vmatprep.subr.mxu0 0.0
    %2990 = vmatpush1.msra.mxu0 0.0
    %2991 = vmatprep.subr.mxu0 0.0
    %2992 = vmatpush1.msra.mxu0 0.0
    %2993 = vmatprep.subr.mxu0 0.0
    %2994 = vmatpush1.msra.mxu0 0.0
    %2995 = vmatprep.subr.mxu0 0.0
    %2996 = vmatpush1.msra.mxu0 0.0
    %2997 = vmatprep.subr.mxu0 0.0
    %2998 = vmatpush1.msra.mxu0 0.0
    %2999 = vmatprep.subr.mxu0 0.0
    %3000 = vmatpush1.msra.mxu0 0.0
    %3001 = vmatprep.subr.mxu0 0.0
    %3002 = vmatpush1.msra.mxu0 0.0
    %3003 = vmatprep.subr.mxu0 0.0
    %3004 = vmatpush1.msra.mxu0 0.0
    %3005 = vmatprep.subr.mxu0 0.0
    %3006 = vmatpush1.msra.mxu0 0.0
    %3007 = vmatprep.subr.mxu0 0.0
    %3008 = vmatpush1.msra.mxu0 0.0
    %3009 = vmatprep.subr.mxu0 0.0
    %3010 = vmatpush1.msra.mxu0 0.0
    %3011 = vmatprep.subr.mxu0 0.0
    %3012 = vmatpush1.msra.mxu0 0.0
    %3013 = vmatprep.subr.mxu0 0.0
    %3014 = vmatpush1.msra.mxu0 0.0
    %3015 = vmatprep.subr.mxu0 0.0
    %3016 = vmatpush1.msra.mxu0 0.0
    %3017 = vmatprep.subr.mxu0 0.0
    %3018 = vmatpush1.msra.mxu0 0.0
    %3019 = vmatprep.subr.mxu0 0.0
    %3020 = vmatpush1.msra.mxu0 0.0
    %3021 = vmatprep.subr.mxu0 0.0
    %3022 = vmatpush1.msra.mxu0 0.0
    %3023 = vmatprep.subr.mxu0 0.0
    %3024 = vmatpush1.msra.mxu0 0.0
    %3025 = vmatprep.subr.mxu0 0.0
    %3026 = vmatpush1.msra.mxu0 0.0
    %3027 = vmatprep.subr.mxu0 0.0
    %3028 = vmatpush1.msra.mxu0 0.0
    %3029 = vmatprep.subr.mxu0 0.0
    %3030 = vmatpush1.msra.mxu0 0.0
    %3031 = vmatprep.subr.mxu0 0.0
    %3032 = vmatpush1.msra.mxu0 0.0
    %3033 = vmatprep.subr.mxu0 0.0
    %3034 = vmatpush1.msra.mxu0 0.0
    %3035 = vmatprep.subr.mxu0 0.0
    %3036 = vmatpush1.msra.mxu0 0.0
    %3037 = vmatprep.subr.mxu0 0.0
    %3038 = vmatpush1.msra.mxu0 0.0
    %3039 = vmatprep.subr.mxu0 0.0
    %3040 = vmatpush1.msra.mxu0 0.0
    %3041 = vmatprep.subr.mxu0 0.0
    %3042 = vmatpush1.msra.mxu0 0.0
    %3043 = vmatprep.subr.mxu0 0.0
    %3044 = vmatpush1.msra.mxu0 0.0
    %3045 = vmatprep.mubr.f32.mxu0 0.0
    %3046 = vmatmul.mubr.f32.gmra.mrb[0].mxu0 %v2979
    %v3047 = vpop.f32.mrb[0].mxu0
    %v3048 = vadd.f32 %v2974, %v3047
    %v3049 = vpop.f32.mrb[0].mxu0
    %v3050 = vadd.f32 %v2976, %v3049
    %3051 = vdwg.mxu0
    %v3052 = vld [vmem:[%s362] sm:$0x7f]
    %v3054 = vsel %vm56, %v3052, 0
    %3056 = vmatprep.subr.mxu0 0.0
    %3057 = vmatpush1.msra.mxu0 %v2746
    %3058 = vmatprep.subr.mxu0 0.0
    %3059 = vmatpush1.msra.mxu0 %v2747
    %3060 = vmatprep.subr.mxu0 0.0
    %3061 = vmatpush1.msra.mxu0 0.0
    %3062 = vmatprep.subr.mxu0 0.0
    %3063 = vmatpush1.msra.mxu0 0.0
    %3064 = vmatprep.subr.mxu0 0.0
    %3065 = vmatpush1.msra.mxu0 0.0
    %3066 = vmatprep.subr.mxu0 0.0
    %3067 = vmatpush1.msra.mxu0 0.0
    %3068 = vmatprep.subr.mxu0 0.0
    %3069 = vmatpush1.msra.mxu0 0.0
    %3070 = vmatprep.subr.mxu0 0.0
    %3071 = vmatpush1.msra.mxu0 0.0
    %3072 = vmatprep.subr.mxu0 0.0
    %3073 = vmatpush1.msra.mxu0 0.0
    %3074 = vmatprep.subr.mxu0 0.0
    %3075 = vmatpush1.msra.mxu0 0.0
    %3076 = vmatprep.subr.mxu0 0.0
    %3077 = vmatpush1.msra.mxu0 0.0
    %3078 = vmatprep.subr.mxu0 0.0
    %3079 = vmatpush1.msra.mxu0 0.0
    %3080 = vmatprep.subr.mxu0 0.0
    %3081 = vmatpush1.msra.mxu0 0.0
    %3082 = vmatprep.subr.mxu0 0.0
    %3083 = vmatpush1.msra.mxu0 0.0
    %3084 = vmatprep.subr.mxu0 0.0
    %3085 = vmatpush1.msra.mxu0 0.0
    %3086 = vmatprep.subr.mxu0 0.0
    %3087 = vmatpush1.msra.mxu0 0.0
    %3088 = vmatprep.subr.mxu0 0.0
    %3089 = vmatpush1.msra.mxu0 0.0
    %3090 = vmatprep.subr.mxu0 0.0
    %3091 = vmatpush1.msra.mxu0 0.0
    %3092 = vmatprep.subr.mxu0 0.0
    %3093 = vmatpush1.msra.mxu0 0.0
    %3094 = vmatprep.subr.mxu0 0.0
    %3095 = vmatpush1.msra.mxu0 0.0
    %3096 = vmatprep.subr.mxu0 0.0
    %3097 = vmatpush1.msra.mxu0 0.0
    %3098 = vmatprep.subr.mxu0 0.0
    %3099 = vmatpush1.msra.mxu0 0.0
    %3100 = vmatprep.subr.mxu0 0.0
    %3101 = vmatpush1.msra.mxu0 0.0
    %3102 = vmatprep.subr.mxu0 0.0
    %3103 = vmatpush1.msra.mxu0 0.0
    %3104 = vmatprep.subr.mxu0 0.0
    %3105 = vmatpush1.msra.mxu0 0.0
    %3106 = vmatprep.subr.mxu0 0.0
    %3107 = vmatpush1.msra.mxu0 0.0
    %3108 = vmatprep.subr.mxu0 0.0
    %3109 = vmatpush1.msra.mxu0 0.0
    %3110 = vmatprep.subr.mxu0 0.0
    %3111 = vmatpush1.msra.mxu0 0.0
    %3112 = vmatprep.subr.mxu0 0.0
    %3113 = vmatpush1.msra.mxu0 0.0
    %3114 = vmatprep.subr.mxu0 0.0
    %3115 = vmatpush1.msra.mxu0 0.0
    %3116 = vmatprep.subr.mxu0 0.0
    %3117 = vmatpush1.msra.mxu0 0.0
    %3118 = vmatprep.subr.mxu0 0.0
    %3119 = vmatpush1.msra.mxu0 0.0
    %3120 = vmatprep.mubr.f32.mxu0 0.0
    %3121 = vmatmul.mubr.f32.gmra.mrb[0].mxu0 %v3054
    %v3122 = vpop.f32.mrb[0].mxu0
    %v3123 = vadd.f32 0.0, %v3122
    %v3124 = vpop.f32.mrb[0].mxu0
    %3125 = vdwg.mxu0
    %v3126 = vld [vmem:[%s437] sm:$0xff]
    %v3127 = vld [vmem:[%s437 + $0x8] sm:$0xff]
    %v3128 = vld [vmem:[%s437 + $0x10] sm:$0xff]
    %v3129 = vld [vmem:[%s437 + $0x18] sm:$0xff]
    %v3131 = vsel %vm56, %v3123, 0
    %3133 = vmatprep.subr.mxu0 %v3127
    %3134 = vmatpush1.msra.mxu0 %v3126
    %3135 = vmatprep.subr.mxu0 %v3129
    %3136 = vmatpush1.msra.mxu0 %v3128
    %3137 = vmatprep.subr.mxu0 0.0
    %3138 = vmatpush1.msra.mxu0 0.0
    %3139 = vmatprep.subr.mxu0 0.0
    %3140 = vmatpush1.msra.mxu0 0.0
    %3141 = vmatprep.subr.mxu0 0.0
    %3142 = vmatpush1.msra.mxu0 0.0
    %3143 = vmatprep.subr.mxu0 0.0
    %3144 = vmatpush1.msra.mxu0 0.0
    %3145 = vmatprep.subr.mxu0 0.0
    %3146 = vmatpush1.msra.mxu0 0.0
    %3147 = vmatprep.subr.mxu0 0.0
    %3148 = vmatpush1.msra.mxu0 0.0
    %3149 = vmatprep.subr.mxu0 0.0
    %3150 = vmatpush1.msra.mxu0 0.0
    %3151 = vmatprep.subr.mxu0 0.0
    %3152 = vmatpush1.msra.mxu0 0.0
    %3153 = vmatprep.subr.mxu0 0.0
    %3154 = vmatpush1.msra.mxu0 0.0
    %3155 = vmatprep.subr.mxu0 0.0
    %3156 = vmatpush1.msra.mxu0 0.0
    %3157 = vmatprep.subr.mxu0 0.0
    %3158 = vmatpush1.msra.mxu0 0.0
    %3159 = vmatprep.subr.mxu0 0.0
    %3160 = vmatpush1.msra.mxu0 0.0
    %3161 = vmatprep.subr.mxu0 0.0
    %3162 = vmatpush1.msra.mxu0 0.0
    %3163 = vmatprep.subr.mxu0 0.0
    %3164 = vmatpush1.msra.mxu0 0.0
    %3165 = vmatprep.subr.mxu0 0.0
    %3166 = vmatpush1.msra.mxu0 0.0
    %3167 = vmatprep.subr.mxu0 0.0
    %3168 = vmatpush1.msra.mxu0 0.0
    %3169 = vmatprep.subr.mxu0 0.0
    %3170 = vmatpush1.msra.mxu0 0.0
    %3171 = vmatprep.subr.mxu0 0.0
    %3172 = vmatpush1.msra.mxu0 0.0
    %3173 = vmatprep.subr.mxu0 0.0
    %3174 = vmatpush1.msra.mxu0 0.0
    %3175 = vmatprep.subr.mxu0 0.0
    %3176 = vmatpush1.msra.mxu0 0.0
    %3177 = vmatprep.subr.mxu0 0.0
    %3178 = vmatpush1.msra.mxu0 0.0
    %3179 = vmatprep.subr.mxu0 0.0
    %3180 = vmatpush1.msra.mxu0 0.0
    %3181 = vmatprep.subr.mxu0 0.0
    %3182 = vmatpush1.msra.mxu0 0.0
    %3183 = vmatprep.subr.mxu0 0.0
    %3184 = vmatpush1.msra.mxu0 0.0
    %3185 = vmatprep.subr.mxu0 0.0
    %3186 = vmatpush1.msra.mxu0 0.0
    %3187 = vmatprep.subr.mxu0 0.0
    %3188 = vmatpush1.msra.mxu0 0.0
    %3189 = vmatprep.subr.mxu0 0.0
    %3190 = vmatpush1.msra.mxu0 0.0
    %3191 = vmatprep.subr.mxu0 0.0
    %3192 = vmatpush1.msra.mxu0 0.0
    %3193 = vmatprep.subr.mxu0 0.0
    %3194 = vmatpush1.msra.mxu0 0.0
    %3195 = vmatprep.subr.mxu0 0.0
    %3196 = vmatpush1.msra.mxu0 0.0
    %3197 = vmatprep.mubr.f32.mxu0 0.0
    %3198 = vmatmul.mubr.f32.gmra.mrb[0].mxu0 %v3131
    %v3199 = vpop.f32.mrb[0].mxu0
    %v3200 = vadd.f32 0.0, %v3199
    %v3201 = vpop.f32.mrb[0].mxu0
    %v3202 = vadd.f32 0.0, %v3201
    %3203 = vdwg.mxu0
    %v3204 = vadd.f32 %v3048, %v3200
    %v3205 = vadd.f32 %v3050, %v3202
    %s3206 = scalar_lea.vmem %s0, 80
    %v3207 = vld [vmem:[%s3206] sm:$0xff]
    %v3208 = vld [vmem:[%s3206 + $0x8] sm:$0xff]
    %3209 = vmatprep.subr.mxu0 0.0
    %3210 = vmatpush1.msra.mxu0 %v3207
    %3211 = vmatprep.subr.mxu0 0.0
    %3212 = vmatpush1.msra.mxu0 %v3208
    %3213 = vmatprep.subr.mxu0 0.0
    %3214 = vmatpush1.msra.mxu0 0.0
    %3215 = vmatprep.subr.mxu0 0.0
    %3216 = vmatpush1.msra.mxu0 0.0
    %3217 = vmatprep.subr.mxu0 0.0
    %3218 = vmatpush1.msra.mxu0 0.0
    %3219 = vmatprep.subr.mxu0 0.0
    %3220 = vmatpush1.msra.mxu0 0.0
    %3221 = vmatprep.subr.mxu0 0.0
    %3222 = vmatpush1.msra.mxu0 0.0
    %3223 = vmatprep.subr.mxu0 0.0
    %3224 = vmatpush1.msra.mxu0 0.0
    %3225 = vmatprep.subr.mxu0 0.0
    %3226 = vmatpush1.msra.mxu0 0.0
    %3227 = vmatprep.subr.mxu0 0.0
    %3228 = vmatpush1.msra.mxu0 0.0
    %3229 = vmatprep.subr.mxu0 0.0
    %3230 = vmatpush1.msra.mxu0 0.0
    %3231 = vmatprep.subr.mxu0 0.0
    %3232 = vmatpush1.msra.mxu0 0.0
    %3233 = vmatprep.subr.mxu0 0.0
    %3234 = vmatpush1.msra.mxu0 0.0
    %3235 = vmatprep.subr.mxu0 0.0
    %3236 = vmatpush1.msra.mxu0 0.0
    %3237 = vmatprep.subr.mxu0 0.0
    %3238 = vmatpush1.msra.mxu0 0.0
    %3239 = vmatprep.subr.mxu0 0.0
    %3240 = vmatpush1.msra.mxu0 0.0
    %3241 = vmatprep.subr.mxu0 0.0
    %3242 = vmatpush1.msra.mxu0 0.0
    %3243 = vmatprep.subr.mxu0 0.0
    %3244 = vmatpush1.msra.mxu0 0.0
    %3245 = vmatprep.subr.mxu0 0.0
    %3246 = vmatpush1.msra.mxu0 0.0
    %3247 = vmatprep.subr.mxu0 0.0
    %3248 = vmatpush1.msra.mxu0 0.0
    %3249 = vmatprep.subr.mxu0 0.0
    %3250 = vmatpush1.msra.mxu0 0.0
    %3251 = vmatprep.subr.mxu0 0.0
    %3252 = vmatpush1.msra.mxu0 0.0
    %3253 = vmatprep.subr.mxu0 0.0
    %3254 = vmatpush1.msra.mxu0 0.0
    %3255 = vmatprep.subr.mxu0 0.0
    %3256 = vmatpush1.msra.mxu0 0.0
    %3257 = vmatprep.subr.mxu0 0.0
    %3258 = vmatpush1.msra.mxu0 0.0
    %3259 = vmatprep.subr.mxu0 0.0
    %3260 = vmatpush1.msra.mxu0 0.0
    %3261 = vmatprep.subr.mxu0 0.0
    %3262 = vmatpush1.msra.mxu0 0.0
    %3263 = vmatprep.subr.mxu0 0.0
    %3264 = vmatpush1.msra.mxu0 0.0
    %3265 = vmatprep.subr.mxu0 0.0
    %3266 = vmatpush1.msra.mxu0 0.0
    %3267 = vmatprep.subr.mxu0 0.0
    %3268 = vmatpush1.msra.mxu0 0.0
    %3269 = vmatprep.subr.mxu0 0.0
    %3270 = vmatpush1.msra.mxu0 0.0
    %3271 = vmatprep.subr.mxu0 0.0
    %3272 = vmatpush1.msra.mxu0 0.0
    %3273 = vmatprep.mubr.f32.mxu0 0.0
    %3274 = vmatmul.mubr.f32.gmra.mrb[0].mxu0 %v2750
    %v3275 = vpop.f32.mrb[0].mxu0
    %v3276 = vadd.f32 0.0, %v3275
    %v3277 = vpop.f32.mrb[0].mxu0
    %3278 = vdwg.mxu0
    %v3279 = vld [vmem:[%s591] sm:$0xff]
    %v3280 = vld [vmem:[%s591 + $0x8] sm:$0xff]
    %v3281 = vld [vmem:[%s591 + $0x10] sm:$0xff]
    %v3282 = vld [vmem:[%s591 + $0x18] sm:$0xff]
    %v3284 = vsel %vm56, %v3276, 0
    %3286 = vmatprep.subr.mxu0 %v3280
    %3287 = vmatpush1.msra.mxu0 %v3279
    %3288 = vmatprep.subr.mxu0 %v3282
    %3289 = vmatpush1.msra.mxu0 %v3281
    %3290 = vmatprep.subr.mxu0 0.0
    %3291 = vmatpush1.msra.mxu0 0.0
    %3292 = vmatprep.subr.mxu0 0.0
    %3293 = vmatpush1.msra.mxu0 0.0
    %3294 = vmatprep.subr.mxu0 0.0
    %3295 = vmatpush1.msra.mxu0 0.0
    %3296 = vmatprep.subr.mxu0 0.0
    %3297 = vmatpush1.msra.mxu0 0.0
    %3298 = vmatprep.subr.mxu0 0.0
    %3299 = vmatpush1.msra.mxu0 0.0
    %3300 = vmatprep.subr.mxu0 0.0
    %3301 = vmatpush1.msra.mxu0 0.0
    %3302 = vmatprep.subr.mxu0 0.0
    %3303 = vmatpush1.msra.mxu0 0.0
    %3304 = vmatprep.subr.mxu0 0.0
    %3305 = vmatpush1.msra.mxu0 0.0
    %3306 = vmatprep.subr.mxu0 0.0
    %3307 = vmatpush1.msra.mxu0 0.0
    %3308 = vmatprep.subr.mxu0 0.0
    %3309 = vmatpush1.msra.mxu0 0.0
    %3310 = vmatprep.subr.mxu0 0.0
    %3311 = vmatpush1.msra.mxu0 0.0
    %3312 = vmatprep.subr.mxu0 0.0
    %3313 = vmatpush1.msra.mxu0 0.0
    %3314 = vmatprep.subr.mxu0 0.0
    %3315 = vmatpush1.msra.mxu0 0.0
    %3316 = vmatprep.subr.mxu0 0.0
    %3317 = vmatpush1.msra.mxu0 0.0
    %3318 = vmatprep.subr.mxu0 0.0
    %3319 = vmatpush1.msra.mxu0 0.0
    %3320 = vmatprep.subr.mxu0 0.0
    %3321 = vmatpush1.msra.mxu0 0.0
    %3322 = vmatprep.subr.mxu0 0.0
    %3323 = vmatpush1.msra.mxu0 0.0
    %3324 = vmatprep.subr.mxu0 0.0
    %3325 = vmatpush1.msra.mxu0 0.0
    %3326 = vmatprep.subr.mxu0 0.0
    %3327 = vmatpush1.msra.mxu0 0.0
    %3328 = vmatprep.subr.mxu0 0.0
    %3329 = vmatpush1.msra.mxu0 0.0
    %3330 = vmatprep.subr.mxu0 0.0
    %3331 = vmatpush1.msra.mxu0 0.0
    %3332 = vmatprep.subr.mxu0 0.0
    %3333 = vmatpush1.msra.mxu0 0.0
    %3334 = vmatprep.subr.mxu0 0.0
    %3335 = vmatpush1.msra.mxu0 0.0
    %3336 = vmatprep.subr.mxu0 0.0
    %3337 = vmatpush1.msra.mxu0 0.0
    %3338 = vmatprep.subr.mxu0 0.0
    %3339 = vmatpush1.msra.mxu0 0.0
    %3340 = vmatprep.subr.mxu0 0.0
    %3341 = vmatpush1.msra.mxu0 0.0
    %3342 = vmatprep.subr.mxu0 0.0
    %3343 = vmatpush1.msra.mxu0 0.0
    %3344 = vmatprep.subr.mxu0 0.0
    %3345 = vmatpush1.msra.mxu0 0.0
    %3346 = vmatprep.subr.mxu0 0.0
    %3347 = vmatpush1.msra.mxu0 0.0
    %3348 = vmatprep.subr.mxu0 0.0
    %3349 = vmatpush1.msra.mxu0 0.0
    %3350 = vmatprep.mubr.f32.mxu0 0.0
    %3351 = vmatmul.mubr.f32.gmra.mrb[0].mxu0 %v3284
    %v3352 = vpop.f32.mrb[0].mxu0
    %v3353 = vadd.f32 0.0, %v3352
    %v3354 = vpop.f32.mrb[0].mxu0
    %v3355 = vadd.f32 0.0, %v3354
    %3356 = vdwg.mxu0
    %v3357 = vadd.f32 %v3204, %v3353
    %v3358 = vadd.f32 %v3205, %v3355
    %3359 = vmatprep.subr.mxu0 0.0
    %3360 = vmatpush1.msra.mxu0 %v3207
    %3361 = vmatprep.subr.mxu0 0.0
    %3362 = vmatpush1.msra.mxu0 %v3208
    %3363 = vmatprep.subr.mxu0 0.0
    %3364 = vmatpush1.msra.mxu0 0.0
    %3365 = vmatprep.subr.mxu0 0.0
    %3366 = vmatpush1.msra.mxu0 0.0
    %3367 = vmatprep.subr.mxu0 0.0
    %3368 = vmatpush1.msra.mxu0 0.0
    %3369 = vmatprep.subr.mxu0 0.0
    %3370 = vmatpush1.msra.mxu0 0.0
    %3371 = vmatprep.subr.mxu0 0.0
    %3372 = vmatpush1.msra.mxu0 0.0
    %3373 = vmatprep.subr.mxu0 0.0
    %3374 = vmatpush1.msra.mxu0 0.0
    %3375 = vmatprep.subr.mxu0 0.0
    %3376 = vmatpush1.msra.mxu0 0.0
    %3377 = vmatprep.subr.mxu0 0.0
    %3378 = vmatpush1.msra.mxu0 0.0
    %3379 = vmatprep.subr.mxu0 0.0
    %3380 = vmatpush1.msra.mxu0 0.0
    %3381 = vmatprep.subr.mxu0 0.0
    %3382 = vmatpush1.msra.mxu0 0.0
    %3383 = vmatprep.subr.mxu0 0.0
    %3384 = vmatpush1.msra.mxu0 0.0
    %3385 = vmatprep.subr.mxu0 0.0
    %3386 = vmatpush1.msra.mxu0 0.0
    %3387 = vmatprep.subr.mxu0 0.0
    %3388 = vmatpush1.msra.mxu0 0.0
    %3389 = vmatprep.subr.mxu0 0.0
    %3390 = vmatpush1.msra.mxu0 0.0
    %3391 = vmatprep.subr.mxu0 0.0
    %3392 = vmatpush1.msra.mxu0 0.0
    %3393 = vmatprep.subr.mxu0 0.0
    %3394 = vmatpush1.msra.mxu0 0.0
    %3395 = vmatprep.subr.mxu0 0.0
    %3396 = vmatpush1.msra.mxu0 0.0
    %3397 = vmatprep.subr.mxu0 0.0
    %3398 = vmatpush1.msra.mxu0 0.0
    %3399 = vmatprep.subr.mxu0 0.0
    %3400 = vmatpush1.msra.mxu0 0.0
    %3401 = vmatprep.subr.mxu0 0.0
    %3402 = vmatpush1.msra.mxu0 0.0
    %3403 = vmatprep.subr.mxu0 0.0
    %3404 = vmatpush1.msra.mxu0 0.0
    %3405 = vmatprep.subr.mxu0 0.0
    %3406 = vmatpush1.msra.mxu0 0.0
    %3407 = vmatprep.subr.mxu0 0.0
    %3408 = vmatpush1.msra.mxu0 0.0
    %3409 = vmatprep.subr.mxu0 0.0
    %3410 = vmatpush1.msra.mxu0 0.0
    %3411 = vmatprep.subr.mxu0 0.0
    %3412 = vmatpush1.msra.mxu0 0.0
    %3413 = vmatprep.subr.mxu0 0.0
    %3414 = vmatpush1.msra.mxu0 0.0
    %3415 = vmatprep.subr.mxu0 0.0
    %3416 = vmatpush1.msra.mxu0 0.0
    %3417 = vmatprep.subr.mxu0 0.0
    %3418 = vmatpush1.msra.mxu0 0.0
    %3419 = vmatprep.subr.mxu0 0.0
    %3420 = vmatpush1.msra.mxu0 0.0
    %3421 = vmatprep.subr.mxu0 0.0
    %3422 = vmatpush1.msra.mxu0 0.0
    %3423 = vmatprep.mubr.f32.mxu0 0.0
    %3424 = vmatmul.mubr.f32.gmra.mrb[0].mxu0 %v2828
    %v3425 = vpop.f32.mrb[0].mxu0
    %v3426 = vadd.f32 0.0, %v3425
    %v3427 = vpop.f32.mrb[0].mxu0
    %3428 = vdwg.mxu0
    %v3429 = vld [vmem:[%s742] sm:$0xff]
    %v3430 = vld [vmem:[%s742 + $0x8] sm:$0xff]
    %v3431 = vld [vmem:[%s742 + $0x10] sm:$0xff]
    %v3432 = vld [vmem:[%s742 + $0x18] sm:$0xff]
    %v3434 = vsel %vm56, %v3426, 0
    %3436 = vmatprep.subr.mxu0 %v3430
    %3437 = vmatpush1.msra.mxu0 %v3429
    %3438 = vmatprep.subr.mxu0 %v3432
    %3439 = vmatpush1.msra.mxu0 %v3431
    %3440 = vmatprep.subr.mxu0 0.0
    %3441 = vmatpush1.msra.mxu0 0.0
    %3442 = vmatprep.subr.mxu0 0.0
    %3443 = vmatpush1.msra.mxu0 0.0
    %3444 = vmatprep.subr.mxu0 0.0
    %3445 = vmatpush1.msra.mxu0 0.0
    %3446 = vmatprep.subr.mxu0 0.0
    %3447 = vmatpush1.msra.mxu0 0.0
    %3448 = vmatprep.subr.mxu0 0.0
    %3449 = vmatpush1.msra.mxu0 0.0
    %3450 = vmatprep.subr.mxu0 0.0
    %3451 = vmatpush1.msra.mxu0 0.0
    %3452 = vmatprep.subr.mxu0 0.0
    %3453 = vmatpush1.msra.mxu0 0.0
    %3454 = vmatprep.subr.mxu0 0.0
    %3455 = vmatpush1.msra.mxu0 0.0
    %3456 = vmatprep.subr.mxu0 0.0
    %3457 = vmatpush1.msra.mxu0 0.0
    %3458 = vmatprep.subr.mxu0 0.0
    %3459 = vmatpush1.msra.mxu0 0.0
    %3460 = vmatprep.subr.mxu0 0.0
    %3461 = vmatpush1.msra.mxu0 0.0
    %3462 = vmatprep.subr.mxu0 0.0
    %3463 = vmatpush1.msra.mxu0 0.0
    %3464 = vmatprep.subr.mxu0 0.0
    %3465 = vmatpush1.msra.mxu0 0.0
    %3466 = vmatprep.subr.mxu0 0.0
    %3467 = vmatpush1.msra.mxu0 0.0
    %3468 = vmatprep.subr.mxu0 0.0
    %3469 = vmatpush1.msra.mxu0 0.0
    %3470 = vmatprep.subr.mxu0 0.0
    %3471 = vmatpush1.msra.mxu0 0.0
    %3472 = vmatprep.subr.mxu0 0.0
    %3473 = vmatpush1.msra.mxu0 0.0
    %3474 = vmatprep.subr.mxu0 0.0
    %3475 = vmatpush1.msra.mxu0 0.0
    %3476 = vmatprep.subr.mxu0 0.0
    %3477 = vmatpush1.msra.mxu0 0.0
    %3478 = vmatprep.subr.mxu0 0.0
    %3479 = vmatpush1.msra.mxu0 0.0
    %3480 = vmatprep.subr.mxu0 0.0
    %3481 = vmatpush1.msra.mxu0 0.0
    %3482 = vmatprep.subr.mxu0 0.0
    %3483 = vmatpush1.msra.mxu0 0.0
    %3484 = vmatprep.subr.mxu0 0.0
    %3485 = vmatpush1.msra.mxu0 0.0
    %3486 = vmatprep.subr.mxu0 0.0
    %3487 = vmatpush1.msra.mxu0 0.0
    %3488 = vmatprep.subr.mxu0 0.0
    %3489 = vmatpush1.msra.mxu0 0.0
    %3490 = vmatprep.subr.mxu0 0.0
    %3491 = vmatpush1.msra.mxu0 0.0
    %3492 = vmatprep.subr.mxu0 0.0
    %3493 = vmatpush1.msra.mxu0 0.0
    %3494 = vmatprep.subr.mxu0 0.0
    %3495 = vmatpush1.msra.mxu0 0.0
    %3496 = vmatprep.subr.mxu0 0.0
    %3497 = vmatpush1.msra.mxu0 0.0
    %3498 = vmatprep.subr.mxu0 0.0
    %3499 = vmatpush1.msra.mxu0 0.0
    %3500 = vmatprep.mubr.f32.mxu0 0.0
    %3501 = vmatmul.mubr.f32.gmra.mrb[0].mxu0 %v3434
    %v3502 = vpop.f32.mrb[0].mxu0
    %v3503 = vadd.f32 0.0, %v3502
    %v3504 = vpop.f32.mrb[0].mxu0
    %v3505 = vadd.f32 0.0, %v3504
    %3506 = vdwg.mxu0
    %v3507 = vadd.f32 %v3357, %v3503
    %v3508 = vadd.f32 %v3358, %v3505
    %3509 = vmatprep.subr.mxu0 0.0
    %3510 = vmatpush1.msra.mxu0 %v3207
    %3511 = vmatprep.subr.mxu0 0.0
    %3512 = vmatpush1.msra.mxu0 %v3208
    %3513 = vmatprep.subr.mxu0 0.0
    %3514 = vmatpush1.msra.mxu0 0.0
    %3515 = vmatprep.subr.mxu0 0.0
    %3516 = vmatpush1.msra.mxu0 0.0
    %3517 = vmatprep.subr.mxu0 0.0
    %3518 = vmatpush1.msra.mxu0 0.0
    %3519 = vmatprep.subr.mxu0 0.0
    %3520 = vmatpush1.msra.mxu0 0.0
    %3521 = vmatprep.subr.mxu0 0.0
    %3522 = vmatpush1.msra.mxu0 0.0
    %3523 = vmatprep.subr.mxu0 0.0
    %3524 = vmatpush1.msra.mxu0 0.0
    %3525 = vmatprep.subr.mxu0 0.0
    %3526 = vmatpush1.msra.mxu0 0.0
    %3527 = vmatprep.subr.mxu0 0.0
    %3528 = vmatpush1.msra.mxu0 0.0
    %3529 = vmatprep.subr.mxu0 0.0
    %3530 = vmatpush1.msra.mxu0 0.0
    %3531 = vmatprep.subr.mxu0 0.0
    %3532 = vmatpush1.msra.mxu0 0.0
    %3533 = vmatprep.subr.mxu0 0.0
    %3534 = vmatpush1.msra.mxu0 0.0
    %3535 = vmatprep.subr.mxu0 0.0
    %3536 = vmatpush1.msra.mxu0 0.0
    %3537 = vmatprep.subr.mxu0 0.0
    %3538 = vmatpush1.msra.mxu0 0.0
    %3539 = vmatprep.subr.mxu0 0.0
    %3540 = vmatpush1.msra.mxu0 0.0
    %3541 = vmatprep.subr.mxu0 0.0
    %3542 = vmatpush1.msra.mxu0 0.0
    %3543 = vmatprep.subr.mxu0 0.0
    %3544 = vmatpush1.msra.mxu0 0.0
    %3545 = vmatprep.subr.mxu0 0.0
    %3546 = vmatpush1.msra.mxu0 0.0
    %3547 = vmatprep.subr.mxu0 0.0
    %3548 = vmatpush1.msra.mxu0 0.0
    %3549 = vmatprep.subr.mxu0 0.0
    %3550 = vmatpush1.msra.mxu0 0.0
    %3551 = vmatprep.subr.mxu0 0.0
    %3552 = vmatpush1.msra.mxu0 0.0
    %3553 = vmatprep.subr.mxu0 0.0
    %3554 = vmatpush1.msra.mxu0 0.0
    %3555 = vmatprep.subr.mxu0 0.0
    %3556 = vmatpush1.msra.mxu0 0.0
    %3557 = vmatprep.subr.mxu0 0.0
    %3558 = vmatpush1.msra.mxu0 0.0
    %3559 = vmatprep.subr.mxu0 0.0
    %3560 = vmatpush1.msra.mxu0 0.0
    %3561 = vmatprep.subr.mxu0 0.0
    %3562 = vmatpush1.msra.mxu0 0.0
    %3563 = vmatprep.subr.mxu0 0.0
    %3564 = vmatpush1.msra.mxu0 0.0
    %3565 = vmatprep.subr.mxu0 0.0
    %3566 = vmatpush1.msra.mxu0 0.0
    %3567 = vmatprep.subr.mxu0 0.0
    %3568 = vmatpush1.msra.mxu0 0.0
    %3569 = vmatprep.subr.mxu0 0.0
    %3570 = vmatpush1.msra.mxu0 0.0
    %3571 = vmatprep.subr.mxu0 0.0
    %3572 = vmatpush1.msra.mxu0 0.0
    %3573 = vmatprep.mubr.f32.mxu0 0.0
    %3574 = vmatmul.mubr.f32.gmra.mrb[0].mxu0 %v3054
    %v3575 = vpop.f32.mrb[0].mxu0
    %v3576 = vadd.f32 0.0, %v3575
    %v3577 = vpop.f32.mrb[0].mxu0
    %3578 = vdwg.mxu0
    %v3579 = vld [vmem:[%s893] sm:$0xff]
    %v3580 = vld [vmem:[%s893 + $0x8] sm:$0xff]
    %v3581 = vld [vmem:[%s893 + $0x10] sm:$0xff]
    %v3582 = vld [vmem:[%s893 + $0x18] sm:$0xff]
    %v3584 = vsel %vm56, %v3576, 0
    %3586 = vmatprep.subr.mxu0 %v3580
    %3587 = vmatpush1.msra.mxu0 %v3579
    %3588 = vmatprep.subr.mxu0 %v3582
    %3589 = vmatpush1.msra.mxu0 %v3581
    %3590 = vmatprep.subr.mxu0 0.0
    %3591 = vmatpush1.msra.mxu0 0.0
    %3592 = vmatprep.subr.mxu0 0.0
    %3593 = vmatpush1.msra.mxu0 0.0
    %3594 = vmatprep.subr.mxu0 0.0
    %3595 = vmatpush1.msra.mxu0 0.0
    %3596 = vmatprep.subr.mxu0 0.0
    %3597 = vmatpush1.msra.mxu0 0.0
    %3598 = vmatprep.subr.mxu0 0.0
    %3599 = vmatpush1.msra.mxu0 0.0
    %3600 = vmatprep.subr.mxu0 0.0
    %3601 = vmatpush1.msra.mxu0 0.0
    %3602 = vmatprep.subr.mxu0 0.0
    %3603 = vmatpush1.msra.mxu0 0.0
    %3604 = vmatprep.subr.mxu0 0.0
    %3605 = vmatpush1.msra.mxu0 0.0
    %3606 = vmatprep.subr.mxu0 0.0
    %3607 = vmatpush1.msra.mxu0 0.0
    %3608 = vmatprep.subr.mxu0 0.0
    %3609 = vmatpush1.msra.mxu0 0.0
    %3610 = vmatprep.subr.mxu0 0.0
    %3611 = vmatpush1.msra.mxu0 0.0
    %3612 = vmatprep.subr.mxu0 0.0
    %3613 = vmatpush1.msra.mxu0 0.0
    %3614 = vmatprep.subr.mxu0 0.0
    %3615 = vmatpush1.msra.mxu0 0.0
    %3616 = vmatprep.subr.mxu0 0.0
    %3617 = vmatpush1.msra.mxu0 0.0
    %3618 = vmatprep.subr.mxu0 0.0
    %3619 = vmatpush1.msra.mxu0 0.0
    %3620 = vmatprep.subr.mxu0 0.0
    %3621 = vmatpush1.msra.mxu0 0.0
    %3622 = vmatprep.subr.mxu0 0.0
    %3623 = vmatpush1.msra.mxu0 0.0
    %3624 = vmatprep.subr.mxu0 0.0
    %3625 = vmatpush1.msra.mxu0 0.0
    %3626 = vmatprep.subr.mxu0 0.0
    %3627 = vmatpush1.msra.mxu0 0.0
    %3628 = vmatprep.subr.mxu0 0.0
    %3629 = vmatpush1.msra.mxu0 0.0
    %3630 = vmatprep.subr.mxu0 0.0
    %3631 = vmatpush1.msra.mxu0 0.0
    %3632 = vmatprep.subr.mxu0 0.0
    %3633 = vmatpush1.msra.mxu0 0.0
    %3634 = vmatprep.subr.mxu0 0.0
    %3635 = vmatpush1.msra.mxu0 0.0
    %3636 = vmatprep.subr.mxu0 0.0
    %3637 = vmatpush1.msra.mxu0 0.0
    %3638 = vmatprep.subr.mxu0 0.0
    %3639 = vmatpush1.msra.mxu0 0.0
    %3640 = vmatprep.subr.mxu0 0.0
    %3641 = vmatpush1.msra.mxu0 0.0
    %3642 = vmatprep.subr.mxu0 0.0
    %3643 = vmatpush1.msra.mxu0 0.0
    %3644 = vmatprep.subr.mxu0 0.0
    %3645 = vmatpush1.msra.mxu0 0.0
    %3646 = vmatprep.subr.mxu0 0.0
    %3647 = vmatpush1.msra.mxu0 0.0
    %3648 = vmatprep.subr.mxu0 0.0
    %3649 = vmatpush1.msra.mxu0 0.0
    %3650 = vmatprep.mubr.f32.mxu0 0.0
    %3651 = vmatmul.mubr.f32.gmra.mrb[0].mxu0 %v3584
    %v3652 = vpop.f32.mrb[0].mxu0
    %v3653 = vadd.f32 0.0, %v3652
    %v3654 = vpop.f32.mrb[0].mxu0
    %v3655 = vadd.f32 0.0, %v3654
    %3656 = vdwg.mxu0
    %v3657 = vadd.f32 %v3507, %v3653
    %v3658 = vadd.f32 %v3508, %v3655
    %s3659 = scalar_lea.vmem %s0, 96
    %v3660 = vld [vmem:[%s3659] sm:$0xff]
    %v3661 = vld [vmem:[%s3659 + $0x8] sm:$0xff]
    %3662 = vmatprep.subr.mxu0 0.0
    %3663 = vmatpush1.msra.mxu0 %v3660
    %3664 = vmatprep.subr.mxu0 0.0
    %3665 = vmatpush1.msra.mxu0 %v3661
    %3666 = vmatprep.subr.mxu0 0.0
    %3667 = vmatpush1.msra.mxu0 0.0
    %3668 = vmatprep.subr.mxu0 0.0
    %3669 = vmatpush1.msra.mxu0 0.0
    %3670 = vmatprep.subr.mxu0 0.0
    %3671 = vmatpush1.msra.mxu0 0.0
    %3672 = vmatprep.subr.mxu0 0.0
    %3673 = vmatpush1.msra.mxu0 0.0
    %3674 = vmatprep.subr.mxu0 0.0
    %3675 = vmatpush1.msra.mxu0 0.0
    %3676 = vmatprep.subr.mxu0 0.0
    %3677 = vmatpush1.msra.mxu0 0.0
    %3678 = vmatprep.subr.mxu0 0.0
    %3679 = vmatpush1.msra.mxu0 0.0
    %3680 = vmatprep.subr.mxu0 0.0
    %3681 = vmatpush1.msra.mxu0 0.0
    %3682 = vmatprep.subr.mxu0 0.0
    %3683 = vmatpush1.msra.mxu0 0.0
    %3684 = vmatprep.subr.mxu0 0.0
    %3685 = vmatpush1.msra.mxu0 0.0
    %3686 = vmatprep.subr.mxu0 0.0
    %3687 = vmatpush1.msra.mxu0 0.0
    %3688 = vmatprep.subr.mxu0 0.0
    %3689 = vmatpush1.msra.mxu0 0.0
    %3690 = vmatprep.subr.mxu0 0.0
    %3691 = vmatpush1.msra.mxu0 0.0
    %3692 = vmatprep.subr.mxu0 0.0
    %3693 = vmatpush1.msra.mxu0 0.0
    %3694 = vmatprep.subr.mxu0 0.0
    %3695 = vmatpush1.msra.mxu0 0.0
    %3696 = vmatprep.subr.mxu0 0.0
    %3697 = vmatpush1.msra.mxu0 0.0
    %3698 = vmatprep.subr.mxu0 0.0
    %3699 = vmatpush1.msra.mxu0 0.0
    %3700 = vmatprep.subr.mxu0 0.0
    %3701 = vmatpush1.msra.mxu0 0.0
    %3702 = vmatprep.subr.mxu0 0.0
    %3703 = vmatpush1.msra.mxu0 0.0
    %3704 = vmatprep.subr.mxu0 0.0
    %3705 = vmatpush1.msra.mxu0 0.0
    %3706 = vmatprep.subr.mxu0 0.0
    %3707 = vmatpush1.msra.mxu0 0.0
    %3708 = vmatprep.subr.mxu0 0.0
    %3709 = vmatpush1.msra.mxu0 0.0
    %3710 = vmatprep.subr.mxu0 0.0
    %3711 = vmatpush1.msra.mxu0 0.0
    %3712 = vmatprep.subr.mxu0 0.0
    %3713 = vmatpush1.msra.mxu0 0.0
    %3714 = vmatprep.subr.mxu0 0.0
    %3715 = vmatpush1.msra.mxu0 0.0
    %3716 = vmatprep.subr.mxu0 0.0
    %3717 = vmatpush1.msra.mxu0 0.0
    %3718 = vmatprep.subr.mxu0 0.0
    %3719 = vmatpush1.msra.mxu0 0.0
    %3720 = vmatprep.subr.mxu0 0.0
    %3721 = vmatpush1.msra.mxu0 0.0
    %3722 = vmatprep.subr.mxu0 0.0
    %3723 = vmatpush1.msra.mxu0 0.0
    %3724 = vmatprep.subr.mxu0 0.0
    %3725 = vmatpush1.msra.mxu0 0.0
    %3726 = vmatprep.mubr.f32.mxu0 0.0
    %3727 = vmatmul.mubr.f32.gmra.mrb[0].mxu0 %v2750
    %v3728 = vpop.f32.mrb[0].mxu0
    %v3729 = vadd.f32 0.0, %v3728
    %v3730 = vpop.f32.mrb[0].mxu0
    %3731 = vdwg.mxu0
    %v3732 = vld [vmem:[%s1047] sm:$0xff]
    %v3733 = vld [vmem:[%s1047 + $0x8] sm:$0xff]
    %v3734 = vld [vmem:[%s1047 + $0x10] sm:$0xff]
    %v3735 = vld [vmem:[%s1047 + $0x18] sm:$0xff]
    %v3737 = vsel %vm56, %v3729, 0
    %3739 = vmatprep.subr.mxu0 %v3733
    %3740 = vmatpush1.msra.mxu0 %v3732
    %3741 = vmatprep.subr.mxu0 %v3735
    %3742 = vmatpush1.msra.mxu0 %v3734
    %3743 = vmatprep.subr.mxu0 0.0
    %3744 = vmatpush1.msra.mxu0 0.0
    %3745 = vmatprep.subr.mxu0 0.0
    %3746 = vmatpush1.msra.mxu0 0.0
    %3747 = vmatprep.subr.mxu0 0.0
    %3748 = vmatpush1.msra.mxu0 0.0
    %3749 = vmatprep.subr.mxu0 0.0
    %3750 = vmatpush1.msra.mxu0 0.0
    %3751 = vmatprep.subr.mxu0 0.0
    %3752 = vmatpush1.msra.mxu0 0.0
    %3753 = vmatprep.subr.mxu0 0.0
    %3754 = vmatpush1.msra.mxu0 0.0
    %3755 = vmatprep.subr.mxu0 0.0
    %3756 = vmatpush1.msra.mxu0 0.0
    %3757 = vmatprep.subr.mxu0 0.0
    %3758 = vmatpush1.msra.mxu0 0.0
    %3759 = vmatprep.subr.mxu0 0.0
    %3760 = vmatpush1.msra.mxu0 0.0
    %3761 = vmatprep.subr.mxu0 0.0
    %3762 = vmatpush1.msra.mxu0 0.0
    %3763 = vmatprep.subr.mxu0 0.0
    %3764 = vmatpush1.msra.mxu0 0.0
    %3765 = vmatprep.subr.mxu0 0.0
    %3766 = vmatpush1.msra.mxu0 0.0
    %3767 = vmatprep.subr.mxu0 0.0
    %3768 = vmatpush1.msra.mxu0 0.0
    %3769 = vmatprep.subr.mxu0 0.0
    %3770 = vmatpush1.msra.mxu0 0.0
    %3771 = vmatprep.subr.mxu0 0.0
    %3772 = vmatpush1.msra.mxu0 0.0
    %3773 = vmatprep.subr.mxu0 0.0
    %3774 = vmatpush1.msra.mxu0 0.0
    %3775 = vmatprep.subr.mxu0 0.0
    %3776 = vmatpush1.msra.mxu0 0.0
    %3777 = vmatprep.subr.mxu0 0.0
    %3778 = vmatpush1.msra.mxu0 0.0
    %3779 = vmatprep.subr.mxu0 0.0
    %3780 = vmatpush1.msra.mxu0 0.0
    %3781 = vmatprep.subr.mxu0 0.0
    %3782 = vmatpush1.msra.mxu0 0.0
    %3783 = vmatprep.subr.mxu0 0.0
    %3784 = vmatpush1.msra.mxu0 0.0
    %3785 = vmatprep.subr.mxu0 0.0
    %3786 = vmatpush1.msra.mxu0 0.0
    %3787 = vmatprep.subr.mxu0 0.0
    %3788 = vmatpush1.msra.mxu0 0.0
    %3789 = vmatprep.subr.mxu0 0.0
    %3790 = vmatpush1.msra.mxu0 0.0
    %3791 = vmatprep.subr.mxu0 0.0
    %3792 = vmatpush1.msra.mxu0 0.0
    %3793 = vmatprep.subr.mxu0 0.0
    %3794 = vmatpush1.msra.mxu0 0.0
    %3795 = vmatprep.subr.mxu0 0.0
    %3796 = vmatpush1.msra.mxu0 0.0
    %3797 = vmatprep.subr.mxu0 0.0
    %3798 = vmatpush1.msra.mxu0 0.0
    %3799 = vmatprep.subr.mxu0 0.0
    %3800 = vmatpush1.msra.mxu0 0.0
    %3801 = vmatprep.subr.mxu0 0.0
    %3802 = vmatpush1.msra.mxu0 0.0
    %3803 = vmatprep.mubr.f32.mxu0 0.0
    %3804 = vmatmul.mubr.f32.gmra.mrb[0].mxu0 %v3737
    %v3805 = vpop.f32.mrb[0].mxu0
    %v3806 = vadd.f32 0.0, %v3805
    %v3807 = vpop.f32.mrb[0].mxu0
    %v3808 = vadd.f32 0.0, %v3807
    %3809 = vdwg.mxu0
    %v3810 = vadd.f32 %v3657, %v3806
    %v3811 = vadd.f32 %v3658, %v3808
    %3812 = vmatprep.subr.mxu0 0.0
    %3813 = vmatpush1.msra.mxu0 %v3660
    %3814 = vmatprep.subr.mxu0 0.0
    %3815 = vmatpush1.msra.mxu0 %v3661
    %3816 = vmatprep.subr.mxu0 0.0
    %3817 = vmatpush1.msra.mxu0 0.0
    %3818 = vmatprep.subr.mxu0 0.0
    %3819 = vmatpush1.msra.mxu0 0.0
    %3820 = vmatprep.subr.mxu0 0.0
    %3821 = vmatpush1.msra.mxu0 0.0
    %3822 = vmatprep.subr.mxu0 0.0
    %3823 = vmatpush1.msra.mxu0 0.0
    %3824 = vmatprep.subr.mxu0 0.0
    %3825 = vmatpush1.msra.mxu0 0.0
    %3826 = vmatprep.subr.mxu0 0.0
    %3827 = vmatpush1.msra.mxu0 0.0
    %3828 = vmatprep.subr.mxu0 0.0
    %3829 = vmatpush1.msra.mxu0 0.0
    %3830 = vmatprep.subr.mxu0 0.0
    %3831 = vmatpush1.msra.mxu0 0.0
    %3832 = vmatprep.subr.mxu0 0.0
    %3833 = vmatpush1.msra.mxu0 0.0
    %3834 = vmatprep.subr.mxu0 0.0
    %3835 = vmatpush1.msra.mxu0 0.0
    %3836 = vmatprep.subr.mxu0 0.0
    %3837 = vmatpush1.msra.mxu0 0.0
    %3838 = vmatprep.subr.mxu0 0.0
    %3839 = vmatpush1.msra.mxu0 0.0
    %3840 = vmatprep.subr.mxu0 0.0
    %3841 = vmatpush1.msra.mxu0 0.0
    %3842 = vmatprep.subr.mxu0 0.0
    %3843 = vmatpush1.msra.mxu0 0.0
    %3844 = vmatprep.subr.mxu0 0.0
    %3845 = vmatpush1.msra.mxu0 0.0
    %3846 = vmatprep.subr.mxu0 0.0
    %3847 = vmatpush1.msra.mxu0 0.0
    %3848 = vmatprep.subr.mxu0 0.0
    %3849 = vmatpush1.msra.mxu0 0.0
    %3850 = vmatprep.subr.mxu0 0.0
    %3851 = vmatpush1.msra.mxu0 0.0
    %3852 = vmatprep.subr.mxu0 0.0
    %3853 = vmatpush1.msra.mxu0 0.0
    %3854 = vmatprep.subr.mxu0 0.0
    %3855 = vmatpush1.msra.mxu0 0.0
    %3856 = vmatprep.subr.mxu0 0.0
    %3857 = vmatpush1.msra.mxu0 0.0
    %3858 = vmatprep.subr.mxu0 0.0
    %3859 = vmatpush1.msra.mxu0 0.0
    %3860 = vmatprep.subr.mxu0 0.0
    %3861 = vmatpush1.msra.mxu0 0.0
    %3862 = vmatprep.subr.mxu0 0.0
    %3863 = vmatpush1.msra.mxu0 0.0
    %3864 = vmatprep.subr.mxu0 0.0
    %3865 = vmatpush1.msra.mxu0 0.0
    %3866 = vmatprep.subr.mxu0 0.0
    %3867 = vmatpush1.msra.mxu0 0.0
    %3868 = vmatprep.subr.mxu0 0.0
    %3869 = vmatpush1.msra.mxu0 0.0
    %3870 = vmatprep.subr.mxu0 0.0
    %3871 = vmatpush1.msra.mxu0 0.0
    %3872 = vmatprep.subr.mxu0 0.0
    %3873 = vmatpush1.msra.mxu0 0.0
    %3874 = vmatprep.subr.mxu0 0.0
    %3875 = vmatpush1.msra.mxu0 0.0
    %3876 = vmatprep.mubr.f32.mxu0 0.0
    %3877 = vmatmul.mubr.f32.gmra.mrb[0].mxu0 %v2828
    %v3878 = vpop.f32.mrb[0].mxu0
    %v3879 = vadd.f32 0.0, %v3878
    %v3880 = vpop.f32.mrb[0].mxu0
    %3881 = vdwg.mxu0
    %v3882 = vld [vmem:[%s1198] sm:$0xff]
    %v3883 = vld [vmem:[%s1198 + $0x8] sm:$0xff]
    %v3884 = vld [vmem:[%s1198 + $0x10] sm:$0xff]
    %v3885 = vld [vmem:[%s1198 + $0x18] sm:$0xff]
    %v3887 = vsel %vm56, %v3879, 0
    %3889 = vmatprep.subr.mxu0 %v3883
    %3890 = vmatpush1.msra.mxu0 %v3882
    %3891 = vmatprep.subr.mxu0 %v3885
    %3892 = vmatpush1.msra.mxu0 %v3884
    %3893 = vmatprep.subr.mxu0 0.0
    %3894 = vmatpush1.msra.mxu0 0.0
    %3895 = vmatprep.subr.mxu0 0.0
    %3896 = vmatpush1.msra.mxu0 0.0
    %3897 = vmatprep.subr.mxu0 0.0
    %3898 = vmatpush1.msra.mxu0 0.0
    %3899 = vmatprep.subr.mxu0 0.0
    %3900 = vmatpush1.msra.mxu0 0.0
    %3901 = vmatprep.subr.mxu0 0.0
    %3902 = vmatpush1.msra.mxu0 0.0
    %3903 = vmatprep.subr.mxu0 0.0
    %3904 = vmatpush1.msra.mxu0 0.0
    %3905 = vmatprep.subr.mxu0 0.0
    %3906 = vmatpush1.msra.mxu0 0.0
    %3907 = vmatprep.subr.mxu0 0.0
    %3908 = vmatpush1.msra.mxu0 0.0
    %3909 = vmatprep.subr.mxu0 0.0
    %3910 = vmatpush1.msra.mxu0 0.0
    %3911 = vmatprep.subr.mxu0 0.0
    %3912 = vmatpush1.msra.mxu0 0.0
    %3913 = vmatprep.subr.mxu0 0.0
    %3914 = vmatpush1.msra.mxu0 0.0
    %3915 = vmatprep.subr.mxu0 0.0
    %3916 = vmatpush1.msra.mxu0 0.0
    %3917 = vmatprep.subr.mxu0 0.0
    %3918 = vmatpush1.msra.mxu0 0.0
    %3919 = vmatprep.subr.mxu0 0.0
    %3920 = vmatpush1.msra.mxu0 0.0
    %3921 = vmatprep.subr.mxu0 0.0
    %3922 = vmatpush1.msra.mxu0 0.0
    %3923 = vmatprep.subr.mxu0 0.0
    %3924 = vmatpush1.msra.mxu0 0.0
    %3925 = vmatprep.subr.mxu0 0.0
    %3926 = vmatpush1.msra.mxu0 0.0
    %3927 = vmatprep.subr.mxu0 0.0
    %3928 = vmatpush1.msra.mxu0 0.0
    %3929 = vmatprep.subr.mxu0 0.0
    %3930 = vmatpush1.msra.mxu0 0.0
    %3931 = vmatprep.subr.mxu0 0.0
    %3932 = vmatpush1.msra.mxu0 0.0
    %3933 = vmatprep.subr.mxu0 0.0
    %3934 = vmatpush1.msra.mxu0 0.0
    %3935 = vmatprep.subr.mxu0 0.0
    %3936 = vmatpush1.msra.mxu0 0.0
    %3937 = vmatprep.subr.mxu0 0.0
    %3938 = vmatpush1.msra.mxu0 0.0
    %3939 = vmatprep.subr.mxu0 0.0
    %3940 = vmatpush1.msra.mxu0 0.0
    %3941 = vmatprep.subr.mxu0 0.0
    %3942 = vmatpush1.msra.mxu0 0.0
    %3943 = vmatprep.subr.mxu0 0.0
    %3944 = vmatpush1.msra.mxu0 0.0
    %3945 = vmatprep.subr.mxu0 0.0
    %3946 = vmatpush1.msra.mxu0 0.0
    %3947 = vmatprep.subr.mxu0 0.0
    %3948 = vmatpush1.msra.mxu0 0.0
    %3949 = vmatprep.subr.mxu0 0.0
    %3950 = vmatpush1.msra.mxu0 0.0
    %3951 = vmatprep.subr.mxu0 0.0
    %3952 = vmatpush1.msra.mxu0 0.0
    %3953 = vmatprep.mubr.f32.mxu0 0.0
    %3954 = vmatmul.mubr.f32.gmra.mrb[0].mxu0 %v3887
    %v3955 = vpop.f32.mrb[0].mxu0
    %v3956 = vadd.f32 0.0, %v3955
    %v3957 = vpop.f32.mrb[0].mxu0
    %v3958 = vadd.f32 0.0, %v3957
    %3959 = vdwg.mxu0
    %v3960 = vadd.f32 %v3810, %v3956
    %v3961 = vadd.f32 %v3811, %v3958
    %3962 = vmatprep.subr.mxu0 0.0
    %3963 = vmatpush1.msra.mxu0 %v3660
    %3964 = vmatprep.subr.mxu0 0.0
    %3965 = vmatpush1.msra.mxu0 %v3661
    %3966 = vmatprep.subr.mxu0 0.0
    %3967 = vmatpush1.msra.mxu0 0.0
    %3968 = vmatprep.subr.mxu0 0.0
    %3969 = vmatpush1.msra.mxu0 0.0
    %3970 = vmatprep.subr.mxu0 0.0
    %3971 = vmatpush1.msra.mxu0 0.0
    %3972 = vmatprep.subr.mxu0 0.0
    %3973 = vmatpush1.msra.mxu0 0.0
    %3974 = vmatprep.subr.mxu0 0.0
    %3975 = vmatpush1.msra.mxu0 0.0
    %3976 = vmatprep.subr.mxu0 0.0
    %3977 = vmatpush1.msra.mxu0 0.0
    %3978 = vmatprep.subr.mxu0 0.0
    %3979 = vmatpush1.msra.mxu0 0.0
    %3980 = vmatprep.subr.mxu0 0.0
    %3981 = vmatpush1.msra.mxu0 0.0
    %3982 = vmatprep.subr.mxu0 0.0
    %3983 = vmatpush1.msra.mxu0 0.0
    %3984 = vmatprep.subr.mxu0 0.0
    %3985 = vmatpush1.msra.mxu0 0.0
    %3986 = vmatprep.subr.mxu0 0.0
    %3987 = vmatpush1.msra.mxu0 0.0
    %3988 = vmatprep.subr.mxu0 0.0
    %3989 = vmatpush1.msra.mxu0 0.0
    %3990 = vmatprep.subr.mxu0 0.0
    %3991 = vmatpush1.msra.mxu0 0.0
    %3992 = vmatprep.subr.mxu0 0.0
    %3993 = vmatpush1.msra.mxu0 0.0
    %3994 = vmatprep.subr.mxu0 0.0
    %3995 = vmatpush1.msra.mxu0 0.0
    %3996 = vmatprep.subr.mxu0 0.0
    %3997 = vmatpush1.msra.mxu0 0.0
    %3998 = vmatprep.subr.mxu0 0.0
    %3999 = vmatpush1.msra.mxu0 0.0
    %4000 = vmatprep.subr.mxu0 0.0
    %4001 = vmatpush1.msra.mxu0 0.0
    %4002 = vmatprep.subr.mxu0 0.0
    %4003 = vmatpush1.msra.mxu0 0.0
    %4004 = vmatprep.subr.mxu0 0.0
    %4005 = vmatpush1.msra.mxu0 0.0
    %4006 = vmatprep.subr.mxu0 0.0
    %4007 = vmatpush1.msra.mxu0 0.0
    %4008 = vmatprep.subr.mxu0 0.0
    %4009 = vmatpush1.msra.mxu0 0.0
    %4010 = vmatprep.subr.mxu0 0.0
    %4011 = vmatpush1.msra.mxu0 0.0
    %4012 = vmatprep.subr.mxu0 0.0
    %4013 = vmatpush1.msra.mxu0 0.0
    %4014 = vmatprep.subr.mxu0 0.0
    %4015 = vmatpush1.msra.mxu0 0.0
    %4016 = vmatprep.subr.mxu0 0.0
    %4017 = vmatpush1.msra.mxu0 0.0
    %4018 = vmatprep.subr.mxu0 0.0
    %4019 = vmatpush1.msra.mxu0 0.0
    %4020 = vmatprep.subr.mxu0 0.0
    %4021 = vmatpush1.msra.mxu0 0.0
    %4022 = vmatprep.subr.mxu0 0.0
    %4023 = vmatpush1.msra.mxu0 0.0
    %4024 = vmatprep.subr.mxu0 0.0
    %4025 = vmatpush1.msra.mxu0 0.0
    %4026 = vmatprep.mubr.f32.mxu0 0.0
    %4027 = vmatmul.mubr.f32.gmra.mrb[0].mxu0 %v3054
    %v4028 = vpop.f32.mrb[0].mxu0
    %v4029 = vadd.f32 0.0, %v4028
    %v4030 = vpop.f32.mrb[0].mxu0
    %4031 = vdwg.mxu0
    %v4032 = vld [vmem:[%s1349] sm:$0xff]
    %v4033 = vld [vmem:[%s1349 + $0x8] sm:$0xff]
    %v4034 = vld [vmem:[%s1349 + $0x10] sm:$0xff]
    %v4035 = vld [vmem:[%s1349 + $0x18] sm:$0xff]
    %v4037 = vsel %vm56, %v4029, 0
    %4039 = vmatprep.subr.mxu0 %v4033
    %4040 = vmatpush1.msra.mxu0 %v4032
    %4041 = vmatprep.subr.mxu0 %v4035
    %4042 = vmatpush1.msra.mxu0 %v4034
    %4043 = vmatprep.subr.mxu0 0.0
    %4044 = vmatpush1.msra.mxu0 0.0
    %4045 = vmatprep.subr.mxu0 0.0
    %4046 = vmatpush1.msra.mxu0 0.0
    %4047 = vmatprep.subr.mxu0 0.0
    %4048 = vmatpush1.msra.mxu0 0.0
    %4049 = vmatprep.subr.mxu0 0.0
    %4050 = vmatpush1.msra.mxu0 0.0
    %4051 = vmatprep.subr.mxu0 0.0
    %4052 = vmatpush1.msra.mxu0 0.0
    %4053 = vmatprep.subr.mxu0 0.0
    %4054 = vmatpush1.msra.mxu0 0.0
    %4055 = vmatprep.subr.mxu0 0.0
    %4056 = vmatpush1.msra.mxu0 0.0
    %4057 = vmatprep.subr.mxu0 0.0
    %4058 = vmatpush1.msra.mxu0 0.0
    %4059 = vmatprep.subr.mxu0 0.0
    %4060 = vmatpush1.msra.mxu0 0.0
    %4061 = vmatprep.subr.mxu0 0.0
    %4062 = vmatpush1.msra.mxu0 0.0
    %4063 = vmatprep.subr.mxu0 0.0
    %4064 = vmatpush1.msra.mxu0 0.0
    %4065 = vmatprep.subr.mxu0 0.0
    %4066 = vmatpush1.msra.mxu0 0.0
    %4067 = vmatprep.subr.mxu0 0.0
    %4068 = vmatpush1.msra.mxu0 0.0
    %4069 = vmatprep.subr.mxu0 0.0
    %4070 = vmatpush1.msra.mxu0 0.0
    %4071 = vmatprep.subr.mxu0 0.0
    %4072 = vmatpush1.msra.mxu0 0.0
    %4073 = vmatprep.subr.mxu0 0.0
    %4074 = vmatpush1.msra.mxu0 0.0
    %4075 = vmatprep.subr.mxu0 0.0
    %4076 = vmatpush1.msra.mxu0 0.0
    %4077 = vmatprep.subr.mxu0 0.0
    %4078 = vmatpush1.msra.mxu0 0.0
    %4079 = vmatprep.subr.mxu0 0.0
    %4080 = vmatpush1.msra.mxu0 0.0
    %4081 = vmatprep.subr.mxu0 0.0
    %4082 = vmatpush1.msra.mxu0 0.0
    %4083 = vmatprep.subr.mxu0 0.0
    %4084 = vmatpush1.msra.mxu0 0.0
    %4085 = vmatprep.subr.mxu0 0.0
    %4086 = vmatpush1.msra.mxu0 0.0
    %4087 = vmatprep.subr.mxu0 0.0
    %4088 = vmatpush1.msra.mxu0 0.0
    %4089 = vmatprep.subr.mxu0 0.0
    %4090 = vmatpush1.msra.mxu0 0.0
    %4091 = vmatprep.subr.mxu0 0.0
    %4092 = vmatpush1.msra.mxu0 0.0
    %4093 = vmatprep.subr.mxu0 0.0
    %4094 = vmatpush1.msra.mxu0 0.0
    %4095 = vmatprep.subr.mxu0 0.0
    %4096 = vmatpush1.msra.mxu0 0.0
    %4097 = vmatprep.subr.mxu0 0.0
    %4098 = vmatpush1.msra.mxu0 0.0
    %4099 = vmatprep.subr.mxu0 0.0
    %4100 = vmatpush1.msra.mxu0 0.0
    %4101 = vmatprep.subr.mxu0 0.0
    %4102 = vmatpush1.msra.mxu0 0.0
    %4103 = vmatprep.mubr.f32.mxu0 0.0
    %4104 = vmatmul.mubr.f32.gmra.mrb[0].mxu0 %v4037
    %v4105 = vpop.f32.mrb[0].mxu0
    %v4106 = vadd.f32 0.0, %v4105
    %v4107 = vpop.f32.mrb[0].mxu0
    %v4108 = vadd.f32 0.0, %v4107
    %4109 = vdwg.mxu0
    %v4110 = vadd.f32 %v3960, %v4106
    %v4111 = vadd.f32 %v3961, %v4108
    %s4112 = scalar_lea.vmem %s0, 112
    %v4113 = vld [vmem:[%s4112] sm:$0xff]
    %v4114 = vld [vmem:[%s4112 + $0x8] sm:$0xff]
    %4115 = vmatprep.subr.mxu0 0.0
    %4116 = vmatpush1.msra.mxu0 %v4113
    %4117 = vmatprep.subr.mxu0 0.0
    %4118 = vmatpush1.msra.mxu0 %v4114
    %4119 = vmatprep.subr.mxu0 0.0
    %4120 = vmatpush1.msra.mxu0 0.0
    %4121 = vmatprep.subr.mxu0 0.0
    %4122 = vmatpush1.msra.mxu0 0.0
    %4123 = vmatprep.subr.mxu0 0.0
    %4124 = vmatpush1.msra.mxu0 0.0
    %4125 = vmatprep.subr.mxu0 0.0
    %4126 = vmatpush1.msra.mxu0 0.0
    %4127 = vmatprep.subr.mxu0 0.0
    %4128 = vmatpush1.msra.mxu0 0.0
    %4129 = vmatprep.subr.mxu0 0.0
    %4130 = vmatpush1.msra.mxu0 0.0
    %4131 = vmatprep.subr.mxu0 0.0
    %4132 = vmatpush1.msra.mxu0 0.0
    %4133 = vmatprep.subr.mxu0 0.0
    %4134 = vmatpush1.msra.mxu0 0.0
    %4135 = vmatprep.subr.mxu0 0.0
    %4136 = vmatpush1.msra.mxu0 0.0
    %4137 = vmatprep.subr.mxu0 0.0
    %4138 = vmatpush1.msra.mxu0 0.0
    %4139 = vmatprep.subr.mxu0 0.0
    %4140 = vmatpush1.msra.mxu0 0.0
    %4141 = vmatprep.subr.mxu0 0.0
    %4142 = vmatpush1.msra.mxu0 0.0
    %4143 = vmatprep.subr.mxu0 0.0
    %4144 = vmatpush1.msra.mxu0 0.0
    %4145 = vmatprep.subr.mxu0 0.0
    %4146 = vmatpush1.msra.mxu0 0.0
    %4147 = vmatprep.subr.mxu0 0.0
    %4148 = vmatpush1.msra.mxu0 0.0
    %4149 = vmatprep.subr.mxu0 0.0
    %4150 = vmatpush1.msra.mxu0 0.0
    %4151 = vmatprep.subr.mxu0 0.0
    %4152 = vmatpush1.msra.mxu0 0.0
    %4153 = vmatprep.subr.mxu0 0.0
    %4154 = vmatpush1.msra.mxu0 0.0
    %4155 = vmatprep.subr.mxu0 0.0
    %4156 = vmatpush1.msra.mxu0 0.0
    %4157 = vmatprep.subr.mxu0 0.0
    %4158 = vmatpush1.msra.mxu0 0.0
    %4159 = vmatprep.subr.mxu0 0.0
    %4160 = vmatpush1.msra.mxu0 0.0
    %4161 = vmatprep.subr.mxu0 0.0
    %4162 = vmatpush1.msra.mxu0 0.0
    %4163 = vmatprep.subr.mxu0 0.0
    %4164 = vmatpush1.msra.mxu0 0.0
    %4165 = vmatprep.subr.mxu0 0.0
    %4166 = vmatpush1.msra.mxu0 0.0
    %4167 = vmatprep.subr.mxu0 0.0
    %4168 = vmatpush1.msra.mxu0 0.0
    %4169 = vmatprep.subr.mxu0 0.0
    %4170 = vmatpush1.msra.mxu0 0.0
    %4171 = vmatprep.subr.mxu0 0.0
    %4172 = vmatpush1.msra.mxu0 0.0
    %4173 = vmatprep.subr.mxu0 0.0
    %4174 = vmatpush1.msra.mxu0 0.0
    %4175 = vmatprep.subr.mxu0 0.0
    %4176 = vmatpush1.msra.mxu0 0.0
    %4177 = vmatprep.subr.mxu0 0.0
    %4178 = vmatpush1.msra.mxu0 0.0
    %4179 = vmatprep.mubr.f32.mxu0 0.0
    %4180 = vmatmul.mubr.f32.gmra.mrb[0].mxu0 %v2750
    %v4181 = vpop.f32.mrb[0].mxu0
    %v4182 = vadd.f32 0.0, %v4181
    %v4183 = vpop.f32.mrb[0].mxu0
    %4184 = vdwg.mxu0
    %v4185 = vld [vmem:[%s1503] sm:$0xff]
    %v4186 = vld [vmem:[%s1503 + $0x8] sm:$0xff]
    %v4187 = vld [vmem:[%s1503 + $0x10] sm:$0xff]
    %v4188 = vld [vmem:[%s1503 + $0x18] sm:$0xff]
    %v4190 = vsel %vm56, %v4182, 0
    %4192 = vmatprep.subr.mxu0 %v4186
    %4193 = vmatpush1.msra.mxu0 %v4185
    %4194 = vmatprep.subr.mxu0 %v4188
    %4195 = vmatpush1.msra.mxu0 %v4187
    %4196 = vmatprep.subr.mxu0 0.0
    %4197 = vmatpush1.msra.mxu0 0.0
    %4198 = vmatprep.subr.mxu0 0.0
    %4199 = vmatpush1.msra.mxu0 0.0
    %4200 = vmatprep.subr.mxu0 0.0
    %4201 = vmatpush1.msra.mxu0 0.0
    %4202 = vmatprep.subr.mxu0 0.0
    %4203 = vmatpush1.msra.mxu0 0.0
    %4204 = vmatprep.subr.mxu0 0.0
    %4205 = vmatpush1.msra.mxu0 0.0
    %4206 = vmatprep.subr.mxu0 0.0
    %4207 = vmatpush1.msra.mxu0 0.0
    %4208 = vmatprep.subr.mxu0 0.0
    %4209 = vmatpush1.msra.mxu0 0.0
    %4210 = vmatprep.subr.mxu0 0.0
    %4211 = vmatpush1.msra.mxu0 0.0
    %4212 = vmatprep.subr.mxu0 0.0
    %4213 = vmatpush1.msra.mxu0 0.0
    %4214 = vmatprep.subr.mxu0 0.0
    %4215 = vmatpush1.msra.mxu0 0.0
    %4216 = vmatprep.subr.mxu0 0.0
    %4217 = vmatpush1.msra.mxu0 0.0
    %4218 = vmatprep.subr.mxu0 0.0
    %4219 = vmatpush1.msra.mxu0 0.0
    %4220 = vmatprep.subr.mxu0 0.0
    %4221 = vmatpush1.msra.mxu0 0.0
    %4222 = vmatprep.subr.mxu0 0.0
    %4223 = vmatpush1.msra.mxu0 0.0
    %4224 = vmatprep.subr.mxu0 0.0
    %4225 = vmatpush1.msra.mxu0 0.0
    %4226 = vmatprep.subr.mxu0 0.0
    %4227 = vmatpush1.msra.mxu0 0.0
    %4228 = vmatprep.subr.mxu0 0.0
    %4229 = vmatpush1.msra.mxu0 0.0
    %4230 = vmatprep.subr.mxu0 0.0
    %4231 = vmatpush1.msra.mxu0 0.0
    %4232 = vmatprep.subr.mxu0 0.0
    %4233 = vmatpush1.msra.mxu0 0.0
    %4234 = vmatprep.subr.mxu0 0.0
    %4235 = vmatpush1.msra.mxu0 0.0
    %4236 = vmatprep.subr.mxu0 0.0
    %4237 = vmatpush1.msra.mxu0 0.0
    %4238 = vmatprep.subr.mxu0 0.0
    %4239 = vmatpush1.msra.mxu0 0.0
    %4240 = vmatprep.subr.mxu0 0.0
    %4241 = vmatpush1.msra.mxu0 0.0
    %4242 = vmatprep.subr.mxu0 0.0
    %4243 = vmatpush1.msra.mxu0 0.0
    %4244 = vmatprep.subr.mxu0 0.0
    %4245 = vmatpush1.msra.mxu0 0.0
    %4246 = vmatprep.subr.mxu0 0.0
    %4247 = vmatpush1.msra.mxu0 0.0
    %4248 = vmatprep.subr.mxu0 0.0
    %4249 = vmatpush1.msra.mxu0 0.0
    %4250 = vmatprep.subr.mxu0 0.0
    %4251 = vmatpush1.msra.mxu0 0.0
    %4252 = vmatprep.subr.mxu0 0.0
    %4253 = vmatpush1.msra.mxu0 0.0
    %4254 = vmatprep.subr.mxu0 0.0
    %4255 = vmatpush1.msra.mxu0 0.0
    %4256 = vmatprep.mubr.f32.mxu0 0.0
    %4257 = vmatmul.mubr.f32.gmra.mrb[0].mxu0 %v4190
    %v4258 = vpop.f32.mrb[0].mxu0
    %v4259 = vadd.f32 0.0, %v4258
    %v4260 = vpop.f32.mrb[0].mxu0
    %v4261 = vadd.f32 0.0, %v4260
    %4262 = vdwg.mxu0
    %v4263 = vadd.f32 %v4110, %v4259
    %v4264 = vadd.f32 %v4111, %v4261
    %4265 = vmatprep.subr.mxu0 0.0
    %4266 = vmatpush1.msra.mxu0 %v4113
    %4267 = vmatprep.subr.mxu0 0.0
    %4268 = vmatpush1.msra.mxu0 %v4114
    %4269 = vmatprep.subr.mxu0 0.0
    %4270 = vmatpush1.msra.mxu0 0.0
    %4271 = vmatprep.subr.mxu0 0.0
    %4272 = vmatpush1.msra.mxu0 0.0
    %4273 = vmatprep.subr.mxu0 0.0
    %4274 = vmatpush1.msra.mxu0 0.0
    %4275 = vmatprep.subr.mxu0 0.0
    %4276 = vmatpush1.msra.mxu0 0.0
    %4277 = vmatprep.subr.mxu0 0.0
    %4278 = vmatpush1.msra.mxu0 0.0
    %4279 = vmatprep.subr.mxu0 0.0
    %4280 = vmatpush1.msra.mxu0 0.0
    %4281 = vmatprep.subr.mxu0 0.0
    %4282 = vmatpush1.msra.mxu0 0.0
    %4283 = vmatprep.subr.mxu0 0.0
    %4284 = vmatpush1.msra.mxu0 0.0
    %4285 = vmatprep.subr.mxu0 0.0
    %4286 = vmatpush1.msra.mxu0 0.0
    %4287 = vmatprep.subr.mxu0 0.0
    %4288 = vmatpush1.msra.mxu0 0.0
    %4289 = vmatprep.subr.mxu0 0.0
    %4290 = vmatpush1.msra.mxu0 0.0
    %4291 = vmatprep.subr.mxu0 0.0
    %4292 = vmatpush1.msra.mxu0 0.0
    %4293 = vmatprep.subr.mxu0 0.0
    %4294 = vmatpush1.msra.mxu0 0.0
    %4295 = vmatprep.subr.mxu0 0.0
    %4296 = vmatpush1.msra.mxu0 0.0
    %4297 = vmatprep.subr.mxu0 0.0
    %4298 = vmatpush1.msra.mxu0 0.0
    %4299 = vmatprep.subr.mxu0 0.0
    %4300 = vmatpush1.msra.mxu0 0.0
    %4301 = vmatprep.subr.mxu0 0.0
    %4302 = vmatpush1.msra.mxu0 0.0
    %4303 = vmatprep.subr.mxu0 0.0
    %4304 = vmatpush1.msra.mxu0 0.0
    %4305 = vmatprep.subr.mxu0 0.0
    %4306 = vmatpush1.msra.mxu0 0.0
    %4307 = vmatprep.subr.mxu0 0.0
    %4308 = vmatpush1.msra.mxu0 0.0
    %4309 = vmatprep.subr.mxu0 0.0
    %4310 = vmatpush1.msra.mxu0 0.0
    %4311 = vmatprep.subr.mxu0 0.0
    %4312 = vmatpush1.msra.mxu0 0.0
    %4313 = vmatprep.subr.mxu0 0.0
    %4314 = vmatpush1.msra.mxu0 0.0
    %4315 = vmatprep.subr.mxu0 0.0
    %4316 = vmatpush1.msra.mxu0 0.0
    %4317 = vmatprep.subr.mxu0 0.0
    %4318 = vmatpush1.msra.mxu0 0.0
    %4319 = vmatprep.subr.mxu0 0.0
    %4320 = vmatpush1.msra.mxu0 0.0
    %4321 = vmatprep.subr.mxu0 0.0
    %4322 = vmatpush1.msra.mxu0 0.0
    %4323 = vmatprep.subr.mxu0 0.0
    %4324 = vmatpush1.msra.mxu0 0.0
    %4325 = vmatprep.subr.mxu0 0.0
    %4326 = vmatpush1.msra.mxu0 0.0
    %4327 = vmatprep.subr.mxu0 0.0
    %4328 = vmatpush1.msra.mxu0 0.0
    %4329 = vmatprep.mubr.f32.mxu0 0.0
    %4330 = vmatmul.mubr.f32.gmra.mrb[0].mxu0 %v2828
    %v4331 = vpop.f32.mrb[0].mxu0
    %v4332 = vadd.f32 0.0, %v4331
    %v4333 = vpop.f32.mrb[0].mxu0
    %4334 = vdwg.mxu0
    %v4335 = vld [vmem:[%s1654] sm:$0xff]
    %v4336 = vld [vmem:[%s1654 + $0x8] sm:$0xff]
    %v4337 = vld [vmem:[%s1654 + $0x10] sm:$0xff]
    %v4338 = vld [vmem:[%s1654 + $0x18] sm:$0xff]
    %v4340 = vsel %vm56, %v4332, 0
    %4342 = vmatprep.subr.mxu0 %v4336
    %4343 = vmatpush1.msra.mxu0 %v4335
    %4344 = vmatprep.subr.mxu0 %v4338
    %4345 = vmatpush1.msra.mxu0 %v4337
    %4346 = vmatprep.subr.mxu0 0.0
    %4347 = vmatpush1.msra.mxu0 0.0
    %4348 = vmatprep.subr.mxu0 0.0
    %4349 = vmatpush1.msra.mxu0 0.0
    %4350 = vmatprep.subr.mxu0 0.0
    %4351 = vmatpush1.msra.mxu0 0.0
    %4352 = vmatprep.subr.mxu0 0.0
    %4353 = vmatpush1.msra.mxu0 0.0
    %4354 = vmatprep.subr.mxu0 0.0
    %4355 = vmatpush1.msra.mxu0 0.0
    %4356 = vmatprep.subr.mxu0 0.0
    %4357 = vmatpush1.msra.mxu0 0.0
    %4358 = vmatprep.subr.mxu0 0.0
    %4359 = vmatpush1.msra.mxu0 0.0
    %4360 = vmatprep.subr.mxu0 0.0
    %4361 = vmatpush1.msra.mxu0 0.0
    %4362 = vmatprep.subr.mxu0 0.0
    %4363 = vmatpush1.msra.mxu0 0.0
    %4364 = vmatprep.subr.mxu0 0.0
    %4365 = vmatpush1.msra.mxu0 0.0
    %4366 = vmatprep.subr.mxu0 0.0
    %4367 = vmatpush1.msra.mxu0 0.0
    %4368 = vmatprep.subr.mxu0 0.0
    %4369 = vmatpush1.msra.mxu0 0.0
    %4370 = vmatprep.subr.mxu0 0.0
    %4371 = vmatpush1.msra.mxu0 0.0
    %4372 = vmatprep.subr.mxu0 0.0
    %4373 = vmatpush1.msra.mxu0 0.0
    %4374 = vmatprep.subr.mxu0 0.0
    %4375 = vmatpush1.msra.mxu0 0.0
    %4376 = vmatprep.subr.mxu0 0.0
    %4377 = vmatpush1.msra.mxu0 0.0
    %4378 = vmatprep.subr.mxu0 0.0
    %4379 = vmatpush1.msra.mxu0 0.0
    %4380 = vmatprep.subr.mxu0 0.0
    %4381 = vmatpush1.msra.mxu0 0.0
    %4382 = vmatprep.subr.mxu0 0.0
    %4383 = vmatpush1.msra.mxu0 0.0
    %4384 = vmatprep.subr.mxu0 0.0
    %4385 = vmatpush1.msra.mxu0 0.0
    %4386 = vmatprep.subr.mxu0 0.0
    %4387 = vmatpush1.msra.mxu0 0.0
    %4388 = vmatprep.subr.mxu0 0.0
    %4389 = vmatpush1.msra.mxu0 0.0
    %4390 = vmatprep.subr.mxu0 0.0
    %4391 = vmatpush1.msra.mxu0 0.0
    %4392 = vmatprep.subr.mxu0 0.0
    %4393 = vmatpush1.msra.mxu0 0.0
    %4394 = vmatprep.subr.mxu0 0.0
    %4395 = vmatpush1.msra.mxu0 0.0
    %4396 = vmatprep.subr.mxu0 0.0
    %4397 = vmatpush1.msra.mxu0 0.0
    %4398 = vmatprep.subr.mxu0 0.0
    %4399 = vmatpush1.msra.mxu0 0.0
    %4400 = vmatprep.subr.mxu0 0.0
    %4401 = vmatpush1.msra.mxu0 0.0
    %4402 = vmatprep.subr.mxu0 0.0
    %4403 = vmatpush1.msra.mxu0 0.0
    %4404 = vmatprep.subr.mxu0 0.0
    %4405 = vmatpush1.msra.mxu0 0.0
    %4406 = vmatprep.mubr.f32.mxu0 0.0
    %4407 = vmatmul.mubr.f32.gmra.mrb[0].mxu0 %v4340
    %v4408 = vpop.f32.mrb[0].mxu0
    %v4409 = vadd.f32 0.0, %v4408
    %v4410 = vpop.f32.mrb[0].mxu0
    %v4411 = vadd.f32 0.0, %v4410
    %4412 = vdwg.mxu0
    %v4413 = vadd.f32 %v4263, %v4409
    %v4414 = vadd.f32 %v4264, %v4411
    %4415 = vmatprep.subr.mxu0 0.0
    %4416 = vmatpush1.msra.mxu0 %v4113
    %4417 = vmatprep.subr.mxu0 0.0
    %4418 = vmatpush1.msra.mxu0 %v4114
    %4419 = vmatprep.subr.mxu0 0.0
    %4420 = vmatpush1.msra.mxu0 0.0
    %4421 = vmatprep.subr.mxu0 0.0
    %4422 = vmatpush1.msra.mxu0 0.0
    %4423 = vmatprep.subr.mxu0 0.0
    %4424 = vmatpush1.msra.mxu0 0.0
    %4425 = vmatprep.subr.mxu0 0.0
    %4426 = vmatpush1.msra.mxu0 0.0
    %4427 = vmatprep.subr.mxu0 0.0
    %4428 = vmatpush1.msra.mxu0 0.0
    %4429 = vmatprep.subr.mxu0 0.0
    %4430 = vmatpush1.msra.mxu0 0.0
    %4431 = vmatprep.subr.mxu0 0.0
    %4432 = vmatpush1.msra.mxu0 0.0
    %4433 = vmatprep.subr.mxu0 0.0
    %4434 = vmatpush1.msra.mxu0 0.0
    %4435 = vmatprep.subr.mxu0 0.0
    %4436 = vmatpush1.msra.mxu0 0.0
    %4437 = vmatprep.subr.mxu0 0.0
    %4438 = vmatpush1.msra.mxu0 0.0
    %4439 = vmatprep.subr.mxu0 0.0
    %4440 = vmatpush1.msra.mxu0 0.0
    %4441 = vmatprep.subr.mxu0 0.0
    %4442 = vmatpush1.msra.mxu0 0.0
    %4443 = vmatprep.subr.mxu0 0.0
    %4444 = vmatpush1.msra.mxu0 0.0
    %4445 = vmatprep.subr.mxu0 0.0
    %4446 = vmatpush1.msra.mxu0 0.0
    %4447 = vmatprep.subr.mxu0 0.0
    %4448 = vmatpush1.msra.mxu0 0.0
    %4449 = vmatprep.subr.mxu0 0.0
    %4450 = vmatpush1.msra.mxu0 0.0
    %4451 = vmatprep.subr.mxu0 0.0
    %4452 = vmatpush1.msra.mxu0 0.0
    %4453 = vmatprep.subr.mxu0 0.0
    %4454 = vmatpush1.msra.mxu0 0.0
    %4455 = vmatprep.subr.mxu0 0.0
    %4456 = vmatpush1.msra.mxu0 0.0
    %4457 = vmatprep.subr.mxu0 0.0
    %4458 = vmatpush1.msra.mxu0 0.0
    %4459 = vmatprep.subr.mxu0 0.0
    %4460 = vmatpush1.msra.mxu0 0.0
    %4461 = vmatprep.subr.mxu0 0.0
    %4462 = vmatpush1.msra.mxu0 0.0
    %4463 = vmatprep.subr.mxu0 0.0
    %4464 = vmatpush1.msra.mxu0 0.0
    %4465 = vmatprep.subr.mxu0 0.0
    %4466 = vmatpush1.msra.mxu0 0.0
    %4467 = vmatprep.subr.mxu0 0.0
    %4468 = vmatpush1.msra.mxu0 0.0
    %4469 = vmatprep.subr.mxu0 0.0
    %4470 = vmatpush1.msra.mxu0 0.0
    %4471 = vmatprep.subr.mxu0 0.0
    %4472 = vmatpush1.msra.mxu0 0.0
    %4473 = vmatprep.subr.mxu0 0.0
    %4474 = vmatpush1.msra.mxu0 0.0
    %4475 = vmatprep.subr.mxu0 0.0
    %4476 = vmatpush1.msra.mxu0 0.0
    %4477 = vmatprep.subr.mxu0 0.0
    %4478 = vmatpush1.msra.mxu0 0.0
    %4479 = vmatprep.mubr.f32.mxu0 0.0
    %4480 = vmatmul.mubr.f32.gmra.mrb[0].mxu0 %v3054
    %v4481 = vpop.f32.mrb[0].mxu0
    %v4482 = vadd.f32 0.0, %v4481
    %v4483 = vpop.f32.mrb[0].mxu0
    %4484 = vdwg.mxu0
    %v4485 = vld [vmem:[%s1805] sm:$0xff]
    %v4486 = vld [vmem:[%s1805 + $0x8] sm:$0xff]
    %v4487 = vld [vmem:[%s1805 + $0x10] sm:$0xff]
    %v4488 = vld [vmem:[%s1805 + $0x18] sm:$0xff]
    %v4490 = vsel %vm56, %v4482, 0
    %4492 = vmatprep.subr.mxu0 %v4486
    %4493 = vmatpush1.msra.mxu0 %v4485
    %4494 = vmatprep.subr.mxu0 %v4488
    %4495 = vmatpush1.msra.mxu0 %v4487
    %4496 = vmatprep.subr.mxu0 0.0
    %4497 = vmatpush1.msra.mxu0 0.0
    %4498 = vmatprep.subr.mxu0 0.0
    %4499 = vmatpush1.msra.mxu0 0.0
    %4500 = vmatprep.subr.mxu0 0.0
    %4501 = vmatpush1.msra.mxu0 0.0
    %4502 = vmatprep.subr.mxu0 0.0
    %4503 = vmatpush1.msra.mxu0 0.0
    %4504 = vmatprep.subr.mxu0 0.0
    %4505 = vmatpush1.msra.mxu0 0.0
    %4506 = vmatprep.subr.mxu0 0.0
    %4507 = vmatpush1.msra.mxu0 0.0
    %4508 = vmatprep.subr.mxu0 0.0
    %4509 = vmatpush1.msra.mxu0 0.0
    %4510 = vmatprep.subr.mxu0 0.0
    %4511 = vmatpush1.msra.mxu0 0.0
    %4512 = vmatprep.subr.mxu0 0.0
    %4513 = vmatpush1.msra.mxu0 0.0
    %4514 = vmatprep.subr.mxu0 0.0
    %4515 = vmatpush1.msra.mxu0 0.0
    %4516 = vmatprep.subr.mxu0 0.0
    %4517 = vmatpush1.msra.mxu0 0.0
    %4518 = vmatprep.subr.mxu0 0.0
    %4519 = vmatpush1.msra.mxu0 0.0
    %4520 = vmatprep.subr.mxu0 0.0
    %4521 = vmatpush1.msra.mxu0 0.0
    %4522 = vmatprep.subr.mxu0 0.0
    %4523 = vmatpush1.msra.mxu0 0.0
    %4524 = vmatprep.subr.mxu0 0.0
    %4525 = vmatpush1.msra.mxu0 0.0
    %4526 = vmatprep.subr.mxu0 0.0
    %4527 = vmatpush1.msra.mxu0 0.0
    %4528 = vmatprep.subr.mxu0 0.0
    %4529 = vmatpush1.msra.mxu0 0.0
    %4530 = vmatprep.subr.mxu0 0.0
    %4531 = vmatpush1.msra.mxu0 0.0
    %4532 = vmatprep.subr.mxu0 0.0
    %4533 = vmatpush1.msra.mxu0 0.0
    %4534 = vmatprep.subr.mxu0 0.0
    %4535 = vmatpush1.msra.mxu0 0.0
    %4536 = vmatprep.subr.mxu0 0.0
    %4537 = vmatpush1.msra.mxu0 0.0
    %4538 = vmatprep.subr.mxu0 0.0
    %4539 = vmatpush1.msra.mxu0 0.0
    %4540 = vmatprep.subr.mxu0 0.0
    %4541 = vmatpush1.msra.mxu0 0.0
    %4542 = vmatprep.subr.mxu0 0.0
    %4543 = vmatpush1.msra.mxu0 0.0
    %4544 = vmatprep.subr.mxu0 0.0
    %4545 = vmatpush1.msra.mxu0 0.0
    %4546 = vmatprep.subr.mxu0 0.0
    %4547 = vmatpush1.msra.mxu0 0.0
    %4548 = vmatprep.subr.mxu0 0.0
    %4549 = vmatpush1.msra.mxu0 0.0
    %4550 = vmatprep.subr.mxu0 0.0
    %4551 = vmatpush1.msra.mxu0 0.0
    %4552 = vmatprep.subr.mxu0 0.0
    %4553 = vmatpush1.msra.mxu0 0.0
    %4554 = vmatprep.subr.mxu0 0.0
    %4555 = vmatpush1.msra.mxu0 0.0
    %4556 = vmatprep.mubr.f32.mxu0 0.0
    %4557 = vmatmul.mubr.f32.gmra.mrb[0].mxu0 %v4490
    %v4558 = vpop.f32.mrb[0].mxu0
    %v4559 = vadd.f32 0.0, %v4558
    %v4560 = vpop.f32.mrb[0].mxu0
    %v4561 = vadd.f32 0.0, %v4560
    %4562 = vdwg.mxu0
    %v4563 = vadd.f32 %v4413, %v4559
    %v4564 = vadd.f32 %v4414, %v4561
    %v4565 = vld [vmem:[%s4] sm:$0x3]
    %v4567 = vlaneseq
    %v4568 = vshrl.u32 %v4567, 7
    %v4569 = vsub.s32 0, %v4568
    %v4570 = vrot.slane %v4565, %v4569
    %v4571 = vlaneseq
    %v4572 = vshrl.u32 %v4571, 7
    %v4573 = vsub.s32 1, %v4572
    %v4574 = vrot.slane %v4565, %v4573
    %v4577 = vadd.f32 %v4563, %v4570
    %v4578 = vadd.f32 %v4564, %v4574
    %v4579 = vmax.f32 %v4577, 0.0
    %v4580 = vmax.f32 %v4578, 0.0
    %v4581 = vld [vmem:[%s2] sm:$0x7]
    %v4583 = vsel %vm1903, %v4581, 0
    %v4586 = vsel %vm1907, %v4579, 0
    %v4589 = vsel %vm1907, %v4580, 0
    %4591 = vmatprep.subr.mxu0 %v4589
    %4592 = vmatpush1.msra.mxu0 %v4586
    %4593 = vmatprep.subr.mxu0 0.0
    %4594 = vmatpush1.msra.mxu0 0.0
    %4595 = vmatprep.subr.mxu0 0.0
    %4596 = vmatpush1.msra.mxu0 0.0
    %4597 = vmatprep.subr.mxu0 0.0
    %4598 = vmatpush1.msra.mxu0 0.0
    %4599 = vmatprep.subr.mxu0 0.0
    %4600 = vmatpush1.msra.mxu0 0.0
    %4601 = vmatprep.subr.mxu0 0.0
    %4602 = vmatpush1.msra.mxu0 0.0
    %4603 = vmatprep.subr.mxu0 0.0
    %4604 = vmatpush1.msra.mxu0 0.0
    %4605 = vmatprep.subr.mxu0 0.0
    %4606 = vmatpush1.msra.mxu0 0.0
    %4607 = vmatprep.subr.mxu0 0.0
    %4608 = vmatpush1.msra.mxu0 0.0
    %4609 = vmatprep.subr.mxu0 0.0
    %4610 = vmatpush1.msra.mxu0 0.0
    %4611 = vmatprep.subr.mxu0 0.0
    %4612 = vmatpush1.msra.mxu0 0.0
    %4613 = vmatprep.subr.mxu0 0.0
    %4614 = vmatpush1.msra.mxu0 0.0
    %4615 = vmatprep.subr.mxu0 0.0
    %4616 = vmatpush1.msra.mxu0 0.0
    %4617 = vmatprep.subr.mxu0 0.0
    %4618 = vmatpush1.msra.mxu0 0.0
    %4619 = vmatprep.subr.mxu0 0.0
    %4620 = vmatpush1.msra.mxu0 0.0
    %4621 = vmatprep.subr.mxu0 0.0
    %4622 = vmatpush1.msra.mxu0 0.0
    %4623 = vmatprep.subr.mxu0 0.0
    %4624 = vmatpush1.msra.mxu0 0.0
    %4625 = vmatprep.subr.mxu0 0.0
    %4626 = vmatpush1.msra.mxu0 0.0
    %4627 = vmatprep.subr.mxu0 0.0
    %4628 = vmatpush1.msra.mxu0 0.0
    %4629 = vmatprep.subr.mxu0 0.0
    %4630 = vmatpush1.msra.mxu0 0.0
    %4631 = vmatprep.subr.mxu0 0.0
    %4632 = vmatpush1.msra.mxu0 0.0
    %4633 = vmatprep.subr.mxu0 0.0
    %4634 = vmatpush1.msra.mxu0 0.0
    %4635 = vmatprep.subr.mxu0 0.0
    %4636 = vmatpush1.msra.mxu0 0.0
    %4637 = vmatprep.subr.mxu0 0.0
    %4638 = vmatpush1.msra.mxu0 0.0
    %4639 = vmatprep.subr.mxu0 0.0
    %4640 = vmatpush1.msra.mxu0 0.0
    %4641 = vmatprep.subr.mxu0 0.0
    %4642 = vmatpush1.msra.mxu0 0.0
    %4643 = vmatprep.subr.mxu0 0.0
    %4644 = vmatpush1.msra.mxu0 0.0
    %4645 = vmatprep.subr.mxu0 0.0
    %4646 = vmatpush1.msra.mxu0 0.0
    %4647 = vmatprep.subr.mxu0 0.0
    %4648 = vmatpush1.msra.mxu0 0.0
    %4649 = vmatprep.subr.mxu0 0.0
    %4650 = vmatpush1.msra.mxu0 0.0
    %4651 = vmatprep.subr.mxu0 0.0
    %4652 = vmatpush1.msra.mxu0 0.0
    %4653 = vmatprep.subr.mxu0 0.0
    %4654 = vmatpush1.msra.mxu0 0.0
    %4655 = vmatprep.mubr.f32.mxu0 0.0
    %4656 = vmatmul.mubr.f32.gmra.mrb[0].mxu0 %v4583
    %v4657 = vpop.f32.mrb[0].mxu0
    %v4658 = vadd.f32 0.0, %v4657
    %v4659 = vpop.f32.mrb[0].mxu0
    %v4660 = vadd.f32 0.0, %v4659
    %4661 = vdwg.mxu0
    %v4662 = vld [vmem:[#allocation2] sm:$0xff]
    %v4663 = vld [vmem:[#allocation2 + $0x8] sm:$0xff]
    %v4664 = vld [vmem:[#allocation2 + $0x10] sm:$0xff]
    %v4665 = vld [vmem:[#allocation2 + $0x18] sm:$0xff]
    %v4666 = vld [vmem:[#allocation2 + $0x20] sm:$0xff]
    %v4667 = vld [vmem:[#allocation2 + $0x28] sm:$0xff]
    %v4668 = vld [vmem:[#allocation2 + $0x30] sm:$0xff]
    %v4669 = vld [vmem:[#allocation2 + $0x38] sm:$0xff]
    %v4670 = vld [vmem:[#allocation2 + $0x40] sm:$0xff]
    %v4671 = vld [vmem:[#allocation2 + $0x48] sm:$0xff]
    %v4672 = vld [vmem:[#allocation2 + $0x50] sm:$0xff]
    %v4673 = vld [vmem:[#allocation2 + $0x58] sm:$0xff]
    %v4674 = vld [vmem:[#allocation2 + $0x60] sm:$0xff]
    %v4675 = vld [vmem:[#allocation2 + $0x68] sm:$0xff]
    %v4676 = vld [vmem:[#allocation2 + $0x70] sm:$0xff]
    %v4677 = vld [vmem:[#allocation2 + $0x78] sm:$0xff]
    %v4678 = vld [vmem:[#allocation2 + $0x80] sm:$0xff]
    %v4679 = vld [vmem:[#allocation2 + $0x88] sm:$0xff]
    %v4680 = vld [vmem:[#allocation2 + $0x90] sm:$0xff]
    %v4681 = vld [vmem:[#allocation2 + $0x98] sm:$0xff]
    %v4682 = vld [vmem:[#allocation2 + $0xa0] sm:$0xff]
    %v4683 = vld [vmem:[#allocation2 + $0xa8] sm:$0xff]
    %v4684 = vld [vmem:[#allocation2 + $0xb0] sm:$0xff]
    %v4685 = vld [vmem:[#allocation2 + $0xb8] sm:$0xff]
    %v4686 = vld [vmem:[#allocation2 + $0xc0] sm:$0xff]
    %v4687 = vld [vmem:[#allocation2 + $0xc8] sm:$0xff]
    %v4688 = vld [vmem:[#allocation2 + $0xd0] sm:$0xff]
    %v4689 = vld [vmem:[#allocation2 + $0xd8] sm:$0xff]
    %v4690 = vld [vmem:[#allocation2 + $0xe0] sm:$0xff]
    %v4691 = vld [vmem:[#allocation2 + $0xe8] sm:$0xff]
    %v4692 = vld [vmem:[#allocation2 + $0xf0] sm:$0xff]
    %v4693 = vld [vmem:[#allocation2 + $0xf8] sm:$0xff]
    %v4694 = vld [vmem:[%s2017] sm:$0x7]
    %v4696 = vsel %vm1903, %v4694, 0
    %4698 = vmatprep.subr.mxu0 %v4589
    %4699 = vmatpush1.msra.mxu0 %v4586
    %4700 = vmatprep.subr.mxu0 0.0
    %4701 = vmatpush1.msra.mxu0 0.0
    %4702 = vmatprep.subr.mxu0 0.0
    %4703 = vmatpush1.msra.mxu0 0.0
    %4704 = vmatprep.subr.mxu0 0.0
    %4705 = vmatpush1.msra.mxu0 0.0
    %4706 = vmatprep.subr.mxu0 0.0
    %4707 = vmatpush1.msra.mxu0 0.0
    %4708 = vmatprep.subr.mxu0 0.0
    %4709 = vmatpush1.msra.mxu0 0.0
    %4710 = vmatprep.subr.mxu0 0.0
    %4711 = vmatpush1.msra.mxu0 0.0
    %4712 = vmatprep.subr.mxu0 0.0
    %4713 = vmatpush1.msra.mxu0 0.0
    %4714 = vmatprep.subr.mxu0 0.0
    %4715 = vmatpush1.msra.mxu0 0.0
    %4716 = vmatprep.subr.mxu0 0.0
    %4717 = vmatpush1.msra.mxu0 0.0
    %4718 = vmatprep.subr.mxu0 0.0
    %4719 = vmatpush1.msra.mxu0 0.0
    %4720 = vmatprep.subr.mxu0 0.0
    %4721 = vmatpush1.msra.mxu0 0.0
    %4722 = vmatprep.subr.mxu0 0.0
    %4723 = vmatpush1.msra.mxu0 0.0
    %4724 = vmatprep.subr.mxu0 0.0
    %4725 = vmatpush1.msra.mxu0 0.0
    %4726 = vmatprep.subr.mxu0 0.0
    %4727 = vmatpush1.msra.mxu0 0.0
    %4728 = vmatprep.subr.mxu0 0.0
    %4729 = vmatpush1.msra.mxu0 0.0
    %4730 = vmatprep.subr.mxu0 0.0
    %4731 = vmatpush1.msra.mxu0 0.0
    %4732 = vmatprep.subr.mxu0 0.0
    %4733 = vmatpush1.msra.mxu0 0.0
    %4734 = vmatprep.subr.mxu0 0.0
    %4735 = vmatpush1.msra.mxu0 0.0
    %4736 = vmatprep.subr.mxu0 0.0
    %4737 = vmatpush1.msra.mxu0 0.0
    %4738 = vmatprep.subr.mxu0 0.0
    %4739 = vmatpush1.msra.mxu0 0.0
    %4740 = vmatprep.subr.mxu0 0.0
    %4741 = vmatpush1.msra.mxu0 0.0
    %4742 = vmatprep.subr.mxu0 0.0
    %4743 = vmatpush1.msra.mxu0 0.0
    %4744 = vmatprep.subr.mxu0 0.0
    %4745 = vmatpush1.msra.mxu0 0.0
    %4746 = vmatprep.subr.mxu0 0.0
    %4747 = vmatpush1.msra.mxu0 0.0
    %4748 = vmatprep.subr.mxu0 0.0
    %4749 = vmatpush1.msra.mxu0 0.0
    %4750 = vmatprep.subr.mxu0 0.0
    %4751 = vmatpush1.msra.mxu0 0.0
    %4752 = vmatprep.subr.mxu0 0.0
    %4753 = vmatpush1.msra.mxu0 0.0
    %4754 = vmatprep.subr.mxu0 0.0
    %4755 = vmatpush1.msra.mxu0 0.0
    %4756 = vmatprep.subr.mxu0 0.0
    %4757 = vmatpush1.msra.mxu0 0.0
    %4758 = vmatprep.subr.mxu0 0.0
    %4759 = vmatpush1.msra.mxu0 0.0
    %4760 = vmatprep.subr.mxu0 0.0
    %4761 = vmatpush1.msra.mxu0 0.0
    %4762 = vmatprep.mubr.f32.mxu0 0.0
    %4763 = vmatmul.mubr.f32.gmra.mrb[0].mxu0 %v4696
    %v4764 = vpop.f32.mrb[0].mxu0
    %v4765 = vadd.f32 0.0, %v4764
    %v4766 = vpop.f32.mrb[0].mxu0
    %v4767 = vadd.f32 0.0, %v4766
    %4768 = vdwg.mxu0
    %v4769 = vld [vmem:[%s2093] sm:$0xff]
    %v4770 = vld [vmem:[%s2093 + $0x8] sm:$0xff]
    %v4771 = vld [vmem:[%s2093 + $0x10] sm:$0xff]
    %v4772 = vld [vmem:[%s2093 + $0x18] sm:$0xff]
    %v4773 = vld [vmem:[%s2093 + $0x20] sm:$0xff]
    %v4774 = vld [vmem:[%s2093 + $0x28] sm:$0xff]
    %v4775 = vld [vmem:[%s2093 + $0x30] sm:$0xff]
    %v4776 = vld [vmem:[%s2093 + $0x38] sm:$0xff]
    %v4777 = vld [vmem:[%s2093 + $0x40] sm:$0xff]
    %v4778 = vld [vmem:[%s2093 + $0x48] sm:$0xff]
    %v4779 = vld [vmem:[%s2093 + $0x50] sm:$0xff]
    %v4780 = vld [vmem:[%s2093 + $0x58] sm:$0xff]
    %v4781 = vld [vmem:[%s2093 + $0x60] sm:$0xff]
    %v4782 = vld [vmem:[%s2093 + $0x68] sm:$0xff]
    %v4783 = vld [vmem:[%s2093 + $0x70] sm:$0xff]
    %v4784 = vld [vmem:[%s2093 + $0x78] sm:$0xff]
    %v4785 = vld [vmem:[%s2093 + $0x80] sm:$0xff]
    %v4786 = vld [vmem:[%s2093 + $0x88] sm:$0xff]
    %v4787 = vld [vmem:[%s2093 + $0x90] sm:$0xff]
    %v4788 = vld [vmem:[%s2093 + $0x98] sm:$0xff]
    %v4789 = vld [vmem:[%s2093 + $0xa0] sm:$0xff]
    %v4790 = vld [vmem:[%s2093 + $0xa8] sm:$0xff]
    %v4791 = vld [vmem:[%s2093 + $0xb0] sm:$0xff]
    %v4792 = vld [vmem:[%s2093 + $0xb8] sm:$0xff]
    %v4793 = vld [vmem:[%s2093 + $0xc0] sm:$0xff]
    %v4794 = vld [vmem:[%s2093 + $0xc8] sm:$0xff]
    %v4795 = vld [vmem:[%s2093 + $0xd0] sm:$0xff]
    %v4796 = vld [vmem:[%s2093 + $0xd8] sm:$0xff]
    %v4797 = vld [vmem:[%s2093 + $0xe0] sm:$0xff]
    %v4798 = vld [vmem:[%s2093 + $0xe8] sm:$0xff]
    %v4799 = vld [vmem:[%s2093 + $0xf0] sm:$0xff]
    %v4800 = vld [vmem:[%s2093 + $0xf8] sm:$0xff]
    %4801 = vmatprep.subr.mxu0 0.0
    %4802 = vmatpush1.msra.mxu0 %v4769
    %4803 = vmatprep.subr.mxu0 0.0
    %4804 = vmatpush1.msra.mxu0 %v4770
    %4805 = vmatprep.subr.mxu0 0.0
    %4806 = vmatpush1.msra.mxu0 %v4771
    %4807 = vmatprep.subr.mxu0 0.0
    %4808 = vmatpush1.msra.mxu0 %v4772
    %4809 = vmatprep.subr.mxu0 0.0
    %4810 = vmatpush1.msra.mxu0 %v4773
    %4811 = vmatprep.subr.mxu0 0.0
    %4812 = vmatpush1.msra.mxu0 %v4774
    %4813 = vmatprep.subr.mxu0 0.0
    %4814 = vmatpush1.msra.mxu0 %v4775
    %4815 = vmatprep.subr.mxu0 0.0
    %4816 = vmatpush1.msra.mxu0 %v4776
    %4817 = vmatprep.subr.mxu0 0.0
    %4818 = vmatpush1.msra.mxu0 %v4777
    %4819 = vmatprep.subr.mxu0 0.0
    %4820 = vmatpush1.msra.mxu0 %v4778
    %4821 = vmatprep.subr.mxu0 0.0
    %4822 = vmatpush1.msra.mxu0 %v4779
    %4823 = vmatprep.subr.mxu0 0.0
    %4824 = vmatpush1.msra.mxu0 %v4780
    %4825 = vmatprep.subr.mxu0 0.0
    %4826 = vmatpush1.msra.mxu0 %v4781
    %4827 = vmatprep.subr.mxu0 0.0
    %4828 = vmatpush1.msra.mxu0 %v4782
    %4829 = vmatprep.subr.mxu0 0.0
    %4830 = vmatpush1.msra.mxu0 %v4783
    %4831 = vmatprep.subr.mxu0 0.0
    %4832 = vmatpush1.msra.mxu0 %v4784
    %4833 = vmatprep.subr.mxu0 0.0
    %4834 = vmatpush1.msra.mxu0 %v4785
    %4835 = vmatprep.subr.mxu0 0.0
    %4836 = vmatpush1.msra.mxu0 %v4786
    %4837 = vmatprep.subr.mxu0 0.0
    %4838 = vmatpush1.msra.mxu0 %v4787
    %4839 = vmatprep.subr.mxu0 0.0
    %4840 = vmatpush1.msra.mxu0 %v4788
    %4841 = vmatprep.subr.mxu0 0.0
    %4842 = vmatpush1.msra.mxu0 %v4789
    %4843 = vmatprep.subr.mxu0 0.0
    %4844 = vmatpush1.msra.mxu0 %v4790
    %4845 = vmatprep.subr.mxu0 0.0
    %4846 = vmatpush1.msra.mxu0 %v4791
    %4847 = vmatprep.subr.mxu0 0.0
    %4848 = vmatpush1.msra.mxu0 %v4792
    %4849 = vmatprep.subr.mxu0 0.0
    %4850 = vmatpush1.msra.mxu0 %v4793
    %4851 = vmatprep.subr.mxu0 0.0
    %4852 = vmatpush1.msra.mxu0 %v4794
    %4853 = vmatprep.subr.mxu0 0.0
    %4854 = vmatpush1.msra.mxu0 %v4795
    %4855 = vmatprep.subr.mxu0 0.0
    %4856 = vmatpush1.msra.mxu0 %v4796
    %4857 = vmatprep.subr.mxu0 0.0
    %4858 = vmatpush1.msra.mxu0 %v4797
    %4859 = vmatprep.subr.mxu0 0.0
    %4860 = vmatpush1.msra.mxu0 %v4798
    %4861 = vmatprep.subr.mxu0 0.0
    %4862 = vmatpush1.msra.mxu0 %v4799
    %4863 = vmatprep.subr.mxu0 0.0
    %4864 = vmatpush1.msra.mxu0 %v4800
    %4865 = vmatprep.mubr.f32.mxu0 %v4767
    %4866 = vmatmul.mubr.f32.gmra.mrb[0].mxu0 %v4765
    %v4867 = vpop.f32.mrb[0].mxu0
    %v4868 = vadd.f32 0.0, %v4867
    %v4869 = vpop.f32.mrb[0].mxu0
    %4870 = vdwg.mxu0
    %4871 = vmatprep.subr.mxu0 0.0
    %4872 = vmatpush1.msra.mxu0 %v4662
    %4873 = vmatprep.subr.mxu0 0.0
    %4874 = vmatpush1.msra.mxu0 %v4663
    %4875 = vmatprep.subr.mxu0 0.0
    %4876 = vmatpush1.msra.mxu0 %v4664
    %4877 = vmatprep.subr.mxu0 0.0
    %4878 = vmatpush1.msra.mxu0 %v4665
    %4879 = vmatprep.subr.mxu0 0.0
    %4880 = vmatpush1.msra.mxu0 %v4666
    %4881 = vmatprep.subr.mxu0 0.0
    %4882 = vmatpush1.msra.mxu0 %v4667
    %4883 = vmatprep.subr.mxu0 0.0
    %4884 = vmatpush1.msra.mxu0 %v4668
    %4885 = vmatprep.subr.mxu0 0.0
    %4886 = vmatpush1.msra.mxu0 %v4669
    %4887 = vmatprep.subr.mxu0 0.0
    %4888 = vmatpush1.msra.mxu0 %v4670
    %4889 = vmatprep.subr.mxu0 0.0
    %4890 = vmatpush1.msra.mxu0 %v4671
    %4891 = vmatprep.subr.mxu0 0.0
    %4892 = vmatpush1.msra.mxu0 %v4672
    %4893 = vmatprep.subr.mxu0 0.0
    %4894 = vmatpush1.msra.mxu0 %v4673
    %4895 = vmatprep.subr.mxu0 0.0
    %4896 = vmatpush1.msra.mxu0 %v4674
    %4897 = vmatprep.subr.mxu0 0.0
    %4898 = vmatpush1.msra.mxu0 %v4675
    %4899 = vmatprep.subr.mxu0 0.0
    %4900 = vmatpush1.msra.mxu0 %v4676
    %4901 = vmatprep.subr.mxu0 0.0
    %4902 = vmatpush1.msra.mxu0 %v4677
    %4903 = vmatprep.subr.mxu0 0.0
    %4904 = vmatpush1.msra.mxu0 %v4678
    %4905 = vmatprep.subr.mxu0 0.0
    %4906 = vmatpush1.msra.mxu0 %v4679
    %4907 = vmatprep.subr.mxu0 0.0
    %4908 = vmatpush1.msra.mxu0 %v4680
    %4909 = vmatprep.subr.mxu0 0.0
    %4910 = vmatpush1.msra.mxu0 %v4681
    %4911 = vmatprep.subr.mxu0 0.0
    %4912 = vmatpush1.msra.mxu0 %v4682
    %4913 = vmatprep.subr.mxu0 0.0
    %4914 = vmatpush1.msra.mxu0 %v4683
    %4915 = vmatprep.subr.mxu0 0.0
    %4916 = vmatpush1.msra.mxu0 %v4684
    %4917 = vmatprep.subr.mxu0 0.0
    %4918 = vmatpush1.msra.mxu0 %v4685
    %4919 = vmatprep.subr.mxu0 0.0
    %4920 = vmatpush1.msra.mxu0 %v4686
    %4921 = vmatprep.subr.mxu0 0.0
    %4922 = vmatpush1.msra.mxu0 %v4687
    %4923 = vmatprep.subr.mxu0 0.0
    %4924 = vmatpush1.msra.mxu0 %v4688
    %4925 = vmatprep.subr.mxu0 0.0
    %4926 = vmatpush1.msra.mxu0 %v4689
    %4927 = vmatprep.subr.mxu0 0.0
    %4928 = vmatpush1.msra.mxu0 %v4690
    %4929 = vmatprep.subr.mxu0 0.0
    %4930 = vmatpush1.msra.mxu0 %v4691
    %4931 = vmatprep.subr.mxu0 0.0
    %4932 = vmatpush1.msra.mxu0 %v4692
    %4933 = vmatprep.subr.mxu0 0.0
    %4934 = vmatpush1.msra.mxu0 %v4693
    %4935 = vmatprep.mubr.f32.mxu0 %v4660
    %4936 = vmatmul.mubr.f32.gmra.mrb[0].mxu0 %v4658
    %v4937 = vpop.f32.mrb[0].mxu0
    %v4938 = vadd.f32 %v4868, %v4937
    %v4939 = vpop.f32.mrb[0].mxu0
    %4940 = vdwg.mxu0
    %v4941 = vld [vmem:[%s2266] sm:$0x7]
    %v4943 = vsel %vm1903, %v4941, 0
    %4945 = vmatprep.subr.mxu0 %v4589
    %4946 = vmatpush1.msra.mxu0 %v4586
    %4947 = vmatprep.subr.mxu0 0.0
    %4948 = vmatpush1.msra.mxu0 0.0
    %4949 = vmatprep.subr.mxu0 0.0
    %4950 = vmatpush1.msra.mxu0 0.0
    %4951 = vmatprep.subr.mxu0 0.0
    %4952 = vmatpush1.msra.mxu0 0.0
    %4953 = vmatprep.subr.mxu0 0.0
    %4954 = vmatpush1.msra.mxu0 0.0
    %4955 = vmatprep.subr.mxu0 0.0
    %4956 = vmatpush1.msra.mxu0 0.0
    %4957 = vmatprep.subr.mxu0 0.0
    %4958 = vmatpush1.msra.mxu0 0.0
    %4959 = vmatprep.subr.mxu0 0.0
    %4960 = vmatpush1.msra.mxu0 0.0
    %4961 = vmatprep.subr.mxu0 0.0
    %4962 = vmatpush1.msra.mxu0 0.0
    %4963 = vmatprep.subr.mxu0 0.0
    %4964 = vmatpush1.msra.mxu0 0.0
    %4965 = vmatprep.subr.mxu0 0.0
    %4966 = vmatpush1.msra.mxu0 0.0
    %4967 = vmatprep.subr.mxu0 0.0
    %4968 = vmatpush1.msra.mxu0 0.0
    %4969 = vmatprep.subr.mxu0 0.0
    %4970 = vmatpush1.msra.mxu0 0.0
    %4971 = vmatprep.subr.mxu0 0.0
    %4972 = vmatpush1.msra.mxu0 0.0
    %4973 = vmatprep.subr.mxu0 0.0
    %4974 = vmatpush1.msra.mxu0 0.0
    %4975 = vmatprep.subr.mxu0 0.0
    %4976 = vmatpush1.msra.mxu0 0.0
    %4977 = vmatprep.subr.mxu0 0.0
    %4978 = vmatpush1.msra.mxu0 0.0
    %4979 = vmatprep.subr.mxu0 0.0
    %4980 = vmatpush1.msra.mxu0 0.0
    %4981 = vmatprep.subr.mxu0 0.0
    %4982 = vmatpush1.msra.mxu0 0.0
    %4983 = vmatprep.subr.mxu0 0.0
    %4984 = vmatpush1.msra.mxu0 0.0
    %4985 = vmatprep.subr.mxu0 0.0
    %4986 = vmatpush1.msra.mxu0 0.0
    %4987 = vmatprep.subr.mxu0 0.0
    %4988 = vmatpush1.msra.mxu0 0.0
    %4989 = vmatprep.subr.mxu0 0.0
    %4990 = vmatpush1.msra.mxu0 0.0
    %4991 = vmatprep.subr.mxu0 0.0
    %4992 = vmatpush1.msra.mxu0 0.0
    %4993 = vmatprep.subr.mxu0 0.0
    %4994 = vmatpush1.msra.mxu0 0.0
    %4995 = vmatprep.subr.mxu0 0.0
    %4996 = vmatpush1.msra.mxu0 0.0
    %4997 = vmatprep.subr.mxu0 0.0
    %4998 = vmatpush1.msra.mxu0 0.0
    %4999 = vmatprep.subr.mxu0 0.0
    %5000 = vmatpush1.msra.mxu0 0.0
    %5001 = vmatprep.subr.mxu0 0.0
    %5002 = vmatpush1.msra.mxu0 0.0
    %5003 = vmatprep.subr.mxu0 0.0
    %5004 = vmatpush1.msra.mxu0 0.0
    %5005 = vmatprep.subr.mxu0 0.0
    %5006 = vmatpush1.msra.mxu0 0.0
    %5007 = vmatprep.subr.mxu0 0.0
    %5008 = vmatpush1.msra.mxu0 0.0
    %5009 = vmatprep.mubr.f32.mxu0 0.0
    %5010 = vmatmul.mubr.f32.gmra.mrb[0].mxu0 %v4943
    %v5011 = vpop.f32.mrb[0].mxu0
    %v5012 = vadd.f32 0.0, %v5011
    %v5013 = vpop.f32.mrb[0].mxu0
    %v5014 = vadd.f32 0.0, %v5013
    %5015 = vdwg.mxu0
    %v5016 = vld [vmem:[%s2342] sm:$0xff]
    %v5017 = vld [vmem:[%s2342 + $0x8] sm:$0xff]
    %v5018 = vld [vmem:[%s2342 + $0x10] sm:$0xff]
    %v5019 = vld [vmem:[%s2342 + $0x18] sm:$0xff]
    %v5020 = vld [vmem:[%s2342 + $0x20] sm:$0xff]
    %v5021 = vld [vmem:[%s2342 + $0x28] sm:$0xff]
    %v5022 = vld [vmem:[%s2342 + $0x30] sm:$0xff]
    %v5023 = vld [vmem:[%s2342 + $0x38] sm:$0xff]
    %v5024 = vld [vmem:[%s2342 + $0x40] sm:$0xff]
    %v5025 = vld [vmem:[%s2342 + $0x48] sm:$0xff]
    %v5026 = vld [vmem:[%s2342 + $0x50] sm:$0xff]
    %v5027 = vld [vmem:[%s2342 + $0x58] sm:$0xff]
    %v5028 = vld [vmem:[%s2342 + $0x60] sm:$0xff]
    %v5029 = vld [vmem:[%s2342 + $0x68] sm:$0xff]
    %v5030 = vld [vmem:[%s2342 + $0x70] sm:$0xff]
    %v5031 = vld [vmem:[%s2342 + $0x78] sm:$0xff]
    %v5032 = vld [vmem:[%s2342 + $0x80] sm:$0xff]
    %v5033 = vld [vmem:[%s2342 + $0x88] sm:$0xff]
    %v5034 = vld [vmem:[%s2342 + $0x90] sm:$0xff]
    %v5035 = vld [vmem:[%s2342 + $0x98] sm:$0xff]
    %v5036 = vld [vmem:[%s2342 + $0xa0] sm:$0xff]
    %v5037 = vld [vmem:[%s2342 + $0xa8] sm:$0xff]
    %v5038 = vld [vmem:[%s2342 + $0xb0] sm:$0xff]
    %v5039 = vld [vmem:[%s2342 + $0xb8] sm:$0xff]
    %v5040 = vld [vmem:[%s2342 + $0xc0] sm:$0xff]
    %v5041 = vld [vmem:[%s2342 + $0xc8] sm:$0xff]
    %v5042 = vld [vmem:[%s2342 + $0xd0] sm:$0xff]
    %v5043 = vld [vmem:[%s2342 + $0xd8] sm:$0xff]
    %v5044 = vld [vmem:[%s2342 + $0xe0] sm:$0xff]
    %v5045 = vld [vmem:[%s2342 + $0xe8] sm:$0xff]
    %v5046 = vld [vmem:[%s2342 + $0xf0] sm:$0xff]
    %v5047 = vld [vmem:[%s2342 + $0xf8] sm:$0xff]
    %5048 = vmatprep.subr.mxu0 0.0
    %5049 = vmatpush1.msra.mxu0 %v5016
    %5050 = vmatprep.subr.mxu0 0.0
    %5051 = vmatpush1.msra.mxu0 %v5017
    %5052 = vmatprep.subr.mxu0 0.0
    %5053 = vmatpush1.msra.mxu0 %v5018
    %5054 = vmatprep.subr.mxu0 0.0
    %5055 = vmatpush1.msra.mxu0 %v5019
    %5056 = vmatprep.subr.mxu0 0.0
    %5057 = vmatpush1.msra.mxu0 %v5020
    %5058 = vmatprep.subr.mxu0 0.0
    %5059 = vmatpush1.msra.mxu0 %v5021
    %5060 = vmatprep.subr.mxu0 0.0
    %5061 = vmatpush1.msra.mxu0 %v5022
    %5062 = vmatprep.subr.mxu0 0.0
    %5063 = vmatpush1.msra.mxu0 %v5023
    %5064 = vmatprep.subr.mxu0 0.0
    %5065 = vmatpush1.msra.mxu0 %v5024
    %5066 = vmatprep.subr.mxu0 0.0
    %5067 = vmatpush1.msra.mxu0 %v5025
    %5068 = vmatprep.subr.mxu0 0.0
    %5069 = vmatpush1.msra.mxu0 %v5026
    %5070 = vmatprep.subr.mxu0 0.0
    %5071 = vmatpush1.msra.mxu0 %v5027
    %5072 = vmatprep.subr.mxu0 0.0
    %5073 = vmatpush1.msra.mxu0 %v5028
    %5074 = vmatprep.subr.mxu0 0.0
    %5075 = vmatpush1.msra.mxu0 %v5029
    %5076 = vmatprep.subr.mxu0 0.0
    %5077 = vmatpush1.msra.mxu0 %v5030
    %5078 = vmatprep.subr.mxu0 0.0
    %5079 = vmatpush1.msra.mxu0 %v5031
    %5080 = vmatprep.subr.mxu0 0.0
    %5081 = vmatpush1.msra.mxu0 %v5032
    %5082 = vmatprep.subr.mxu0 0.0
    %5083 = vmatpush1.msra.mxu0 %v5033
    %5084 = vmatprep.subr.mxu0 0.0
    %5085 = vmatpush1.msra.mxu0 %v5034
    %5086 = vmatprep.subr.mxu0 0.0
    %5087 = vmatpush1.msra.mxu0 %v5035
    %5088 = vmatprep.subr.mxu0 0.0
    %5089 = vmatpush1.msra.mxu0 %v5036
    %5090 = vmatprep.subr.mxu0 0.0
    %5091 = vmatpush1.msra.mxu0 %v5037
    %5092 = vmatprep.subr.mxu0 0.0
    %5093 = vmatpush1.msra.mxu0 %v5038
    %5094 = vmatprep.subr.mxu0 0.0
    %5095 = vmatpush1.msra.mxu0 %v5039
    %5096 = vmatprep.subr.mxu0 0.0
    %5097 = vmatpush1.msra.mxu0 %v5040
    %5098 = vmatprep.subr.mxu0 0.0
    %5099 = vmatpush1.msra.mxu0 %v5041
    %5100 = vmatprep.subr.mxu0 0.0
    %5101 = vmatpush1.msra.mxu0 %v5042
    %5102 = vmatprep.subr.mxu0 0.0
    %5103 = vmatpush1.msra.mxu0 %v5043
    %5104 = vmatprep.subr.mxu0 0.0
    %5105 = vmatpush1.msra.mxu0 %v5044
    %5106 = vmatprep.subr.mxu0 0.0
    %5107 = vmatpush1.msra.mxu0 %v5045
    %5108 = vmatprep.subr.mxu0 0.0
    %5109 = vmatpush1.msra.mxu0 %v5046
    %5110 = vmatprep.subr.mxu0 0.0
    %5111 = vmatpush1.msra.mxu0 %v5047
    %5112 = vmatprep.mubr.f32.mxu0 %v5014
    %5113 = vmatmul.mubr.f32.gmra.mrb[0].mxu0 %v5012
    %v5114 = vpop.f32.mrb[0].mxu0
    %v5115 = vadd.f32 0.0, %v5114
    %v5116 = vpop.f32.mrb[0].mxu0
    %5117 = vdwg.mxu0
    %v5118 = vadd.f32 %v4938, %v5115
    %v5119 = vld [vmem:[%s6] sm:$0x1]
    %v5121 = vlaneseq
    %v5122 = vshrl.u32 %v5121, 7
    %v5123 = vsub.s32 0, %v5122
    %v5124 = vrot.slane %v5119, %v5123
    %v5126 = vadd.f32 %v5118, %v5124
    %v5127 = vmax.f32 %v5126, 0.0
    %v5128 = vld [vmem:[%s8] sm:$0x1]
    %v5129 = vld [vmem:[%s7] sm:$0xff]
    %v5130 = vld [vmem:[%s7 + $0x8] sm:$0xff]
    %v5131 = vld [vmem:[%s7 + $0x10] sm:$0xff]
    %v5132 = vld [vmem:[%s7 + $0x18] sm:$0xff]
    %v5133 = vld [vmem:[%s7 + $0x20] sm:$0xff]
    %v5134 = vld [vmem:[%s7 + $0x28] sm:$0xff]
    %v5135 = vld [vmem:[%s7 + $0x30] sm:$0xff]
    %v5136 = vld [vmem:[%s7 + $0x38] sm:$0xff]
    %v5137 = vld [vmem:[%s7 + $0x40] sm:$0xff]
    %v5138 = vld [vmem:[%s7 + $0x48] sm:$0xff]
    %v5139 = vld [vmem:[%s7 + $0x50] sm:$0xff]
    %v5140 = vld [vmem:[%s7 + $0x58] sm:$0xff]
    %v5141 = vld [vmem:[%s7 + $0x60] sm:$0xff]
    %v5142 = vld [vmem:[%s7 + $0x68] sm:$0xff]
    %v5143 = vld [vmem:[%s7 + $0x70] sm:$0xff]
    %v5144 = vld [vmem:[%s7 + $0x78] sm:$0xff]
    %5145 = vmatprep.subr.mxu0 0.0
    %5146 = vmatpush1.msra.mxu0 %v5129
    %5147 = vmatprep.subr.mxu0 0.0
    %5148 = vmatpush1.msra.mxu0 %v5130
    %5149 = vmatprep.subr.mxu0 0.0
    %5150 = vmatpush1.msra.mxu0 %v5131
    %5151 = vmatprep.subr.mxu0 0.0
    %5152 = vmatpush1.msra.mxu0 %v5132
    %5153 = vmatprep.subr.mxu0 0.0
    %5154 = vmatpush1.msra.mxu0 %v5133
    %5155 = vmatprep.subr.mxu0 0.0
    %5156 = vmatpush1.msra.mxu0 %v5134
    %5157 = vmatprep.subr.mxu0 0.0
    %5158 = vmatpush1.msra.mxu0 %v5135
    %5159 = vmatprep.subr.mxu0 0.0
    %5160 = vmatpush1.msra.mxu0 %v5136
    %5161 = vmatprep.subr.mxu0 0.0
    %5162 = vmatpush1.msra.mxu0 %v5137
    %5163 = vmatprep.subr.mxu0 0.0
    %5164 = vmatpush1.msra.mxu0 %v5138
    %5165 = vmatprep.subr.mxu0 0.0
    %5166 = vmatpush1.msra.mxu0 %v5139
    %5167 = vmatprep.subr.mxu0 0.0
    %5168 = vmatpush1.msra.mxu0 %v5140
    %5169 = vmatprep.subr.mxu0 0.0
    %5170 = vmatpush1.msra.mxu0 %v5141
    %5171 = vmatprep.subr.mxu0 0.0
    %5172 = vmatpush1.msra.mxu0 %v5142
    %5173 = vmatprep.subr.mxu0 0.0
    %5174 = vmatpush1.msra.mxu0 %v5143
    %5175 = vmatprep.subr.mxu0 0.0
    %5176 = vmatpush1.msra.mxu0 %v5144
    %5177 = vmatprep.subr.mxu0 0.0
    %5178 = vmatpush1.msra.mxu0 0.0
    %5179 = vmatprep.subr.mxu0 0.0
    %5180 = vmatpush1.msra.mxu0 0.0
    %5181 = vmatprep.subr.mxu0 0.0
    %5182 = vmatpush1.msra.mxu0 0.0
    %5183 = vmatprep.subr.mxu0 0.0
    %5184 = vmatpush1.msra.mxu0 0.0
    %5185 = vmatprep.subr.mxu0 0.0
    %5186 = vmatpush1.msra.mxu0 0.0
    %5187 = vmatprep.subr.mxu0 0.0
    %5188 = vmatpush1.msra.mxu0 0.0
    %5189 = vmatprep.subr.mxu0 0.0
    %5190 = vmatpush1.msra.mxu0 0.0
    %5191 = vmatprep.subr.mxu0 0.0
    %5192 = vmatpush1.msra.mxu0 0.0
    %5193 = vmatprep.subr.mxu0 0.0
    %5194 = vmatpush1.msra.mxu0 0.0
    %5195 = vmatprep.subr.mxu0 0.0
    %5196 = vmatpush1.msra.mxu0 0.0
    %5197 = vmatprep.subr.mxu0 0.0
    %5198 = vmatpush1.msra.mxu0 0.0
    %5199 = vmatprep.subr.mxu0 0.0
    %5200 = vmatpush1.msra.mxu0 0.0
    %5201 = vmatprep.subr.mxu0 0.0
    %5202 = vmatpush1.msra.mxu0 0.0
    %5203 = vmatprep.subr.mxu0 0.0
    %5204 = vmatpush1.msra.mxu0 0.0
    %5205 = vmatprep.subr.mxu0 0.0
    %5206 = vmatpush1.msra.mxu0 0.0
    %5207 = vmatprep.subr.mxu0 0.0
    %5208 = vmatpush1.msra.mxu0 0.0
    %5209 = vmatprep.mubr.f32.mxu0 0.0
    %5210 = vmatmul.mubr.f32.gmra.mrb[0].mxu0 %v5127
    %v5211 = vpop.f32.mrb[0].mxu0
    %v5212 = vadd.f32 0.0, %v5211
    %v5213 = vpop.f32.mrb[0].mxu0
    %5214 = vdwg.mxu0
    %v5215 = vadd.f32 %v5128, %v5212
    %v5216 = vld [vmem:[%s2543] sm:$0xff]
    %v5217 = vld [vmem:[%s2543 + $0x8] sm:$0xff]
    %v5218 = vld [vmem:[%s2543 + $0x10] sm:$0xff]
    %v5219 = vld [vmem:[%s2543 + $0x18] sm:$0xff]
    %v5220 = vld [vmem:[%s2543 + $0x20] sm:$0xff]
    %v5221 = vld [vmem:[%s2543 + $0x28] sm:$0xff]
    %v5222 = vld [vmem:[%s2543 + $0x30] sm:$0xff]
    %v5223 = vld [vmem:[%s2543 + $0x38] sm:$0xff]
    %v5224 = vld [vmem:[%s2543 + $0x40] sm:$0xff]
    %v5225 = vld [vmem:[%s2543 + $0x48] sm:$0xff]
    %v5226 = vld [vmem:[%s2543 + $0x50] sm:$0xff]
    %v5227 = vld [vmem:[%s2543 + $0x58] sm:$0xff]
    %v5228 = vld [vmem:[%s2543 + $0x60] sm:$0xff]
    %v5229 = vld [vmem:[%s2543 + $0x68] sm:$0xff]
    %v5230 = vld [vmem:[%s2543 + $0x70] sm:$0xff]
    %v5231 = vld [vmem:[%s2543 + $0x78] sm:$0xff]
    %v5233 = vrot.slane %v5127, 1
    %5235 = vmatprep.subr.mxu0 0.0
    %5236 = vmatpush1.msra.mxu0 %v5216
    %5237 = vmatprep.subr.mxu0 0.0
    %5238 = vmatpush1.msra.mxu0 %v5217
    %5239 = vmatprep.subr.mxu0 0.0
    %5240 = vmatpush1.msra.mxu0 %v5218
    %5241 = vmatprep.subr.mxu0 0.0
    %5242 = vmatpush1.msra.mxu0 %v5219
    %5243 = vmatprep.subr.mxu0 0.0
    %5244 = vmatpush1.msra.mxu0 %v5220
    %5245 = vmatprep.subr.mxu0 0.0
    %5246 = vmatpush1.msra.mxu0 %v5221
    %5247 = vmatprep.subr.mxu0 0.0
    %5248 = vmatpush1.msra.mxu0 %v5222
    %5249 = vmatprep.subr.mxu0 0.0
    %5250 = vmatpush1.msra.mxu0 %v5223
    %5251 = vmatprep.subr.mxu0 0.0
    %5252 = vmatpush1.msra.mxu0 %v5224
    %5253 = vmatprep.subr.mxu0 0.0
    %5254 = vmatpush1.msra.mxu0 %v5225
    %5255 = vmatprep.subr.mxu0 0.0
    %5256 = vmatpush1.msra.mxu0 %v5226
    %5257 = vmatprep.subr.mxu0 0.0
    %5258 = vmatpush1.msra.mxu0 %v5227
    %5259 = vmatprep.subr.mxu0 0.0
    %5260 = vmatpush1.msra.mxu0 %v5228
    %5261 = vmatprep.subr.mxu0 0.0
    %5262 = vmatpush1.msra.mxu0 %v5229
    %5263 = vmatprep.subr.mxu0 0.0
    %5264 = vmatpush1.msra.mxu0 %v5230
    %5265 = vmatprep.subr.mxu0 0.0
    %5266 = vmatpush1.msra.mxu0 %v5231
    %5267 = vmatprep.subr.mxu0 0.0
    %5268 = vmatpush1.msra.mxu0 0.0
    %5269 = vmatprep.subr.mxu0 0.0
    %5270 = vmatpush1.msra.mxu0 0.0
    %5271 = vmatprep.subr.mxu0 0.0
    %5272 = vmatpush1.msra.mxu0 0.0
    %5273 = vmatprep.subr.mxu0 0.0
    %5274 = vmatpush1.msra.mxu0 0.0
    %5275 = vmatprep.subr.mxu0 0.0
    %5276 = vmatpush1.msra.mxu0 0.0
    %5277 = vmatprep.subr.mxu0 0.0
    %5278 = vmatpush1.msra.mxu0 0.0
    %5279 = vmatprep.subr.mxu0 0.0
    %5280 = vmatpush1.msra.mxu0 0.0
    %5281 = vmatprep.subr.mxu0 0.0
    %5282 = vmatpush1.msra.mxu0 0.0
    %5283 = vmatprep.subr.mxu0 0.0
    %5284 = vmatpush1.msra.mxu0 0.0
    %5285 = vmatprep.subr.mxu0 0.0
    %5286 = vmatpush1.msra.mxu0 0.0
    %5287 = vmatprep.subr.mxu0 0.0
    %5288 = vmatpush1.msra.mxu0 0.0
    %5289 = vmatprep.subr.mxu0 0.0
    %5290 = vmatpush1.msra.mxu0 0.0
    %5291 = vmatprep.subr.mxu0 0.0
    %5292 = vmatpush1.msra.mxu0 0.0
    %5293 = vmatprep.subr.mxu0 0.0
    %5294 = vmatpush1.msra.mxu0 0.0
    %5295 = vmatprep.subr.mxu0 0.0
    %5296 = vmatpush1.msra.mxu0 0.0
    %5297 = vmatprep.subr.mxu0 0.0
    %5298 = vmatpush1.msra.mxu0 0.0
    %5299 = vmatprep.mubr.f32.mxu0 0.0
    %5300 = vmatmul.mubr.f32.gmra.mrb[0].mxu0 %v5233
    %v5301 = vpop.f32.mrb[0].mxu0
    %v5302 = vadd.f32 0.0, %v5301
    %v5303 = vpop.f32.mrb[0].mxu0
    %5304 = vdwg.mxu0
    %v5305 = vadd.f32 %v5215, %v5302
    %v5306 = vld [vmem:[%s2634] sm:$0xff]
    %v5307 = vld [vmem:[%s2634 + $0x8] sm:$0xff]
    %v5308 = vld [vmem:[%s2634 + $0x10] sm:$0xff]
    %v5309 = vld [vmem:[%s2634 + $0x18] sm:$0xff]
    %v5310 = vld [vmem:[%s2634 + $0x20] sm:$0xff]
    %v5311 = vld [vmem:[%s2634 + $0x28] sm:$0xff]
    %v5312 = vld [vmem:[%s2634 + $0x30] sm:$0xff]
    %v5313 = vld [vmem:[%s2634 + $0x38] sm:$0xff]
    %v5314 = vld [vmem:[%s2634 + $0x40] sm:$0xff]
    %v5315 = vld [vmem:[%s2634 + $0x48] sm:$0xff]
    %v5316 = vld [vmem:[%s2634 + $0x50] sm:$0xff]
    %v5317 = vld [vmem:[%s2634 + $0x58] sm:$0xff]
    %v5318 = vld [vmem:[%s2634 + $0x60] sm:$0xff]
    %v5319 = vld [vmem:[%s2634 + $0x68] sm:$0xff]
    %v5320 = vld [vmem:[%s2634 + $0x70] sm:$0xff]
    %v5321 = vld [vmem:[%s2634 + $0x78] sm:$0xff]
    %v5322 = vrot.slane %v5127, 2
    %5324 = vmatprep.subr.mxu0 0.0
    %5325 = vmatpush1.msra.mxu0 %v5306
    %5326 = vmatprep.subr.mxu0 0.0
    %5327 = vmatpush1.msra.mxu0 %v5307
    %5328 = vmatprep.subr.mxu0 0.0
    %5329 = vmatpush1.msra.mxu0 %v5308
    %5330 = vmatprep.subr.mxu0 0.0
    %5331 = vmatpush1.msra.mxu0 %v5309
    %5332 = vmatprep.subr.mxu0 0.0
    %5333 = vmatpush1.msra.mxu0 %v5310
    %5334 = vmatprep.subr.mxu0 0.0
    %5335 = vmatpush1.msra.mxu0 %v5311
    %5336 = vmatprep.subr.mxu0 0.0
    %5337 = vmatpush1.msra.mxu0 %v5312
    %5338 = vmatprep.subr.mxu0 0.0
    %5339 = vmatpush1.msra.mxu0 %v5313
    %5340 = vmatprep.subr.mxu0 0.0
    %5341 = vmatpush1.msra.mxu0 %v5314
    %5342 = vmatprep.subr.mxu0 0.0
    %5343 = vmatpush1.msra.mxu0 %v5315
    %5344 = vmatprep.subr.mxu0 0.0
    %5345 = vmatpush1.msra.mxu0 %v5316
    %5346 = vmatprep.subr.mxu0 0.0
    %5347 = vmatpush1.msra.mxu0 %v5317
    %5348 = vmatprep.subr.mxu0 0.0
    %5349 = vmatpush1.msra.mxu0 %v5318
    %5350 = vmatprep.subr.mxu0 0.0
    %5351 = vmatpush1.msra.mxu0 %v5319
    %5352 = vmatprep.subr.mxu0 0.0
    %5353 = vmatpush1.msra.mxu0 %v5320
    %5354 = vmatprep.subr.mxu0 0.0
    %5355 = vmatpush1.msra.mxu0 %v5321
    %5356 = vmatprep.subr.mxu0 0.0
    %5357 = vmatpush1.msra.mxu0 0.0
    %5358 = vmatprep.subr.mxu0 0.0
    %5359 = vmatpush1.msra.mxu0 0.0
    %5360 = vmatprep.subr.mxu0 0.0
    %5361 = vmatpush1.msra.mxu0 0.0
    %5362 = vmatprep.subr.mxu0 0.0
    %5363 = vmatpush1.msra.mxu0 0.0
    %5364 = vmatprep.subr.mxu0 0.0
    %5365 = vmatpush1.msra.mxu0 0.0
    %5366 = vmatprep.subr.mxu0 0.0
    %5367 = vmatpush1.msra.mxu0 0.0
    %5368 = vmatprep.subr.mxu0 0.0
    %5369 = vmatpush1.msra.mxu0 0.0
    %5370 = vmatprep.subr.mxu0 0.0
    %5371 = vmatpush1.msra.mxu0 0.0
    %5372 = vmatprep.subr.mxu0 0.0
    %5373 = vmatpush1.msra.mxu0 0.0
    %5374 = vmatprep.subr.mxu0 0.0
    %5375 = vmatpush1.msra.mxu0 0.0
    %5376 = vmatprep.subr.mxu0 0.0
    %5377 = vmatpush1.msra.mxu0 0.0
    %5378 = vmatprep.subr.mxu0 0.0
    %5379 = vmatpush1.msra.mxu0 0.0
    %5380 = vmatprep.subr.mxu0 0.0
    %5381 = vmatpush1.msra.mxu0 0.0
    %5382 = vmatprep.subr.mxu0 0.0
    %5383 = vmatpush1.msra.mxu0 0.0
    %5384 = vmatprep.subr.mxu0 0.0
    %5385 = vmatpush1.msra.mxu0 0.0
    %5386 = vmatprep.subr.mxu0 0.0
    %5387 = vmatpush1.msra.mxu0 0.0
    %5388 = vmatprep.mubr.f32.mxu0 0.0
    %5389 = vmatmul.mubr.f32.gmra.mrb[0].mxu0 %v5322
    %v5390 = vpop.f32.mrb[0].mxu0
    %v5391 = vadd.f32 0.0, %v5390
    %v5392 = vpop.f32.mrb[0].mxu0
    %5393 = vdwg.mxu0
    %v5394 = vadd.f32 %v5305, %v5391
    %v5395 = vsel %vm2724, %v5394, 0.0
    %5396 = vadd.xlane.f32.xlu0 %v5395
    %v5397 = vpop.xlane.xlu0 %5396
    %v5398 = vmul.f32 %v5397, %v2728
    %v5399 = vsub.f32 %v5394, %v5398
    %v5400 = vmul.f32 %v5399, %v5399
    %v5401 = vsel %vm2724, %v5400, 0.0
    %5402 = vadd.xlane.f32.xlu0 %v5401
    %v5403 = vpop.xlane.xlu0 %5402
    %v5404 = vmul.f32 %v5403, %v2728
    %v5405 = vadd.f32 %v5404, 1e-05
    %v5406 = vrsqrt.pop %v5405
    %v5407 = vmul.f32 %v5399, %v5406
    %v5408 = vld [vmem:[%s9] sm:$0x1]
    %v5409 = vmul.f32 %v5407, %v5408
    %v5410 = vld [vmem:[%s10] sm:$0x1]
    %v5411 = vadd.f32 %v5409, %v5410
    %v5412 = vtanh.pop %v5411
    %5413 = vst.msk [vmem:[#allocation5 + $0x1] sm:$0x1] %vm2724, %v5412
    // Predicated region
    $region50: #{pixel_encoder_forward.1} parent=1 // pred_check
      _
    $region51: #{pixel_encoder_forward.1} parent=1 // pred_check_branch
      %5415 = sbr.rel (0) target = $region53
    $region52: #{pixel_encoder_forward.1} parent=1 // pred_region
      %s5417 = ssub.s32 32, 32
      %5418 = vsyncadd [#allocation4], %s5417
      %s5420 = sshll.u32 [#allocation5], 4
      %s5421 = int_to_ptr.vmem [resolvable:$true] %s5420
      %5423 = dma.vmem_to_hbm [thread:$0]  %s5421, 32, %s11, [#allocation4]
    $region53: #{pixel_encoder_forward.1} parent=1 // pred_fallthru
      _
    // Predicated region
    $region54: #{pixel_encoder_forward.1} parent=1 // pred_check
      _
    $region55: #{pixel_encoder_forward.1} parent=1 // pred_check_branch
      %5425 = sbr.rel (0) target = $region57
    $region56: #{pixel_encoder_forward.1} parent=1 // pred_region
      %5426 = dma.done [#allocation4], 32
    $region57: #{pixel_encoder_forward.1} parent=1 // pred_fallthru
      _
    %5427 = vsyncpa [#allocation3], 1
    %5428 = vsyncpa [#allocation4], 1

</llo_original>
